<compile_context>
chip_gen: v7x
topology: tpu7x:2x2x1
jax: 0.10.0
libtpu: 0.0.40
codegen_flags: <defaults>
</compile_context>

<pallas_src>
import jax
import jax.numpy as jnp
from jax.experimental import pallas as pl
from jax.experimental.pallas import tpu as pltpu

# ---------------- problem sizes (small, synthetic) ----------------
N = 16          # nodes per graph
F = 8           # in_features
EMB = 16        # emb_features
K = 8           # next_n_nodes
E = 64          # edges per graph
G = 16          # number of graphs in the batch
OUT = EMB + K   # fused head width (24)
OUT_PAD = 128   # lane-dense packed output width


def diffpool_kernel(x_ref, ai_ref, aj_ref, w_ref, b_ref, out_ref):
    gb, n, f = x_ref.shape
    e = ai_ref.shape[-1]
    out = b_ref.shape[-1]              # EMB + K (fused head width)
    k = out_ref.shape[-2]              # next_n_nodes
    emb = out - k
    out_pad = out_ref.shape[-1]        # 128 (lane-dense slab)

    x = x_ref[...]                     # (gb, N, F)  f32
    ai = ai_ref[...]                   # (gb, E)     int32
    aj = aj_ref[...]                   # (gb, E)     int32

    # --- one-hot edge selectors in (gb, N, E): E stays on the lane axis -----
    node_iota = jax.lax.broadcasted_iota(jnp.int32, (gb, n, e), 1)
    si = (node_iota == ai[:, None, :]).astype(jnp.float32)   # si[g,n,e]=[ai==n]
    sj = (node_iota == aj[:, None, :]).astype(jnp.float32)   # sj[g,m,e]=[aj==m]

    # --- dense per-graph adjacency (edge multiplicity) + out-degree ---------
    # A[n, m] = #edges (n -> m);  deg[n] = #edges with source n.
    adj = jnp.einsum('gne,gme->gnm', si, sj,
                     preferred_element_type=jnp.float32)      # (gb, N, N)
    deg = jnp.sum(si, axis=-1, keepdims=True)                 # (gb, N, 1)

    # --- shared-weight projection, flattened over the batch -----------------
    # w_ref = [Wi^T | Wj^T] is (F, 2*OUT); one 2D dot for both heads+endpoints.
    xw = jnp.dot(x.reshape(gb * n, f), w_ref[...],
                 preferred_element_type=jnp.float32)          # (gb*N, 2*OUT)
    xw = xw.reshape(gb, n, 2 * out)
    xw_i = xw[:, :, :out] + b_ref[...]                        # x @ Wi^T + b
    xw_j = xw[:, :, out:]                                     # x @ Wj^T

    # --- scatter-sum of edge messages, re-expressed in N-space --------------
    # agg[n] = deg(n) * (x[n] Wi^T + b) + (A @ (x Wj^T))[n]
    agg = deg * xw_i + jnp.einsum('gnm,gmo->gno', adj, xw_j,
                                  preferred_element_type=jnp.float32)

    z = agg[:, :, :emb]                                       # (gb, N, EMB)
    s_logits = agg[:, :, emb:]                                # (gb, N, K)

    # --- softmax over clusters (exact divide: s feeds two more matmuls) -----
    mx = jnp.max(s_logits, axis=-1, keepdims=True)
    p = jnp.exp(s_logits - mx)
    s = p / jnp.sum(p, axis=-1, keepdims=True)                # (gb, N, K)

    # --- fused pooling head: s^T @ [z | A s | 0-pad] -> (gb, K, 128) --------
    a_s = jnp.einsum('gnm,gmk->gnk', adj, s,
                     preferred_element_type=jnp.float32)      # (gb, N, K)
    rhs = jnp.concatenate(
        [z, a_s, jnp.zeros((gb, n, out_pad - out), jnp.float32)], axis=-1)
    out_ref[...] = jnp.einsum('gnk,gnc->gkc', s, rhs,
                              preferred_element_type=jnp.float32)


def _grid_steps(g_total: int) -> int:
    """1 resident step on single-TC chips (v5e/v6e/interpret); 2 on v7x."""
    try:
        kind = jax.devices()[0].device_kind.lower()
    except Exception:
        kind = ""
    steps = 2 if "v7" in kind else 1
    while steps > 1 and g_total % steps != 0:
        steps -= 1
    return steps


def diffpool_forward(x, ai, aj, w_emb, b_emb, w_pool, b_pool):
    """Batched DiffPool forward. x: (G,N,F) f32; ai/aj: (G,E) int32."""
    g_total, n, f = x.shape
    e = ai.shape[-1]
    emb = w_emb.shape[0]
    k = w_pool.shape[0]
    out = emb + k

    # Wrapper-side layout plumbing: fuse both heads and both edge endpoints
    # into a single pre-transposed weight  W = [Wi^T | Wj^T]  (F, 2*OUT).
    w_full = jnp.concatenate([w_emb, w_pool], axis=0)          # (OUT, 2F)
    w = jnp.concatenate([jnp.transpose(w_full[:, :f]),         # Wi^T (F, OUT)
                         jnp.transpose(w_full[:, f:])],        # Wj^T (F, OUT)
                        axis=1)                                # (F, 2*OUT)
    b = jnp.concatenate([b_emb, b_pool]).reshape(1, out)       # (1, OUT)

    steps = _grid_steps(g_total)
    gb = g_total // steps

    flops = g_total * (2 * n * n * e            # adjacency build
                       + 2 * n * f * 2 * out    # x @ [Wi^T | Wj^T]
                       + 2 * n * n * out        # A @ (x Wj^T)
                       + 2 * n * n * k          # A @ s
                       + 2 * n * k * OUT_PAD)   # s^T @ [z | A s | pad]
    bytes_accessed = 4 * (x.size + ai.size + aj.size + w.size + b.size
                          + g_total * k * OUT_PAD)
    cost = pl.CostEstimate(flops=flops, transcendentals=g_total * n * k,
                           bytes_accessed=bytes_accessed)

    out_slab = pl.pallas_call(
        diffpool_kernel,
        out_shape=jax.ShapeDtypeStruct((g_total, k, OUT_PAD), jnp.float32),
        grid=(steps,),
        in_specs=[
            pl.BlockSpec((gb, n, f), lambda g: (g, 0, 0)),     # x
            pl.BlockSpec((gb, e), lambda g: (g, 0)),           # Ai
            pl.BlockSpec((gb, e), lambda g: (g, 0)),           # Aj
            pl.BlockSpec((f, 2 * out), lambda g: (0, 0)),      # [Wi^T | Wj^T]
            pl.BlockSpec((1, out), lambda g: (0, 0)),          # bias
        ],
        out_specs=pl.BlockSpec((gb, k, OUT_PAD), lambda g: (g, 0, 0)),
        compiler_params=pltpu.CompilerParams(
            dimension_semantics=("parallel",)),
        cost_estimate=cost,
    )(x, ai, aj, w, b)

    next_x = out_slab[:, :, :emb]                              # (G, K, EMB)
    next_adj = out_slab[:, :, emb:out]                         # (G, K, K)
    # TODO(synk): the original PyTorch forward ends with `pass` (returns None)
    # and applies `s.T @ adj @ s` to the edge-index tuple (a type error); here
    # we return (next_x, next_adj) using the dense edge-multiplicity adjacency.
    return next_x, next_adj


def diffpool_reference(x, ai, aj, w_emb, b_emb, w_pool, b_pool):
    """Pure-JAX reference (single graph), mirrors the PyTorch semantics."""
    xij = jnp.concatenate([x[ai], x[aj]], axis=1)              # (E, 2F)
    z = jax.ops.segment_sum(xij @ w_emb.T + b_emb, ai, num_segments=N)
    s = jax.nn.softmax(
        jax.ops.segment_sum(xij @ w_pool.T + b_pool, ai, num_segments=N),
        axis=1)
    adj_dense = jnp.zeros((N, N), jnp.float32).at[ai, aj].add(1.0)
    return s.T @ z, s.T @ adj_dense @ s


if __name__ == "__main__":
    key = jax.random.PRNGKey(0)
    k_x, k_ai, k_aj, k_we, k_be, k_wp, k_bp = jax.random.split(key, 7)

    x = jax.random.normal(k_x, (G, N, F), dtype=jnp.float32)

    # Edge lists; the first N edges of every graph make each node appear as a
    # source, so torch_scatter's implicit output size (max(Ai)+1) equals N.
    ai = jnp.concatenate(
        [jnp.tile(jnp.arange(N, dtype=jnp.int32)[None, :], (G, 1)),
         jax.random.randint(k_ai, (G, E - N), 0, N, jnp.int32)], axis=1)
    aj = jax.random.randint(k_aj, (G, E), 0, N, dtype=jnp.int32)

    # PyTorch nn.Linear default init: U(-1/sqrt(fan_in), 1/sqrt(fan_in))
    bound = float(1.0 / jnp.sqrt(2.0 * F))
    w_emb = jax.random.uniform(k_we, (EMB, 2 * F), jnp.float32, -bound, bound)
    b_emb = jax.random.uniform(k_be, (EMB,), jnp.float32, -bound, bound)
    w_pool = jax.random.uniform(k_wp, (K, 2 * F), jnp.float32, -bound, bound)
    b_pool = jax.random.uniform(k_bp, (K,), jnp.float32, -bound, bound)

    next_x, next_adj = diffpool_forward(x, ai, aj, w_emb, b_emb, w_pool, b_pool)
    jax.block_until_ready((next_x, next_adj))

    ref_fn = jax.vmap(lambda xg, aig, ajg: diffpool_reference(
        xg, aig, ajg, w_emb, b_emb, w_pool, b_pool))
    ref_x, ref_adj = ref_fn(x, ai, aj)

    assert jnp.allclose(next_x, ref_x, atol=2e-3, rtol=2e-3), \
        float(jnp.max(jnp.abs(next_x - ref_x)))
    assert jnp.allclose(next_adj, ref_adj, atol=2e-3, rtol=2e-3), \
        float(jnp.max(jnp.abs(next_adj - ref_adj)))

    print("KERNEL_OK")
</pallas_src>

<mosaic_0001>
module attributes {stable_mosaic.version = 11 : i64} {
  func.func @diffpool_kernel(%arg0: i32, %arg1: memref<16x16x8xf32, #tpu.memory_space<vmem>>, %arg2: memref<16x64xi32, #tpu.memory_space<vmem>>, %arg3: memref<16x64xi32, #tpu.memory_space<vmem>>, %arg4: memref<8x48xf32, #tpu.memory_space<vmem>>, %arg5: memref<1x24xf32, #tpu.memory_space<vmem>>, %arg6: memref<16x8x128xf32, #tpu.memory_space<vmem>>) attributes {dimension_semantics = [#tpu.dimension_semantics<parallel>], iteration_bounds = array<i64: 1>, scalar_prefetch = 0 : i64, scratch_operands = 0 : i64, tpu.core_type = #tpu.core_type<tc>, window_params = [{transform_indices = @transform_0, window_bounds = array<i64: 16, 16, 8>}, {transform_indices = @transform_1, window_bounds = array<i64: 16, 64>}, {transform_indices = @transform_2, window_bounds = array<i64: 16, 64>}, {pipeline_mode = #tpu.pipeline_mode<synchronous>, transform_indices = @transform_3, window_bounds = array<i64: 8, 48>}, {pipeline_mode = #tpu.pipeline_mode<synchronous>, transform_indices = @transform_4, window_bounds = array<i64: 1, 24>}, {transform_indices = @transform_5, window_bounds = array<i64: 16, 8, 128>}]} {
    %c0 = arith.constant 0 : index
    %c0_0 = arith.constant 0 : index
    %c0_1 = arith.constant 0 : index
    %0 = vector.load %arg1[%c0, %c0_0, %c0_1] : memref<16x16x8xf32, #tpu.memory_space<vmem>>, vector<16x16x8xf32>
    %c0_2 = arith.constant 0 : index
    %c0_3 = arith.constant 0 : index
    %1 = vector.load %arg2[%c0_2, %c0_3] : memref<16x64xi32, #tpu.memory_space<vmem>>, vector<16x64xi32>
    %c0_4 = arith.constant 0 : index
    %c0_5 = arith.constant 0 : index
    %2 = vector.load %arg3[%c0_4, %c0_5] : memref<16x64xi32, #tpu.memory_space<vmem>>, vector<16x64xi32>
    %3 = tpu.iota {dimensions = array<i32: 1>} : vector<16x16x64xi32>
    %4 = vector.shape_cast %1 : vector<16x64xi32> to vector<16x1x64xi32>
    %5 = vector.broadcast %4 : vector<16x1x64xi32> to vector<16x16x64xi32>
    %6 = arith.cmpi eq, %3, %5 : vector<16x16x64xi32>
    %7 = arith.extui %6 : vector<16x16x64xi1> to vector<16x16x64xi32>
    %8 = arith.sitofp %7 : vector<16x16x64xi32> to vector<16x16x64xf32>
    %9 = vector.shape_cast %2 : vector<16x64xi32> to vector<16x1x64xi32>
    %10 = vector.broadcast %9 : vector<16x1x64xi32> to vector<16x16x64xi32>
    %11 = arith.cmpi eq, %3, %10 : vector<16x16x64xi32>
    %12 = arith.extui %11 : vector<16x16x64xi1> to vector<16x16x64xi32>
    %13 = arith.sitofp %12 : vector<16x16x64xi32> to vector<16x16x64xf32>
    "tpu.trace_start"() <{level = 10 : i32, message = "gne,gme->gnm"}> : () -> ()
    %cst = arith.constant dense<0.000000e+00> : vector<16x16x16xf32>
    %14 = tpu.matmul %8, %13, %cst {dimension_numbers = #tpu.dot_dimension_numbers<[2], [2], [1], [1], [0, 0, 0, 1, 1, 1], [0], [0]>} : vector<16x16x64xf32>, vector<16x16x64xf32>, vector<16x16x16xf32> -> vector<16x16x16xf32>
    "tpu.trace_stop"() : () -> ()
    %cst_6 = arith.constant dense<0.000000e+00> : vector<16x16xf32>
    %15 = vector.multi_reduction <add>, %8, %cst_6 [2] : vector<16x16x64xf32> to vector<16x16xf32>
    %16 = vector.shape_cast %15 : vector<16x16xf32> to vector<16x16x1xf32>
    %17 = vector.shape_cast %0 : vector<16x16x8xf32> to vector<256x8xf32>
    %c0_7 = arith.constant 0 : index
    %c0_8 = arith.constant 0 : index
    %18 = vector.load %arg4[%c0_7, %c0_8] : memref<8x48xf32, #tpu.memory_space<vmem>>, vector<8x48xf32>
    %cst_9 = arith.constant dense<0.000000e+00> : vector<256x48xf32>
    %19 = tpu.matmul %17, %18, %cst_9 {dimension_numbers = #tpu.dot_dimension_numbers<[1], [0], [0], [1], [0, 0, 1, 1], [], []>} : vector<256x8xf32>, vector<8x48xf32>, vector<256x48xf32> -> vector<256x48xf32>
    %20 = vector.shape_cast %19 : vector<256x48xf32> to vector<16x16x48xf32>
    %21 = vector.extract_strided_slice %20 {offsets = [0, 0, 0], sizes = [16, 16, 24], strides = [1, 1, 1]} : vector<16x16x48xf32> to vector<16x16x24xf32>
    %c0_10 = arith.constant 0 : index
    %c0_11 = arith.constant 0 : index
    %22 = vector.load %arg5[%c0_10, %c0_11] : memref<1x24xf32, #tpu.memory_space<vmem>>, vector<1x24xf32>
    %23 = vector.shape_cast %22 : vector<1x24xf32> to vector<1x1x24xf32>
    %24 = vector.broadcast %23 : vector<1x1x24xf32> to vector<16x16x24xf32>
    %25 = arith.addf %21, %24 : vector<16x16x24xf32>
    %26 = vector.extract_strided_slice %20 {offsets = [0, 0, 24], sizes = [16, 16, 24], strides = [1, 1, 1]} : vector<16x16x48xf32> to vector<16x16x24xf32>
    %27 = vector.broadcast %16 : vector<16x16x1xf32> to vector<16x16x24xf32>
    %28 = arith.mulf %27, %25 : vector<16x16x24xf32>
    "tpu.trace_start"() <{level = 10 : i32, message = "gnm,gmo->gno"}> : () -> ()
    %cst_12 = arith.constant dense<0.000000e+00> : vector<16x16x24xf32>
    %29 = tpu.matmul %14, %26, %cst_12 {dimension_numbers = #tpu.dot_dimension_numbers<[2], [1], [1], [2], [0, 0, 0, 1, 1, 2], [0], [0]>} : vector<16x16x16xf32>, vector<16x16x24xf32>, vector<16x16x24xf32> -> vector<16x16x24xf32>
    "tpu.trace_stop"() : () -> ()
    %30 = arith.addf %28, %29 : vector<16x16x24xf32>
    %31 = vector.extract_strided_slice %30 {offsets = [0, 0, 0], sizes = [16, 16, 16], strides = [1, 1, 1]} : vector<16x16x24xf32> to vector<16x16x16xf32>
    %32 = vector.extract_strided_slice %30 {offsets = [0, 0, 16], sizes = [16, 16, 8], strides = [1, 1, 1]} : vector<16x16x24xf32> to vector<16x16x8xf32>
    %cst_13 = arith.constant dense<0xFF800000> : vector<16x16xf32>
    %33 = vector.multi_reduction <maximumf>, %32, %cst_13 [2] : vector<16x16x8xf32> to vector<16x16xf32>
    %34 = vector.shape_cast %33 : vector<16x16xf32> to vector<16x16x1xf32>
    %35 = vector.broadcast %34 : vector<16x16x1xf32> to vector<16x16x8xf32>
    %36 = arith.subf %32, %35 : vector<16x16x8xf32>
    %37 = math.exp %36 : vector<16x16x8xf32>
    %cst_14 = arith.constant dense<0.000000e+00> : vector<16x16xf32>
    %38 = vector.multi_reduction <add>, %37, %cst_14 [2] : vector<16x16x8xf32> to vector<16x16xf32>
    %39 = vector.shape_cast %38 : vector<16x16xf32> to vector<16x16x1xf32>
    %40 = vector.broadcast %39 : vector<16x16x1xf32> to vector<16x16x8xf32>
    %41 = arith.divf %37, %40 : vector<16x16x8xf32>
    "tpu.trace_start"() <{level = 10 : i32, message = "gnm,gmk->gnk"}> : () -> ()
    %cst_15 = arith.constant dense<0.000000e+00> : vector<16x16x8xf32>
    %42 = tpu.matmul %14, %41, %cst_15 {dimension_numbers = #tpu.dot_dimension_numbers<[2], [1], [1], [2], [0, 0, 0, 1, 1, 2], [0], [0]>} : vector<16x16x16xf32>, vector<16x16x8xf32>, vector<16x16x8xf32> -> vector<16x16x8xf32>
    %cst_16 = arith.constant 0.000000e+00 : f32
    "tpu.trace_stop"() : () -> ()
    %43 = vector.broadcast %cst_16 : f32 to vector<16x16x104xf32>
    %44 = tpu.concatenate %31, %42, %43 in 2 : vector<16x16x16xf32>, vector<16x16x8xf32>, vector<16x16x104xf32> -> vector<16x16x128xf32>
    "tpu.trace_start"() <{level = 10 : i32, message = "gnk,gnc->gkc"}> : () -> ()
    %cst_17 = arith.constant dense<0.000000e+00> : vector<16x8x128xf32>
    %45 = tpu.matmul %41, %44, %cst_17 {dimension_numbers = #tpu.dot_dimension_numbers<[1], [1], [2], [2], [0, 0, 0, 2, 1, 2], [0], [0]>} : vector<16x16x8xf32>, vector<16x16x128xf32>, vector<16x8x128xf32> -> vector<16x8x128xf32>
    "tpu.trace_stop"() : () -> ()
    %c0_18 = arith.constant 0 : index
    %c0_19 = arith.constant 0 : index
    %c0_20 = arith.constant 0 : index
    %46 = vector.load %arg6[%c0_18, %c0_19, %c0_20] : memref<16x8x128xf32, #tpu.memory_space<vmem>>, vector<16x8x128xf32>
    tpu.vector_store %arg6[%c0_18, %c0_19, %c0_20], %45 {strides = array<i32>} : memref<16x8x128xf32, #tpu.memory_space<vmem>>, vector<16x8x128xf32>,
    return
  }
  func.func @transform_0(%arg0: i32) -> (i32, i32, i32) {
    %c0_i32 = arith.constant 0 : i32
    %c0_i32_0 = arith.constant 0 : i32
    %c0_i32_1 = arith.constant 0 : i32
    return %arg0, %c0_i32, %c0_i32_0 : i32, i32, i32
  }
  func.func @transform_1(%arg0: i32) -> (i32, i32) {
    %c0_i32 = arith.constant 0 : i32
    %c0_i32_0 = arith.constant 0 : i32
    return %arg0, %c0_i32 : i32, i32
  }
  func.func @transform_2(%arg0: i32) -> (i32, i32) {
    %c0_i32 = arith.constant 0 : i32
    %c0_i32_0 = arith.constant 0 : i32
    return %arg0, %c0_i32 : i32, i32
  }
  func.func @transform_3(%arg0: i32) -> (i32, i32) {
    %c0_i32 = arith.constant 0 : i32
    %c0_i32_0 = arith.constant 0 : i32
    %c0_i32_1 = arith.constant 0 : i32
    return %c0_i32, %c0_i32_0 : i32, i32
  }
  func.func @transform_4(%arg0: i32) -> (i32, i32) {
    %c0_i32 = arith.constant 0 : i32
    %c0_i32_0 = arith.constant 0 : i32
    %c0_i32_1 = arith.constant 0 : i32
    return %c0_i32, %c0_i32_0 : i32, i32
  }
  func.func @transform_5(%arg0: i32) -> (i32, i32, i32) {
    %c0_i32 = arith.constant 0 : i32
    %c0_i32_0 = arith.constant 0 : i32
    %c0_i32_1 = arith.constant 0 : i32
    return %arg0, %c0_i32, %c0_i32_0 : i32, i32, i32
  }
}

</mosaic_0001>

<llo_original>
// kernel: tpu_custom_call.1
$region0: #{tpu_custom_call.1}
  #allocation0 [shape = 'u32[]', space=smem, size = 0x4, offset = 0x4, fixed_abs, tag = 'smem constant byte address 0x4 - core index']
  #allocation1 [shape = 'u32[144,128]{1,0:T(1,128)}', space=vmem, size = 0x12000, scoped, tag = 'internal scratch']
  %s0 = inlined_call_operand.vmem [shape: f32[16,16,8], index: 0, kind: input, shape index: {}]
  %s1 = inlined_call_operand.vmem [shape: s32[16,64], index: 1, kind: input, shape index: {}]
  %s2 = inlined_call_operand.vmem [shape: s32[16,64], index: 2, kind: input, shape index: {}]
  %s3 = inlined_call_operand.vmem [shape: f32[8,48], index: 3, kind: input, shape index: {}]
  %s4 = inlined_call_operand.vmem [shape: f32[1,24], index: 4, kind: input, shape index: {}]
  %s5 = inlined_call_operand.hbm [shape: f32[16,8,128], index: 5, kind: output, shape index: {}]
  %s6 = sld [smem:[#allocation0]]
  $region30: #{tpu_custom_call.1} parent=0
    _
  %s8 = ssub.s32 1, %s6
  %s9 = scalar_select 0, %s8, %s6
  $region1: #{tpu_custom_call.1} parent=0
    #allocation2 [shape = 'u8[65536]{0}', space=vmem, size = 0x10000, scoped, tag = 'output window, operand 0, single buffered']
    #allocation3 [shape = 's32[1]{0}', space=sflag, size = 0x4, scoped, tag = 'scoped memory for tpu_custom_call.1']
    %10 = vsyncpa [#allocation3], 0
    // Predicated region
    $region2: #{tpu_custom_call.1} parent=1 // pred_check
      _
    $region3: #{tpu_custom_call.1} parent=1 // pred_check_branch
      %12 = sbr.rel (0) target = $region5
    $region4: #{tpu_custom_call.1} parent=1 // pred_region
      _
    $region5: #{tpu_custom_call.1} parent=1 // pred_fallthru
      _
    // Predicated region
    $region6: #{tpu_custom_call.1} parent=1 // pred_check
      _
    $region7: #{tpu_custom_call.1} parent=1 // pred_check_branch
      %14 = sbr.rel (0) target = $region9
    $region8: #{tpu_custom_call.1} parent=1 // pred_region
      _
    $region9: #{tpu_custom_call.1} parent=1 // pred_fallthru
      _
    // Predicated region
    $region10: #{tpu_custom_call.1} parent=1 // pred_check
      _
    $region11: #{tpu_custom_call.1} parent=1 // pred_check_branch
      %16 = sbr.rel (0) target = $region13
    $region12: #{tpu_custom_call.1} parent=1 // pred_region
      _
    $region13: #{tpu_custom_call.1} parent=1 // pred_fallthru
      _
    // Predicated region
    $region14: #{tpu_custom_call.1} parent=1 // pred_check
      _
    $region15: #{tpu_custom_call.1} parent=1 // pred_check_branch
      %18 = sbr.rel (0) target = $region17
    $region16: #{tpu_custom_call.1} parent=1 // pred_region
      _
    $region17: #{tpu_custom_call.1} parent=1 // pred_fallthru
      _
    // Predicated region
    $region18: #{tpu_custom_call.1} parent=1 // pred_check
      _
    $region19: #{tpu_custom_call.1} parent=1 // pred_check_branch
      %20 = sbr.rel (0) target = $region21
    $region20: #{tpu_custom_call.1} parent=1 // pred_region
      _
    $region21: #{tpu_custom_call.1} parent=1 // pred_fallthru
      _
    %v21 = vld [vmem:[%s0] sm:$0xff]
    %v22 = vld [vmem:[%s0 + $0x8] sm:$0xff]
    %v23 = vld [vmem:[%s0 + $0x10] sm:$0xff]
    %v24 = vld [vmem:[%s0 + $0x18] sm:$0xff]
    %v25 = vld [vmem:[%s0 + $0x20] sm:$0xff]
    %v26 = vld [vmem:[%s0 + $0x28] sm:$0xff]
    %v27 = vld [vmem:[%s0 + $0x30] sm:$0xff]
    %v28 = vld [vmem:[%s0 + $0x38] sm:$0xff]
    %v29 = vld [vmem:[%s0 + $0x40] sm:$0xff]
    %v30 = vld [vmem:[%s0 + $0x48] sm:$0xff]
    %v31 = vld [vmem:[%s0 + $0x50] sm:$0xff]
    %v32 = vld [vmem:[%s0 + $0x58] sm:$0xff]
    %v33 = vld [vmem:[%s0 + $0x60] sm:$0xff]
    %v34 = vld [vmem:[%s0 + $0x68] sm:$0xff]
    %v35 = vld [vmem:[%s0 + $0x70] sm:$0xff]
    %v36 = vld [vmem:[%s0 + $0x78] sm:$0xff]
    %v37 = vld [vmem:[%s0 + $0x80] sm:$0xff]
    %v38 = vld [vmem:[%s0 + $0x88] sm:$0xff]
    %v39 = vld [vmem:[%s0 + $0x90] sm:$0xff]
    %v40 = vld [vmem:[%s0 + $0x98] sm:$0xff]
    %v41 = vld [vmem:[%s0 + $0xa0] sm:$0xff]
    %v42 = vld [vmem:[%s0 + $0xa8] sm:$0xff]
    %v43 = vld [vmem:[%s0 + $0xb0] sm:$0xff]
    %v44 = vld [vmem:[%s0 + $0xb8] sm:$0xff]
    %v45 = vld [vmem:[%s0 + $0xc0] sm:$0xff]
    %v46 = vld [vmem:[%s0 + $0xc8] sm:$0xff]
    %v47 = vld [vmem:[%s0 + $0xd0] sm:$0xff]
    %v48 = vld [vmem:[%s0 + $0xd8] sm:$0xff]
    %v49 = vld [vmem:[%s0 + $0xe0] sm:$0xff]
    %v50 = vld [vmem:[%s0 + $0xe8] sm:$0xff]
    %v51 = vld [vmem:[%s0 + $0xf0] sm:$0xff]
    %v52 = vld [vmem:[%s0 + $0xf8] sm:$0xff]
    %v53 = vld [vmem:[%s1] sm:$0xff]
    %v54 = vld [vmem:[%s1 + $0x8] sm:$0xff]
    %v55 = vld [vmem:[%s2] sm:$0xff]
    %v56 = vld [vmem:[%s2 + $0x8] sm:$0xff]
    %v57 = vlaneseq
    %v58 = vshrl.u32 %v57, 7
    %v59 = vadd.s32 %v58, 8
    %v60 = vcombine.high %v53, %v53
    %v62 = vunpack.c.l.s4 1966171168
    %v63 = vunpack.c.0.s8 %v62
    %v64 = vlaneseq
    %v65 = vshrl.u32 %v64, 7
    %v66 = vsub.s32 %v63, %v65
    %v67 = vrot.slane %v53, %v66
    %v69 = vunpack.c.l.s4 1966171168
    %v70 = vunpack.c.0.s8 %v69
    %v71 = vlaneseq
    %v72 = vshrl.u32 %v71, 7
    %v73 = vsub.s32 %v70, %v72
    %v74 = vrot.slane %v60, %v73
    %v75 = vcombine.high %v67, %v67
    %v76 = vcombine.high %v74, %v74
    %v78 = vunpack.c.l.s4 1966171168
    %v79 = vunpack.c.0.s8 %v78
    %v80 = vlaneseq
    %v81 = vshrl.u32 %v80, 7
    %v82 = vsub.s32 %v79, %v81
    %v83 = vrot.slane %v67, %v82
    %v85 = vunpack.c.l.s4 1966171168
    %v86 = vunpack.c.0.s8 %v85
    %v87 = vlaneseq
    %v88 = vshrl.u32 %v87, 7
    %v89 = vsub.s32 %v86, %v88
    %v90 = vrot.slane %v74, %v89
    %v92 = vunpack.c.l.s4 1966171168
    %v93 = vunpack.c.0.s8 %v92
    %v94 = vlaneseq
    %v95 = vshrl.u32 %v94, 7
    %v96 = vsub.s32 %v93, %v95
    %v97 = vrot.slane %v75, %v96
    %v99 = vunpack.c.l.s4 1966171168
    %v100 = vunpack.c.0.s8 %v99
    %v101 = vlaneseq
    %v102 = vshrl.u32 %v101, 7
    %v103 = vsub.s32 %v100, %v102
    %v104 = vrot.slane %v76, %v103
    %v105 = vcombine.high %v83, %v83
    %v106 = vcombine.high %v90, %v90
    %v107 = vcombine.high %v97, %v97
    %v108 = vcombine.high %v104, %v104
    %v109 = vcombine.high %v54, %v54
    %v111 = vunpack.c.l.s4 1966171168
    %v112 = vunpack.c.0.s8 %v111
    %v113 = vlaneseq
    %v114 = vshrl.u32 %v113, 7
    %v115 = vsub.s32 %v112, %v114
    %v116 = vrot.slane %v54, %v115
    %v118 = vunpack.c.l.s4 1966171168
    %v119 = vunpack.c.0.s8 %v118
    %v120 = vlaneseq
    %v121 = vshrl.u32 %v120, 7
    %v122 = vsub.s32 %v119, %v121
    %v123 = vrot.slane %v109, %v122
    %v124 = vcombine.high %v116, %v116
    %v125 = vcombine.high %v123, %v123
    %v127 = vunpack.c.l.s4 1966171168
    %v128 = vunpack.c.0.s8 %v127
    %v129 = vlaneseq
    %v130 = vshrl.u32 %v129, 7
    %v131 = vsub.s32 %v128, %v130
    %v132 = vrot.slane %v116, %v131
    %v134 = vunpack.c.l.s4 1966171168
    %v135 = vunpack.c.0.s8 %v134
    %v136 = vlaneseq
    %v137 = vshrl.u32 %v136, 7
    %v138 = vsub.s32 %v135, %v137
    %v139 = vrot.slane %v123, %v138
    %v141 = vunpack.c.l.s4 1966171168
    %v142 = vunpack.c.0.s8 %v141
    %v143 = vlaneseq
    %v144 = vshrl.u32 %v143, 7
    %v145 = vsub.s32 %v142, %v144
    %v146 = vrot.slane %v124, %v145
    %v148 = vunpack.c.l.s4 1966171168
    %v149 = vunpack.c.0.s8 %v148
    %v150 = vlaneseq
    %v151 = vshrl.u32 %v150, 7
    %v152 = vsub.s32 %v149, %v151
    %v153 = vrot.slane %v125, %v152
    %v154 = vcombine.high %v132, %v132
    %v155 = vcombine.high %v139, %v139
    %v156 = vcombine.high %v146, %v146
    %v157 = vcombine.high %v153, %v153
    %v158 = vlaneseq
    %v159 = vshrl.u32 %v158, 7
    %v160 = vsub.s32 0, %v159
    %v161 = vrot.slane %v83, %v160
    %v162 = vlaneseq
    %v163 = vshrl.u32 %v162, 7
    %v164 = vsub.s32 0, %v163
    %v165 = vrot.slane %v97, %v164
    %v166 = vlaneseq
    %v167 = vshrl.u32 %v166, 7
    %v168 = vsub.s32 0, %v167
    %v169 = vrot.slane %v105, %v168
    %v170 = vlaneseq
    %v171 = vshrl.u32 %v170, 7
    %v172 = vsub.s32 0, %v171
    %v173 = vrot.slane %v107, %v172
    %v174 = vlaneseq
    %v175 = vshrl.u32 %v174, 7
    %v176 = vsub.s32 0, %v175
    %v177 = vrot.slane %v90, %v176
    %v178 = vlaneseq
    %v179 = vshrl.u32 %v178, 7
    %v180 = vsub.s32 0, %v179
    %v181 = vrot.slane %v104, %v180
    %v182 = vlaneseq
    %v183 = vshrl.u32 %v182, 7
    %v184 = vsub.s32 0, %v183
    %v185 = vrot.slane %v106, %v184
    %v186 = vlaneseq
    %v187 = vshrl.u32 %v186, 7
    %v188 = vsub.s32 0, %v187
    %v189 = vrot.slane %v108, %v188
    %v190 = vlaneseq
    %v191 = vshrl.u32 %v190, 7
    %v192 = vsub.s32 0, %v191
    %v193 = vrot.slane %v132, %v192
    %v194 = vlaneseq
    %v195 = vshrl.u32 %v194, 7
    %v196 = vsub.s32 0, %v195
    %v197 = vrot.slane %v146, %v196
    %v198 = vlaneseq
    %v199 = vshrl.u32 %v198, 7
    %v200 = vsub.s32 0, %v199
    %v201 = vrot.slane %v154, %v200
    %v202 = vlaneseq
    %v203 = vshrl.u32 %v202, 7
    %v204 = vsub.s32 0, %v203
    %v205 = vrot.slane %v156, %v204
    %v206 = vlaneseq
    %v207 = vshrl.u32 %v206, 7
    %v208 = vsub.s32 0, %v207
    %v209 = vrot.slane %v139, %v208
    %v210 = vlaneseq
    %v211 = vshrl.u32 %v210, 7
    %v212 = vsub.s32 0, %v211
    %v213 = vrot.slane %v153, %v212
    %v214 = vlaneseq
    %v215 = vshrl.u32 %v214, 7
    %v216 = vsub.s32 0, %v215
    %v217 = vrot.slane %v155, %v216
    %v218 = vlaneseq
    %v219 = vshrl.u32 %v218, 7
    %v220 = vsub.s32 0, %v219
    %v221 = vrot.slane %v157, %v220
    %vm222 = vcmp.eq.s32.totalorder %v58, %v161
    %vm223 = vcmp.eq.s32.totalorder %v59, %v161
    %vm224 = vcmp.eq.s32.totalorder %v58, %v165
    %vm225 = vcmp.eq.s32.totalorder %v59, %v165
    %vm226 = vcmp.eq.s32.totalorder %v58, %v169
    %vm227 = vcmp.eq.s32.totalorder %v59, %v169
    %vm228 = vcmp.eq.s32.totalorder %v58, %v173
    %vm229 = vcmp.eq.s32.totalorder %v59, %v173
    %vm230 = vcmp.eq.s32.totalorder %v58, %v177
    %vm231 = vcmp.eq.s32.totalorder %v59, %v177
    %vm232 = vcmp.eq.s32.totalorder %v58, %v181
    %vm233 = vcmp.eq.s32.totalorder %v59, %v181
    %vm234 = vcmp.eq.s32.totalorder %v58, %v185
    %vm235 = vcmp.eq.s32.totalorder %v59, %v185
    %vm236 = vcmp.eq.s32.totalorder %v58, %v189
    %vm237 = vcmp.eq.s32.totalorder %v59, %v189
    %vm238 = vcmp.eq.s32.totalorder %v58, %v193
    %vm239 = vcmp.eq.s32.totalorder %v59, %v193
    %vm240 = vcmp.eq.s32.totalorder %v58, %v197
    %vm241 = vcmp.eq.s32.totalorder %v59, %v197
    %vm242 = vcmp.eq.s32.totalorder %v58, %v201
    %vm243 = vcmp.eq.s32.totalorder %v59, %v201
    %vm244 = vcmp.eq.s32.totalorder %v58, %v205
    %vm245 = vcmp.eq.s32.totalorder %v59, %v205
    %vm246 = vcmp.eq.s32.totalorder %v58, %v209
    %vm247 = vcmp.eq.s32.totalorder %v59, %v209
    %vm248 = vcmp.eq.s32.totalorder %v58, %v213
    %vm249 = vcmp.eq.s32.totalorder %v59, %v213
    %vm250 = vcmp.eq.s32.totalorder %v58, %v217
    %vm251 = vcmp.eq.s32.totalorder %v59, %v217
    %vm252 = vcmp.eq.s32.totalorder %v58, %v221
    %vm253 = vcmp.eq.s32.totalorder %v59, %v221
    %v254 = vsel %vm222, 1, 0
    %v255 = vsel %vm223, 1, 0
    %v256 = vsel %vm224, 1, 0
    %v257 = vsel %vm225, 1, 0
    %v258 = vsel %vm226, 1, 0
    %v259 = vsel %vm227, 1, 0
    %v260 = vsel %vm228, 1, 0
    %v261 = vsel %vm229, 1, 0
    %v262 = vsel %vm230, 1, 0
    %v263 = vsel %vm231, 1, 0
    %v264 = vsel %vm232, 1, 0
    %v265 = vsel %vm233, 1, 0
    %v266 = vsel %vm234, 1, 0
    %v267 = vsel %vm235, 1, 0
    %v268 = vsel %vm236, 1, 0
    %v269 = vsel %vm237, 1, 0
    %v270 = vsel %vm238, 1, 0
    %v271 = vsel %vm239, 1, 0
    %v272 = vsel %vm240, 1, 0
    %v273 = vsel %vm241, 1, 0
    %v274 = vsel %vm242, 1, 0
    %v275 = vsel %vm243, 1, 0
    %v276 = vsel %vm244, 1, 0
    %v277 = vsel %vm245, 1, 0
    %v278 = vsel %vm246, 1, 0
    %v279 = vsel %vm247, 1, 0
    %v280 = vsel %vm248, 1, 0
    %v281 = vsel %vm249, 1, 0
    %v282 = vsel %vm250, 1, 0
    %v283 = vsel %vm251, 1, 0
    %v284 = vsel %vm252, 1, 0
    %v285 = vsel %vm253, 1, 0
    %v286 = vcvt.s32.f32 %v254
    %v287 = vcvt.s32.f32 %v255
    %v288 = vcvt.s32.f32 %v256
    %v289 = vcvt.s32.f32 %v257
    %v290 = vcvt.s32.f32 %v258
    %v291 = vcvt.s32.f32 %v259
    %v292 = vcvt.s32.f32 %v260
    %v293 = vcvt.s32.f32 %v261
    %v294 = vcvt.s32.f32 %v262
    %v295 = vcvt.s32.f32 %v263
    %v296 = vcvt.s32.f32 %v264
    %v297 = vcvt.s32.f32 %v265
    %v298 = vcvt.s32.f32 %v266
    %v299 = vcvt.s32.f32 %v267
    %v300 = vcvt.s32.f32 %v268
    %v301 = vcvt.s32.f32 %v269
    %v302 = vcvt.s32.f32 %v270
    %v303 = vcvt.s32.f32 %v271
    %v304 = vcvt.s32.f32 %v272
    %v305 = vcvt.s32.f32 %v273
    %v306 = vcvt.s32.f32 %v274
    %v307 = vcvt.s32.f32 %v275
    %v308 = vcvt.s32.f32 %v276
    %v309 = vcvt.s32.f32 %v277
    %v310 = vcvt.s32.f32 %v278
    %v311 = vcvt.s32.f32 %v279
    %v312 = vcvt.s32.f32 %v280
    %v313 = vcvt.s32.f32 %v281
    %v314 = vcvt.s32.f32 %v282
    %v315 = vcvt.s32.f32 %v283
    %v316 = vcvt.s32.f32 %v284
    %v317 = vcvt.s32.f32 %v285
    %v318 = vcombine.high %v55, %v55
    %v320 = vunpack.c.l.s4 1966171168
    %v321 = vunpack.c.0.s8 %v320
    %v322 = vlaneseq
    %v323 = vshrl.u32 %v322, 7
    %v324 = vsub.s32 %v321, %v323
    %v325 = vrot.slane %v55, %v324
    %v327 = vunpack.c.l.s4 1966171168
    %v328 = vunpack.c.0.s8 %v327
    %v329 = vlaneseq
    %v330 = vshrl.u32 %v329, 7
    %v331 = vsub.s32 %v328, %v330
    %v332 = vrot.slane %v318, %v331
    %v333 = vcombine.high %v325, %v325
    %v334 = vcombine.high %v332, %v332
    %v336 = vunpack.c.l.s4 1966171168
    %v337 = vunpack.c.0.s8 %v336
    %v338 = vlaneseq
    %v339 = vshrl.u32 %v338, 7
    %v340 = vsub.s32 %v337, %v339
    %v341 = vrot.slane %v325, %v340
    %v343 = vunpack.c.l.s4 1966171168
    %v344 = vunpack.c.0.s8 %v343
    %v345 = vlaneseq
    %v346 = vshrl.u32 %v345, 7
    %v347 = vsub.s32 %v344, %v346
    %v348 = vrot.slane %v332, %v347
    %v350 = vunpack.c.l.s4 1966171168
    %v351 = vunpack.c.0.s8 %v350
    %v352 = vlaneseq
    %v353 = vshrl.u32 %v352, 7
    %v354 = vsub.s32 %v351, %v353
    %v355 = vrot.slane %v333, %v354
    %v357 = vunpack.c.l.s4 1966171168
    %v358 = vunpack.c.0.s8 %v357
    %v359 = vlaneseq
    %v360 = vshrl.u32 %v359, 7
    %v361 = vsub.s32 %v358, %v360
    %v362 = vrot.slane %v334, %v361
    %v363 = vcombine.high %v341, %v341
    %v364 = vcombine.high %v348, %v348
    %v365 = vcombine.high %v355, %v355
    %v366 = vcombine.high %v362, %v362
    %v367 = vcombine.high %v56, %v56
    %v369 = vunpack.c.l.s4 1966171168
    %v370 = vunpack.c.0.s8 %v369
    %v371 = vlaneseq
    %v372 = vshrl.u32 %v371, 7
    %v373 = vsub.s32 %v370, %v372
    %v374 = vrot.slane %v56, %v373
    %v376 = vunpack.c.l.s4 1966171168
    %v377 = vunpack.c.0.s8 %v376
    %v378 = vlaneseq
    %v379 = vshrl.u32 %v378, 7
    %v380 = vsub.s32 %v377, %v379
    %v381 = vrot.slane %v367, %v380
    %v382 = vcombine.high %v374, %v374
    %v383 = vcombine.high %v381, %v381
    %v385 = vunpack.c.l.s4 1966171168
    %v386 = vunpack.c.0.s8 %v385
    %v387 = vlaneseq
    %v388 = vshrl.u32 %v387, 7
    %v389 = vsub.s32 %v386, %v388
    %v390 = vrot.slane %v374, %v389
    %v392 = vunpack.c.l.s4 1966171168
    %v393 = vunpack.c.0.s8 %v392
    %v394 = vlaneseq
    %v395 = vshrl.u32 %v394, 7
    %v396 = vsub.s32 %v393, %v395
    %v397 = vrot.slane %v381, %v396
    %v399 = vunpack.c.l.s4 1966171168
    %v400 = vunpack.c.0.s8 %v399
    %v401 = vlaneseq
    %v402 = vshrl.u32 %v401, 7
    %v403 = vsub.s32 %v400, %v402
    %v404 = vrot.slane %v382, %v403
    %v406 = vunpack.c.l.s4 1966171168
    %v407 = vunpack.c.0.s8 %v406
    %v408 = vlaneseq
    %v409 = vshrl.u32 %v408, 7
    %v410 = vsub.s32 %v407, %v409
    %v411 = vrot.slane %v383, %v410
    %v412 = vcombine.high %v390, %v390
    %v413 = vcombine.high %v397, %v397
    %v414 = vcombine.high %v404, %v404
    %v415 = vcombine.high %v411, %v411
    %v416 = vlaneseq
    %v417 = vshrl.u32 %v416, 7
    %v418 = vsub.s32 0, %v417
    %v419 = vrot.slane %v341, %v418
    %v420 = vlaneseq
    %v421 = vshrl.u32 %v420, 7
    %v422 = vsub.s32 0, %v421
    %v423 = vrot.slane %v355, %v422
    %v424 = vlaneseq
    %v425 = vshrl.u32 %v424, 7
    %v426 = vsub.s32 0, %v425
    %v427 = vrot.slane %v363, %v426
    %v428 = vlaneseq
    %v429 = vshrl.u32 %v428, 7
    %v430 = vsub.s32 0, %v429
    %v431 = vrot.slane %v365, %v430
    %v432 = vlaneseq
    %v433 = vshrl.u32 %v432, 7
    %v434 = vsub.s32 0, %v433
    %v435 = vrot.slane %v348, %v434
    %v436 = vlaneseq
    %v437 = vshrl.u32 %v436, 7
    %v438 = vsub.s32 0, %v437
    %v439 = vrot.slane %v362, %v438
    %v440 = vlaneseq
    %v441 = vshrl.u32 %v440, 7
    %v442 = vsub.s32 0, %v441
    %v443 = vrot.slane %v364, %v442
    %v444 = vlaneseq
    %v445 = vshrl.u32 %v444, 7
    %v446 = vsub.s32 0, %v445
    %v447 = vrot.slane %v366, %v446
    %v448 = vlaneseq
    %v449 = vshrl.u32 %v448, 7
    %v450 = vsub.s32 0, %v449
    %v451 = vrot.slane %v390, %v450
    %v452 = vlaneseq
    %v453 = vshrl.u32 %v452, 7
    %v454 = vsub.s32 0, %v453
    %v455 = vrot.slane %v404, %v454
    %v456 = vlaneseq
    %v457 = vshrl.u32 %v456, 7
    %v458 = vsub.s32 0, %v457
    %v459 = vrot.slane %v412, %v458
    %v460 = vlaneseq
    %v461 = vshrl.u32 %v460, 7
    %v462 = vsub.s32 0, %v461
    %v463 = vrot.slane %v414, %v462
    %v464 = vlaneseq
    %v465 = vshrl.u32 %v464, 7
    %v466 = vsub.s32 0, %v465
    %v467 = vrot.slane %v397, %v466
    %v468 = vlaneseq
    %v469 = vshrl.u32 %v468, 7
    %v470 = vsub.s32 0, %v469
    %v471 = vrot.slane %v411, %v470
    %v472 = vlaneseq
    %v473 = vshrl.u32 %v472, 7
    %v474 = vsub.s32 0, %v473
    %v475 = vrot.slane %v413, %v474
    %v476 = vlaneseq
    %v477 = vshrl.u32 %v476, 7
    %v478 = vsub.s32 0, %v477
    %v479 = vrot.slane %v415, %v478
    %vm480 = vcmp.eq.s32.totalorder %v58, %v419
    %vm481 = vcmp.eq.s32.totalorder %v59, %v419
    %vm482 = vcmp.eq.s32.totalorder %v58, %v423
    %vm483 = vcmp.eq.s32.totalorder %v59, %v423
    %vm484 = vcmp.eq.s32.totalorder %v58, %v427
    %vm485 = vcmp.eq.s32.totalorder %v59, %v427
    %vm486 = vcmp.eq.s32.totalorder %v58, %v431
    %vm487 = vcmp.eq.s32.totalorder %v59, %v431
    %vm488 = vcmp.eq.s32.totalorder %v58, %v435
    %vm489 = vcmp.eq.s32.totalorder %v59, %v435
    %vm490 = vcmp.eq.s32.totalorder %v58, %v439
    %vm491 = vcmp.eq.s32.totalorder %v59, %v439
    %vm492 = vcmp.eq.s32.totalorder %v58, %v443
    %vm493 = vcmp.eq.s32.totalorder %v59, %v443
    %vm494 = vcmp.eq.s32.totalorder %v58, %v447
    %vm495 = vcmp.eq.s32.totalorder %v59, %v447
    %vm496 = vcmp.eq.s32.totalorder %v58, %v451
    %vm497 = vcmp.eq.s32.totalorder %v59, %v451
    %vm498 = vcmp.eq.s32.totalorder %v58, %v455
    %vm499 = vcmp.eq.s32.totalorder %v59, %v455
    %vm500 = vcmp.eq.s32.totalorder %v58, %v459
    %vm501 = vcmp.eq.s32.totalorder %v59, %v459
    %vm502 = vcmp.eq.s32.totalorder %v58, %v463
    %vm503 = vcmp.eq.s32.totalorder %v59, %v463
    %vm504 = vcmp.eq.s32.totalorder %v58, %v467
    %vm505 = vcmp.eq.s32.totalorder %v59, %v467
    %vm506 = vcmp.eq.s32.totalorder %v58, %v471
    %vm507 = vcmp.eq.s32.totalorder %v59, %v471
    %vm508 = vcmp.eq.s32.totalorder %v58, %v475
    %vm509 = vcmp.eq.s32.totalorder %v59, %v475
    %vm510 = vcmp.eq.s32.totalorder %v58, %v479
    %vm511 = vcmp.eq.s32.totalorder %v59, %v479
    %v512 = vsel %vm480, 1, 0
    %v513 = vsel %vm481, 1, 0
    %v514 = vsel %vm482, 1, 0
    %v515 = vsel %vm483, 1, 0
    %v516 = vsel %vm484, 1, 0
    %v517 = vsel %vm485, 1, 0
    %v518 = vsel %vm486, 1, 0
    %v519 = vsel %vm487, 1, 0
    %v520 = vsel %vm488, 1, 0
    %v521 = vsel %vm489, 1, 0
    %v522 = vsel %vm490, 1, 0
    %v523 = vsel %vm491, 1, 0
    %v524 = vsel %vm492, 1, 0
    %v525 = vsel %vm493, 1, 0
    %v526 = vsel %vm494, 1, 0
    %v527 = vsel %vm495, 1, 0
    %v528 = vsel %vm496, 1, 0
    %v529 = vsel %vm497, 1, 0
    %v530 = vsel %vm498, 1, 0
    %v531 = vsel %vm499, 1, 0
    %v532 = vsel %vm500, 1, 0
    %v533 = vsel %vm501, 1, 0
    %v534 = vsel %vm502, 1, 0
    %v535 = vsel %vm503, 1, 0
    %v536 = vsel %vm504, 1, 0
    %v537 = vsel %vm505, 1, 0
    %v538 = vsel %vm506, 1, 0
    %v539 = vsel %vm507, 1, 0
    %v540 = vsel %vm508, 1, 0
    %v541 = vsel %vm509, 1, 0
    %v542 = vsel %vm510, 1, 0
    %v543 = vsel %vm511, 1, 0
    %v544 = vcvt.s32.f32 %v512
    %v545 = vcvt.s32.f32 %v513
    %v546 = vcvt.s32.f32 %v514
    %v547 = vcvt.s32.f32 %v515
    %v548 = vcvt.s32.f32 %v516
    %v549 = vcvt.s32.f32 %v517
    %v550 = vcvt.s32.f32 %v518
    %v551 = vcvt.s32.f32 %v519
    %v552 = vcvt.s32.f32 %v520
    %v553 = vcvt.s32.f32 %v521
    %v554 = vcvt.s32.f32 %v522
    %v555 = vcvt.s32.f32 %v523
    %v556 = vcvt.s32.f32 %v524
    %v557 = vcvt.s32.f32 %v525
    %v558 = vcvt.s32.f32 %v526
    %v559 = vcvt.s32.f32 %v527
    %v560 = vcvt.s32.f32 %v528
    %v561 = vcvt.s32.f32 %v529
    %v562 = vcvt.s32.f32 %v530
    %v563 = vcvt.s32.f32 %v531
    %v564 = vcvt.s32.f32 %v532
    %v565 = vcvt.s32.f32 %v533
    %v566 = vcvt.s32.f32 %v534
    %v567 = vcvt.s32.f32 %v535
    %v568 = vcvt.s32.f32 %v536
    %v569 = vcvt.s32.f32 %v537
    %v570 = vcvt.s32.f32 %v538
    %v571 = vcvt.s32.f32 %v539
    %v572 = vcvt.s32.f32 %v540
    %v573 = vcvt.s32.f32 %v541
    %v574 = vcvt.s32.f32 %v542
    %v575 = vcvt.s32.f32 %v543
    %vm576 = vcmask 523264
    %v578 = vsel %vm576, %v286, 0
    %v581 = vsel %vm576, %v287, 0
    %v584 = vsel %vm576, %v544, 0
    %v587 = vsel %vm576, %v545, 0
    %589 = vmatprep.subr.mxu0 0.0
    %590 = vmatpush1.xpose.msra.mxu0 %v584
    %591 = vmatprep.subr.mxu0 0.0
    %592 = vmatpush1.xpose.msra.mxu0 %v587
    %593 = vmatprep.subr.mxu0 0.0
    %594 = vmatpush1.xpose.msra.mxu0 0.0
    %595 = vmatprep.subr.mxu0 0.0
    %596 = vmatpush1.xpose.msra.mxu0 0.0
    %597 = vmatprep.subr.mxu0 0.0
    %598 = vmatpush1.xpose.msra.mxu0 0.0
    %599 = vmatprep.subr.mxu0 0.0
    %600 = vmatpush1.xpose.msra.mxu0 0.0
    %601 = vmatprep.subr.mxu0 0.0
    %602 = vmatpush1.xpose.msra.mxu0 0.0
    %603 = vmatprep.subr.mxu0 0.0
    %604 = vmatpush1.xpose.msra.mxu0 0.0
    %605 = vmatprep.subr.mxu0 0.0
    %606 = vmatpush1.xpose.msra.mxu0 0.0
    %607 = vmatprep.subr.mxu0 0.0
    %608 = vmatpush1.xpose.msra.mxu0 0.0
    %609 = vmatprep.subr.mxu0 0.0
    %610 = vmatpush1.xpose.msra.mxu0 0.0
    %611 = vmatprep.subr.mxu0 0.0
    %612 = vmatpush1.xpose.msra.mxu0 0.0
    %613 = vmatprep.subr.mxu0 0.0
    %614 = vmatpush1.xpose.msra.mxu0 0.0
    %615 = vmatprep.subr.mxu0 0.0
    %616 = vmatpush1.xpose.msra.mxu0 0.0
    %617 = vmatprep.subr.mxu0 0.0
    %618 = vmatpush1.xpose.msra.mxu0 0.0
    %619 = vmatprep.subr.mxu0 0.0
    %620 = vmatpush1.xpose.msra.mxu0 0.0
    %621 = vmatprep.subr.mxu0 0.0
    %622 = vmatpush1.xpose.msra.mxu0 0.0
    %623 = vmatprep.subr.mxu0 0.0
    %624 = vmatpush1.xpose.msra.mxu0 0.0
    %625 = vmatprep.subr.mxu0 0.0
    %626 = vmatpush1.xpose.msra.mxu0 0.0
    %627 = vmatprep.subr.mxu0 0.0
    %628 = vmatpush1.xpose.msra.mxu0 0.0
    %629 = vmatprep.subr.mxu0 0.0
    %630 = vmatpush1.xpose.msra.mxu0 0.0
    %631 = vmatprep.subr.mxu0 0.0
    %632 = vmatpush1.xpose.msra.mxu0 0.0
    %633 = vmatprep.subr.mxu0 0.0
    %634 = vmatpush1.xpose.msra.mxu0 0.0
    %635 = vmatprep.subr.mxu0 0.0
    %636 = vmatpush1.xpose.msra.mxu0 0.0
    %637 = vmatprep.subr.mxu0 0.0
    %638 = vmatpush1.xpose.msra.mxu0 0.0
    %639 = vmatprep.subr.mxu0 0.0
    %640 = vmatpush1.xpose.msra.mxu0 0.0
    %641 = vmatprep.subr.mxu0 0.0
    %642 = vmatpush1.xpose.msra.mxu0 0.0
    %643 = vmatprep.subr.mxu0 0.0
    %644 = vmatpush1.xpose.msra.mxu0 0.0
    %645 = vmatprep.subr.mxu0 0.0
    %646 = vmatpush1.xpose.msra.mxu0 0.0
    %647 = vmatprep.subr.mxu0 0.0
    %648 = vmatpush1.xpose.msra.mxu0 0.0
    %649 = vmatprep.subr.mxu0 0.0
    %650 = vmatpush1.xpose.msra.mxu0 0.0
    %651 = vmatprep.subr.mxu0 0.0
    %652 = vmatpush1.xpose.msra.mxu0 0.0
    %653 = vmatprep.mubr.f32.mxu0 0.0
    %654 = vmatmul.mubr.f32.gmra.mrb[0].mxu0 %v578
    %v655 = vpop.f32.mrb[0].mxu0
    %v656 = vadd.f32 0.0, %v655
    %v657 = vpop.f32.mrb[0].mxu0
    %658 = vmatprep.mubr.f32.mxu0 0.0
    %659 = vmatmul.mubr.f32.gmra.mrb[0].mxu0 %v581
    %v660 = vpop.f32.mrb[0].mxu0
    %v661 = vadd.f32 0.0, %v660
    %v662 = vpop.f32.mrb[0].mxu0
    %663 = vdwg.mxu0
    %v665 = vsel %vm576, %v288, 0
    %v668 = vsel %vm576, %v289, 0
    %v671 = vsel %vm576, %v546, 0
    %v674 = vsel %vm576, %v547, 0
    %676 = vmatprep.subr.mxu0 0.0
    %677 = vmatpush1.xpose.msra.mxu0 %v671
    %678 = vmatprep.subr.mxu0 0.0
    %679 = vmatpush1.xpose.msra.mxu0 %v674
    %680 = vmatprep.subr.mxu0 0.0
    %681 = vmatpush1.xpose.msra.mxu0 0.0
    %682 = vmatprep.subr.mxu0 0.0
    %683 = vmatpush1.xpose.msra.mxu0 0.0
    %684 = vmatprep.subr.mxu0 0.0
    %685 = vmatpush1.xpose.msra.mxu0 0.0
    %686 = vmatprep.subr.mxu0 0.0
    %687 = vmatpush1.xpose.msra.mxu0 0.0
    %688 = vmatprep.subr.mxu0 0.0
    %689 = vmatpush1.xpose.msra.mxu0 0.0
    %690 = vmatprep.subr.mxu0 0.0
    %691 = vmatpush1.xpose.msra.mxu0 0.0
    %692 = vmatprep.subr.mxu0 0.0
    %693 = vmatpush1.xpose.msra.mxu0 0.0
    %694 = vmatprep.subr.mxu0 0.0
    %695 = vmatpush1.xpose.msra.mxu0 0.0
    %696 = vmatprep.subr.mxu0 0.0
    %697 = vmatpush1.xpose.msra.mxu0 0.0
    %698 = vmatprep.subr.mxu0 0.0
    %699 = vmatpush1.xpose.msra.mxu0 0.0
    %700 = vmatprep.subr.mxu0 0.0
    %701 = vmatpush1.xpose.msra.mxu0 0.0
    %702 = vmatprep.subr.mxu0 0.0
    %703 = vmatpush1.xpose.msra.mxu0 0.0
    %704 = vmatprep.subr.mxu0 0.0
    %705 = vmatpush1.xpose.msra.mxu0 0.0
    %706 = vmatprep.subr.mxu0 0.0
    %707 = vmatpush1.xpose.msra.mxu0 0.0
    %708 = vmatprep.subr.mxu0 0.0
    %709 = vmatpush1.xpose.msra.mxu0 0.0
    %710 = vmatprep.subr.mxu0 0.0
    %711 = vmatpush1.xpose.msra.mxu0 0.0
    %712 = vmatprep.subr.mxu0 0.0
    %713 = vmatpush1.xpose.msra.mxu0 0.0
    %714 = vmatprep.subr.mxu0 0.0
    %715 = vmatpush1.xpose.msra.mxu0 0.0
    %716 = vmatprep.subr.mxu0 0.0
    %717 = vmatpush1.xpose.msra.mxu0 0.0
    %718 = vmatprep.subr.mxu0 0.0
    %719 = vmatpush1.xpose.msra.mxu0 0.0
    %720 = vmatprep.subr.mxu0 0.0
    %721 = vmatpush1.xpose.msra.mxu0 0.0
    %722 = vmatprep.subr.mxu0 0.0
    %723 = vmatpush1.xpose.msra.mxu0 0.0
    %724 = vmatprep.subr.mxu0 0.0
    %725 = vmatpush1.xpose.msra.mxu0 0.0
    %726 = vmatprep.subr.mxu0 0.0
    %727 = vmatpush1.xpose.msra.mxu0 0.0
    %728 = vmatprep.subr.mxu0 0.0
    %729 = vmatpush1.xpose.msra.mxu0 0.0
    %730 = vmatprep.subr.mxu0 0.0
    %731 = vmatpush1.xpose.msra.mxu0 0.0
    %732 = vmatprep.subr.mxu0 0.0
    %733 = vmatpush1.xpose.msra.mxu0 0.0
    %734 = vmatprep.subr.mxu0 0.0
    %735 = vmatpush1.xpose.msra.mxu0 0.0
    %736 = vmatprep.subr.mxu0 0.0
    %737 = vmatpush1.xpose.msra.mxu0 0.0
    %738 = vmatprep.subr.mxu0 0.0
    %739 = vmatpush1.xpose.msra.mxu0 0.0
    %740 = vmatprep.mubr.f32.mxu0 0.0
    %741 = vmatmul.mubr.f32.gmra.mrb[0].mxu0 %v665
    %v742 = vpop.f32.mrb[0].mxu0
    %v743 = vadd.f32 0.0, %v742
    %v744 = vpop.f32.mrb[0].mxu0
    %745 = vmatprep.mubr.f32.mxu0 0.0
    %746 = vmatmul.mubr.f32.gmra.mrb[0].mxu0 %v668
    %v747 = vpop.f32.mrb[0].mxu0
    %v748 = vadd.f32 0.0, %v747
    %v749 = vpop.f32.mrb[0].mxu0
    %750 = vdwg.mxu0
    %v752 = vsel %vm576, %v290, 0
    %v755 = vsel %vm576, %v291, 0
    %v758 = vsel %vm576, %v548, 0
    %v761 = vsel %vm576, %v549, 0
    %763 = vmatprep.subr.mxu0 0.0
    %764 = vmatpush1.xpose.msra.mxu0 %v758
    %765 = vmatprep.subr.mxu0 0.0
    %766 = vmatpush1.xpose.msra.mxu0 %v761
    %767 = vmatprep.subr.mxu0 0.0
    %768 = vmatpush1.xpose.msra.mxu0 0.0
    %769 = vmatprep.subr.mxu0 0.0
    %770 = vmatpush1.xpose.msra.mxu0 0.0
    %771 = vmatprep.subr.mxu0 0.0
    %772 = vmatpush1.xpose.msra.mxu0 0.0
    %773 = vmatprep.subr.mxu0 0.0
    %774 = vmatpush1.xpose.msra.mxu0 0.0
    %775 = vmatprep.subr.mxu0 0.0
    %776 = vmatpush1.xpose.msra.mxu0 0.0
    %777 = vmatprep.subr.mxu0 0.0
    %778 = vmatpush1.xpose.msra.mxu0 0.0
    %779 = vmatprep.subr.mxu0 0.0
    %780 = vmatpush1.xpose.msra.mxu0 0.0
    %781 = vmatprep.subr.mxu0 0.0
    %782 = vmatpush1.xpose.msra.mxu0 0.0
    %783 = vmatprep.subr.mxu0 0.0
    %784 = vmatpush1.xpose.msra.mxu0 0.0
    %785 = vmatprep.subr.mxu0 0.0
    %786 = vmatpush1.xpose.msra.mxu0 0.0
    %787 = vmatprep.subr.mxu0 0.0
    %788 = vmatpush1.xpose.msra.mxu0 0.0
    %789 = vmatprep.subr.mxu0 0.0
    %790 = vmatpush1.xpose.msra.mxu0 0.0
    %791 = vmatprep.subr.mxu0 0.0
    %792 = vmatpush1.xpose.msra.mxu0 0.0
    %793 = vmatprep.subr.mxu0 0.0
    %794 = vmatpush1.xpose.msra.mxu0 0.0
    %795 = vmatprep.subr.mxu0 0.0
    %796 = vmatpush1.xpose.msra.mxu0 0.0
    %797 = vmatprep.subr.mxu0 0.0
    %798 = vmatpush1.xpose.msra.mxu0 0.0
    %799 = vmatprep.subr.mxu0 0.0
    %800 = vmatpush1.xpose.msra.mxu0 0.0
    %801 = vmatprep.subr.mxu0 0.0
    %802 = vmatpush1.xpose.msra.mxu0 0.0
    %803 = vmatprep.subr.mxu0 0.0
    %804 = vmatpush1.xpose.msra.mxu0 0.0
    %805 = vmatprep.subr.mxu0 0.0
    %806 = vmatpush1.xpose.msra.mxu0 0.0
    %807 = vmatprep.subr.mxu0 0.0
    %808 = vmatpush1.xpose.msra.mxu0 0.0
    %809 = vmatprep.subr.mxu0 0.0
    %810 = vmatpush1.xpose.msra.mxu0 0.0
    %811 = vmatprep.subr.mxu0 0.0
    %812 = vmatpush1.xpose.msra.mxu0 0.0
    %813 = vmatprep.subr.mxu0 0.0
    %814 = vmatpush1.xpose.msra.mxu0 0.0
    %815 = vmatprep.subr.mxu0 0.0
    %816 = vmatpush1.xpose.msra.mxu0 0.0
    %817 = vmatprep.subr.mxu0 0.0
    %818 = vmatpush1.xpose.msra.mxu0 0.0
    %819 = vmatprep.subr.mxu0 0.0
    %820 = vmatpush1.xpose.msra.mxu0 0.0
    %821 = vmatprep.subr.mxu0 0.0
    %822 = vmatpush1.xpose.msra.mxu0 0.0
    %823 = vmatprep.subr.mxu0 0.0
    %824 = vmatpush1.xpose.msra.mxu0 0.0
    %825 = vmatprep.subr.mxu0 0.0
    %826 = vmatpush1.xpose.msra.mxu0 0.0
    %827 = vmatprep.mubr.f32.mxu0 0.0
    %828 = vmatmul.mubr.f32.gmra.mrb[0].mxu0 %v752
    %v829 = vpop.f32.mrb[0].mxu0
    %v830 = vadd.f32 0.0, %v829
    %v831 = vpop.f32.mrb[0].mxu0
    %832 = vmatprep.mubr.f32.mxu0 0.0
    %833 = vmatmul.mubr.f32.gmra.mrb[0].mxu0 %v755
    %v834 = vpop.f32.mrb[0].mxu0
    %v835 = vadd.f32 0.0, %v834
    %v836 = vpop.f32.mrb[0].mxu0
    %837 = vdwg.mxu0
    %v839 = vsel %vm576, %v292, 0
    %v842 = vsel %vm576, %v293, 0
    %v845 = vsel %vm576, %v550, 0
    %v848 = vsel %vm576, %v551, 0
    %850 = vmatprep.subr.mxu0 0.0
    %851 = vmatpush1.xpose.msra.mxu0 %v845
    %852 = vmatprep.subr.mxu0 0.0
    %853 = vmatpush1.xpose.msra.mxu0 %v848
    %854 = vmatprep.subr.mxu0 0.0
    %855 = vmatpush1.xpose.msra.mxu0 0.0
    %856 = vmatprep.subr.mxu0 0.0
    %857 = vmatpush1.xpose.msra.mxu0 0.0
    %858 = vmatprep.subr.mxu0 0.0
    %859 = vmatpush1.xpose.msra.mxu0 0.0
    %860 = vmatprep.subr.mxu0 0.0
    %861 = vmatpush1.xpose.msra.mxu0 0.0
    %862 = vmatprep.subr.mxu0 0.0
    %863 = vmatpush1.xpose.msra.mxu0 0.0
    %864 = vmatprep.subr.mxu0 0.0
    %865 = vmatpush1.xpose.msra.mxu0 0.0
    %866 = vmatprep.subr.mxu0 0.0
    %867 = vmatpush1.xpose.msra.mxu0 0.0
    %868 = vmatprep.subr.mxu0 0.0
    %869 = vmatpush1.xpose.msra.mxu0 0.0
    %870 = vmatprep.subr.mxu0 0.0
    %871 = vmatpush1.xpose.msra.mxu0 0.0
    %872 = vmatprep.subr.mxu0 0.0
    %873 = vmatpush1.xpose.msra.mxu0 0.0
    %874 = vmatprep.subr.mxu0 0.0
    %875 = vmatpush1.xpose.msra.mxu0 0.0
    %876 = vmatprep.subr.mxu0 0.0
    %877 = vmatpush1.xpose.msra.mxu0 0.0
    %878 = vmatprep.subr.mxu0 0.0
    %879 = vmatpush1.xpose.msra.mxu0 0.0
    %880 = vmatprep.subr.mxu0 0.0
    %881 = vmatpush1.xpose.msra.mxu0 0.0
    %882 = vmatprep.subr.mxu0 0.0
    %883 = vmatpush1.xpose.msra.mxu0 0.0
    %884 = vmatprep.subr.mxu0 0.0
    %885 = vmatpush1.xpose.msra.mxu0 0.0
    %886 = vmatprep.subr.mxu0 0.0
    %887 = vmatpush1.xpose.msra.mxu0 0.0
    %888 = vmatprep.subr.mxu0 0.0
    %889 = vmatpush1.xpose.msra.mxu0 0.0
    %890 = vmatprep.subr.mxu0 0.0
    %891 = vmatpush1.xpose.msra.mxu0 0.0
    %892 = vmatprep.subr.mxu0 0.0
    %893 = vmatpush1.xpose.msra.mxu0 0.0
    %894 = vmatprep.subr.mxu0 0.0
    %895 = vmatpush1.xpose.msra.mxu0 0.0
    %896 = vmatprep.subr.mxu0 0.0
    %897 = vmatpush1.xpose.msra.mxu0 0.0
    %898 = vmatprep.subr.mxu0 0.0
    %899 = vmatpush1.xpose.msra.mxu0 0.0
    %900 = vmatprep.subr.mxu0 0.0
    %901 = vmatpush1.xpose.msra.mxu0 0.0
    %902 = vmatprep.subr.mxu0 0.0
    %903 = vmatpush1.xpose.msra.mxu0 0.0
    %904 = vmatprep.subr.mxu0 0.0
    %905 = vmatpush1.xpose.msra.mxu0 0.0
    %906 = vmatprep.subr.mxu0 0.0
    %907 = vmatpush1.xpose.msra.mxu0 0.0
    %908 = vmatprep.subr.mxu0 0.0
    %909 = vmatpush1.xpose.msra.mxu0 0.0
    %910 = vmatprep.subr.mxu0 0.0
    %911 = vmatpush1.xpose.msra.mxu0 0.0
    %912 = vmatprep.subr.mxu0 0.0
    %913 = vmatpush1.xpose.msra.mxu0 0.0
    %914 = vmatprep.mubr.f32.mxu0 0.0
    %915 = vmatmul.mubr.f32.gmra.mrb[0].mxu0 %v839
    %v916 = vpop.f32.mrb[0].mxu0
    %v917 = vadd.f32 0.0, %v916
    %v918 = vpop.f32.mrb[0].mxu0
    %919 = vmatprep.mubr.f32.mxu0 0.0
    %920 = vmatmul.mubr.f32.gmra.mrb[0].mxu0 %v842
    %v921 = vpop.f32.mrb[0].mxu0
    %v922 = vadd.f32 0.0, %v921
    %v923 = vpop.f32.mrb[0].mxu0
    %924 = vdwg.mxu0
    %v926 = vsel %vm576, %v294, 0
    %v929 = vsel %vm576, %v295, 0
    %v932 = vsel %vm576, %v552, 0
    %v935 = vsel %vm576, %v553, 0
    %937 = vmatprep.subr.mxu0 0.0
    %938 = vmatpush1.xpose.msra.mxu0 %v932
    %939 = vmatprep.subr.mxu0 0.0
    %940 = vmatpush1.xpose.msra.mxu0 %v935
    %941 = vmatprep.subr.mxu0 0.0
    %942 = vmatpush1.xpose.msra.mxu0 0.0
    %943 = vmatprep.subr.mxu0 0.0
    %944 = vmatpush1.xpose.msra.mxu0 0.0
    %945 = vmatprep.subr.mxu0 0.0
    %946 = vmatpush1.xpose.msra.mxu0 0.0
    %947 = vmatprep.subr.mxu0 0.0
    %948 = vmatpush1.xpose.msra.mxu0 0.0
    %949 = vmatprep.subr.mxu0 0.0
    %950 = vmatpush1.xpose.msra.mxu0 0.0
    %951 = vmatprep.subr.mxu0 0.0
    %952 = vmatpush1.xpose.msra.mxu0 0.0
    %953 = vmatprep.subr.mxu0 0.0
    %954 = vmatpush1.xpose.msra.mxu0 0.0
    %955 = vmatprep.subr.mxu0 0.0
    %956 = vmatpush1.xpose.msra.mxu0 0.0
    %957 = vmatprep.subr.mxu0 0.0
    %958 = vmatpush1.xpose.msra.mxu0 0.0
    %959 = vmatprep.subr.mxu0 0.0
    %960 = vmatpush1.xpose.msra.mxu0 0.0
    %961 = vmatprep.subr.mxu0 0.0
    %962 = vmatpush1.xpose.msra.mxu0 0.0
    %963 = vmatprep.subr.mxu0 0.0
    %964 = vmatpush1.xpose.msra.mxu0 0.0
    %965 = vmatprep.subr.mxu0 0.0
    %966 = vmatpush1.xpose.msra.mxu0 0.0
    %967 = vmatprep.subr.mxu0 0.0
    %968 = vmatpush1.xpose.msra.mxu0 0.0
    %969 = vmatprep.subr.mxu0 0.0
    %970 = vmatpush1.xpose.msra.mxu0 0.0
    %971 = vmatprep.subr.mxu0 0.0
    %972 = vmatpush1.xpose.msra.mxu0 0.0
    %973 = vmatprep.subr.mxu0 0.0
    %974 = vmatpush1.xpose.msra.mxu0 0.0
    %975 = vmatprep.subr.mxu0 0.0
    %976 = vmatpush1.xpose.msra.mxu0 0.0
    %977 = vmatprep.subr.mxu0 0.0
    %978 = vmatpush1.xpose.msra.mxu0 0.0
    %979 = vmatprep.subr.mxu0 0.0
    %980 = vmatpush1.xpose.msra.mxu0 0.0
    %981 = vmatprep.subr.mxu0 0.0
    %982 = vmatpush1.xpose.msra.mxu0 0.0
    %983 = vmatprep.subr.mxu0 0.0
    %984 = vmatpush1.xpose.msra.mxu0 0.0
    %985 = vmatprep.subr.mxu0 0.0
    %986 = vmatpush1.xpose.msra.mxu0 0.0
    %987 = vmatprep.subr.mxu0 0.0
    %988 = vmatpush1.xpose.msra.mxu0 0.0
    %989 = vmatprep.subr.mxu0 0.0
    %990 = vmatpush1.xpose.msra.mxu0 0.0
    %991 = vmatprep.subr.mxu0 0.0
    %992 = vmatpush1.xpose.msra.mxu0 0.0
    %993 = vmatprep.subr.mxu0 0.0
    %994 = vmatpush1.xpose.msra.mxu0 0.0
    %995 = vmatprep.subr.mxu0 0.0
    %996 = vmatpush1.xpose.msra.mxu0 0.0
    %997 = vmatprep.subr.mxu0 0.0
    %998 = vmatpush1.xpose.msra.mxu0 0.0
    %999 = vmatprep.subr.mxu0 0.0
    %1000 = vmatpush1.xpose.msra.mxu0 0.0
    %1001 = vmatprep.mubr.f32.mxu0 0.0
    %1002 = vmatmul.mubr.f32.gmra.mrb[0].mxu0 %v926
    %v1003 = vpop.f32.mrb[0].mxu0
    %v1004 = vadd.f32 0.0, %v1003
    %v1005 = vpop.f32.mrb[0].mxu0
    %1006 = vmatprep.mubr.f32.mxu0 0.0
    %1007 = vmatmul.mubr.f32.gmra.mrb[0].mxu0 %v929
    %v1008 = vpop.f32.mrb[0].mxu0
    %v1009 = vadd.f32 0.0, %v1008
    %v1010 = vpop.f32.mrb[0].mxu0
    %1011 = vdwg.mxu0
    %v1013 = vsel %vm576, %v296, 0
    %v1016 = vsel %vm576, %v297, 0
    %v1019 = vsel %vm576, %v554, 0
    %v1022 = vsel %vm576, %v555, 0
    %1024 = vmatprep.subr.mxu0 0.0
    %1025 = vmatpush1.xpose.msra.mxu0 %v1019
    %1026 = vmatprep.subr.mxu0 0.0
    %1027 = vmatpush1.xpose.msra.mxu0 %v1022
    %1028 = vmatprep.subr.mxu0 0.0
    %1029 = vmatpush1.xpose.msra.mxu0 0.0
    %1030 = vmatprep.subr.mxu0 0.0
    %1031 = vmatpush1.xpose.msra.mxu0 0.0
    %1032 = vmatprep.subr.mxu0 0.0
    %1033 = vmatpush1.xpose.msra.mxu0 0.0
    %1034 = vmatprep.subr.mxu0 0.0
    %1035 = vmatpush1.xpose.msra.mxu0 0.0
    %1036 = vmatprep.subr.mxu0 0.0
    %1037 = vmatpush1.xpose.msra.mxu0 0.0
    %1038 = vmatprep.subr.mxu0 0.0
    %1039 = vmatpush1.xpose.msra.mxu0 0.0
    %1040 = vmatprep.subr.mxu0 0.0
    %1041 = vmatpush1.xpose.msra.mxu0 0.0
    %1042 = vmatprep.subr.mxu0 0.0
    %1043 = vmatpush1.xpose.msra.mxu0 0.0
    %1044 = vmatprep.subr.mxu0 0.0
    %1045 = vmatpush1.xpose.msra.mxu0 0.0
    %1046 = vmatprep.subr.mxu0 0.0
    %1047 = vmatpush1.xpose.msra.mxu0 0.0
    %1048 = vmatprep.subr.mxu0 0.0
    %1049 = vmatpush1.xpose.msra.mxu0 0.0
    %1050 = vmatprep.subr.mxu0 0.0
    %1051 = vmatpush1.xpose.msra.mxu0 0.0
    %1052 = vmatprep.subr.mxu0 0.0
    %1053 = vmatpush1.xpose.msra.mxu0 0.0
    %1054 = vmatprep.subr.mxu0 0.0
    %1055 = vmatpush1.xpose.msra.mxu0 0.0
    %1056 = vmatprep.subr.mxu0 0.0
    %1057 = vmatpush1.xpose.msra.mxu0 0.0
    %1058 = vmatprep.subr.mxu0 0.0
    %1059 = vmatpush1.xpose.msra.mxu0 0.0
    %1060 = vmatprep.subr.mxu0 0.0
    %1061 = vmatpush1.xpose.msra.mxu0 0.0
    %1062 = vmatprep.subr.mxu0 0.0
    %1063 = vmatpush1.xpose.msra.mxu0 0.0
    %1064 = vmatprep.subr.mxu0 0.0
    %1065 = vmatpush1.xpose.msra.mxu0 0.0
    %1066 = vmatprep.subr.mxu0 0.0
    %1067 = vmatpush1.xpose.msra.mxu0 0.0
    %1068 = vmatprep.subr.mxu0 0.0
    %1069 = vmatpush1.xpose.msra.mxu0 0.0
    %1070 = vmatprep.subr.mxu0 0.0
    %1071 = vmatpush1.xpose.msra.mxu0 0.0
    %1072 = vmatprep.subr.mxu0 0.0
    %1073 = vmatpush1.xpose.msra.mxu0 0.0
    %1074 = vmatprep.subr.mxu0 0.0
    %1075 = vmatpush1.xpose.msra.mxu0 0.0
    %1076 = vmatprep.subr.mxu0 0.0
    %1077 = vmatpush1.xpose.msra.mxu0 0.0
    %1078 = vmatprep.subr.mxu0 0.0
    %1079 = vmatpush1.xpose.msra.mxu0 0.0
    %1080 = vmatprep.subr.mxu0 0.0
    %1081 = vmatpush1.xpose.msra.mxu0 0.0
    %1082 = vmatprep.subr.mxu0 0.0
    %1083 = vmatpush1.xpose.msra.mxu0 0.0
    %1084 = vmatprep.subr.mxu0 0.0
    %1085 = vmatpush1.xpose.msra.mxu0 0.0
    %1086 = vmatprep.subr.mxu0 0.0
    %1087 = vmatpush1.xpose.msra.mxu0 0.0
    %1088 = vmatprep.mubr.f32.mxu0 0.0
    %1089 = vmatmul.mubr.f32.gmra.mrb[0].mxu0 %v1013
    %v1090 = vpop.f32.mrb[0].mxu0
    %v1091 = vadd.f32 0.0, %v1090
    %v1092 = vpop.f32.mrb[0].mxu0
    %1093 = vmatprep.mubr.f32.mxu0 0.0
    %1094 = vmatmul.mubr.f32.gmra.mrb[0].mxu0 %v1016
    %v1095 = vpop.f32.mrb[0].mxu0
    %v1096 = vadd.f32 0.0, %v1095
    %v1097 = vpop.f32.mrb[0].mxu0
    %1098 = vdwg.mxu0
    %v1100 = vsel %vm576, %v298, 0
    %v1103 = vsel %vm576, %v299, 0
    %v1106 = vsel %vm576, %v556, 0
    %v1109 = vsel %vm576, %v557, 0
    %1111 = vmatprep.subr.mxu0 0.0
    %1112 = vmatpush1.xpose.msra.mxu0 %v1106
    %1113 = vmatprep.subr.mxu0 0.0
    %1114 = vmatpush1.xpose.msra.mxu0 %v1109
    %1115 = vmatprep.subr.mxu0 0.0
    %1116 = vmatpush1.xpose.msra.mxu0 0.0
    %1117 = vmatprep.subr.mxu0 0.0
    %1118 = vmatpush1.xpose.msra.mxu0 0.0
    %1119 = vmatprep.subr.mxu0 0.0
    %1120 = vmatpush1.xpose.msra.mxu0 0.0
    %1121 = vmatprep.subr.mxu0 0.0
    %1122 = vmatpush1.xpose.msra.mxu0 0.0
    %1123 = vmatprep.subr.mxu0 0.0
    %1124 = vmatpush1.xpose.msra.mxu0 0.0
    %1125 = vmatprep.subr.mxu0 0.0
    %1126 = vmatpush1.xpose.msra.mxu0 0.0
    %1127 = vmatprep.subr.mxu0 0.0
    %1128 = vmatpush1.xpose.msra.mxu0 0.0
    %1129 = vmatprep.subr.mxu0 0.0
    %1130 = vmatpush1.xpose.msra.mxu0 0.0
    %1131 = vmatprep.subr.mxu0 0.0
    %1132 = vmatpush1.xpose.msra.mxu0 0.0
    %1133 = vmatprep.subr.mxu0 0.0
    %1134 = vmatpush1.xpose.msra.mxu0 0.0
    %1135 = vmatprep.subr.mxu0 0.0
    %1136 = vmatpush1.xpose.msra.mxu0 0.0
    %1137 = vmatprep.subr.mxu0 0.0
    %1138 = vmatpush1.xpose.msra.mxu0 0.0
    %1139 = vmatprep.subr.mxu0 0.0
    %1140 = vmatpush1.xpose.msra.mxu0 0.0
    %1141 = vmatprep.subr.mxu0 0.0
    %1142 = vmatpush1.xpose.msra.mxu0 0.0
    %1143 = vmatprep.subr.mxu0 0.0
    %1144 = vmatpush1.xpose.msra.mxu0 0.0
    %1145 = vmatprep.subr.mxu0 0.0
    %1146 = vmatpush1.xpose.msra.mxu0 0.0
    %1147 = vmatprep.subr.mxu0 0.0
    %1148 = vmatpush1.xpose.msra.mxu0 0.0
    %1149 = vmatprep.subr.mxu0 0.0
    %1150 = vmatpush1.xpose.msra.mxu0 0.0
    %1151 = vmatprep.subr.mxu0 0.0
    %1152 = vmatpush1.xpose.msra.mxu0 0.0
    %1153 = vmatprep.subr.mxu0 0.0
    %1154 = vmatpush1.xpose.msra.mxu0 0.0
    %1155 = vmatprep.subr.mxu0 0.0
    %1156 = vmatpush1.xpose.msra.mxu0 0.0
    %1157 = vmatprep.subr.mxu0 0.0
    %1158 = vmatpush1.xpose.msra.mxu0 0.0
    %1159 = vmatprep.subr.mxu0 0.0
    %1160 = vmatpush1.xpose.msra.mxu0 0.0
    %1161 = vmatprep.subr.mxu0 0.0
    %1162 = vmatpush1.xpose.msra.mxu0 0.0
    %1163 = vmatprep.subr.mxu0 0.0
    %1164 = vmatpush1.xpose.msra.mxu0 0.0
    %1165 = vmatprep.subr.mxu0 0.0
    %1166 = vmatpush1.xpose.msra.mxu0 0.0
    %1167 = vmatprep.subr.mxu0 0.0
    %1168 = vmatpush1.xpose.msra.mxu0 0.0
    %1169 = vmatprep.subr.mxu0 0.0
    %1170 = vmatpush1.xpose.msra.mxu0 0.0
    %1171 = vmatprep.subr.mxu0 0.0
    %1172 = vmatpush1.xpose.msra.mxu0 0.0
    %1173 = vmatprep.subr.mxu0 0.0
    %1174 = vmatpush1.xpose.msra.mxu0 0.0
    %1175 = vmatprep.mubr.f32.mxu0 0.0
    %1176 = vmatmul.mubr.f32.gmra.mrb[0].mxu0 %v1100
    %v1177 = vpop.f32.mrb[0].mxu0
    %v1178 = vadd.f32 0.0, %v1177
    %v1179 = vpop.f32.mrb[0].mxu0
    %1180 = vmatprep.mubr.f32.mxu0 0.0
    %1181 = vmatmul.mubr.f32.gmra.mrb[0].mxu0 %v1103
    %v1182 = vpop.f32.mrb[0].mxu0
    %v1183 = vadd.f32 0.0, %v1182
    %v1184 = vpop.f32.mrb[0].mxu0
    %1185 = vdwg.mxu0
    %v1187 = vsel %vm576, %v300, 0
    %v1190 = vsel %vm576, %v301, 0
    %v1193 = vsel %vm576, %v558, 0
    %v1196 = vsel %vm576, %v559, 0
    %1198 = vmatprep.subr.mxu0 0.0
    %1199 = vmatpush1.xpose.msra.mxu0 %v1193
    %1200 = vmatprep.subr.mxu0 0.0
    %1201 = vmatpush1.xpose.msra.mxu0 %v1196
    %1202 = vmatprep.subr.mxu0 0.0
    %1203 = vmatpush1.xpose.msra.mxu0 0.0
    %1204 = vmatprep.subr.mxu0 0.0
    %1205 = vmatpush1.xpose.msra.mxu0 0.0
    %1206 = vmatprep.subr.mxu0 0.0
    %1207 = vmatpush1.xpose.msra.mxu0 0.0
    %1208 = vmatprep.subr.mxu0 0.0
    %1209 = vmatpush1.xpose.msra.mxu0 0.0
    %1210 = vmatprep.subr.mxu0 0.0
    %1211 = vmatpush1.xpose.msra.mxu0 0.0
    %1212 = vmatprep.subr.mxu0 0.0
    %1213 = vmatpush1.xpose.msra.mxu0 0.0
    %1214 = vmatprep.subr.mxu0 0.0
    %1215 = vmatpush1.xpose.msra.mxu0 0.0
    %1216 = vmatprep.subr.mxu0 0.0
    %1217 = vmatpush1.xpose.msra.mxu0 0.0
    %1218 = vmatprep.subr.mxu0 0.0
    %1219 = vmatpush1.xpose.msra.mxu0 0.0
    %1220 = vmatprep.subr.mxu0 0.0
    %1221 = vmatpush1.xpose.msra.mxu0 0.0
    %1222 = vmatprep.subr.mxu0 0.0
    %1223 = vmatpush1.xpose.msra.mxu0 0.0
    %1224 = vmatprep.subr.mxu0 0.0
    %1225 = vmatpush1.xpose.msra.mxu0 0.0
    %1226 = vmatprep.subr.mxu0 0.0
    %1227 = vmatpush1.xpose.msra.mxu0 0.0
    %1228 = vmatprep.subr.mxu0 0.0
    %1229 = vmatpush1.xpose.msra.mxu0 0.0
    %1230 = vmatprep.subr.mxu0 0.0
    %1231 = vmatpush1.xpose.msra.mxu0 0.0
    %1232 = vmatprep.subr.mxu0 0.0
    %1233 = vmatpush1.xpose.msra.mxu0 0.0
    %1234 = vmatprep.subr.mxu0 0.0
    %1235 = vmatpush1.xpose.msra.mxu0 0.0
    %1236 = vmatprep.subr.mxu0 0.0
    %1237 = vmatpush1.xpose.msra.mxu0 0.0
    %1238 = vmatprep.subr.mxu0 0.0
    %1239 = vmatpush1.xpose.msra.mxu0 0.0
    %1240 = vmatprep.subr.mxu0 0.0
    %1241 = vmatpush1.xpose.msra.mxu0 0.0
    %1242 = vmatprep.subr.mxu0 0.0
    %1243 = vmatpush1.xpose.msra.mxu0 0.0
    %1244 = vmatprep.subr.mxu0 0.0
    %1245 = vmatpush1.xpose.msra.mxu0 0.0
    %1246 = vmatprep.subr.mxu0 0.0
    %1247 = vmatpush1.xpose.msra.mxu0 0.0
    %1248 = vmatprep.subr.mxu0 0.0
    %1249 = vmatpush1.xpose.msra.mxu0 0.0
    %1250 = vmatprep.subr.mxu0 0.0
    %1251 = vmatpush1.xpose.msra.mxu0 0.0
    %1252 = vmatprep.subr.mxu0 0.0
    %1253 = vmatpush1.xpose.msra.mxu0 0.0
    %1254 = vmatprep.subr.mxu0 0.0
    %1255 = vmatpush1.xpose.msra.mxu0 0.0
    %1256 = vmatprep.subr.mxu0 0.0
    %1257 = vmatpush1.xpose.msra.mxu0 0.0
    %1258 = vmatprep.subr.mxu0 0.0
    %1259 = vmatpush1.xpose.msra.mxu0 0.0
    %1260 = vmatprep.subr.mxu0 0.0
    %1261 = vmatpush1.xpose.msra.mxu0 0.0
    %1262 = vmatprep.mubr.f32.mxu0 0.0
    %1263 = vmatmul.mubr.f32.gmra.mrb[0].mxu0 %v1187
    %v1264 = vpop.f32.mrb[0].mxu0
    %v1265 = vadd.f32 0.0, %v1264
    %v1266 = vpop.f32.mrb[0].mxu0
    %1267 = vmatprep.mubr.f32.mxu0 0.0
    %1268 = vmatmul.mubr.f32.gmra.mrb[0].mxu0 %v1190
    %v1269 = vpop.f32.mrb[0].mxu0
    %v1270 = vadd.f32 0.0, %v1269
    %v1271 = vpop.f32.mrb[0].mxu0
    %1272 = vdwg.mxu0
    %v1274 = vsel %vm576, %v302, 0
    %v1277 = vsel %vm576, %v303, 0
    %v1280 = vsel %vm576, %v560, 0
    %v1283 = vsel %vm576, %v561, 0
    %1285 = vmatprep.subr.mxu0 0.0
    %1286 = vmatpush1.xpose.msra.mxu0 %v1280
    %1287 = vmatprep.subr.mxu0 0.0
    %1288 = vmatpush1.xpose.msra.mxu0 %v1283
    %1289 = vmatprep.subr.mxu0 0.0
    %1290 = vmatpush1.xpose.msra.mxu0 0.0
    %1291 = vmatprep.subr.mxu0 0.0
    %1292 = vmatpush1.xpose.msra.mxu0 0.0
    %1293 = vmatprep.subr.mxu0 0.0
    %1294 = vmatpush1.xpose.msra.mxu0 0.0
    %1295 = vmatprep.subr.mxu0 0.0
    %1296 = vmatpush1.xpose.msra.mxu0 0.0
    %1297 = vmatprep.subr.mxu0 0.0
    %1298 = vmatpush1.xpose.msra.mxu0 0.0
    %1299 = vmatprep.subr.mxu0 0.0
    %1300 = vmatpush1.xpose.msra.mxu0 0.0
    %1301 = vmatprep.subr.mxu0 0.0
    %1302 = vmatpush1.xpose.msra.mxu0 0.0
    %1303 = vmatprep.subr.mxu0 0.0
    %1304 = vmatpush1.xpose.msra.mxu0 0.0
    %1305 = vmatprep.subr.mxu0 0.0
    %1306 = vmatpush1.xpose.msra.mxu0 0.0
    %1307 = vmatprep.subr.mxu0 0.0
    %1308 = vmatpush1.xpose.msra.mxu0 0.0
    %1309 = vmatprep.subr.mxu0 0.0
    %1310 = vmatpush1.xpose.msra.mxu0 0.0
    %1311 = vmatprep.subr.mxu0 0.0
    %1312 = vmatpush1.xpose.msra.mxu0 0.0
    %1313 = vmatprep.subr.mxu0 0.0
    %1314 = vmatpush1.xpose.msra.mxu0 0.0
    %1315 = vmatprep.subr.mxu0 0.0
    %1316 = vmatpush1.xpose.msra.mxu0 0.0
    %1317 = vmatprep.subr.mxu0 0.0
    %1318 = vmatpush1.xpose.msra.mxu0 0.0
    %1319 = vmatprep.subr.mxu0 0.0
    %1320 = vmatpush1.xpose.msra.mxu0 0.0
    %1321 = vmatprep.subr.mxu0 0.0
    %1322 = vmatpush1.xpose.msra.mxu0 0.0
    %1323 = vmatprep.subr.mxu0 0.0
    %1324 = vmatpush1.xpose.msra.mxu0 0.0
    %1325 = vmatprep.subr.mxu0 0.0
    %1326 = vmatpush1.xpose.msra.mxu0 0.0
    %1327 = vmatprep.subr.mxu0 0.0
    %1328 = vmatpush1.xpose.msra.mxu0 0.0
    %1329 = vmatprep.subr.mxu0 0.0
    %1330 = vmatpush1.xpose.msra.mxu0 0.0
    %1331 = vmatprep.subr.mxu0 0.0
    %1332 = vmatpush1.xpose.msra.mxu0 0.0
    %1333 = vmatprep.subr.mxu0 0.0
    %1334 = vmatpush1.xpose.msra.mxu0 0.0
    %1335 = vmatprep.subr.mxu0 0.0
    %1336 = vmatpush1.xpose.msra.mxu0 0.0
    %1337 = vmatprep.subr.mxu0 0.0
    %1338 = vmatpush1.xpose.msra.mxu0 0.0
    %1339 = vmatprep.subr.mxu0 0.0
    %1340 = vmatpush1.xpose.msra.mxu0 0.0
    %1341 = vmatprep.subr.mxu0 0.0
    %1342 = vmatpush1.xpose.msra.mxu0 0.0
    %1343 = vmatprep.subr.mxu0 0.0
    %1344 = vmatpush1.xpose.msra.mxu0 0.0
    %1345 = vmatprep.subr.mxu0 0.0
    %1346 = vmatpush1.xpose.msra.mxu0 0.0
    %1347 = vmatprep.subr.mxu0 0.0
    %1348 = vmatpush1.xpose.msra.mxu0 0.0
    %1349 = vmatprep.mubr.f32.mxu0 0.0
    %1350 = vmatmul.mubr.f32.gmra.mrb[0].mxu0 %v1274
    %v1351 = vpop.f32.mrb[0].mxu0
    %v1352 = vadd.f32 0.0, %v1351
    %v1353 = vpop.f32.mrb[0].mxu0
    %1354 = vmatprep.mubr.f32.mxu0 0.0
    %1355 = vmatmul.mubr.f32.gmra.mrb[0].mxu0 %v1277
    %v1356 = vpop.f32.mrb[0].mxu0
    %v1357 = vadd.f32 0.0, %v1356
    %v1358 = vpop.f32.mrb[0].mxu0
    %1359 = vdwg.mxu0
    %v1361 = vsel %vm576, %v304, 0
    %v1364 = vsel %vm576, %v305, 0
    %v1367 = vsel %vm576, %v562, 0
    %v1370 = vsel %vm576, %v563, 0
    %1372 = vmatprep.subr.mxu0 0.0
    %1373 = vmatpush1.xpose.msra.mxu0 %v1367
    %1374 = vmatprep.subr.mxu0 0.0
    %1375 = vmatpush1.xpose.msra.mxu0 %v1370
    %1376 = vmatprep.subr.mxu0 0.0
    %1377 = vmatpush1.xpose.msra.mxu0 0.0
    %1378 = vmatprep.subr.mxu0 0.0
    %1379 = vmatpush1.xpose.msra.mxu0 0.0
    %1380 = vmatprep.subr.mxu0 0.0
    %1381 = vmatpush1.xpose.msra.mxu0 0.0
    %1382 = vmatprep.subr.mxu0 0.0
    %1383 = vmatpush1.xpose.msra.mxu0 0.0
    %1384 = vmatprep.subr.mxu0 0.0
    %1385 = vmatpush1.xpose.msra.mxu0 0.0
    %1386 = vmatprep.subr.mxu0 0.0
    %1387 = vmatpush1.xpose.msra.mxu0 0.0
    %1388 = vmatprep.subr.mxu0 0.0
    %1389 = vmatpush1.xpose.msra.mxu0 0.0
    %1390 = vmatprep.subr.mxu0 0.0
    %1391 = vmatpush1.xpose.msra.mxu0 0.0
    %1392 = vmatprep.subr.mxu0 0.0
    %1393 = vmatpush1.xpose.msra.mxu0 0.0
    %1394 = vmatprep.subr.mxu0 0.0
    %1395 = vmatpush1.xpose.msra.mxu0 0.0
    %1396 = vmatprep.subr.mxu0 0.0
    %1397 = vmatpush1.xpose.msra.mxu0 0.0
    %1398 = vmatprep.subr.mxu0 0.0
    %1399 = vmatpush1.xpose.msra.mxu0 0.0
    %1400 = vmatprep.subr.mxu0 0.0
    %1401 = vmatpush1.xpose.msra.mxu0 0.0
    %1402 = vmatprep.subr.mxu0 0.0
    %1403 = vmatpush1.xpose.msra.mxu0 0.0
    %1404 = vmatprep.subr.mxu0 0.0
    %1405 = vmatpush1.xpose.msra.mxu0 0.0
    %1406 = vmatprep.subr.mxu0 0.0
    %1407 = vmatpush1.xpose.msra.mxu0 0.0
    %1408 = vmatprep.subr.mxu0 0.0
    %1409 = vmatpush1.xpose.msra.mxu0 0.0
    %1410 = vmatprep.subr.mxu0 0.0
    %1411 = vmatpush1.xpose.msra.mxu0 0.0
    %1412 = vmatprep.subr.mxu0 0.0
    %1413 = vmatpush1.xpose.msra.mxu0 0.0
    %1414 = vmatprep.subr.mxu0 0.0
    %1415 = vmatpush1.xpose.msra.mxu0 0.0
    %1416 = vmatprep.subr.mxu0 0.0
    %1417 = vmatpush1.xpose.msra.mxu0 0.0
    %1418 = vmatprep.subr.mxu0 0.0
    %1419 = vmatpush1.xpose.msra.mxu0 0.0
    %1420 = vmatprep.subr.mxu0 0.0
    %1421 = vmatpush1.xpose.msra.mxu0 0.0
    %1422 = vmatprep.subr.mxu0 0.0
    %1423 = vmatpush1.xpose.msra.mxu0 0.0
    %1424 = vmatprep.subr.mxu0 0.0
    %1425 = vmatpush1.xpose.msra.mxu0 0.0
    %1426 = vmatprep.subr.mxu0 0.0
    %1427 = vmatpush1.xpose.msra.mxu0 0.0
    %1428 = vmatprep.subr.mxu0 0.0
    %1429 = vmatpush1.xpose.msra.mxu0 0.0
    %1430 = vmatprep.subr.mxu0 0.0
    %1431 = vmatpush1.xpose.msra.mxu0 0.0
    %1432 = vmatprep.subr.mxu0 0.0
    %1433 = vmatpush1.xpose.msra.mxu0 0.0
    %1434 = vmatprep.subr.mxu0 0.0
    %1435 = vmatpush1.xpose.msra.mxu0 0.0
    %1436 = vmatprep.mubr.f32.mxu0 0.0
    %1437 = vmatmul.mubr.f32.gmra.mrb[0].mxu0 %v1361
    %v1438 = vpop.f32.mrb[0].mxu0
    %v1439 = vadd.f32 0.0, %v1438
    %v1440 = vpop.f32.mrb[0].mxu0
    %1441 = vmatprep.mubr.f32.mxu0 0.0
    %1442 = vmatmul.mubr.f32.gmra.mrb[0].mxu0 %v1364
    %v1443 = vpop.f32.mrb[0].mxu0
    %v1444 = vadd.f32 0.0, %v1443
    %v1445 = vpop.f32.mrb[0].mxu0
    %1446 = vdwg.mxu0
    %v1448 = vsel %vm576, %v306, 0
    %v1451 = vsel %vm576, %v307, 0
    %v1454 = vsel %vm576, %v564, 0
    %v1457 = vsel %vm576, %v565, 0
    %1459 = vmatprep.subr.mxu0 0.0
    %1460 = vmatpush1.xpose.msra.mxu0 %v1454
    %1461 = vmatprep.subr.mxu0 0.0
    %1462 = vmatpush1.xpose.msra.mxu0 %v1457
    %1463 = vmatprep.subr.mxu0 0.0
    %1464 = vmatpush1.xpose.msra.mxu0 0.0
    %1465 = vmatprep.subr.mxu0 0.0
    %1466 = vmatpush1.xpose.msra.mxu0 0.0
    %1467 = vmatprep.subr.mxu0 0.0
    %1468 = vmatpush1.xpose.msra.mxu0 0.0
    %1469 = vmatprep.subr.mxu0 0.0
    %1470 = vmatpush1.xpose.msra.mxu0 0.0
    %1471 = vmatprep.subr.mxu0 0.0
    %1472 = vmatpush1.xpose.msra.mxu0 0.0
    %1473 = vmatprep.subr.mxu0 0.0
    %1474 = vmatpush1.xpose.msra.mxu0 0.0
    %1475 = vmatprep.subr.mxu0 0.0
    %1476 = vmatpush1.xpose.msra.mxu0 0.0
    %1477 = vmatprep.subr.mxu0 0.0
    %1478 = vmatpush1.xpose.msra.mxu0 0.0
    %1479 = vmatprep.subr.mxu0 0.0
    %1480 = vmatpush1.xpose.msra.mxu0 0.0
    %1481 = vmatprep.subr.mxu0 0.0
    %1482 = vmatpush1.xpose.msra.mxu0 0.0
    %1483 = vmatprep.subr.mxu0 0.0
    %1484 = vmatpush1.xpose.msra.mxu0 0.0
    %1485 = vmatprep.subr.mxu0 0.0
    %1486 = vmatpush1.xpose.msra.mxu0 0.0
    %1487 = vmatprep.subr.mxu0 0.0
    %1488 = vmatpush1.xpose.msra.mxu0 0.0
    %1489 = vmatprep.subr.mxu0 0.0
    %1490 = vmatpush1.xpose.msra.mxu0 0.0
    %1491 = vmatprep.subr.mxu0 0.0
    %1492 = vmatpush1.xpose.msra.mxu0 0.0
    %1493 = vmatprep.subr.mxu0 0.0
    %1494 = vmatpush1.xpose.msra.mxu0 0.0
    %1495 = vmatprep.subr.mxu0 0.0
    %1496 = vmatpush1.xpose.msra.mxu0 0.0
    %1497 = vmatprep.subr.mxu0 0.0
    %1498 = vmatpush1.xpose.msra.mxu0 0.0
    %1499 = vmatprep.subr.mxu0 0.0
    %1500 = vmatpush1.xpose.msra.mxu0 0.0
    %1501 = vmatprep.subr.mxu0 0.0
    %1502 = vmatpush1.xpose.msra.mxu0 0.0
    %1503 = vmatprep.subr.mxu0 0.0
    %1504 = vmatpush1.xpose.msra.mxu0 0.0
    %1505 = vmatprep.subr.mxu0 0.0
    %1506 = vmatpush1.xpose.msra.mxu0 0.0
    %1507 = vmatprep.subr.mxu0 0.0
    %1508 = vmatpush1.xpose.msra.mxu0 0.0
    %1509 = vmatprep.subr.mxu0 0.0
    %1510 = vmatpush1.xpose.msra.mxu0 0.0
    %1511 = vmatprep.subr.mxu0 0.0
    %1512 = vmatpush1.xpose.msra.mxu0 0.0
    %1513 = vmatprep.subr.mxu0 0.0
    %1514 = vmatpush1.xpose.msra.mxu0 0.0
    %1515 = vmatprep.subr.mxu0 0.0
    %1516 = vmatpush1.xpose.msra.mxu0 0.0
    %1517 = vmatprep.subr.mxu0 0.0
    %1518 = vmatpush1.xpose.msra.mxu0 0.0
    %1519 = vmatprep.subr.mxu0 0.0
    %1520 = vmatpush1.xpose.msra.mxu0 0.0
    %1521 = vmatprep.subr.mxu0 0.0
    %1522 = vmatpush1.xpose.msra.mxu0 0.0
    %1523 = vmatprep.mubr.f32.mxu0 0.0
    %1524 = vmatmul.mubr.f32.gmra.mrb[0].mxu0 %v1448
    %v1525 = vpop.f32.mrb[0].mxu0
    %v1526 = vadd.f32 0.0, %v1525
    %v1527 = vpop.f32.mrb[0].mxu0
    %1528 = vmatprep.mubr.f32.mxu0 0.0
    %1529 = vmatmul.mubr.f32.gmra.mrb[0].mxu0 %v1451
    %v1530 = vpop.f32.mrb[0].mxu0
    %v1531 = vadd.f32 0.0, %v1530
    %v1532 = vpop.f32.mrb[0].mxu0
    %1533 = vdwg.mxu0
    %v1535 = vsel %vm576, %v308, 0
    %v1538 = vsel %vm576, %v309, 0
    %v1541 = vsel %vm576, %v566, 0
    %v1544 = vsel %vm576, %v567, 0
    %1546 = vmatprep.subr.mxu0 0.0
    %1547 = vmatpush1.xpose.msra.mxu0 %v1541
    %1548 = vmatprep.subr.mxu0 0.0
    %1549 = vmatpush1.xpose.msra.mxu0 %v1544
    %1550 = vmatprep.subr.mxu0 0.0
    %1551 = vmatpush1.xpose.msra.mxu0 0.0
    %1552 = vmatprep.subr.mxu0 0.0
    %1553 = vmatpush1.xpose.msra.mxu0 0.0
    %1554 = vmatprep.subr.mxu0 0.0
    %1555 = vmatpush1.xpose.msra.mxu0 0.0
    %1556 = vmatprep.subr.mxu0 0.0
    %1557 = vmatpush1.xpose.msra.mxu0 0.0
    %1558 = vmatprep.subr.mxu0 0.0
    %1559 = vmatpush1.xpose.msra.mxu0 0.0
    %1560 = vmatprep.subr.mxu0 0.0
    %1561 = vmatpush1.xpose.msra.mxu0 0.0
    %1562 = vmatprep.subr.mxu0 0.0
    %1563 = vmatpush1.xpose.msra.mxu0 0.0
    %1564 = vmatprep.subr.mxu0 0.0
    %1565 = vmatpush1.xpose.msra.mxu0 0.0
    %1566 = vmatprep.subr.mxu0 0.0
    %1567 = vmatpush1.xpose.msra.mxu0 0.0
    %1568 = vmatprep.subr.mxu0 0.0
    %1569 = vmatpush1.xpose.msra.mxu0 0.0
    %1570 = vmatprep.subr.mxu0 0.0
    %1571 = vmatpush1.xpose.msra.mxu0 0.0
    %1572 = vmatprep.subr.mxu0 0.0
    %1573 = vmatpush1.xpose.msra.mxu0 0.0
    %1574 = vmatprep.subr.mxu0 0.0
    %1575 = vmatpush1.xpose.msra.mxu0 0.0
    %1576 = vmatprep.subr.mxu0 0.0
    %1577 = vmatpush1.xpose.msra.mxu0 0.0
    %1578 = vmatprep.subr.mxu0 0.0
    %1579 = vmatpush1.xpose.msra.mxu0 0.0
    %1580 = vmatprep.subr.mxu0 0.0
    %1581 = vmatpush1.xpose.msra.mxu0 0.0
    %1582 = vmatprep.subr.mxu0 0.0
    %1583 = vmatpush1.xpose.msra.mxu0 0.0
    %1584 = vmatprep.subr.mxu0 0.0
    %1585 = vmatpush1.xpose.msra.mxu0 0.0
    %1586 = vmatprep.subr.mxu0 0.0
    %1587 = vmatpush1.xpose.msra.mxu0 0.0
    %1588 = vmatprep.subr.mxu0 0.0
    %1589 = vmatpush1.xpose.msra.mxu0 0.0
    %1590 = vmatprep.subr.mxu0 0.0
    %1591 = vmatpush1.xpose.msra.mxu0 0.0
    %1592 = vmatprep.subr.mxu0 0.0
    %1593 = vmatpush1.xpose.msra.mxu0 0.0
    %1594 = vmatprep.subr.mxu0 0.0
    %1595 = vmatpush1.xpose.msra.mxu0 0.0
    %1596 = vmatprep.subr.mxu0 0.0
    %1597 = vmatpush1.xpose.msra.mxu0 0.0
    %1598 = vmatprep.subr.mxu0 0.0
    %1599 = vmatpush1.xpose.msra.mxu0 0.0
    %1600 = vmatprep.subr.mxu0 0.0
    %1601 = vmatpush1.xpose.msra.mxu0 0.0
    %1602 = vmatprep.subr.mxu0 0.0
    %1603 = vmatpush1.xpose.msra.mxu0 0.0
    %1604 = vmatprep.subr.mxu0 0.0
    %1605 = vmatpush1.xpose.msra.mxu0 0.0
    %1606 = vmatprep.subr.mxu0 0.0
    %1607 = vmatpush1.xpose.msra.mxu0 0.0
    %1608 = vmatprep.subr.mxu0 0.0
    %1609 = vmatpush1.xpose.msra.mxu0 0.0
    %1610 = vmatprep.mubr.f32.mxu0 0.0
    %1611 = vmatmul.mubr.f32.gmra.mrb[0].mxu0 %v1535
    %v1612 = vpop.f32.mrb[0].mxu0
    %v1613 = vadd.f32 0.0, %v1612
    %v1614 = vpop.f32.mrb[0].mxu0
    %1615 = vmatprep.mubr.f32.mxu0 0.0
    %1616 = vmatmul.mubr.f32.gmra.mrb[0].mxu0 %v1538
    %v1617 = vpop.f32.mrb[0].mxu0
    %v1618 = vadd.f32 0.0, %v1617
    %v1619 = vpop.f32.mrb[0].mxu0
    %1620 = vdwg.mxu0
    %v1622 = vsel %vm576, %v310, 0
    %v1625 = vsel %vm576, %v311, 0
    %v1628 = vsel %vm576, %v568, 0
    %v1631 = vsel %vm576, %v569, 0
    %1633 = vmatprep.subr.mxu0 0.0
    %1634 = vmatpush1.xpose.msra.mxu0 %v1628
    %1635 = vmatprep.subr.mxu0 0.0
    %1636 = vmatpush1.xpose.msra.mxu0 %v1631
    %1637 = vmatprep.subr.mxu0 0.0
    %1638 = vmatpush1.xpose.msra.mxu0 0.0
    %1639 = vmatprep.subr.mxu0 0.0
    %1640 = vmatpush1.xpose.msra.mxu0 0.0
    %1641 = vmatprep.subr.mxu0 0.0
    %1642 = vmatpush1.xpose.msra.mxu0 0.0
    %1643 = vmatprep.subr.mxu0 0.0
    %1644 = vmatpush1.xpose.msra.mxu0 0.0
    %1645 = vmatprep.subr.mxu0 0.0
    %1646 = vmatpush1.xpose.msra.mxu0 0.0
    %1647 = vmatprep.subr.mxu0 0.0
    %1648 = vmatpush1.xpose.msra.mxu0 0.0
    %1649 = vmatprep.subr.mxu0 0.0
    %1650 = vmatpush1.xpose.msra.mxu0 0.0
    %1651 = vmatprep.subr.mxu0 0.0
    %1652 = vmatpush1.xpose.msra.mxu0 0.0
    %1653 = vmatprep.subr.mxu0 0.0
    %1654 = vmatpush1.xpose.msra.mxu0 0.0
    %1655 = vmatprep.subr.mxu0 0.0
    %1656 = vmatpush1.xpose.msra.mxu0 0.0
    %1657 = vmatprep.subr.mxu0 0.0
    %1658 = vmatpush1.xpose.msra.mxu0 0.0
    %1659 = vmatprep.subr.mxu0 0.0
    %1660 = vmatpush1.xpose.msra.mxu0 0.0
    %1661 = vmatprep.subr.mxu0 0.0
    %1662 = vmatpush1.xpose.msra.mxu0 0.0
    %1663 = vmatprep.subr.mxu0 0.0
    %1664 = vmatpush1.xpose.msra.mxu0 0.0
    %1665 = vmatprep.subr.mxu0 0.0
    %1666 = vmatpush1.xpose.msra.mxu0 0.0
    %1667 = vmatprep.subr.mxu0 0.0
    %1668 = vmatpush1.xpose.msra.mxu0 0.0
    %1669 = vmatprep.subr.mxu0 0.0
    %1670 = vmatpush1.xpose.msra.mxu0 0.0
    %1671 = vmatprep.subr.mxu0 0.0
    %1672 = vmatpush1.xpose.msra.mxu0 0.0
    %1673 = vmatprep.subr.mxu0 0.0
    %1674 = vmatpush1.xpose.msra.mxu0 0.0
    %1675 = vmatprep.subr.mxu0 0.0
    %1676 = vmatpush1.xpose.msra.mxu0 0.0
    %1677 = vmatprep.subr.mxu0 0.0
    %1678 = vmatpush1.xpose.msra.mxu0 0.0
    %1679 = vmatprep.subr.mxu0 0.0
    %1680 = vmatpush1.xpose.msra.mxu0 0.0
    %1681 = vmatprep.subr.mxu0 0.0
    %1682 = vmatpush1.xpose.msra.mxu0 0.0
    %1683 = vmatprep.subr.mxu0 0.0
    %1684 = vmatpush1.xpose.msra.mxu0 0.0
    %1685 = vmatprep.subr.mxu0 0.0
    %1686 = vmatpush1.xpose.msra.mxu0 0.0
    %1687 = vmatprep.subr.mxu0 0.0
    %1688 = vmatpush1.xpose.msra.mxu0 0.0
    %1689 = vmatprep.subr.mxu0 0.0
    %1690 = vmatpush1.xpose.msra.mxu0 0.0
    %1691 = vmatprep.subr.mxu0 0.0
    %1692 = vmatpush1.xpose.msra.mxu0 0.0
    %1693 = vmatprep.subr.mxu0 0.0
    %1694 = vmatpush1.xpose.msra.mxu0 0.0
    %1695 = vmatprep.subr.mxu0 0.0
    %1696 = vmatpush1.xpose.msra.mxu0 0.0
    %1697 = vmatprep.mubr.f32.mxu0 0.0
    %1698 = vmatmul.mubr.f32.gmra.mrb[0].mxu0 %v1622
    %v1699 = vpop.f32.mrb[0].mxu0
    %v1700 = vadd.f32 0.0, %v1699
    %v1701 = vpop.f32.mrb[0].mxu0
    %1702 = vmatprep.mubr.f32.mxu0 0.0
    %1703 = vmatmul.mubr.f32.gmra.mrb[0].mxu0 %v1625
    %v1704 = vpop.f32.mrb[0].mxu0
    %v1705 = vadd.f32 0.0, %v1704
    %v1706 = vpop.f32.mrb[0].mxu0
    %1707 = vdwg.mxu0
    %v1709 = vsel %vm576, %v312, 0
    %v1712 = vsel %vm576, %v313, 0
    %v1715 = vsel %vm576, %v570, 0
    %v1718 = vsel %vm576, %v571, 0
    %1720 = vmatprep.subr.mxu0 0.0
    %1721 = vmatpush1.xpose.msra.mxu0 %v1715
    %1722 = vmatprep.subr.mxu0 0.0
    %1723 = vmatpush1.xpose.msra.mxu0 %v1718
    %1724 = vmatprep.subr.mxu0 0.0
    %1725 = vmatpush1.xpose.msra.mxu0 0.0
    %1726 = vmatprep.subr.mxu0 0.0
    %1727 = vmatpush1.xpose.msra.mxu0 0.0
    %1728 = vmatprep.subr.mxu0 0.0
    %1729 = vmatpush1.xpose.msra.mxu0 0.0
    %1730 = vmatprep.subr.mxu0 0.0
    %1731 = vmatpush1.xpose.msra.mxu0 0.0
    %1732 = vmatprep.subr.mxu0 0.0
    %1733 = vmatpush1.xpose.msra.mxu0 0.0
    %1734 = vmatprep.subr.mxu0 0.0
    %1735 = vmatpush1.xpose.msra.mxu0 0.0
    %1736 = vmatprep.subr.mxu0 0.0
    %1737 = vmatpush1.xpose.msra.mxu0 0.0
    %1738 = vmatprep.subr.mxu0 0.0
    %1739 = vmatpush1.xpose.msra.mxu0 0.0
    %1740 = vmatprep.subr.mxu0 0.0
    %1741 = vmatpush1.xpose.msra.mxu0 0.0
    %1742 = vmatprep.subr.mxu0 0.0
    %1743 = vmatpush1.xpose.msra.mxu0 0.0
    %1744 = vmatprep.subr.mxu0 0.0
    %1745 = vmatpush1.xpose.msra.mxu0 0.0
    %1746 = vmatprep.subr.mxu0 0.0
    %1747 = vmatpush1.xpose.msra.mxu0 0.0
    %1748 = vmatprep.subr.mxu0 0.0
    %1749 = vmatpush1.xpose.msra.mxu0 0.0
    %1750 = vmatprep.subr.mxu0 0.0
    %1751 = vmatpush1.xpose.msra.mxu0 0.0
    %1752 = vmatprep.subr.mxu0 0.0
    %1753 = vmatpush1.xpose.msra.mxu0 0.0
    %1754 = vmatprep.subr.mxu0 0.0
    %1755 = vmatpush1.xpose.msra.mxu0 0.0
    %1756 = vmatprep.subr.mxu0 0.0
    %1757 = vmatpush1.xpose.msra.mxu0 0.0
    %1758 = vmatprep.subr.mxu0 0.0
    %1759 = vmatpush1.xpose.msra.mxu0 0.0
    %1760 = vmatprep.subr.mxu0 0.0
    %1761 = vmatpush1.xpose.msra.mxu0 0.0
    %1762 = vmatprep.subr.mxu0 0.0
    %1763 = vmatpush1.xpose.msra.mxu0 0.0
    %1764 = vmatprep.subr.mxu0 0.0
    %1765 = vmatpush1.xpose.msra.mxu0 0.0
    %1766 = vmatprep.subr.mxu0 0.0
    %1767 = vmatpush1.xpose.msra.mxu0 0.0
    %1768 = vmatprep.subr.mxu0 0.0
    %1769 = vmatpush1.xpose.msra.mxu0 0.0
    %1770 = vmatprep.subr.mxu0 0.0
    %1771 = vmatpush1.xpose.msra.mxu0 0.0
    %1772 = vmatprep.subr.mxu0 0.0
    %1773 = vmatpush1.xpose.msra.mxu0 0.0
    %1774 = vmatprep.subr.mxu0 0.0
    %1775 = vmatpush1.xpose.msra.mxu0 0.0
    %1776 = vmatprep.subr.mxu0 0.0
    %1777 = vmatpush1.xpose.msra.mxu0 0.0
    %1778 = vmatprep.subr.mxu0 0.0
    %1779 = vmatpush1.xpose.msra.mxu0 0.0
    %1780 = vmatprep.subr.mxu0 0.0
    %1781 = vmatpush1.xpose.msra.mxu0 0.0
    %1782 = vmatprep.subr.mxu0 0.0
    %1783 = vmatpush1.xpose.msra.mxu0 0.0
    %1784 = vmatprep.mubr.f32.mxu0 0.0
    %1785 = vmatmul.mubr.f32.gmra.mrb[0].mxu0 %v1709
    %v1786 = vpop.f32.mrb[0].mxu0
    %v1787 = vadd.f32 0.0, %v1786
    %v1788 = vpop.f32.mrb[0].mxu0
    %1789 = vmatprep.mubr.f32.mxu0 0.0
    %1790 = vmatmul.mubr.f32.gmra.mrb[0].mxu0 %v1712
    %v1791 = vpop.f32.mrb[0].mxu0
    %v1792 = vadd.f32 0.0, %v1791
    %v1793 = vpop.f32.mrb[0].mxu0
    %1794 = vdwg.mxu0
    %v1796 = vsel %vm576, %v314, 0
    %v1799 = vsel %vm576, %v315, 0
    %v1802 = vsel %vm576, %v572, 0
    %v1805 = vsel %vm576, %v573, 0
    %1807 = vmatprep.subr.mxu0 0.0
    %1808 = vmatpush1.xpose.msra.mxu0 %v1802
    %1809 = vmatprep.subr.mxu0 0.0
    %1810 = vmatpush1.xpose.msra.mxu0 %v1805
    %1811 = vmatprep.subr.mxu0 0.0
    %1812 = vmatpush1.xpose.msra.mxu0 0.0
    %1813 = vmatprep.subr.mxu0 0.0
    %1814 = vmatpush1.xpose.msra.mxu0 0.0
    %1815 = vmatprep.subr.mxu0 0.0
    %1816 = vmatpush1.xpose.msra.mxu0 0.0
    %1817 = vmatprep.subr.mxu0 0.0
    %1818 = vmatpush1.xpose.msra.mxu0 0.0
    %1819 = vmatprep.subr.mxu0 0.0
    %1820 = vmatpush1.xpose.msra.mxu0 0.0
    %1821 = vmatprep.subr.mxu0 0.0
    %1822 = vmatpush1.xpose.msra.mxu0 0.0
    %1823 = vmatprep.subr.mxu0 0.0
    %1824 = vmatpush1.xpose.msra.mxu0 0.0
    %1825 = vmatprep.subr.mxu0 0.0
    %1826 = vmatpush1.xpose.msra.mxu0 0.0
    %1827 = vmatprep.subr.mxu0 0.0
    %1828 = vmatpush1.xpose.msra.mxu0 0.0
    %1829 = vmatprep.subr.mxu0 0.0
    %1830 = vmatpush1.xpose.msra.mxu0 0.0
    %1831 = vmatprep.subr.mxu0 0.0
    %1832 = vmatpush1.xpose.msra.mxu0 0.0
    %1833 = vmatprep.subr.mxu0 0.0
    %1834 = vmatpush1.xpose.msra.mxu0 0.0
    %1835 = vmatprep.subr.mxu0 0.0
    %1836 = vmatpush1.xpose.msra.mxu0 0.0
    %1837 = vmatprep.subr.mxu0 0.0
    %1838 = vmatpush1.xpose.msra.mxu0 0.0
    %1839 = vmatprep.subr.mxu0 0.0
    %1840 = vmatpush1.xpose.msra.mxu0 0.0
    %1841 = vmatprep.subr.mxu0 0.0
    %1842 = vmatpush1.xpose.msra.mxu0 0.0
    %1843 = vmatprep.subr.mxu0 0.0
    %1844 = vmatpush1.xpose.msra.mxu0 0.0
    %1845 = vmatprep.subr.mxu0 0.0
    %1846 = vmatpush1.xpose.msra.mxu0 0.0
    %1847 = vmatprep.subr.mxu0 0.0
    %1848 = vmatpush1.xpose.msra.mxu0 0.0
    %1849 = vmatprep.subr.mxu0 0.0
    %1850 = vmatpush1.xpose.msra.mxu0 0.0
    %1851 = vmatprep.subr.mxu0 0.0
    %1852 = vmatpush1.xpose.msra.mxu0 0.0
    %1853 = vmatprep.subr.mxu0 0.0
    %1854 = vmatpush1.xpose.msra.mxu0 0.0
    %1855 = vmatprep.subr.mxu0 0.0
    %1856 = vmatpush1.xpose.msra.mxu0 0.0
    %1857 = vmatprep.subr.mxu0 0.0
    %1858 = vmatpush1.xpose.msra.mxu0 0.0
    %1859 = vmatprep.subr.mxu0 0.0
    %1860 = vmatpush1.xpose.msra.mxu0 0.0
    %1861 = vmatprep.subr.mxu0 0.0
    %1862 = vmatpush1.xpose.msra.mxu0 0.0
    %1863 = vmatprep.subr.mxu0 0.0
    %1864 = vmatpush1.xpose.msra.mxu0 0.0
    %1865 = vmatprep.subr.mxu0 0.0
    %1866 = vmatpush1.xpose.msra.mxu0 0.0
    %1867 = vmatprep.subr.mxu0 0.0
    %1868 = vmatpush1.xpose.msra.mxu0 0.0
    %1869 = vmatprep.subr.mxu0 0.0
    %1870 = vmatpush1.xpose.msra.mxu0 0.0
    %1871 = vmatprep.mubr.f32.mxu0 0.0
    %1872 = vmatmul.mubr.f32.gmra.mrb[0].mxu0 %v1796
    %v1873 = vpop.f32.mrb[0].mxu0
    %v1874 = vadd.f32 0.0, %v1873
    %v1875 = vpop.f32.mrb[0].mxu0
    %1876 = vmatprep.mubr.f32.mxu0 0.0
    %1877 = vmatmul.mubr.f32.gmra.mrb[0].mxu0 %v1799
    %v1878 = vpop.f32.mrb[0].mxu0
    %v1879 = vadd.f32 0.0, %v1878
    %v1880 = vpop.f32.mrb[0].mxu0
    %1881 = vdwg.mxu0
    %v1883 = vsel %vm576, %v316, 0
    %v1886 = vsel %vm576, %v317, 0
    %v1889 = vsel %vm576, %v574, 0
    %v1892 = vsel %vm576, %v575, 0
    %1894 = vmatprep.subr.mxu0 0.0
    %1895 = vmatpush1.xpose.msra.mxu0 %v1889
    %1896 = vmatprep.subr.mxu0 0.0
    %1897 = vmatpush1.xpose.msra.mxu0 %v1892
    %1898 = vmatprep.subr.mxu0 0.0
    %1899 = vmatpush1.xpose.msra.mxu0 0.0
    %1900 = vmatprep.subr.mxu0 0.0
    %1901 = vmatpush1.xpose.msra.mxu0 0.0
    %1902 = vmatprep.subr.mxu0 0.0
    %1903 = vmatpush1.xpose.msra.mxu0 0.0
    %1904 = vmatprep.subr.mxu0 0.0
    %1905 = vmatpush1.xpose.msra.mxu0 0.0
    %1906 = vmatprep.subr.mxu0 0.0
    %1907 = vmatpush1.xpose.msra.mxu0 0.0
    %1908 = vmatprep.subr.mxu0 0.0
    %1909 = vmatpush1.xpose.msra.mxu0 0.0
    %1910 = vmatprep.subr.mxu0 0.0
    %1911 = vmatpush1.xpose.msra.mxu0 0.0
    %1912 = vmatprep.subr.mxu0 0.0
    %1913 = vmatpush1.xpose.msra.mxu0 0.0
    %1914 = vmatprep.subr.mxu0 0.0
    %1915 = vmatpush1.xpose.msra.mxu0 0.0
    %1916 = vmatprep.subr.mxu0 0.0
    %1917 = vmatpush1.xpose.msra.mxu0 0.0
    %1918 = vmatprep.subr.mxu0 0.0
    %1919 = vmatpush1.xpose.msra.mxu0 0.0
    %1920 = vmatprep.subr.mxu0 0.0
    %1921 = vmatpush1.xpose.msra.mxu0 0.0
    %1922 = vmatprep.subr.mxu0 0.0
    %1923 = vmatpush1.xpose.msra.mxu0 0.0
    %1924 = vmatprep.subr.mxu0 0.0
    %1925 = vmatpush1.xpose.msra.mxu0 0.0
    %1926 = vmatprep.subr.mxu0 0.0
    %1927 = vmatpush1.xpose.msra.mxu0 0.0
    %1928 = vmatprep.subr.mxu0 0.0
    %1929 = vmatpush1.xpose.msra.mxu0 0.0
    %1930 = vmatprep.subr.mxu0 0.0
    %1931 = vmatpush1.xpose.msra.mxu0 0.0
    %1932 = vmatprep.subr.mxu0 0.0
    %1933 = vmatpush1.xpose.msra.mxu0 0.0
    %1934 = vmatprep.subr.mxu0 0.0
    %1935 = vmatpush1.xpose.msra.mxu0 0.0
    %1936 = vmatprep.subr.mxu0 0.0
    %1937 = vmatpush1.xpose.msra.mxu0 0.0
    %1938 = vmatprep.subr.mxu0 0.0
    %1939 = vmatpush1.xpose.msra.mxu0 0.0
    %1940 = vmatprep.subr.mxu0 0.0
    %1941 = vmatpush1.xpose.msra.mxu0 0.0
    %1942 = vmatprep.subr.mxu0 0.0
    %1943 = vmatpush1.xpose.msra.mxu0 0.0
    %1944 = vmatprep.subr.mxu0 0.0
    %1945 = vmatpush1.xpose.msra.mxu0 0.0
    %1946 = vmatprep.subr.mxu0 0.0
    %1947 = vmatpush1.xpose.msra.mxu0 0.0
    %1948 = vmatprep.subr.mxu0 0.0
    %1949 = vmatpush1.xpose.msra.mxu0 0.0
    %1950 = vmatprep.subr.mxu0 0.0
    %1951 = vmatpush1.xpose.msra.mxu0 0.0
    %1952 = vmatprep.subr.mxu0 0.0
    %1953 = vmatpush1.xpose.msra.mxu0 0.0
    %1954 = vmatprep.subr.mxu0 0.0
    %1955 = vmatpush1.xpose.msra.mxu0 0.0
    %1956 = vmatprep.subr.mxu0 0.0
    %1957 = vmatpush1.xpose.msra.mxu0 0.0
    %1958 = vmatprep.mubr.f32.mxu0 0.0
    %1959 = vmatmul.mubr.f32.gmra.mrb[0].mxu0 %v1883
    %v1960 = vpop.f32.mrb[0].mxu0
    %v1961 = vadd.f32 0.0, %v1960
    %v1962 = vpop.f32.mrb[0].mxu0
    %1963 = vmatprep.mubr.f32.mxu0 0.0
    %1964 = vmatmul.mubr.f32.gmra.mrb[0].mxu0 %v1886
    %v1965 = vpop.f32.mrb[0].mxu0
    %v1966 = vadd.f32 0.0, %v1965
    %v1967 = vpop.f32.mrb[0].mxu0
    %1968 = vdwg.mxu0
    %v1969 = vsel %vm576, %v286, 0.0
    %1970 = vadd.xlane.f32.xlu0 %v1969
    %v1971 = vpop.xlane.xlu0 %1970
    %v1972 = vsel %vm576, %v287, 0.0
    %1973 = vadd.xlane.f32.xlu0 %v1972
    %v1974 = vpop.xlane.xlu0 %1973
    %v1975 = vsel %vm576, %v288, 0.0
    %1976 = vadd.xlane.f32.xlu0 %v1975
    %v1977 = vpop.xlane.xlu0 %1976
    %v1978 = vsel %vm576, %v289, 0.0
    %1979 = vadd.xlane.f32.xlu0 %v1978
    %v1980 = vpop.xlane.xlu0 %1979
    %v1981 = vsel %vm576, %v290, 0.0
    %1982 = vadd.xlane.f32.xlu0 %v1981
    %v1983 = vpop.xlane.xlu0 %1982
    %v1984 = vsel %vm576, %v291, 0.0
    %1985 = vadd.xlane.f32.xlu0 %v1984
    %v1986 = vpop.xlane.xlu0 %1985
    %v1987 = vsel %vm576, %v292, 0.0
    %1988 = vadd.xlane.f32.xlu0 %v1987
    %v1989 = vpop.xlane.xlu0 %1988
    %v1990 = vsel %vm576, %v293, 0.0
    %1991 = vadd.xlane.f32.xlu0 %v1990
    %v1992 = vpop.xlane.xlu0 %1991
    %v1993 = vsel %vm576, %v294, 0.0
    %1994 = vadd.xlane.f32.xlu0 %v1993
    %v1995 = vpop.xlane.xlu0 %1994
    %v1996 = vsel %vm576, %v295, 0.0
    %1997 = vadd.xlane.f32.xlu0 %v1996
    %v1998 = vpop.xlane.xlu0 %1997
    %v1999 = vsel %vm576, %v296, 0.0
    %2000 = vadd.xlane.f32.xlu0 %v1999
    %v2001 = vpop.xlane.xlu0 %2000
    %v2002 = vsel %vm576, %v297, 0.0
    %2003 = vadd.xlane.f32.xlu0 %v2002
    %v2004 = vpop.xlane.xlu0 %2003
    %v2005 = vsel %vm576, %v298, 0.0
    %2006 = vadd.xlane.f32.xlu0 %v2005
    %v2007 = vpop.xlane.xlu0 %2006
    %v2008 = vsel %vm576, %v299, 0.0
    %2009 = vadd.xlane.f32.xlu0 %v2008
    %v2010 = vpop.xlane.xlu0 %2009
    %v2011 = vsel %vm576, %v300, 0.0
    %2012 = vadd.xlane.f32.xlu0 %v2011
    %v2013 = vpop.xlane.xlu0 %2012
    %v2014 = vsel %vm576, %v301, 0.0
    %2015 = vadd.xlane.f32.xlu0 %v2014
    %v2016 = vpop.xlane.xlu0 %2015
    %v2017 = vsel %vm576, %v302, 0.0
    %2018 = vadd.xlane.f32.xlu0 %v2017
    %v2019 = vpop.xlane.xlu0 %2018
    %v2020 = vsel %vm576, %v303, 0.0
    %2021 = vadd.xlane.f32.xlu0 %v2020
    %v2022 = vpop.xlane.xlu0 %2021
    %v2023 = vsel %vm576, %v304, 0.0
    %2024 = vadd.xlane.f32.xlu0 %v2023
    %v2025 = vpop.xlane.xlu0 %2024
    %v2026 = vsel %vm576, %v305, 0.0
    %2027 = vadd.xlane.f32.xlu0 %v2026
    %v2028 = vpop.xlane.xlu0 %2027
    %v2029 = vsel %vm576, %v306, 0.0
    %2030 = vadd.xlane.f32.xlu0 %v2029
    %v2031 = vpop.xlane.xlu0 %2030
    %v2032 = vsel %vm576, %v307, 0.0
    %2033 = vadd.xlane.f32.xlu0 %v2032
    %v2034 = vpop.xlane.xlu0 %2033
    %v2035 = vsel %vm576, %v308, 0.0
    %2036 = vadd.xlane.f32.xlu0 %v2035
    %v2037 = vpop.xlane.xlu0 %2036
    %v2038 = vsel %vm576, %v309, 0.0
    %2039 = vadd.xlane.f32.xlu0 %v2038
    %v2040 = vpop.xlane.xlu0 %2039
    %v2041 = vsel %vm576, %v310, 0.0
    %2042 = vadd.xlane.f32.xlu0 %v2041
    %v2043 = vpop.xlane.xlu0 %2042
    %v2044 = vsel %vm576, %v311, 0.0
    %2045 = vadd.xlane.f32.xlu0 %v2044
    %v2046 = vpop.xlane.xlu0 %2045
    %v2047 = vsel %vm576, %v312, 0.0
    %2048 = vadd.xlane.f32.xlu0 %v2047
    %v2049 = vpop.xlane.xlu0 %2048
    %v2050 = vsel %vm576, %v313, 0.0
    %2051 = vadd.xlane.f32.xlu0 %v2050
    %v2052 = vpop.xlane.xlu0 %2051
    %v2053 = vsel %vm576, %v314, 0.0
    %2054 = vadd.xlane.f32.xlu0 %v2053
    %v2055 = vpop.xlane.xlu0 %2054
    %v2056 = vsel %vm576, %v315, 0.0
    %2057 = vadd.xlane.f32.xlu0 %v2056
    %v2058 = vpop.xlane.xlu0 %2057
    %v2059 = vsel %vm576, %v316, 0.0
    %2060 = vadd.xlane.f32.xlu0 %v2059
    %v2061 = vpop.xlane.xlu0 %2060
    %v2062 = vsel %vm576, %v317, 0.0
    %2063 = vadd.xlane.f32.xlu0 %v2062
    %v2064 = vpop.xlane.xlu0 %2063
    %v2065 = vld [vmem:[%s3] sm:$0xff]
    %vm2066 = vcmask 64512
    %v2068 = vsel %vm2066, %v21, 0
    %v2071 = vsel %vm2066, %v22, 0
    %v2074 = vsel %vm2066, %v23, 0
    %v2077 = vsel %vm2066, %v24, 0
    %v2080 = vsel %vm2066, %v25, 0
    %v2083 = vsel %vm2066, %v26, 0
    %v2086 = vsel %vm2066, %v27, 0
    %v2089 = vsel %vm2066, %v28, 0
    %v2092 = vsel %vm2066, %v29, 0
    %v2095 = vsel %vm2066, %v30, 0
    %v2098 = vsel %vm2066, %v31, 0
    %v2101 = vsel %vm2066, %v32, 0
    %v2104 = vsel %vm2066, %v33, 0
    %v2107 = vsel %vm2066, %v34, 0
    %v2110 = vsel %vm2066, %v35, 0
    %v2113 = vsel %vm2066, %v36, 0
    %v2116 = vsel %vm2066, %v37, 0
    %v2119 = vsel %vm2066, %v38, 0
    %v2122 = vsel %vm2066, %v39, 0
    %v2125 = vsel %vm2066, %v40, 0
    %v2128 = vsel %vm2066, %v41, 0
    %v2131 = vsel %vm2066, %v42, 0
    %v2134 = vsel %vm2066, %v43, 0
    %v2137 = vsel %vm2066, %v44, 0
    %v2140 = vsel %vm2066, %v45, 0
    %v2143 = vsel %vm2066, %v46, 0
    %v2146 = vsel %vm2066, %v47, 0
    %v2149 = vsel %vm2066, %v48, 0
    %v2152 = vsel %vm2066, %v49, 0
    %v2155 = vsel %vm2066, %v50, 0
    %v2158 = vsel %vm2066, %v51, 0
    %v2161 = vsel %vm2066, %v52, 0
    %2163 = vmatprep.subr.mxu0 0.0
    %2164 = vmatpush1.msra.mxu0 %v2065
    %2165 = vmatprep.subr.mxu0 0.0
    %2166 = vmatpush1.msra.mxu0 0.0
    %2167 = vmatprep.subr.mxu0 0.0
    %2168 = vmatpush1.msra.mxu0 0.0
    %2169 = vmatprep.subr.mxu0 0.0
    %2170 = vmatpush1.msra.mxu0 0.0
    %2171 = vmatprep.subr.mxu0 0.0
    %2172 = vmatpush1.msra.mxu0 0.0
    %2173 = vmatprep.subr.mxu0 0.0
    %2174 = vmatpush1.msra.mxu0 0.0
    %2175 = vmatprep.subr.mxu0 0.0
    %2176 = vmatpush1.msra.mxu0 0.0
    %2177 = vmatprep.subr.mxu0 0.0
    %2178 = vmatpush1.msra.mxu0 0.0
    %2179 = vmatprep.subr.mxu0 0.0
    %2180 = vmatpush1.msra.mxu0 0.0
    %2181 = vmatprep.subr.mxu0 0.0
    %2182 = vmatpush1.msra.mxu0 0.0
    %2183 = vmatprep.subr.mxu0 0.0
    %2184 = vmatpush1.msra.mxu0 0.0
    %2185 = vmatprep.subr.mxu0 0.0
    %2186 = vmatpush1.msra.mxu0 0.0
    %2187 = vmatprep.subr.mxu0 0.0
    %2188 = vmatpush1.msra.mxu0 0.0
    %2189 = vmatprep.subr.mxu0 0.0
    %2190 = vmatpush1.msra.mxu0 0.0
    %2191 = vmatprep.subr.mxu0 0.0
    %2192 = vmatpush1.msra.mxu0 0.0
    %2193 = vmatprep.subr.mxu0 0.0
    %2194 = vmatpush1.msra.mxu0 0.0
    %2195 = vmatprep.subr.mxu0 0.0
    %2196 = vmatpush1.msra.mxu0 0.0
    %2197 = vmatprep.subr.mxu0 0.0
    %2198 = vmatpush1.msra.mxu0 0.0
    %2199 = vmatprep.subr.mxu0 0.0
    %2200 = vmatpush1.msra.mxu0 0.0
    %2201 = vmatprep.subr.mxu0 0.0
    %2202 = vmatpush1.msra.mxu0 0.0
    %2203 = vmatprep.subr.mxu0 0.0
    %2204 = vmatpush1.msra.mxu0 0.0
    %2205 = vmatprep.subr.mxu0 0.0
    %2206 = vmatpush1.msra.mxu0 0.0
    %2207 = vmatprep.subr.mxu0 0.0
    %2208 = vmatpush1.msra.mxu0 0.0
    %2209 = vmatprep.subr.mxu0 0.0
    %2210 = vmatpush1.msra.mxu0 0.0
    %2211 = vmatprep.subr.mxu0 0.0
    %2212 = vmatpush1.msra.mxu0 0.0
    %2213 = vmatprep.subr.mxu0 0.0
    %2214 = vmatpush1.msra.mxu0 0.0
    %2215 = vmatprep.subr.mxu0 0.0
    %2216 = vmatpush1.msra.mxu0 0.0
    %2217 = vmatprep.subr.mxu0 0.0
    %2218 = vmatpush1.msra.mxu0 0.0
    %2219 = vmatprep.subr.mxu0 0.0
    %2220 = vmatpush1.msra.mxu0 0.0
    %2221 = vmatprep.subr.mxu0 0.0
    %2222 = vmatpush1.msra.mxu0 0.0
    %2223 = vmatprep.subr.mxu0 0.0
    %2224 = vmatpush1.msra.mxu0 0.0
    %2225 = vmatprep.subr.mxu0 0.0
    %2226 = vmatpush1.msra.mxu0 0.0
    %2227 = vmatprep.mubr.f32.mxu0 0.0
    %2228 = vmatmul.mubr.f32.gmra.mrb[0].mxu0 %v2068
    %v2229 = vpop.f32.mrb[0].mxu0
    %v2230 = vadd.f32 0.0, %v2229
    %v2231 = vpop.f32.mrb[0].mxu0
    %2232 = vmatprep.mubr.f32.mxu0 0.0
    %2233 = vmatmul.mubr.f32.gmra.mrb[0].mxu0 %v2071
    %v2234 = vpop.f32.mrb[0].mxu0
    %v2235 = vadd.f32 0.0, %v2234
    %v2236 = vpop.f32.mrb[0].mxu0
    %2237 = vmatprep.mubr.f32.mxu0 0.0
    %2238 = vmatmul.mubr.f32.gmra.mrb[0].mxu0 %v2074
    %v2239 = vpop.f32.mrb[0].mxu0
    %v2240 = vadd.f32 0.0, %v2239
    %v2241 = vpop.f32.mrb[0].mxu0
    %2242 = vmatprep.mubr.f32.mxu0 0.0
    %2243 = vmatmul.mubr.f32.gmra.mrb[0].mxu0 %v2077
    %v2244 = vpop.f32.mrb[0].mxu0
    %v2245 = vadd.f32 0.0, %v2244
    %v2246 = vpop.f32.mrb[0].mxu0
    %2247 = vmatprep.mubr.f32.mxu0 0.0
    %2248 = vmatmul.mubr.f32.gmra.mrb[0].mxu0 %v2080
    %v2249 = vpop.f32.mrb[0].mxu0
    %v2250 = vadd.f32 0.0, %v2249
    %v2251 = vpop.f32.mrb[0].mxu0
    %2252 = vmatprep.mubr.f32.mxu0 0.0
    %2253 = vmatmul.mubr.f32.gmra.mrb[0].mxu0 %v2083
    %v2254 = vpop.f32.mrb[0].mxu0
    %v2255 = vadd.f32 0.0, %v2254
    %v2256 = vpop.f32.mrb[0].mxu0
    %2257 = vmatprep.mubr.f32.mxu0 0.0
    %2258 = vmatmul.mubr.f32.gmra.mrb[0].mxu0 %v2086
    %v2259 = vpop.f32.mrb[0].mxu0
    %v2260 = vadd.f32 0.0, %v2259
    %v2261 = vpop.f32.mrb[0].mxu0
    %2262 = vmatprep.mubr.f32.mxu0 0.0
    %2263 = vmatmul.mubr.f32.gmra.mrb[0].mxu0 %v2089
    %v2264 = vpop.f32.mrb[0].mxu0
    %v2265 = vadd.f32 0.0, %v2264
    %v2266 = vpop.f32.mrb[0].mxu0
    %2267 = vmatprep.mubr.f32.mxu0 0.0
    %2268 = vmatmul.mubr.f32.gmra.mrb[0].mxu0 %v2092
    %v2269 = vpop.f32.mrb[0].mxu0
    %v2270 = vadd.f32 0.0, %v2269
    %v2271 = vpop.f32.mrb[0].mxu0
    %2272 = vmatprep.mubr.f32.mxu0 0.0
    %2273 = vmatmul.mubr.f32.gmra.mrb[0].mxu0 %v2095
    %v2274 = vpop.f32.mrb[0].mxu0
    %v2275 = vadd.f32 0.0, %v2274
    %v2276 = vpop.f32.mrb[0].mxu0
    %2277 = vmatprep.mubr.f32.mxu0 0.0
    %2278 = vmatmul.mubr.f32.gmra.mrb[0].mxu0 %v2098
    %v2279 = vpop.f32.mrb[0].mxu0
    %v2280 = vadd.f32 0.0, %v2279
    %v2281 = vpop.f32.mrb[0].mxu0
    %2282 = vmatprep.mubr.f32.mxu0 0.0
    %2283 = vmatmul.mubr.f32.gmra.mrb[0].mxu0 %v2101
    %v2284 = vpop.f32.mrb[0].mxu0
    %v2285 = vadd.f32 0.0, %v2284
    %v2286 = vpop.f32.mrb[0].mxu0
    %2287 = vmatprep.mubr.f32.mxu0 0.0
    %2288 = vmatmul.mubr.f32.gmra.mrb[0].mxu0 %v2104
    %v2289 = vpop.f32.mrb[0].mxu0
    %v2290 = vadd.f32 0.0, %v2289
    %v2291 = vpop.f32.mrb[0].mxu0
    %2292 = vmatprep.mubr.f32.mxu0 0.0
    %2293 = vmatmul.mubr.f32.gmra.mrb[0].mxu0 %v2107
    %v2294 = vpop.f32.mrb[0].mxu0
    %v2295 = vadd.f32 0.0, %v2294
    %v2296 = vpop.f32.mrb[0].mxu0
    %2297 = vmatprep.mubr.f32.mxu0 0.0
    %2298 = vmatmul.mubr.f32.gmra.mrb[0].mxu0 %v2110
    %v2299 = vpop.f32.mrb[0].mxu0
    %v2300 = vadd.f32 0.0, %v2299
    %v2301 = vpop.f32.mrb[0].mxu0
    %2302 = vmatprep.mubr.f32.mxu0 0.0
    %2303 = vmatmul.mubr.f32.gmra.mrb[0].mxu0 %v2113
    %v2304 = vpop.f32.mrb[0].mxu0
    %v2305 = vadd.f32 0.0, %v2304
    %v2306 = vpop.f32.mrb[0].mxu0
    %2307 = vmatprep.mubr.f32.mxu0 0.0
    %2308 = vmatmul.mubr.f32.gmra.mrb[0].mxu0 %v2116
    %v2309 = vpop.f32.mrb[0].mxu0
    %v2310 = vadd.f32 0.0, %v2309
    %v2311 = vpop.f32.mrb[0].mxu0
    %2312 = vmatprep.mubr.f32.mxu0 0.0
    %2313 = vmatmul.mubr.f32.gmra.mrb[0].mxu0 %v2119
    %v2314 = vpop.f32.mrb[0].mxu0
    %v2315 = vadd.f32 0.0, %v2314
    %v2316 = vpop.f32.mrb[0].mxu0
    %2317 = vmatprep.mubr.f32.mxu0 0.0
    %2318 = vmatmul.mubr.f32.gmra.mrb[0].mxu0 %v2122
    %v2319 = vpop.f32.mrb[0].mxu0
    %v2320 = vadd.f32 0.0, %v2319
    %v2321 = vpop.f32.mrb[0].mxu0
    %2322 = vmatprep.mubr.f32.mxu0 0.0
    %2323 = vmatmul.mubr.f32.gmra.mrb[0].mxu0 %v2125
    %v2324 = vpop.f32.mrb[0].mxu0
    %v2325 = vadd.f32 0.0, %v2324
    %v2326 = vpop.f32.mrb[0].mxu0
    %2327 = vmatprep.mubr.f32.mxu0 0.0
    %2328 = vmatmul.mubr.f32.gmra.mrb[0].mxu0 %v2128
    %v2329 = vpop.f32.mrb[0].mxu0
    %v2330 = vadd.f32 0.0, %v2329
    %v2331 = vpop.f32.mrb[0].mxu0
    %2332 = vmatprep.mubr.f32.mxu0 0.0
    %2333 = vmatmul.mubr.f32.gmra.mrb[0].mxu0 %v2131
    %v2334 = vpop.f32.mrb[0].mxu0
    %v2335 = vadd.f32 0.0, %v2334
    %v2336 = vpop.f32.mrb[0].mxu0
    %2337 = vmatprep.mubr.f32.mxu0 0.0
    %2338 = vmatmul.mubr.f32.gmra.mrb[0].mxu0 %v2134
    %v2339 = vpop.f32.mrb[0].mxu0
    %v2340 = vadd.f32 0.0, %v2339
    %v2341 = vpop.f32.mrb[0].mxu0
    %2342 = vmatprep.mubr.f32.mxu0 0.0
    %2343 = vmatmul.mubr.f32.gmra.mrb[0].mxu0 %v2137
    %v2344 = vpop.f32.mrb[0].mxu0
    %v2345 = vadd.f32 0.0, %v2344
    %v2346 = vpop.f32.mrb[0].mxu0
    %2347 = vmatprep.mubr.f32.mxu0 0.0
    %2348 = vmatmul.mubr.f32.gmra.mrb[0].mxu0 %v2140
    %v2349 = vpop.f32.mrb[0].mxu0
    %v2350 = vadd.f32 0.0, %v2349
    %v2351 = vpop.f32.mrb[0].mxu0
    %2352 = vmatprep.mubr.f32.mxu0 0.0
    %2353 = vmatmul.mubr.f32.gmra.mrb[0].mxu0 %v2143
    %v2354 = vpop.f32.mrb[0].mxu0
    %v2355 = vadd.f32 0.0, %v2354
    %v2356 = vpop.f32.mrb[0].mxu0
    %2357 = vmatprep.mubr.f32.mxu0 0.0
    %2358 = vmatmul.mubr.f32.gmra.mrb[0].mxu0 %v2146
    %v2359 = vpop.f32.mrb[0].mxu0
    %v2360 = vadd.f32 0.0, %v2359
    %v2361 = vpop.f32.mrb[0].mxu0
    %2362 = vmatprep.mubr.f32.mxu0 0.0
    %2363 = vmatmul.mubr.f32.gmra.mrb[0].mxu0 %v2149
    %v2364 = vpop.f32.mrb[0].mxu0
    %v2365 = vadd.f32 0.0, %v2364
    %v2366 = vpop.f32.mrb[0].mxu0
    %2367 = vmatprep.mubr.f32.mxu0 0.0
    %2368 = vmatmul.mubr.f32.gmra.mrb[0].mxu0 %v2152
    %v2369 = vpop.f32.mrb[0].mxu0
    %v2370 = vadd.f32 0.0, %v2369
    %v2371 = vpop.f32.mrb[0].mxu0
    %2372 = vmatprep.mubr.f32.mxu0 0.0
    %2373 = vmatmul.mubr.f32.gmra.mrb[0].mxu0 %v2155
    %v2374 = vpop.f32.mrb[0].mxu0
    %v2375 = vadd.f32 0.0, %v2374
    %v2376 = vpop.f32.mrb[0].mxu0
    %2377 = vmatprep.mubr.f32.mxu0 0.0
    %2378 = vmatmul.mubr.f32.gmra.mrb[0].mxu0 %v2158
    %v2379 = vpop.f32.mrb[0].mxu0
    %v2380 = vadd.f32 0.0, %v2379
    %v2381 = vpop.f32.mrb[0].mxu0
    %2382 = vmatprep.mubr.f32.mxu0 0.0
    %2383 = vmatmul.mubr.f32.gmra.mrb[0].mxu0 %v2161
    %v2384 = vpop.f32.mrb[0].mxu0
    %v2385 = vadd.f32 0.0, %v2384
    %v2386 = vpop.f32.mrb[0].mxu0
    %2387 = vdwg.mxu0
    %v2388 = vld [vmem:[%s4] sm:$0x1]
    %v2390 = vlaneseq
    %v2391 = vshrl.u32 %v2390, 7
    %v2392 = vsub.s32 0, %v2391
    %v2393 = vrot.slane %v2388, %v2392
    %v2395 = vadd.f32 %v2230, %v2393
    %v2396 = vadd.f32 %v2235, %v2393
    %v2397 = vadd.f32 %v2240, %v2393
    %v2398 = vadd.f32 %v2245, %v2393
    %v2399 = vadd.f32 %v2250, %v2393
    %v2400 = vadd.f32 %v2255, %v2393
    %v2401 = vadd.f32 %v2260, %v2393
    %v2402 = vadd.f32 %v2265, %v2393
    %v2403 = vadd.f32 %v2270, %v2393
    %v2404 = vadd.f32 %v2275, %v2393
    %v2405 = vadd.f32 %v2280, %v2393
    %v2406 = vadd.f32 %v2285, %v2393
    %v2407 = vadd.f32 %v2290, %v2393
    %v2408 = vadd.f32 %v2295, %v2393
    %v2409 = vadd.f32 %v2300, %v2393
    %v2410 = vadd.f32 %v2305, %v2393
    %v2411 = vadd.f32 %v2310, %v2393
    %v2412 = vadd.f32 %v2315, %v2393
    %v2413 = vadd.f32 %v2320, %v2393
    %v2414 = vadd.f32 %v2325, %v2393
    %v2415 = vadd.f32 %v2330, %v2393
    %v2416 = vadd.f32 %v2335, %v2393
    %v2417 = vadd.f32 %v2340, %v2393
    %v2418 = vadd.f32 %v2345, %v2393
    %v2419 = vadd.f32 %v2350, %v2393
    %v2420 = vadd.f32 %v2355, %v2393
    %v2421 = vadd.f32 %v2360, %v2393
    %v2422 = vadd.f32 %v2365, %v2393
    %v2423 = vadd.f32 %v2370, %v2393
    %v2424 = vadd.f32 %v2375, %v2393
    %v2425 = vadd.f32 %v2380, %v2393
    %v2426 = vadd.f32 %v2385, %v2393
    %v2427 = vmul.f32 %v1971, %v2395
    %v2428 = vmul.f32 %v1974, %v2396
    %v2429 = vmul.f32 %v1977, %v2397
    %v2430 = vmul.f32 %v1980, %v2398
    %v2431 = vmul.f32 %v1983, %v2399
    %v2432 = vmul.f32 %v1986, %v2400
    %v2433 = vmul.f32 %v1989, %v2401
    %v2434 = vmul.f32 %v1992, %v2402
    %v2435 = vmul.f32 %v1995, %v2403
    %v2436 = vmul.f32 %v1998, %v2404
    %v2437 = vmul.f32 %v2001, %v2405
    %v2438 = vmul.f32 %v2004, %v2406
    %v2439 = vmul.f32 %v2007, %v2407
    %v2440 = vmul.f32 %v2010, %v2408
    %v2441 = vmul.f32 %v2013, %v2409
    %v2442 = vmul.f32 %v2016, %v2410
    %v2443 = vmul.f32 %v2019, %v2411
    %v2444 = vmul.f32 %v2022, %v2412
    %v2445 = vmul.f32 %v2025, %v2413
    %v2446 = vmul.f32 %v2028, %v2414
    %v2447 = vmul.f32 %v2031, %v2415
    %v2448 = vmul.f32 %v2034, %v2416
    %v2449 = vmul.f32 %v2037, %v2417
    %v2450 = vmul.f32 %v2040, %v2418
    %v2451 = vmul.f32 %v2043, %v2419
    %v2452 = vmul.f32 %v2046, %v2420
    %v2453 = vmul.f32 %v2049, %v2421
    %v2454 = vmul.f32 %v2052, %v2422
    %v2455 = vmul.f32 %v2055, %v2423
    %v2456 = vmul.f32 %v2058, %v2424
    %v2457 = vmul.f32 %v2061, %v2425
    %v2458 = vmul.f32 %v2064, %v2426
    %2461 = vrot.lane.b32.xlu0 %v2230, 104
    %v2462 = vpop.permute.xlu0 %2461
    %2463 = vrot.lane.b32.xlu0 %v2235, 104
    %v2464 = vpop.permute.xlu0 %2463
    %vm2467 = vcmask 130048
    %v2469 = vsel %vm2467, %v656, 0
    %v2472 = vsel %vm2467, %v661, 0
    %2474 = vmatprep.subr.mxu0 0.0
    %2475 = vmatpush1.msra.mxu0 %v2462
    %2476 = vmatprep.subr.mxu0 0.0
    %2477 = vmatpush1.msra.mxu0 %v2464
    %2478 = vmatprep.subr.mxu0 0.0
    %2479 = vmatpush1.msra.mxu0 0.0
    %2480 = vmatprep.subr.mxu0 0.0
    %2481 = vmatpush1.msra.mxu0 0.0
    %2482 = vmatprep.subr.mxu0 0.0
    %2483 = vmatpush1.msra.mxu0 0.0
    %2484 = vmatprep.subr.mxu0 0.0
    %2485 = vmatpush1.msra.mxu0 0.0
    %2486 = vmatprep.subr.mxu0 0.0
    %2487 = vmatpush1.msra.mxu0 0.0
    %2488 = vmatprep.subr.mxu0 0.0
    %2489 = vmatpush1.msra.mxu0 0.0
    %2490 = vmatprep.subr.mxu0 0.0
    %2491 = vmatpush1.msra.mxu0 0.0
    %2492 = vmatprep.subr.mxu0 0.0
    %2493 = vmatpush1.msra.mxu0 0.0
    %2494 = vmatprep.subr.mxu0 0.0
    %2495 = vmatpush1.msra.mxu0 0.0
    %2496 = vmatprep.subr.mxu0 0.0
    %2497 = vmatpush1.msra.mxu0 0.0
    %2498 = vmatprep.subr.mxu0 0.0
    %2499 = vmatpush1.msra.mxu0 0.0
    %2500 = vmatprep.subr.mxu0 0.0
    %2501 = vmatpush1.msra.mxu0 0.0
    %2502 = vmatprep.subr.mxu0 0.0
    %2503 = vmatpush1.msra.mxu0 0.0
    %2504 = vmatprep.subr.mxu0 0.0
    %2505 = vmatpush1.msra.mxu0 0.0
    %2506 = vmatprep.subr.mxu0 0.0
    %2507 = vmatpush1.msra.mxu0 0.0
    %2508 = vmatprep.subr.mxu0 0.0
    %2509 = vmatpush1.msra.mxu0 0.0
    %2510 = vmatprep.subr.mxu0 0.0
    %2511 = vmatpush1.msra.mxu0 0.0
    %2512 = vmatprep.subr.mxu0 0.0
    %2513 = vmatpush1.msra.mxu0 0.0
    %2514 = vmatprep.subr.mxu0 0.0
    %2515 = vmatpush1.msra.mxu0 0.0
    %2516 = vmatprep.subr.mxu0 0.0
    %2517 = vmatpush1.msra.mxu0 0.0
    %2518 = vmatprep.subr.mxu0 0.0
    %2519 = vmatpush1.msra.mxu0 0.0
    %2520 = vmatprep.subr.mxu0 0.0
    %2521 = vmatpush1.msra.mxu0 0.0
    %2522 = vmatprep.subr.mxu0 0.0
    %2523 = vmatpush1.msra.mxu0 0.0
    %2524 = vmatprep.subr.mxu0 0.0
    %2525 = vmatpush1.msra.mxu0 0.0
    %2526 = vmatprep.subr.mxu0 0.0
    %2527 = vmatpush1.msra.mxu0 0.0
    %2528 = vmatprep.subr.mxu0 0.0
    %2529 = vmatpush1.msra.mxu0 0.0
    %2530 = vmatprep.subr.mxu0 0.0
    %2531 = vmatpush1.msra.mxu0 0.0
    %2532 = vmatprep.subr.mxu0 0.0
    %2533 = vmatpush1.msra.mxu0 0.0
    %2534 = vmatprep.subr.mxu0 0.0
    %2535 = vmatpush1.msra.mxu0 0.0
    %2536 = vmatprep.subr.mxu0 0.0
    %2537 = vmatpush1.msra.mxu0 0.0
    %2538 = vmatprep.mubr.f32.mxu0 0.0
    %2539 = vmatmul.mubr.f32.gmra.mrb[0].mxu0 %v2469
    %v2540 = vpop.f32.mrb[0].mxu0
    %v2541 = vadd.f32 0.0, %v2540
    %v2542 = vpop.f32.mrb[0].mxu0
    %2543 = vmatprep.mubr.f32.mxu0 0.0
    %2544 = vmatmul.mubr.f32.gmra.mrb[0].mxu0 %v2472
    %v2545 = vpop.f32.mrb[0].mxu0
    %v2546 = vadd.f32 0.0, %v2545
    %v2547 = vpop.f32.mrb[0].mxu0
    %2548 = vdwg.mxu0
    %2551 = vrot.lane.b32.xlu0 %v2240, 104
    %v2552 = vpop.permute.xlu0 %2551
    %2553 = vrot.lane.b32.xlu0 %v2245, 104
    %v2554 = vpop.permute.xlu0 %2553
    %v2558 = vsel %vm2467, %v743, 0
    %v2561 = vsel %vm2467, %v748, 0
    %2563 = vmatprep.subr.mxu0 0.0
    %2564 = vmatpush1.msra.mxu0 %v2552
    %2565 = vmatprep.subr.mxu0 0.0
    %2566 = vmatpush1.msra.mxu0 %v2554
    %2567 = vmatprep.subr.mxu0 0.0
    %2568 = vmatpush1.msra.mxu0 0.0
    %2569 = vmatprep.subr.mxu0 0.0
    %2570 = vmatpush1.msra.mxu0 0.0
    %2571 = vmatprep.subr.mxu0 0.0
    %2572 = vmatpush1.msra.mxu0 0.0
    %2573 = vmatprep.subr.mxu0 0.0
    %2574 = vmatpush1.msra.mxu0 0.0
    %2575 = vmatprep.subr.mxu0 0.0
    %2576 = vmatpush1.msra.mxu0 0.0
    %2577 = vmatprep.subr.mxu0 0.0
    %2578 = vmatpush1.msra.mxu0 0.0
    %2579 = vmatprep.subr.mxu0 0.0
    %2580 = vmatpush1.msra.mxu0 0.0
    %2581 = vmatprep.subr.mxu0 0.0
    %2582 = vmatpush1.msra.mxu0 0.0
    %2583 = vmatprep.subr.mxu0 0.0
    %2584 = vmatpush1.msra.mxu0 0.0
    %2585 = vmatprep.subr.mxu0 0.0
    %2586 = vmatpush1.msra.mxu0 0.0
    %2587 = vmatprep.subr.mxu0 0.0
    %2588 = vmatpush1.msra.mxu0 0.0
    %2589 = vmatprep.subr.mxu0 0.0
    %2590 = vmatpush1.msra.mxu0 0.0
    %2591 = vmatprep.subr.mxu0 0.0
    %2592 = vmatpush1.msra.mxu0 0.0
    %2593 = vmatprep.subr.mxu0 0.0
    %2594 = vmatpush1.msra.mxu0 0.0
    %2595 = vmatprep.subr.mxu0 0.0
    %2596 = vmatpush1.msra.mxu0 0.0
    %2597 = vmatprep.subr.mxu0 0.0
    %2598 = vmatpush1.msra.mxu0 0.0
    %2599 = vmatprep.subr.mxu0 0.0
    %2600 = vmatpush1.msra.mxu0 0.0
    %2601 = vmatprep.subr.mxu0 0.0
    %2602 = vmatpush1.msra.mxu0 0.0
    %2603 = vmatprep.subr.mxu0 0.0
    %2604 = vmatpush1.msra.mxu0 0.0
    %2605 = vmatprep.subr.mxu0 0.0
    %2606 = vmatpush1.msra.mxu0 0.0
    %2607 = vmatprep.subr.mxu0 0.0
    %2608 = vmatpush1.msra.mxu0 0.0
    %2609 = vmatprep.subr.mxu0 0.0
    %2610 = vmatpush1.msra.mxu0 0.0
    %2611 = vmatprep.subr.mxu0 0.0
    %2612 = vmatpush1.msra.mxu0 0.0
    %2613 = vmatprep.subr.mxu0 0.0
    %2614 = vmatpush1.msra.mxu0 0.0
    %2615 = vmatprep.subr.mxu0 0.0
    %2616 = vmatpush1.msra.mxu0 0.0
    %2617 = vmatprep.subr.mxu0 0.0
    %2618 = vmatpush1.msra.mxu0 0.0
    %2619 = vmatprep.subr.mxu0 0.0
    %2620 = vmatpush1.msra.mxu0 0.0
    %2621 = vmatprep.subr.mxu0 0.0
    %2622 = vmatpush1.msra.mxu0 0.0
    %2623 = vmatprep.subr.mxu0 0.0
    %2624 = vmatpush1.msra.mxu0 0.0
    %2625 = vmatprep.subr.mxu0 0.0
    %2626 = vmatpush1.msra.mxu0 0.0
    %2627 = vmatprep.mubr.f32.mxu0 0.0
    %2628 = vmatmul.mubr.f32.gmra.mrb[0].mxu0 %v2558
    %v2629 = vpop.f32.mrb[0].mxu0
    %v2630 = vadd.f32 0.0, %v2629
    %v2631 = vpop.f32.mrb[0].mxu0
    %2632 = vmatprep.mubr.f32.mxu0 0.0
    %2633 = vmatmul.mubr.f32.gmra.mrb[0].mxu0 %v2561
    %v2634 = vpop.f32.mrb[0].mxu0
    %v2635 = vadd.f32 0.0, %v2634
    %v2636 = vpop.f32.mrb[0].mxu0
    %2637 = vdwg.mxu0
    %2640 = vrot.lane.b32.xlu0 %v2250, 104
    %v2641 = vpop.permute.xlu0 %2640
    %2642 = vrot.lane.b32.xlu0 %v2255, 104
    %v2643 = vpop.permute.xlu0 %2642
    %v2647 = vsel %vm2467, %v830, 0
    %v2650 = vsel %vm2467, %v835, 0
    %2652 = vmatprep.subr.mxu0 0.0
    %2653 = vmatpush1.msra.mxu0 %v2641
    %2654 = vmatprep.subr.mxu0 0.0
    %2655 = vmatpush1.msra.mxu0 %v2643
    %2656 = vmatprep.subr.mxu0 0.0
    %2657 = vmatpush1.msra.mxu0 0.0
    %2658 = vmatprep.subr.mxu0 0.0
    %2659 = vmatpush1.msra.mxu0 0.0
    %2660 = vmatprep.subr.mxu0 0.0
    %2661 = vmatpush1.msra.mxu0 0.0
    %2662 = vmatprep.subr.mxu0 0.0
    %2663 = vmatpush1.msra.mxu0 0.0
    %2664 = vmatprep.subr.mxu0 0.0
    %2665 = vmatpush1.msra.mxu0 0.0
    %2666 = vmatprep.subr.mxu0 0.0
    %2667 = vmatpush1.msra.mxu0 0.0
    %2668 = vmatprep.subr.mxu0 0.0
    %2669 = vmatpush1.msra.mxu0 0.0
    %2670 = vmatprep.subr.mxu0 0.0
    %2671 = vmatpush1.msra.mxu0 0.0
    %2672 = vmatprep.subr.mxu0 0.0
    %2673 = vmatpush1.msra.mxu0 0.0
    %2674 = vmatprep.subr.mxu0 0.0
    %2675 = vmatpush1.msra.mxu0 0.0
    %2676 = vmatprep.subr.mxu0 0.0
    %2677 = vmatpush1.msra.mxu0 0.0
    %2678 = vmatprep.subr.mxu0 0.0
    %2679 = vmatpush1.msra.mxu0 0.0
    %2680 = vmatprep.subr.mxu0 0.0
    %2681 = vmatpush1.msra.mxu0 0.0
    %2682 = vmatprep.subr.mxu0 0.0
    %2683 = vmatpush1.msra.mxu0 0.0
    %2684 = vmatprep.subr.mxu0 0.0
    %2685 = vmatpush1.msra.mxu0 0.0
    %2686 = vmatprep.subr.mxu0 0.0
    %2687 = vmatpush1.msra.mxu0 0.0
    %2688 = vmatprep.subr.mxu0 0.0
    %2689 = vmatpush1.msra.mxu0 0.0
    %2690 = vmatprep.subr.mxu0 0.0
    %2691 = vmatpush1.msra.mxu0 0.0
    %2692 = vmatprep.subr.mxu0 0.0
    %2693 = vmatpush1.msra.mxu0 0.0
    %2694 = vmatprep.subr.mxu0 0.0
    %2695 = vmatpush1.msra.mxu0 0.0
    %2696 = vmatprep.subr.mxu0 0.0
    %2697 = vmatpush1.msra.mxu0 0.0
    %2698 = vmatprep.subr.mxu0 0.0
    %2699 = vmatpush1.msra.mxu0 0.0
    %2700 = vmatprep.subr.mxu0 0.0
    %2701 = vmatpush1.msra.mxu0 0.0
    %2702 = vmatprep.subr.mxu0 0.0
    %2703 = vmatpush1.msra.mxu0 0.0
    %2704 = vmatprep.subr.mxu0 0.0
    %2705 = vmatpush1.msra.mxu0 0.0
    %2706 = vmatprep.subr.mxu0 0.0
    %2707 = vmatpush1.msra.mxu0 0.0
    %2708 = vmatprep.subr.mxu0 0.0
    %2709 = vmatpush1.msra.mxu0 0.0
    %2710 = vmatprep.subr.mxu0 0.0
    %2711 = vmatpush1.msra.mxu0 0.0
    %2712 = vmatprep.subr.mxu0 0.0
    %2713 = vmatpush1.msra.mxu0 0.0
    %2714 = vmatprep.subr.mxu0 0.0
    %2715 = vmatpush1.msra.mxu0 0.0
    %2716 = vmatprep.mubr.f32.mxu0 0.0
    %2717 = vmatmul.mubr.f32.gmra.mrb[0].mxu0 %v2647
    %v2718 = vpop.f32.mrb[0].mxu0
    %v2719 = vadd.f32 0.0, %v2718
    %v2720 = vpop.f32.mrb[0].mxu0
    %2721 = vmatprep.mubr.f32.mxu0 0.0
    %2722 = vmatmul.mubr.f32.gmra.mrb[0].mxu0 %v2650
    %v2723 = vpop.f32.mrb[0].mxu0
    %v2724 = vadd.f32 0.0, %v2723
    %v2725 = vpop.f32.mrb[0].mxu0
    %2726 = vdwg.mxu0
    %2729 = vrot.lane.b32.xlu0 %v2260, 104
    %v2730 = vpop.permute.xlu0 %2729
    %2731 = vrot.lane.b32.xlu0 %v2265, 104
    %v2732 = vpop.permute.xlu0 %2731
    %v2736 = vsel %vm2467, %v917, 0
    %v2739 = vsel %vm2467, %v922, 0
    %2741 = vmatprep.subr.mxu0 0.0
    %2742 = vmatpush1.msra.mxu0 %v2730
    %2743 = vmatprep.subr.mxu0 0.0
    %2744 = vmatpush1.msra.mxu0 %v2732
    %2745 = vmatprep.subr.mxu0 0.0
    %2746 = vmatpush1.msra.mxu0 0.0
    %2747 = vmatprep.subr.mxu0 0.0
    %2748 = vmatpush1.msra.mxu0 0.0
    %2749 = vmatprep.subr.mxu0 0.0
    %2750 = vmatpush1.msra.mxu0 0.0
    %2751 = vmatprep.subr.mxu0 0.0
    %2752 = vmatpush1.msra.mxu0 0.0
    %2753 = vmatprep.subr.mxu0 0.0
    %2754 = vmatpush1.msra.mxu0 0.0
    %2755 = vmatprep.subr.mxu0 0.0
    %2756 = vmatpush1.msra.mxu0 0.0
    %2757 = vmatprep.subr.mxu0 0.0
    %2758 = vmatpush1.msra.mxu0 0.0
    %2759 = vmatprep.subr.mxu0 0.0
    %2760 = vmatpush1.msra.mxu0 0.0
    %2761 = vmatprep.subr.mxu0 0.0
    %2762 = vmatpush1.msra.mxu0 0.0
    %2763 = vmatprep.subr.mxu0 0.0
    %2764 = vmatpush1.msra.mxu0 0.0
    %2765 = vmatprep.subr.mxu0 0.0
    %2766 = vmatpush1.msra.mxu0 0.0
    %2767 = vmatprep.subr.mxu0 0.0
    %2768 = vmatpush1.msra.mxu0 0.0
    %2769 = vmatprep.subr.mxu0 0.0
    %2770 = vmatpush1.msra.mxu0 0.0
    %2771 = vmatprep.subr.mxu0 0.0
    %2772 = vmatpush1.msra.mxu0 0.0
    %2773 = vmatprep.subr.mxu0 0.0
    %2774 = vmatpush1.msra.mxu0 0.0
    %2775 = vmatprep.subr.mxu0 0.0
    %2776 = vmatpush1.msra.mxu0 0.0
    %2777 = vmatprep.subr.mxu0 0.0
    %2778 = vmatpush1.msra.mxu0 0.0
    %2779 = vmatprep.subr.mxu0 0.0
    %2780 = vmatpush1.msra.mxu0 0.0
    %2781 = vmatprep.subr.mxu0 0.0
    %2782 = vmatpush1.msra.mxu0 0.0
    %2783 = vmatprep.subr.mxu0 0.0
    %2784 = vmatpush1.msra.mxu0 0.0
    %2785 = vmatprep.subr.mxu0 0.0
    %2786 = vmatpush1.msra.mxu0 0.0
    %2787 = vmatprep.subr.mxu0 0.0
    %2788 = vmatpush1.msra.mxu0 0.0
    %2789 = vmatprep.subr.mxu0 0.0
    %2790 = vmatpush1.msra.mxu0 0.0
    %2791 = vmatprep.subr.mxu0 0.0
    %2792 = vmatpush1.msra.mxu0 0.0
    %2793 = vmatprep.subr.mxu0 0.0
    %2794 = vmatpush1.msra.mxu0 0.0
    %2795 = vmatprep.subr.mxu0 0.0
    %2796 = vmatpush1.msra.mxu0 0.0
    %2797 = vmatprep.subr.mxu0 0.0
    %2798 = vmatpush1.msra.mxu0 0.0
    %2799 = vmatprep.subr.mxu0 0.0
    %2800 = vmatpush1.msra.mxu0 0.0
    %2801 = vmatprep.subr.mxu0 0.0
    %2802 = vmatpush1.msra.mxu0 0.0
    %2803 = vmatprep.subr.mxu0 0.0
    %2804 = vmatpush1.msra.mxu0 0.0
    %2805 = vmatprep.mubr.f32.mxu0 0.0
    %2806 = vmatmul.mubr.f32.gmra.mrb[0].mxu0 %v2736
    %v2807 = vpop.f32.mrb[0].mxu0
    %v2808 = vadd.f32 0.0, %v2807
    %v2809 = vpop.f32.mrb[0].mxu0
    %2810 = vmatprep.mubr.f32.mxu0 0.0
    %2811 = vmatmul.mubr.f32.gmra.mrb[0].mxu0 %v2739
    %v2812 = vpop.f32.mrb[0].mxu0
    %v2813 = vadd.f32 0.0, %v2812
    %v2814 = vpop.f32.mrb[0].mxu0
    %2815 = vdwg.mxu0
    %2818 = vrot.lane.b32.xlu0 %v2270, 104
    %v2819 = vpop.permute.xlu0 %2818
    %2820 = vrot.lane.b32.xlu0 %v2275, 104
    %v2821 = vpop.permute.xlu0 %2820
    %v2825 = vsel %vm2467, %v1004, 0
    %v2828 = vsel %vm2467, %v1009, 0
    %2830 = vmatprep.subr.mxu0 0.0
    %2831 = vmatpush1.msra.mxu0 %v2819
    %2832 = vmatprep.subr.mxu0 0.0
    %2833 = vmatpush1.msra.mxu0 %v2821
    %2834 = vmatprep.subr.mxu0 0.0
    %2835 = vmatpush1.msra.mxu0 0.0
    %2836 = vmatprep.subr.mxu0 0.0
    %2837 = vmatpush1.msra.mxu0 0.0
    %2838 = vmatprep.subr.mxu0 0.0
    %2839 = vmatpush1.msra.mxu0 0.0
    %2840 = vmatprep.subr.mxu0 0.0
    %2841 = vmatpush1.msra.mxu0 0.0
    %2842 = vmatprep.subr.mxu0 0.0
    %2843 = vmatpush1.msra.mxu0 0.0
    %2844 = vmatprep.subr.mxu0 0.0
    %2845 = vmatpush1.msra.mxu0 0.0
    %2846 = vmatprep.subr.mxu0 0.0
    %2847 = vmatpush1.msra.mxu0 0.0
    %2848 = vmatprep.subr.mxu0 0.0
    %2849 = vmatpush1.msra.mxu0 0.0
    %2850 = vmatprep.subr.mxu0 0.0
    %2851 = vmatpush1.msra.mxu0 0.0
    %2852 = vmatprep.subr.mxu0 0.0
    %2853 = vmatpush1.msra.mxu0 0.0
    %2854 = vmatprep.subr.mxu0 0.0
    %2855 = vmatpush1.msra.mxu0 0.0
    %2856 = vmatprep.subr.mxu0 0.0
    %2857 = vmatpush1.msra.mxu0 0.0
    %2858 = vmatprep.subr.mxu0 0.0
    %2859 = vmatpush1.msra.mxu0 0.0
    %2860 = vmatprep.subr.mxu0 0.0
    %2861 = vmatpush1.msra.mxu0 0.0
    %2862 = vmatprep.subr.mxu0 0.0
    %2863 = vmatpush1.msra.mxu0 0.0
    %2864 = vmatprep.subr.mxu0 0.0
    %2865 = vmatpush1.msra.mxu0 0.0
    %2866 = vmatprep.subr.mxu0 0.0
    %2867 = vmatpush1.msra.mxu0 0.0
    %2868 = vmatprep.subr.mxu0 0.0
    %2869 = vmatpush1.msra.mxu0 0.0
    %2870 = vmatprep.subr.mxu0 0.0
    %2871 = vmatpush1.msra.mxu0 0.0
    %2872 = vmatprep.subr.mxu0 0.0
    %2873 = vmatpush1.msra.mxu0 0.0
    %2874 = vmatprep.subr.mxu0 0.0
    %2875 = vmatpush1.msra.mxu0 0.0
    %2876 = vmatprep.subr.mxu0 0.0
    %2877 = vmatpush1.msra.mxu0 0.0
    %2878 = vmatprep.subr.mxu0 0.0
    %2879 = vmatpush1.msra.mxu0 0.0
    %2880 = vmatprep.subr.mxu0 0.0
    %2881 = vmatpush1.msra.mxu0 0.0
    %2882 = vmatprep.subr.mxu0 0.0
    %2883 = vmatpush1.msra.mxu0 0.0
    %2884 = vmatprep.subr.mxu0 0.0
    %2885 = vmatpush1.msra.mxu0 0.0
    %2886 = vmatprep.subr.mxu0 0.0
    %2887 = vmatpush1.msra.mxu0 0.0
    %2888 = vmatprep.subr.mxu0 0.0
    %2889 = vmatpush1.msra.mxu0 0.0
    %2890 = vmatprep.subr.mxu0 0.0
    %2891 = vmatpush1.msra.mxu0 0.0
    %2892 = vmatprep.subr.mxu0 0.0
    %2893 = vmatpush1.msra.mxu0 0.0
    %2894 = vmatprep.mubr.f32.mxu0 0.0
    %2895 = vmatmul.mubr.f32.gmra.mrb[0].mxu0 %v2825
    %v2896 = vpop.f32.mrb[0].mxu0
    %v2897 = vadd.f32 0.0, %v2896
    %v2898 = vpop.f32.mrb[0].mxu0
    %2899 = vmatprep.mubr.f32.mxu0 0.0
    %2900 = vmatmul.mubr.f32.gmra.mrb[0].mxu0 %v2828
    %v2901 = vpop.f32.mrb[0].mxu0
    %v2902 = vadd.f32 0.0, %v2901
    %v2903 = vpop.f32.mrb[0].mxu0
    %2904 = vdwg.mxu0
    %2907 = vrot.lane.b32.xlu0 %v2280, 104
    %v2908 = vpop.permute.xlu0 %2907
    %2909 = vrot.lane.b32.xlu0 %v2285, 104
    %v2910 = vpop.permute.xlu0 %2909
    %v2914 = vsel %vm2467, %v1091, 0
    %v2917 = vsel %vm2467, %v1096, 0
    %2919 = vmatprep.subr.mxu0 0.0
    %2920 = vmatpush1.msra.mxu0 %v2908
    %2921 = vmatprep.subr.mxu0 0.0
    %2922 = vmatpush1.msra.mxu0 %v2910
    %2923 = vmatprep.subr.mxu0 0.0
    %2924 = vmatpush1.msra.mxu0 0.0
    %2925 = vmatprep.subr.mxu0 0.0
    %2926 = vmatpush1.msra.mxu0 0.0
    %2927 = vmatprep.subr.mxu0 0.0
    %2928 = vmatpush1.msra.mxu0 0.0
    %2929 = vmatprep.subr.mxu0 0.0
    %2930 = vmatpush1.msra.mxu0 0.0
    %2931 = vmatprep.subr.mxu0 0.0
    %2932 = vmatpush1.msra.mxu0 0.0
    %2933 = vmatprep.subr.mxu0 0.0
    %2934 = vmatpush1.msra.mxu0 0.0
    %2935 = vmatprep.subr.mxu0 0.0
    %2936 = vmatpush1.msra.mxu0 0.0
    %2937 = vmatprep.subr.mxu0 0.0
    %2938 = vmatpush1.msra.mxu0 0.0
    %2939 = vmatprep.subr.mxu0 0.0
    %2940 = vmatpush1.msra.mxu0 0.0
    %2941 = vmatprep.subr.mxu0 0.0
    %2942 = vmatpush1.msra.mxu0 0.0
    %2943 = vmatprep.subr.mxu0 0.0
    %2944 = vmatpush1.msra.mxu0 0.0
    %2945 = vmatprep.subr.mxu0 0.0
    %2946 = vmatpush1.msra.mxu0 0.0
    %2947 = vmatprep.subr.mxu0 0.0
    %2948 = vmatpush1.msra.mxu0 0.0
    %2949 = vmatprep.subr.mxu0 0.0
    %2950 = vmatpush1.msra.mxu0 0.0
    %2951 = vmatprep.subr.mxu0 0.0
    %2952 = vmatpush1.msra.mxu0 0.0
    %2953 = vmatprep.subr.mxu0 0.0
    %2954 = vmatpush1.msra.mxu0 0.0
    %2955 = vmatprep.subr.mxu0 0.0
    %2956 = vmatpush1.msra.mxu0 0.0
    %2957 = vmatprep.subr.mxu0 0.0
    %2958 = vmatpush1.msra.mxu0 0.0
    %2959 = vmatprep.subr.mxu0 0.0
    %2960 = vmatpush1.msra.mxu0 0.0
    %2961 = vmatprep.subr.mxu0 0.0
    %2962 = vmatpush1.msra.mxu0 0.0
    %2963 = vmatprep.subr.mxu0 0.0
    %2964 = vmatpush1.msra.mxu0 0.0
    %2965 = vmatprep.subr.mxu0 0.0
    %2966 = vmatpush1.msra.mxu0 0.0
    %2967 = vmatprep.subr.mxu0 0.0
    %2968 = vmatpush1.msra.mxu0 0.0
    %2969 = vmatprep.subr.mxu0 0.0
    %2970 = vmatpush1.msra.mxu0 0.0
    %2971 = vmatprep.subr.mxu0 0.0
    %2972 = vmatpush1.msra.mxu0 0.0
    %2973 = vmatprep.subr.mxu0 0.0
    %2974 = vmatpush1.msra.mxu0 0.0
    %2975 = vmatprep.subr.mxu0 0.0
    %2976 = vmatpush1.msra.mxu0 0.0
    %2977 = vmatprep.subr.mxu0 0.0
    %2978 = vmatpush1.msra.mxu0 0.0
    %2979 = vmatprep.subr.mxu0 0.0
    %2980 = vmatpush1.msra.mxu0 0.0
    %2981 = vmatprep.subr.mxu0 0.0
    %2982 = vmatpush1.msra.mxu0 0.0
    %2983 = vmatprep.mubr.f32.mxu0 0.0
    %2984 = vmatmul.mubr.f32.gmra.mrb[0].mxu0 %v2914
    %v2985 = vpop.f32.mrb[0].mxu0
    %v2986 = vadd.f32 0.0, %v2985
    %v2987 = vpop.f32.mrb[0].mxu0
    %2988 = vmatprep.mubr.f32.mxu0 0.0
    %2989 = vmatmul.mubr.f32.gmra.mrb[0].mxu0 %v2917
    %v2990 = vpop.f32.mrb[0].mxu0
    %v2991 = vadd.f32 0.0, %v2990
    %v2992 = vpop.f32.mrb[0].mxu0
    %2993 = vdwg.mxu0
    %2996 = vrot.lane.b32.xlu0 %v2290, 104
    %v2997 = vpop.permute.xlu0 %2996
    %2998 = vrot.lane.b32.xlu0 %v2295, 104
    %v2999 = vpop.permute.xlu0 %2998
    %v3003 = vsel %vm2467, %v1178, 0
    %v3006 = vsel %vm2467, %v1183, 0
    %3008 = vmatprep.subr.mxu0 0.0
    %3009 = vmatpush1.msra.mxu0 %v2997
    %3010 = vmatprep.subr.mxu0 0.0
    %3011 = vmatpush1.msra.mxu0 %v2999
    %3012 = vmatprep.subr.mxu0 0.0
    %3013 = vmatpush1.msra.mxu0 0.0
    %3014 = vmatprep.subr.mxu0 0.0
    %3015 = vmatpush1.msra.mxu0 0.0
    %3016 = vmatprep.subr.mxu0 0.0
    %3017 = vmatpush1.msra.mxu0 0.0
    %3018 = vmatprep.subr.mxu0 0.0
    %3019 = vmatpush1.msra.mxu0 0.0
    %3020 = vmatprep.subr.mxu0 0.0
    %3021 = vmatpush1.msra.mxu0 0.0
    %3022 = vmatprep.subr.mxu0 0.0
    %3023 = vmatpush1.msra.mxu0 0.0
    %3024 = vmatprep.subr.mxu0 0.0
    %3025 = vmatpush1.msra.mxu0 0.0
    %3026 = vmatprep.subr.mxu0 0.0
    %3027 = vmatpush1.msra.mxu0 0.0
    %3028 = vmatprep.subr.mxu0 0.0
    %3029 = vmatpush1.msra.mxu0 0.0
    %3030 = vmatprep.subr.mxu0 0.0
    %3031 = vmatpush1.msra.mxu0 0.0
    %3032 = vmatprep.subr.mxu0 0.0
    %3033 = vmatpush1.msra.mxu0 0.0
    %3034 = vmatprep.subr.mxu0 0.0
    %3035 = vmatpush1.msra.mxu0 0.0
    %3036 = vmatprep.subr.mxu0 0.0
    %3037 = vmatpush1.msra.mxu0 0.0
    %3038 = vmatprep.subr.mxu0 0.0
    %3039 = vmatpush1.msra.mxu0 0.0
    %3040 = vmatprep.subr.mxu0 0.0
    %3041 = vmatpush1.msra.mxu0 0.0
    %3042 = vmatprep.subr.mxu0 0.0
    %3043 = vmatpush1.msra.mxu0 0.0
    %3044 = vmatprep.subr.mxu0 0.0
    %3045 = vmatpush1.msra.mxu0 0.0
    %3046 = vmatprep.subr.mxu0 0.0
    %3047 = vmatpush1.msra.mxu0 0.0
    %3048 = vmatprep.subr.mxu0 0.0
    %3049 = vmatpush1.msra.mxu0 0.0
    %3050 = vmatprep.subr.mxu0 0.0
    %3051 = vmatpush1.msra.mxu0 0.0
    %3052 = vmatprep.subr.mxu0 0.0
    %3053 = vmatpush1.msra.mxu0 0.0
    %3054 = vmatprep.subr.mxu0 0.0
    %3055 = vmatpush1.msra.mxu0 0.0
    %3056 = vmatprep.subr.mxu0 0.0
    %3057 = vmatpush1.msra.mxu0 0.0
    %3058 = vmatprep.subr.mxu0 0.0
    %3059 = vmatpush1.msra.mxu0 0.0
    %3060 = vmatprep.subr.mxu0 0.0
    %3061 = vmatpush1.msra.mxu0 0.0
    %3062 = vmatprep.subr.mxu0 0.0
    %3063 = vmatpush1.msra.mxu0 0.0
    %3064 = vmatprep.subr.mxu0 0.0
    %3065 = vmatpush1.msra.mxu0 0.0
    %3066 = vmatprep.subr.mxu0 0.0
    %3067 = vmatpush1.msra.mxu0 0.0
    %3068 = vmatprep.subr.mxu0 0.0
    %3069 = vmatpush1.msra.mxu0 0.0
    %3070 = vmatprep.subr.mxu0 0.0
    %3071 = vmatpush1.msra.mxu0 0.0
    %3072 = vmatprep.mubr.f32.mxu0 0.0
    %3073 = vmatmul.mubr.f32.gmra.mrb[0].mxu0 %v3003
    %v3074 = vpop.f32.mrb[0].mxu0
    %v3075 = vadd.f32 0.0, %v3074
    %v3076 = vpop.f32.mrb[0].mxu0
    %3077 = vmatprep.mubr.f32.mxu0 0.0
    %3078 = vmatmul.mubr.f32.gmra.mrb[0].mxu0 %v3006
    %v3079 = vpop.f32.mrb[0].mxu0
    %v3080 = vadd.f32 0.0, %v3079
    %v3081 = vpop.f32.mrb[0].mxu0
    %3082 = vdwg.mxu0
    %3085 = vrot.lane.b32.xlu0 %v2300, 104
    %v3086 = vpop.permute.xlu0 %3085
    %3087 = vrot.lane.b32.xlu0 %v2305, 104
    %v3088 = vpop.permute.xlu0 %3087
    %v3092 = vsel %vm2467, %v1265, 0
    %v3095 = vsel %vm2467, %v1270, 0
    %3097 = vmatprep.subr.mxu0 0.0
    %3098 = vmatpush1.msra.mxu0 %v3086
    %3099 = vmatprep.subr.mxu0 0.0
    %3100 = vmatpush1.msra.mxu0 %v3088
    %3101 = vmatprep.subr.mxu0 0.0
    %3102 = vmatpush1.msra.mxu0 0.0
    %3103 = vmatprep.subr.mxu0 0.0
    %3104 = vmatpush1.msra.mxu0 0.0
    %3105 = vmatprep.subr.mxu0 0.0
    %3106 = vmatpush1.msra.mxu0 0.0
    %3107 = vmatprep.subr.mxu0 0.0
    %3108 = vmatpush1.msra.mxu0 0.0
    %3109 = vmatprep.subr.mxu0 0.0
    %3110 = vmatpush1.msra.mxu0 0.0
    %3111 = vmatprep.subr.mxu0 0.0
    %3112 = vmatpush1.msra.mxu0 0.0
    %3113 = vmatprep.subr.mxu0 0.0
    %3114 = vmatpush1.msra.mxu0 0.0
    %3115 = vmatprep.subr.mxu0 0.0
    %3116 = vmatpush1.msra.mxu0 0.0
    %3117 = vmatprep.subr.mxu0 0.0
    %3118 = vmatpush1.msra.mxu0 0.0
    %3119 = vmatprep.subr.mxu0 0.0
    %3120 = vmatpush1.msra.mxu0 0.0
    %3121 = vmatprep.subr.mxu0 0.0
    %3122 = vmatpush1.msra.mxu0 0.0
    %3123 = vmatprep.subr.mxu0 0.0
    %3124 = vmatpush1.msra.mxu0 0.0
    %3125 = vmatprep.subr.mxu0 0.0
    %3126 = vmatpush1.msra.mxu0 0.0
    %3127 = vmatprep.subr.mxu0 0.0
    %3128 = vmatpush1.msra.mxu0 0.0
    %3129 = vmatprep.subr.mxu0 0.0
    %3130 = vmatpush1.msra.mxu0 0.0
    %3131 = vmatprep.subr.mxu0 0.0
    %3132 = vmatpush1.msra.mxu0 0.0
    %3133 = vmatprep.subr.mxu0 0.0
    %3134 = vmatpush1.msra.mxu0 0.0
    %3135 = vmatprep.subr.mxu0 0.0
    %3136 = vmatpush1.msra.mxu0 0.0
    %3137 = vmatprep.subr.mxu0 0.0
    %3138 = vmatpush1.msra.mxu0 0.0
    %3139 = vmatprep.subr.mxu0 0.0
    %3140 = vmatpush1.msra.mxu0 0.0
    %3141 = vmatprep.subr.mxu0 0.0
    %3142 = vmatpush1.msra.mxu0 0.0
    %3143 = vmatprep.subr.mxu0 0.0
    %3144 = vmatpush1.msra.mxu0 0.0
    %3145 = vmatprep.subr.mxu0 0.0
    %3146 = vmatpush1.msra.mxu0 0.0
    %3147 = vmatprep.subr.mxu0 0.0
    %3148 = vmatpush1.msra.mxu0 0.0
    %3149 = vmatprep.subr.mxu0 0.0
    %3150 = vmatpush1.msra.mxu0 0.0
    %3151 = vmatprep.subr.mxu0 0.0
    %3152 = vmatpush1.msra.mxu0 0.0
    %3153 = vmatprep.subr.mxu0 0.0
    %3154 = vmatpush1.msra.mxu0 0.0
    %3155 = vmatprep.subr.mxu0 0.0
    %3156 = vmatpush1.msra.mxu0 0.0
    %3157 = vmatprep.subr.mxu0 0.0
    %3158 = vmatpush1.msra.mxu0 0.0
    %3159 = vmatprep.subr.mxu0 0.0
    %3160 = vmatpush1.msra.mxu0 0.0
    %3161 = vmatprep.mubr.f32.mxu0 0.0
    %3162 = vmatmul.mubr.f32.gmra.mrb[0].mxu0 %v3092
    %v3163 = vpop.f32.mrb[0].mxu0
    %v3164 = vadd.f32 0.0, %v3163
    %v3165 = vpop.f32.mrb[0].mxu0
    %3166 = vmatprep.mubr.f32.mxu0 0.0
    %3167 = vmatmul.mubr.f32.gmra.mrb[0].mxu0 %v3095
    %v3168 = vpop.f32.mrb[0].mxu0
    %v3169 = vadd.f32 0.0, %v3168
    %v3170 = vpop.f32.mrb[0].mxu0
    %3171 = vdwg.mxu0
    %3174 = vrot.lane.b32.xlu0 %v2310, 104
    %v3175 = vpop.permute.xlu0 %3174
    %3176 = vrot.lane.b32.xlu0 %v2315, 104
    %v3177 = vpop.permute.xlu0 %3176
    %v3181 = vsel %vm2467, %v1352, 0
    %v3184 = vsel %vm2467, %v1357, 0
    %3186 = vmatprep.subr.mxu0 0.0
    %3187 = vmatpush1.msra.mxu0 %v3175
    %3188 = vmatprep.subr.mxu0 0.0
    %3189 = vmatpush1.msra.mxu0 %v3177
    %3190 = vmatprep.subr.mxu0 0.0
    %3191 = vmatpush1.msra.mxu0 0.0
    %3192 = vmatprep.subr.mxu0 0.0
    %3193 = vmatpush1.msra.mxu0 0.0
    %3194 = vmatprep.subr.mxu0 0.0
    %3195 = vmatpush1.msra.mxu0 0.0
    %3196 = vmatprep.subr.mxu0 0.0
    %3197 = vmatpush1.msra.mxu0 0.0
    %3198 = vmatprep.subr.mxu0 0.0
    %3199 = vmatpush1.msra.mxu0 0.0
    %3200 = vmatprep.subr.mxu0 0.0
    %3201 = vmatpush1.msra.mxu0 0.0
    %3202 = vmatprep.subr.mxu0 0.0
    %3203 = vmatpush1.msra.mxu0 0.0
    %3204 = vmatprep.subr.mxu0 0.0
    %3205 = vmatpush1.msra.mxu0 0.0
    %3206 = vmatprep.subr.mxu0 0.0
    %3207 = vmatpush1.msra.mxu0 0.0
    %3208 = vmatprep.subr.mxu0 0.0
    %3209 = vmatpush1.msra.mxu0 0.0
    %3210 = vmatprep.subr.mxu0 0.0
    %3211 = vmatpush1.msra.mxu0 0.0
    %3212 = vmatprep.subr.mxu0 0.0
    %3213 = vmatpush1.msra.mxu0 0.0
    %3214 = vmatprep.subr.mxu0 0.0
    %3215 = vmatpush1.msra.mxu0 0.0
    %3216 = vmatprep.subr.mxu0 0.0
    %3217 = vmatpush1.msra.mxu0 0.0
    %3218 = vmatprep.subr.mxu0 0.0
    %3219 = vmatpush1.msra.mxu0 0.0
    %3220 = vmatprep.subr.mxu0 0.0
    %3221 = vmatpush1.msra.mxu0 0.0
    %3222 = vmatprep.subr.mxu0 0.0
    %3223 = vmatpush1.msra.mxu0 0.0
    %3224 = vmatprep.subr.mxu0 0.0
    %3225 = vmatpush1.msra.mxu0 0.0
    %3226 = vmatprep.subr.mxu0 0.0
    %3227 = vmatpush1.msra.mxu0 0.0
    %3228 = vmatprep.subr.mxu0 0.0
    %3229 = vmatpush1.msra.mxu0 0.0
    %3230 = vmatprep.subr.mxu0 0.0
    %3231 = vmatpush1.msra.mxu0 0.0
    %3232 = vmatprep.subr.mxu0 0.0
    %3233 = vmatpush1.msra.mxu0 0.0
    %3234 = vmatprep.subr.mxu0 0.0
    %3235 = vmatpush1.msra.mxu0 0.0
    %3236 = vmatprep.subr.mxu0 0.0
    %3237 = vmatpush1.msra.mxu0 0.0
    %3238 = vmatprep.subr.mxu0 0.0
    %3239 = vmatpush1.msra.mxu0 0.0
    %3240 = vmatprep.subr.mxu0 0.0
    %3241 = vmatpush1.msra.mxu0 0.0
    %3242 = vmatprep.subr.mxu0 0.0
    %3243 = vmatpush1.msra.mxu0 0.0
    %3244 = vmatprep.subr.mxu0 0.0
    %3245 = vmatpush1.msra.mxu0 0.0
    %3246 = vmatprep.subr.mxu0 0.0
    %3247 = vmatpush1.msra.mxu0 0.0
    %3248 = vmatprep.subr.mxu0 0.0
    %3249 = vmatpush1.msra.mxu0 0.0
    %3250 = vmatprep.mubr.f32.mxu0 0.0
    %3251 = vmatmul.mubr.f32.gmra.mrb[0].mxu0 %v3181
    %v3252 = vpop.f32.mrb[0].mxu0
    %v3253 = vadd.f32 0.0, %v3252
    %v3254 = vpop.f32.mrb[0].mxu0
    %3255 = vmatprep.mubr.f32.mxu0 0.0
    %3256 = vmatmul.mubr.f32.gmra.mrb[0].mxu0 %v3184
    %v3257 = vpop.f32.mrb[0].mxu0
    %v3258 = vadd.f32 0.0, %v3257
    %v3259 = vpop.f32.mrb[0].mxu0
    %3260 = vdwg.mxu0
    %3263 = vrot.lane.b32.xlu0 %v2320, 104
    %v3264 = vpop.permute.xlu0 %3263
    %3265 = vrot.lane.b32.xlu0 %v2325, 104
    %v3266 = vpop.permute.xlu0 %3265
    %v3270 = vsel %vm2467, %v1439, 0
    %v3273 = vsel %vm2467, %v1444, 0
    %3275 = vmatprep.subr.mxu0 0.0
    %3276 = vmatpush1.msra.mxu0 %v3264
    %3277 = vmatprep.subr.mxu0 0.0
    %3278 = vmatpush1.msra.mxu0 %v3266
    %3279 = vmatprep.subr.mxu0 0.0
    %3280 = vmatpush1.msra.mxu0 0.0
    %3281 = vmatprep.subr.mxu0 0.0
    %3282 = vmatpush1.msra.mxu0 0.0
    %3283 = vmatprep.subr.mxu0 0.0
    %3284 = vmatpush1.msra.mxu0 0.0
    %3285 = vmatprep.subr.mxu0 0.0
    %3286 = vmatpush1.msra.mxu0 0.0
    %3287 = vmatprep.subr.mxu0 0.0
    %3288 = vmatpush1.msra.mxu0 0.0
    %3289 = vmatprep.subr.mxu0 0.0
    %3290 = vmatpush1.msra.mxu0 0.0
    %3291 = vmatprep.subr.mxu0 0.0
    %3292 = vmatpush1.msra.mxu0 0.0
    %3293 = vmatprep.subr.mxu0 0.0
    %3294 = vmatpush1.msra.mxu0 0.0
    %3295 = vmatprep.subr.mxu0 0.0
    %3296 = vmatpush1.msra.mxu0 0.0
    %3297 = vmatprep.subr.mxu0 0.0
    %3298 = vmatpush1.msra.mxu0 0.0
    %3299 = vmatprep.subr.mxu0 0.0
    %3300 = vmatpush1.msra.mxu0 0.0
    %3301 = vmatprep.subr.mxu0 0.0
    %3302 = vmatpush1.msra.mxu0 0.0
    %3303 = vmatprep.subr.mxu0 0.0
    %3304 = vmatpush1.msra.mxu0 0.0
    %3305 = vmatprep.subr.mxu0 0.0
    %3306 = vmatpush1.msra.mxu0 0.0
    %3307 = vmatprep.subr.mxu0 0.0
    %3308 = vmatpush1.msra.mxu0 0.0
    %3309 = vmatprep.subr.mxu0 0.0
    %3310 = vmatpush1.msra.mxu0 0.0
    %3311 = vmatprep.subr.mxu0 0.0
    %3312 = vmatpush1.msra.mxu0 0.0
    %3313 = vmatprep.subr.mxu0 0.0
    %3314 = vmatpush1.msra.mxu0 0.0
    %3315 = vmatprep.subr.mxu0 0.0
    %3316 = vmatpush1.msra.mxu0 0.0
    %3317 = vmatprep.subr.mxu0 0.0
    %3318 = vmatpush1.msra.mxu0 0.0
    %3319 = vmatprep.subr.mxu0 0.0
    %3320 = vmatpush1.msra.mxu0 0.0
    %3321 = vmatprep.subr.mxu0 0.0
    %3322 = vmatpush1.msra.mxu0 0.0
    %3323 = vmatprep.subr.mxu0 0.0
    %3324 = vmatpush1.msra.mxu0 0.0
    %3325 = vmatprep.subr.mxu0 0.0
    %3326 = vmatpush1.msra.mxu0 0.0
    %3327 = vmatprep.subr.mxu0 0.0
    %3328 = vmatpush1.msra.mxu0 0.0
    %3329 = vmatprep.subr.mxu0 0.0
    %3330 = vmatpush1.msra.mxu0 0.0
    %3331 = vmatprep.subr.mxu0 0.0
    %3332 = vmatpush1.msra.mxu0 0.0
    %3333 = vmatprep.subr.mxu0 0.0
    %3334 = vmatpush1.msra.mxu0 0.0
    %3335 = vmatprep.subr.mxu0 0.0
    %3336 = vmatpush1.msra.mxu0 0.0
    %3337 = vmatprep.subr.mxu0 0.0
    %3338 = vmatpush1.msra.mxu0 0.0
    %3339 = vmatprep.mubr.f32.mxu0 0.0
    %3340 = vmatmul.mubr.f32.gmra.mrb[0].mxu0 %v3270
    %v3341 = vpop.f32.mrb[0].mxu0
    %v3342 = vadd.f32 0.0, %v3341
    %v3343 = vpop.f32.mrb[0].mxu0
    %3344 = vmatprep.mubr.f32.mxu0 0.0
    %3345 = vmatmul.mubr.f32.gmra.mrb[0].mxu0 %v3273
    %v3346 = vpop.f32.mrb[0].mxu0
    %v3347 = vadd.f32 0.0, %v3346
    %v3348 = vpop.f32.mrb[0].mxu0
    %3349 = vdwg.mxu0
    %3352 = vrot.lane.b32.xlu0 %v2330, 104
    %v3353 = vpop.permute.xlu0 %3352
    %3354 = vrot.lane.b32.xlu0 %v2335, 104
    %v3355 = vpop.permute.xlu0 %3354
    %v3359 = vsel %vm2467, %v1526, 0
    %v3362 = vsel %vm2467, %v1531, 0
    %3364 = vmatprep.subr.mxu0 0.0
    %3365 = vmatpush1.msra.mxu0 %v3353
    %3366 = vmatprep.subr.mxu0 0.0
    %3367 = vmatpush1.msra.mxu0 %v3355
    %3368 = vmatprep.subr.mxu0 0.0
    %3369 = vmatpush1.msra.mxu0 0.0
    %3370 = vmatprep.subr.mxu0 0.0
    %3371 = vmatpush1.msra.mxu0 0.0
    %3372 = vmatprep.subr.mxu0 0.0
    %3373 = vmatpush1.msra.mxu0 0.0
    %3374 = vmatprep.subr.mxu0 0.0
    %3375 = vmatpush1.msra.mxu0 0.0
    %3376 = vmatprep.subr.mxu0 0.0
    %3377 = vmatpush1.msra.mxu0 0.0
    %3378 = vmatprep.subr.mxu0 0.0
    %3379 = vmatpush1.msra.mxu0 0.0
    %3380 = vmatprep.subr.mxu0 0.0
    %3381 = vmatpush1.msra.mxu0 0.0
    %3382 = vmatprep.subr.mxu0 0.0
    %3383 = vmatpush1.msra.mxu0 0.0
    %3384 = vmatprep.subr.mxu0 0.0
    %3385 = vmatpush1.msra.mxu0 0.0
    %3386 = vmatprep.subr.mxu0 0.0
    %3387 = vmatpush1.msra.mxu0 0.0
    %3388 = vmatprep.subr.mxu0 0.0
    %3389 = vmatpush1.msra.mxu0 0.0
    %3390 = vmatprep.subr.mxu0 0.0
    %3391 = vmatpush1.msra.mxu0 0.0
    %3392 = vmatprep.subr.mxu0 0.0
    %3393 = vmatpush1.msra.mxu0 0.0
    %3394 = vmatprep.subr.mxu0 0.0
    %3395 = vmatpush1.msra.mxu0 0.0
    %3396 = vmatprep.subr.mxu0 0.0
    %3397 = vmatpush1.msra.mxu0 0.0
    %3398 = vmatprep.subr.mxu0 0.0
    %3399 = vmatpush1.msra.mxu0 0.0
    %3400 = vmatprep.subr.mxu0 0.0
    %3401 = vmatpush1.msra.mxu0 0.0
    %3402 = vmatprep.subr.mxu0 0.0
    %3403 = vmatpush1.msra.mxu0 0.0
    %3404 = vmatprep.subr.mxu0 0.0
    %3405 = vmatpush1.msra.mxu0 0.0
    %3406 = vmatprep.subr.mxu0 0.0
    %3407 = vmatpush1.msra.mxu0 0.0
    %3408 = vmatprep.subr.mxu0 0.0
    %3409 = vmatpush1.msra.mxu0 0.0
    %3410 = vmatprep.subr.mxu0 0.0
    %3411 = vmatpush1.msra.mxu0 0.0
    %3412 = vmatprep.subr.mxu0 0.0
    %3413 = vmatpush1.msra.mxu0 0.0
    %3414 = vmatprep.subr.mxu0 0.0
    %3415 = vmatpush1.msra.mxu0 0.0
    %3416 = vmatprep.subr.mxu0 0.0
    %3417 = vmatpush1.msra.mxu0 0.0
    %3418 = vmatprep.subr.mxu0 0.0
    %3419 = vmatpush1.msra.mxu0 0.0
    %3420 = vmatprep.subr.mxu0 0.0
    %3421 = vmatpush1.msra.mxu0 0.0
    %3422 = vmatprep.subr.mxu0 0.0
    %3423 = vmatpush1.msra.mxu0 0.0
    %3424 = vmatprep.subr.mxu0 0.0
    %3425 = vmatpush1.msra.mxu0 0.0
    %3426 = vmatprep.subr.mxu0 0.0
    %3427 = vmatpush1.msra.mxu0 0.0
    %3428 = vmatprep.mubr.f32.mxu0 0.0
    %3429 = vmatmul.mubr.f32.gmra.mrb[0].mxu0 %v3359
    %v3430 = vpop.f32.mrb[0].mxu0
    %v3431 = vadd.f32 0.0, %v3430
    %v3432 = vpop.f32.mrb[0].mxu0
    %3433 = vmatprep.mubr.f32.mxu0 0.0
    %3434 = vmatmul.mubr.f32.gmra.mrb[0].mxu0 %v3362
    %v3435 = vpop.f32.mrb[0].mxu0
    %v3436 = vadd.f32 0.0, %v3435
    %v3437 = vpop.f32.mrb[0].mxu0
    %3438 = vdwg.mxu0
    %3441 = vrot.lane.b32.xlu0 %v2340, 104
    %v3442 = vpop.permute.xlu0 %3441
    %3443 = vrot.lane.b32.xlu0 %v2345, 104
    %v3444 = vpop.permute.xlu0 %3443
    %v3448 = vsel %vm2467, %v1613, 0
    %v3451 = vsel %vm2467, %v1618, 0
    %3453 = vmatprep.subr.mxu0 0.0
    %3454 = vmatpush1.msra.mxu0 %v3442
    %3455 = vmatprep.subr.mxu0 0.0
    %3456 = vmatpush1.msra.mxu0 %v3444
    %3457 = vmatprep.subr.mxu0 0.0
    %3458 = vmatpush1.msra.mxu0 0.0
    %3459 = vmatprep.subr.mxu0 0.0
    %3460 = vmatpush1.msra.mxu0 0.0
    %3461 = vmatprep.subr.mxu0 0.0
    %3462 = vmatpush1.msra.mxu0 0.0
    %3463 = vmatprep.subr.mxu0 0.0
    %3464 = vmatpush1.msra.mxu0 0.0
    %3465 = vmatprep.subr.mxu0 0.0
    %3466 = vmatpush1.msra.mxu0 0.0
    %3467 = vmatprep.subr.mxu0 0.0
    %3468 = vmatpush1.msra.mxu0 0.0
    %3469 = vmatprep.subr.mxu0 0.0
    %3470 = vmatpush1.msra.mxu0 0.0
    %3471 = vmatprep.subr.mxu0 0.0
    %3472 = vmatpush1.msra.mxu0 0.0
    %3473 = vmatprep.subr.mxu0 0.0
    %3474 = vmatpush1.msra.mxu0 0.0
    %3475 = vmatprep.subr.mxu0 0.0
    %3476 = vmatpush1.msra.mxu0 0.0
    %3477 = vmatprep.subr.mxu0 0.0
    %3478 = vmatpush1.msra.mxu0 0.0
    %3479 = vmatprep.subr.mxu0 0.0
    %3480 = vmatpush1.msra.mxu0 0.0
    %3481 = vmatprep.subr.mxu0 0.0
    %3482 = vmatpush1.msra.mxu0 0.0
    %3483 = vmatprep.subr.mxu0 0.0
    %3484 = vmatpush1.msra.mxu0 0.0
    %3485 = vmatprep.subr.mxu0 0.0
    %3486 = vmatpush1.msra.mxu0 0.0
    %3487 = vmatprep.subr.mxu0 0.0
    %3488 = vmatpush1.msra.mxu0 0.0
    %3489 = vmatprep.subr.mxu0 0.0
    %3490 = vmatpush1.msra.mxu0 0.0
    %3491 = vmatprep.subr.mxu0 0.0
    %3492 = vmatpush1.msra.mxu0 0.0
    %3493 = vmatprep.subr.mxu0 0.0
    %3494 = vmatpush1.msra.mxu0 0.0
    %3495 = vmatprep.subr.mxu0 0.0
    %3496 = vmatpush1.msra.mxu0 0.0
    %3497 = vmatprep.subr.mxu0 0.0
    %3498 = vmatpush1.msra.mxu0 0.0
    %3499 = vmatprep.subr.mxu0 0.0
    %3500 = vmatpush1.msra.mxu0 0.0
    %3501 = vmatprep.subr.mxu0 0.0
    %3502 = vmatpush1.msra.mxu0 0.0
    %3503 = vmatprep.subr.mxu0 0.0
    %3504 = vmatpush1.msra.mxu0 0.0
    %3505 = vmatprep.subr.mxu0 0.0
    %3506 = vmatpush1.msra.mxu0 0.0
    %3507 = vmatprep.subr.mxu0 0.0
    %3508 = vmatpush1.msra.mxu0 0.0
    %3509 = vmatprep.subr.mxu0 0.0
    %3510 = vmatpush1.msra.mxu0 0.0
    %3511 = vmatprep.subr.mxu0 0.0
    %3512 = vmatpush1.msra.mxu0 0.0
    %3513 = vmatprep.subr.mxu0 0.0
    %3514 = vmatpush1.msra.mxu0 0.0
    %3515 = vmatprep.subr.mxu0 0.0
    %3516 = vmatpush1.msra.mxu0 0.0
    %3517 = vmatprep.mubr.f32.mxu0 0.0
    %3518 = vmatmul.mubr.f32.gmra.mrb[0].mxu0 %v3448
    %v3519 = vpop.f32.mrb[0].mxu0
    %v3520 = vadd.f32 0.0, %v3519
    %v3521 = vpop.f32.mrb[0].mxu0
    %3522 = vmatprep.mubr.f32.mxu0 0.0
    %3523 = vmatmul.mubr.f32.gmra.mrb[0].mxu0 %v3451
    %v3524 = vpop.f32.mrb[0].mxu0
    %v3525 = vadd.f32 0.0, %v3524
    %v3526 = vpop.f32.mrb[0].mxu0
    %3527 = vdwg.mxu0
    %3530 = vrot.lane.b32.xlu0 %v2350, 104
    %v3531 = vpop.permute.xlu0 %3530
    %3532 = vrot.lane.b32.xlu0 %v2355, 104
    %v3533 = vpop.permute.xlu0 %3532
    %v3537 = vsel %vm2467, %v1700, 0
    %v3540 = vsel %vm2467, %v1705, 0
    %3542 = vmatprep.subr.mxu0 0.0
    %3543 = vmatpush1.msra.mxu0 %v3531
    %3544 = vmatprep.subr.mxu0 0.0
    %3545 = vmatpush1.msra.mxu0 %v3533
    %3546 = vmatprep.subr.mxu0 0.0
    %3547 = vmatpush1.msra.mxu0 0.0
    %3548 = vmatprep.subr.mxu0 0.0
    %3549 = vmatpush1.msra.mxu0 0.0
    %3550 = vmatprep.subr.mxu0 0.0
    %3551 = vmatpush1.msra.mxu0 0.0
    %3552 = vmatprep.subr.mxu0 0.0
    %3553 = vmatpush1.msra.mxu0 0.0
    %3554 = vmatprep.subr.mxu0 0.0
    %3555 = vmatpush1.msra.mxu0 0.0
    %3556 = vmatprep.subr.mxu0 0.0
    %3557 = vmatpush1.msra.mxu0 0.0
    %3558 = vmatprep.subr.mxu0 0.0
    %3559 = vmatpush1.msra.mxu0 0.0
    %3560 = vmatprep.subr.mxu0 0.0
    %3561 = vmatpush1.msra.mxu0 0.0
    %3562 = vmatprep.subr.mxu0 0.0
    %3563 = vmatpush1.msra.mxu0 0.0
    %3564 = vmatprep.subr.mxu0 0.0
    %3565 = vmatpush1.msra.mxu0 0.0
    %3566 = vmatprep.subr.mxu0 0.0
    %3567 = vmatpush1.msra.mxu0 0.0
    %3568 = vmatprep.subr.mxu0 0.0
    %3569 = vmatpush1.msra.mxu0 0.0
    %3570 = vmatprep.subr.mxu0 0.0
    %3571 = vmatpush1.msra.mxu0 0.0
    %3572 = vmatprep.subr.mxu0 0.0
    %3573 = vmatpush1.msra.mxu0 0.0
    %3574 = vmatprep.subr.mxu0 0.0
    %3575 = vmatpush1.msra.mxu0 0.0
    %3576 = vmatprep.subr.mxu0 0.0
    %3577 = vmatpush1.msra.mxu0 0.0
    %3578 = vmatprep.subr.mxu0 0.0
    %3579 = vmatpush1.msra.mxu0 0.0
    %3580 = vmatprep.subr.mxu0 0.0
    %3581 = vmatpush1.msra.mxu0 0.0
    %3582 = vmatprep.subr.mxu0 0.0
    %3583 = vmatpush1.msra.mxu0 0.0
    %3584 = vmatprep.subr.mxu0 0.0
    %3585 = vmatpush1.msra.mxu0 0.0
    %3586 = vmatprep.subr.mxu0 0.0
    %3587 = vmatpush1.msra.mxu0 0.0
    %3588 = vmatprep.subr.mxu0 0.0
    %3589 = vmatpush1.msra.mxu0 0.0
    %3590 = vmatprep.subr.mxu0 0.0
    %3591 = vmatpush1.msra.mxu0 0.0
    %3592 = vmatprep.subr.mxu0 0.0
    %3593 = vmatpush1.msra.mxu0 0.0
    %3594 = vmatprep.subr.mxu0 0.0
    %3595 = vmatpush1.msra.mxu0 0.0
    %3596 = vmatprep.subr.mxu0 0.0
    %3597 = vmatpush1.msra.mxu0 0.0
    %3598 = vmatprep.subr.mxu0 0.0
    %3599 = vmatpush1.msra.mxu0 0.0
    %3600 = vmatprep.subr.mxu0 0.0
    %3601 = vmatpush1.msra.mxu0 0.0
    %3602 = vmatprep.subr.mxu0 0.0
    %3603 = vmatpush1.msra.mxu0 0.0
    %3604 = vmatprep.subr.mxu0 0.0
    %3605 = vmatpush1.msra.mxu0 0.0
    %3606 = vmatprep.mubr.f32.mxu0 0.0
    %3607 = vmatmul.mubr.f32.gmra.mrb[0].mxu0 %v3537
    %v3608 = vpop.f32.mrb[0].mxu0
    %v3609 = vadd.f32 0.0, %v3608
    %v3610 = vpop.f32.mrb[0].mxu0
    %3611 = vmatprep.mubr.f32.mxu0 0.0
    %3612 = vmatmul.mubr.f32.gmra.mrb[0].mxu0 %v3540
    %v3613 = vpop.f32.mrb[0].mxu0
    %v3614 = vadd.f32 0.0, %v3613
    %v3615 = vpop.f32.mrb[0].mxu0
    %3616 = vdwg.mxu0
    %3619 = vrot.lane.b32.xlu0 %v2360, 104
    %v3620 = vpop.permute.xlu0 %3619
    %3621 = vrot.lane.b32.xlu0 %v2365, 104
    %v3622 = vpop.permute.xlu0 %3621
    %v3626 = vsel %vm2467, %v1787, 0
    %v3629 = vsel %vm2467, %v1792, 0
    %3631 = vmatprep.subr.mxu0 0.0
    %3632 = vmatpush1.msra.mxu0 %v3620
    %3633 = vmatprep.subr.mxu0 0.0
    %3634 = vmatpush1.msra.mxu0 %v3622
    %3635 = vmatprep.subr.mxu0 0.0
    %3636 = vmatpush1.msra.mxu0 0.0
    %3637 = vmatprep.subr.mxu0 0.0
    %3638 = vmatpush1.msra.mxu0 0.0
    %3639 = vmatprep.subr.mxu0 0.0
    %3640 = vmatpush1.msra.mxu0 0.0
    %3641 = vmatprep.subr.mxu0 0.0
    %3642 = vmatpush1.msra.mxu0 0.0
    %3643 = vmatprep.subr.mxu0 0.0
    %3644 = vmatpush1.msra.mxu0 0.0
    %3645 = vmatprep.subr.mxu0 0.0
    %3646 = vmatpush1.msra.mxu0 0.0
    %3647 = vmatprep.subr.mxu0 0.0
    %3648 = vmatpush1.msra.mxu0 0.0
    %3649 = vmatprep.subr.mxu0 0.0
    %3650 = vmatpush1.msra.mxu0 0.0
    %3651 = vmatprep.subr.mxu0 0.0
    %3652 = vmatpush1.msra.mxu0 0.0
    %3653 = vmatprep.subr.mxu0 0.0
    %3654 = vmatpush1.msra.mxu0 0.0
    %3655 = vmatprep.subr.mxu0 0.0
    %3656 = vmatpush1.msra.mxu0 0.0
    %3657 = vmatprep.subr.mxu0 0.0
    %3658 = vmatpush1.msra.mxu0 0.0
    %3659 = vmatprep.subr.mxu0 0.0
    %3660 = vmatpush1.msra.mxu0 0.0
    %3661 = vmatprep.subr.mxu0 0.0
    %3662 = vmatpush1.msra.mxu0 0.0
    %3663 = vmatprep.subr.mxu0 0.0
    %3664 = vmatpush1.msra.mxu0 0.0
    %3665 = vmatprep.subr.mxu0 0.0
    %3666 = vmatpush1.msra.mxu0 0.0
    %3667 = vmatprep.subr.mxu0 0.0
    %3668 = vmatpush1.msra.mxu0 0.0
    %3669 = vmatprep.subr.mxu0 0.0
    %3670 = vmatpush1.msra.mxu0 0.0
    %3671 = vmatprep.subr.mxu0 0.0
    %3672 = vmatpush1.msra.mxu0 0.0
    %3673 = vmatprep.subr.mxu0 0.0
    %3674 = vmatpush1.msra.mxu0 0.0
    %3675 = vmatprep.subr.mxu0 0.0
    %3676 = vmatpush1.msra.mxu0 0.0
    %3677 = vmatprep.subr.mxu0 0.0
    %3678 = vmatpush1.msra.mxu0 0.0
    %3679 = vmatprep.subr.mxu0 0.0
    %3680 = vmatpush1.msra.mxu0 0.0
    %3681 = vmatprep.subr.mxu0 0.0
    %3682 = vmatpush1.msra.mxu0 0.0
    %3683 = vmatprep.subr.mxu0 0.0
    %3684 = vmatpush1.msra.mxu0 0.0
    %3685 = vmatprep.subr.mxu0 0.0
    %3686 = vmatpush1.msra.mxu0 0.0
    %3687 = vmatprep.subr.mxu0 0.0
    %3688 = vmatpush1.msra.mxu0 0.0
    %3689 = vmatprep.subr.mxu0 0.0
    %3690 = vmatpush1.msra.mxu0 0.0
    %3691 = vmatprep.subr.mxu0 0.0
    %3692 = vmatpush1.msra.mxu0 0.0
    %3693 = vmatprep.subr.mxu0 0.0
    %3694 = vmatpush1.msra.mxu0 0.0
    %3695 = vmatprep.mubr.f32.mxu0 0.0
    %3696 = vmatmul.mubr.f32.gmra.mrb[0].mxu0 %v3626
    %v3697 = vpop.f32.mrb[0].mxu0
    %v3698 = vadd.f32 0.0, %v3697
    %v3699 = vpop.f32.mrb[0].mxu0
    %3700 = vmatprep.mubr.f32.mxu0 0.0
    %3701 = vmatmul.mubr.f32.gmra.mrb[0].mxu0 %v3629
    %v3702 = vpop.f32.mrb[0].mxu0
    %v3703 = vadd.f32 0.0, %v3702
    %v3704 = vpop.f32.mrb[0].mxu0
    %3705 = vdwg.mxu0
    %3708 = vrot.lane.b32.xlu0 %v2370, 104
    %v3709 = vpop.permute.xlu0 %3708
    %3710 = vrot.lane.b32.xlu0 %v2375, 104
    %v3711 = vpop.permute.xlu0 %3710
    %v3715 = vsel %vm2467, %v1874, 0
    %v3718 = vsel %vm2467, %v1879, 0
    %3720 = vmatprep.subr.mxu0 0.0
    %3721 = vmatpush1.msra.mxu0 %v3709
    %3722 = vmatprep.subr.mxu0 0.0
    %3723 = vmatpush1.msra.mxu0 %v3711
    %3724 = vmatprep.subr.mxu0 0.0
    %3725 = vmatpush1.msra.mxu0 0.0
    %3726 = vmatprep.subr.mxu0 0.0
    %3727 = vmatpush1.msra.mxu0 0.0
    %3728 = vmatprep.subr.mxu0 0.0
    %3729 = vmatpush1.msra.mxu0 0.0
    %3730 = vmatprep.subr.mxu0 0.0
    %3731 = vmatpush1.msra.mxu0 0.0
    %3732 = vmatprep.subr.mxu0 0.0
    %3733 = vmatpush1.msra.mxu0 0.0
    %3734 = vmatprep.subr.mxu0 0.0
    %3735 = vmatpush1.msra.mxu0 0.0
    %3736 = vmatprep.subr.mxu0 0.0
    %3737 = vmatpush1.msra.mxu0 0.0
    %3738 = vmatprep.subr.mxu0 0.0
    %3739 = vmatpush1.msra.mxu0 0.0
    %3740 = vmatprep.subr.mxu0 0.0
    %3741 = vmatpush1.msra.mxu0 0.0
    %3742 = vmatprep.subr.mxu0 0.0
    %3743 = vmatpush1.msra.mxu0 0.0
    %3744 = vmatprep.subr.mxu0 0.0
    %3745 = vmatpush1.msra.mxu0 0.0
    %3746 = vmatprep.subr.mxu0 0.0
    %3747 = vmatpush1.msra.mxu0 0.0
    %3748 = vmatprep.subr.mxu0 0.0
    %3749 = vmatpush1.msra.mxu0 0.0
    %3750 = vmatprep.subr.mxu0 0.0
    %3751 = vmatpush1.msra.mxu0 0.0
    %3752 = vmatprep.subr.mxu0 0.0
    %3753 = vmatpush1.msra.mxu0 0.0
    %3754 = vmatprep.subr.mxu0 0.0
    %3755 = vmatpush1.msra.mxu0 0.0
    %3756 = vmatprep.subr.mxu0 0.0
    %3757 = vmatpush1.msra.mxu0 0.0
    %3758 = vmatprep.subr.mxu0 0.0
    %3759 = vmatpush1.msra.mxu0 0.0
    %3760 = vmatprep.subr.mxu0 0.0
    %3761 = vmatpush1.msra.mxu0 0.0
    %3762 = vmatprep.subr.mxu0 0.0
    %3763 = vmatpush1.msra.mxu0 0.0
    %3764 = vmatprep.subr.mxu0 0.0
    %3765 = vmatpush1.msra.mxu0 0.0
    %3766 = vmatprep.subr.mxu0 0.0
    %3767 = vmatpush1.msra.mxu0 0.0
    %3768 = vmatprep.subr.mxu0 0.0
    %3769 = vmatpush1.msra.mxu0 0.0
    %3770 = vmatprep.subr.mxu0 0.0
    %3771 = vmatpush1.msra.mxu0 0.0
    %3772 = vmatprep.subr.mxu0 0.0
    %3773 = vmatpush1.msra.mxu0 0.0
    %3774 = vmatprep.subr.mxu0 0.0
    %3775 = vmatpush1.msra.mxu0 0.0
    %3776 = vmatprep.subr.mxu0 0.0
    %3777 = vmatpush1.msra.mxu0 0.0
    %3778 = vmatprep.subr.mxu0 0.0
    %3779 = vmatpush1.msra.mxu0 0.0
    %3780 = vmatprep.subr.mxu0 0.0
    %3781 = vmatpush1.msra.mxu0 0.0
    %3782 = vmatprep.subr.mxu0 0.0
    %3783 = vmatpush1.msra.mxu0 0.0
    %3784 = vmatprep.mubr.f32.mxu0 0.0
    %3785 = vmatmul.mubr.f32.gmra.mrb[0].mxu0 %v3715
    %v3786 = vpop.f32.mrb[0].mxu0
    %v3787 = vadd.f32 0.0, %v3786
    %v3788 = vpop.f32.mrb[0].mxu0
    %3789 = vmatprep.mubr.f32.mxu0 0.0
    %3790 = vmatmul.mubr.f32.gmra.mrb[0].mxu0 %v3718
    %v3791 = vpop.f32.mrb[0].mxu0
    %v3792 = vadd.f32 0.0, %v3791
    %v3793 = vpop.f32.mrb[0].mxu0
    %3794 = vdwg.mxu0
    %3797 = vrot.lane.b32.xlu0 %v2380, 104
    %v3798 = vpop.permute.xlu0 %3797
    %3799 = vrot.lane.b32.xlu0 %v2385, 104
    %v3800 = vpop.permute.xlu0 %3799
    %v3804 = vsel %vm2467, %v1961, 0
    %v3807 = vsel %vm2467, %v1966, 0
    %3809 = vmatprep.subr.mxu0 0.0
    %3810 = vmatpush1.msra.mxu0 %v3798
    %3811 = vmatprep.subr.mxu0 0.0
    %3812 = vmatpush1.msra.mxu0 %v3800
    %3813 = vmatprep.subr.mxu0 0.0
    %3814 = vmatpush1.msra.mxu0 0.0
    %3815 = vmatprep.subr.mxu0 0.0
    %3816 = vmatpush1.msra.mxu0 0.0
    %3817 = vmatprep.subr.mxu0 0.0
    %3818 = vmatpush1.msra.mxu0 0.0
    %3819 = vmatprep.subr.mxu0 0.0
    %3820 = vmatpush1.msra.mxu0 0.0
    %3821 = vmatprep.subr.mxu0 0.0
    %3822 = vmatpush1.msra.mxu0 0.0
    %3823 = vmatprep.subr.mxu0 0.0
    %3824 = vmatpush1.msra.mxu0 0.0
    %3825 = vmatprep.subr.mxu0 0.0
    %3826 = vmatpush1.msra.mxu0 0.0
    %3827 = vmatprep.subr.mxu0 0.0
    %3828 = vmatpush1.msra.mxu0 0.0
    %3829 = vmatprep.subr.mxu0 0.0
    %3830 = vmatpush1.msra.mxu0 0.0
    %3831 = vmatprep.subr.mxu0 0.0
    %3832 = vmatpush1.msra.mxu0 0.0
    %3833 = vmatprep.subr.mxu0 0.0
    %3834 = vmatpush1.msra.mxu0 0.0
    %3835 = vmatprep.subr.mxu0 0.0
    %3836 = vmatpush1.msra.mxu0 0.0
    %3837 = vmatprep.subr.mxu0 0.0
    %3838 = vmatpush1.msra.mxu0 0.0
    %3839 = vmatprep.subr.mxu0 0.0
    %3840 = vmatpush1.msra.mxu0 0.0
    %3841 = vmatprep.subr.mxu0 0.0
    %3842 = vmatpush1.msra.mxu0 0.0
    %3843 = vmatprep.subr.mxu0 0.0
    %3844 = vmatpush1.msra.mxu0 0.0
    %3845 = vmatprep.subr.mxu0 0.0
    %3846 = vmatpush1.msra.mxu0 0.0
    %3847 = vmatprep.subr.mxu0 0.0
    %3848 = vmatpush1.msra.mxu0 0.0
    %3849 = vmatprep.subr.mxu0 0.0
    %3850 = vmatpush1.msra.mxu0 0.0
    %3851 = vmatprep.subr.mxu0 0.0
    %3852 = vmatpush1.msra.mxu0 0.0
    %3853 = vmatprep.subr.mxu0 0.0
    %3854 = vmatpush1.msra.mxu0 0.0
    %3855 = vmatprep.subr.mxu0 0.0
    %3856 = vmatpush1.msra.mxu0 0.0
    %3857 = vmatprep.subr.mxu0 0.0
    %3858 = vmatpush1.msra.mxu0 0.0
    %3859 = vmatprep.subr.mxu0 0.0
    %3860 = vmatpush1.msra.mxu0 0.0
    %3861 = vmatprep.subr.mxu0 0.0
    %3862 = vmatpush1.msra.mxu0 0.0
    %3863 = vmatprep.subr.mxu0 0.0
    %3864 = vmatpush1.msra.mxu0 0.0
    %3865 = vmatprep.subr.mxu0 0.0
    %3866 = vmatpush1.msra.mxu0 0.0
    %3867 = vmatprep.subr.mxu0 0.0
    %3868 = vmatpush1.msra.mxu0 0.0
    %3869 = vmatprep.subr.mxu0 0.0
    %3870 = vmatpush1.msra.mxu0 0.0
    %3871 = vmatprep.subr.mxu0 0.0
    %3872 = vmatpush1.msra.mxu0 0.0
    %3873 = vmatprep.mubr.f32.mxu0 0.0
    %3874 = vmatmul.mubr.f32.gmra.mrb[0].mxu0 %v3804
    %v3875 = vpop.f32.mrb[0].mxu0
    %v3876 = vadd.f32 0.0, %v3875
    %v3877 = vpop.f32.mrb[0].mxu0
    %3878 = vmatprep.mubr.f32.mxu0 0.0
    %3879 = vmatmul.mubr.f32.gmra.mrb[0].mxu0 %v3807
    %v3880 = vpop.f32.mrb[0].mxu0
    %v3881 = vadd.f32 0.0, %v3880
    %v3882 = vpop.f32.mrb[0].mxu0
    %3883 = vdwg.mxu0
    %v3884 = vadd.f32 %v2427, %v2541
    %v3885 = vadd.f32 %v2428, %v2546
    %v3886 = vadd.f32 %v2429, %v2630
    %v3887 = vadd.f32 %v2430, %v2635
    %v3888 = vadd.f32 %v2431, %v2719
    %v3889 = vadd.f32 %v2432, %v2724
    %v3890 = vadd.f32 %v2433, %v2808
    %v3891 = vadd.f32 %v2434, %v2813
    %v3892 = vadd.f32 %v2435, %v2897
    %v3893 = vadd.f32 %v2436, %v2902
    %v3894 = vadd.f32 %v2437, %v2986
    %v3895 = vadd.f32 %v2438, %v2991
    %v3896 = vadd.f32 %v2439, %v3075
    %v3897 = vadd.f32 %v2440, %v3080
    %v3898 = vadd.f32 %v2441, %v3164
    %v3899 = vadd.f32 %v2442, %v3169
    %v3900 = vadd.f32 %v2443, %v3253
    %v3901 = vadd.f32 %v2444, %v3258
    %v3902 = vadd.f32 %v2445, %v3342
    %v3903 = vadd.f32 %v2446, %v3347
    %v3904 = vadd.f32 %v2447, %v3431
    %v3905 = vadd.f32 %v2448, %v3436
    %v3906 = vadd.f32 %v2449, %v3520
    %v3907 = vadd.f32 %v2450, %v3525
    %v3908 = vadd.f32 %v2451, %v3609
    %v3909 = vadd.f32 %v2452, %v3614
    %v3910 = vadd.f32 %v2453, %v3698
    %v3911 = vadd.f32 %v2454, %v3703
    %v3912 = vadd.f32 %v2455, %v3787
    %v3913 = vadd.f32 %v2456, %v3792
    %v3914 = vadd.f32 %v2457, %v3876
    %v3915 = vadd.f32 %v2458, %v3881
    %vm3916 = vcmask 195712
    %v3917 = vsel %vm3916, %v3884, -inf
    %3918 = vmax.xlane.f32.xlu0 %v3917
    %v3919 = vpop.xlane.xlu0 %3918
    %v3920 = vsel %vm3916, %v3885, -inf
    %3921 = vmax.xlane.f32.xlu0 %v3920
    %v3922 = vpop.xlane.xlu0 %3921
    %v3923 = vsel %vm3916, %v3886, -inf
    %3924 = vmax.xlane.f32.xlu0 %v3923
    %v3925 = vpop.xlane.xlu0 %3924
    %v3926 = vsel %vm3916, %v3887, -inf
    %3927 = vmax.xlane.f32.xlu0 %v3926
    %v3928 = vpop.xlane.xlu0 %3927
    %v3929 = vsel %vm3916, %v3888, -inf
    %3930 = vmax.xlane.f32.xlu0 %v3929
    %v3931 = vpop.xlane.xlu0 %3930
    %v3932 = vsel %vm3916, %v3889, -inf
    %3933 = vmax.xlane.f32.xlu0 %v3932
    %v3934 = vpop.xlane.xlu0 %3933
    %v3935 = vsel %vm3916, %v3890, -inf
    %3936 = vmax.xlane.f32.xlu0 %v3935
    %v3937 = vpop.xlane.xlu0 %3936
    %v3938 = vsel %vm3916, %v3891, -inf
    %3939 = vmax.xlane.f32.xlu0 %v3938
    %v3940 = vpop.xlane.xlu0 %3939
    %v3941 = vsel %vm3916, %v3892, -inf
    %3942 = vmax.xlane.f32.xlu0 %v3941
    %v3943 = vpop.xlane.xlu0 %3942
    %v3944 = vsel %vm3916, %v3893, -inf
    %3945 = vmax.xlane.f32.xlu0 %v3944
    %v3946 = vpop.xlane.xlu0 %3945
    %v3947 = vsel %vm3916, %v3894, -inf
    %3948 = vmax.xlane.f32.xlu0 %v3947
    %v3949 = vpop.xlane.xlu0 %3948
    %v3950 = vsel %vm3916, %v3895, -inf
    %3951 = vmax.xlane.f32.xlu0 %v3950
    %v3952 = vpop.xlane.xlu0 %3951
    %v3953 = vsel %vm3916, %v3896, -inf
    %3954 = vmax.xlane.f32.xlu0 %v3953
    %v3955 = vpop.xlane.xlu0 %3954
    %v3956 = vsel %vm3916, %v3897, -inf
    %3957 = vmax.xlane.f32.xlu0 %v3956
    %v3958 = vpop.xlane.xlu0 %3957
    %v3959 = vsel %vm3916, %v3898, -inf
    %3960 = vmax.xlane.f32.xlu0 %v3959
    %v3961 = vpop.xlane.xlu0 %3960
    %v3962 = vsel %vm3916, %v3899, -inf
    %3963 = vmax.xlane.f32.xlu0 %v3962
    %v3964 = vpop.xlane.xlu0 %3963
    %v3965 = vsel %vm3916, %v3900, -inf
    %3966 = vmax.xlane.f32.xlu0 %v3965
    %v3967 = vpop.xlane.xlu0 %3966
    %v3968 = vsel %vm3916, %v3901, -inf
    %3969 = vmax.xlane.f32.xlu0 %v3968
    %v3970 = vpop.xlane.xlu0 %3969
    %v3971 = vsel %vm3916, %v3902, -inf
    %3972 = vmax.xlane.f32.xlu0 %v3971
    %v3973 = vpop.xlane.xlu0 %3972
    %v3974 = vsel %vm3916, %v3903, -inf
    %3975 = vmax.xlane.f32.xlu0 %v3974
    %v3976 = vpop.xlane.xlu0 %3975
    %v3977 = vsel %vm3916, %v3904, -inf
    %3978 = vmax.xlane.f32.xlu0 %v3977
    %v3979 = vpop.xlane.xlu0 %3978
    %v3980 = vsel %vm3916, %v3905, -inf
    %3981 = vmax.xlane.f32.xlu0 %v3980
    %v3982 = vpop.xlane.xlu0 %3981
    %v3983 = vsel %vm3916, %v3906, -inf
    %3984 = vmax.xlane.f32.xlu0 %v3983
    %v3985 = vpop.xlane.xlu0 %3984
    %v3986 = vsel %vm3916, %v3907, -inf
    %3987 = vmax.xlane.f32.xlu0 %v3986
    %v3988 = vpop.xlane.xlu0 %3987
    %v3989 = vsel %vm3916, %v3908, -inf
    %3990 = vmax.xlane.f32.xlu0 %v3989
    %v3991 = vpop.xlane.xlu0 %3990
    %v3992 = vsel %vm3916, %v3909, -inf
    %3993 = vmax.xlane.f32.xlu0 %v3992
    %v3994 = vpop.xlane.xlu0 %3993
    %v3995 = vsel %vm3916, %v3910, -inf
    %3996 = vmax.xlane.f32.xlu0 %v3995
    %v3997 = vpop.xlane.xlu0 %3996
    %v3998 = vsel %vm3916, %v3911, -inf
    %3999 = vmax.xlane.f32.xlu0 %v3998
    %v4000 = vpop.xlane.xlu0 %3999
    %v4001 = vsel %vm3916, %v3912, -inf
    %4002 = vmax.xlane.f32.xlu0 %v4001
    %v4003 = vpop.xlane.xlu0 %4002
    %v4004 = vsel %vm3916, %v3913, -inf
    %4005 = vmax.xlane.f32.xlu0 %v4004
    %v4006 = vpop.xlane.xlu0 %4005
    %v4007 = vsel %vm3916, %v3914, -inf
    %4008 = vmax.xlane.f32.xlu0 %v4007
    %v4009 = vpop.xlane.xlu0 %4008
    %v4010 = vsel %vm3916, %v3915, -inf
    %4011 = vmax.xlane.f32.xlu0 %v4010
    %v4012 = vpop.xlane.xlu0 %4011
    %v4013 = vsub.f32 %v3884, %v3919
    %v4014 = vsub.f32 %v3885, %v3922
    %v4015 = vsub.f32 %v3886, %v3925
    %v4016 = vsub.f32 %v3887, %v3928
    %v4017 = vsub.f32 %v3888, %v3931
    %v4018 = vsub.f32 %v3889, %v3934
    %v4019 = vsub.f32 %v3890, %v3937
    %v4020 = vsub.f32 %v3891, %v3940
    %v4021 = vsub.f32 %v3892, %v3943
    %v4022 = vsub.f32 %v3893, %v3946
    %v4023 = vsub.f32 %v3894, %v3949
    %v4024 = vsub.f32 %v3895, %v3952
    %v4025 = vsub.f32 %v3896, %v3955
    %v4026 = vsub.f32 %v3897, %v3958
    %v4027 = vsub.f32 %v3898, %v3961
    %v4028 = vsub.f32 %v3899, %v3964
    %v4029 = vsub.f32 %v3900, %v3967
    %v4030 = vsub.f32 %v3901, %v3970
    %v4031 = vsub.f32 %v3902, %v3973
    %v4032 = vsub.f32 %v3903, %v3976
    %v4033 = vsub.f32 %v3904, %v3979
    %v4034 = vsub.f32 %v3905, %v3982
    %v4035 = vsub.f32 %v3906, %v3985
    %v4036 = vsub.f32 %v3907, %v3988
    %v4037 = vsub.f32 %v3908, %v3991
    %v4038 = vsub.f32 %v3909, %v3994
    %v4039 = vsub.f32 %v3910, %v3997
    %v4040 = vsub.f32 %v3911, %v4000
    %v4041 = vsub.f32 %v3912, %v4003
    %v4042 = vsub.f32 %v3913, %v4006
    %v4043 = vsub.f32 %v3914, %v4009
    %v4044 = vsub.f32 %v3915, %v4012
    %v4045 = vmul.f32 %v4013, 1.442695
    %v4046 = vpow.pop %v4045
    %v4047 = vmul.f32 %v4014, 1.442695
    %v4048 = vpow.pop %v4047
    %v4049 = vmul.f32 %v4015, 1.442695
    %v4050 = vpow.pop %v4049
    %v4051 = vmul.f32 %v4016, 1.442695
    %v4052 = vpow.pop %v4051
    %v4053 = vmul.f32 %v4017, 1.442695
    %v4054 = vpow.pop %v4053
    %v4055 = vmul.f32 %v4018, 1.442695
    %v4056 = vpow.pop %v4055
    %v4057 = vmul.f32 %v4019, 1.442695
    %v4058 = vpow.pop %v4057
    %v4059 = vmul.f32 %v4020, 1.442695
    %v4060 = vpow.pop %v4059
    %v4061 = vmul.f32 %v4021, 1.442695
    %v4062 = vpow.pop %v4061
    %v4063 = vmul.f32 %v4022, 1.442695
    %v4064 = vpow.pop %v4063
    %v4065 = vmul.f32 %v4023, 1.442695
    %v4066 = vpow.pop %v4065
    %v4067 = vmul.f32 %v4024, 1.442695
    %v4068 = vpow.pop %v4067
    %v4069 = vmul.f32 %v4025, 1.442695
    %v4070 = vpow.pop %v4069
    %v4071 = vmul.f32 %v4026, 1.442695
    %v4072 = vpow.pop %v4071
    %v4073 = vmul.f32 %v4027, 1.442695
    %v4074 = vpow.pop %v4073
    %v4075 = vmul.f32 %v4028, 1.442695
    %v4076 = vpow.pop %v4075
    %v4077 = vmul.f32 %v4029, 1.442695
    %v4078 = vpow.pop %v4077
    %v4079 = vmul.f32 %v4030, 1.442695
    %v4080 = vpow.pop %v4079
    %v4081 = vmul.f32 %v4031, 1.442695
    %v4082 = vpow.pop %v4081
    %v4083 = vmul.f32 %v4032, 1.442695
    %v4084 = vpow.pop %v4083
    %v4085 = vmul.f32 %v4033, 1.442695
    %v4086 = vpow.pop %v4085
    %v4087 = vmul.f32 %v4034, 1.442695
    %v4088 = vpow.pop %v4087
    %v4089 = vmul.f32 %v4035, 1.442695
    %v4090 = vpow.pop %v4089
    %v4091 = vmul.f32 %v4036, 1.442695
    %v4092 = vpow.pop %v4091
    %v4093 = vmul.f32 %v4037, 1.442695
    %v4094 = vpow.pop %v4093
    %v4095 = vmul.f32 %v4038, 1.442695
    %v4096 = vpow.pop %v4095
    %v4097 = vmul.f32 %v4039, 1.442695
    %v4098 = vpow.pop %v4097
    %v4099 = vmul.f32 %v4040, 1.442695
    %v4100 = vpow.pop %v4099
    %v4101 = vmul.f32 %v4041, 1.442695
    %v4102 = vpow.pop %v4101
    %v4103 = vmul.f32 %v4042, 1.442695
    %v4104 = vpow.pop %v4103
    %v4105 = vmul.f32 %v4043, 1.442695
    %v4106 = vpow.pop %v4105
    %v4107 = vmul.f32 %v4044, 1.442695
    %v4108 = vpow.pop %v4107
    %4141 = vrot.lane.b32.xlu0 %v4046, 112
    %v4142 = vpop.permute.xlu0 %4141
    %4143 = vrot.lane.b32.xlu0 %v4048, 112
    %v4144 = vpop.permute.xlu0 %4143
    %4145 = vrot.lane.b32.xlu0 %v4050, 112
    %v4146 = vpop.permute.xlu0 %4145
    %4147 = vrot.lane.b32.xlu0 %v4052, 112
    %v4148 = vpop.permute.xlu0 %4147
    %4149 = vrot.lane.b32.xlu0 %v4054, 112
    %v4150 = vpop.permute.xlu0 %4149
    %4151 = vrot.lane.b32.xlu0 %v4056, 112
    %v4152 = vpop.permute.xlu0 %4151
    %4153 = vrot.lane.b32.xlu0 %v4058, 112
    %v4154 = vpop.permute.xlu0 %4153
    %4155 = vrot.lane.b32.xlu0 %v4060, 112
    %v4156 = vpop.permute.xlu0 %4155
    %4157 = vrot.lane.b32.xlu0 %v4062, 112
    %v4158 = vpop.permute.xlu0 %4157
    %4159 = vrot.lane.b32.xlu0 %v4064, 112
    %v4160 = vpop.permute.xlu0 %4159
    %4161 = vrot.lane.b32.xlu0 %v4066, 112
    %v4162 = vpop.permute.xlu0 %4161
    %4163 = vrot.lane.b32.xlu0 %v4068, 112
    %v4164 = vpop.permute.xlu0 %4163
    %4165 = vrot.lane.b32.xlu0 %v4070, 112
    %v4166 = vpop.permute.xlu0 %4165
    %4167 = vrot.lane.b32.xlu0 %v4072, 112
    %v4168 = vpop.permute.xlu0 %4167
    %4169 = vrot.lane.b32.xlu0 %v4074, 112
    %v4170 = vpop.permute.xlu0 %4169
    %4171 = vrot.lane.b32.xlu0 %v4076, 112
    %v4172 = vpop.permute.xlu0 %4171
    %4173 = vrot.lane.b32.xlu0 %v4078, 112
    %v4174 = vpop.permute.xlu0 %4173
    %4175 = vrot.lane.b32.xlu0 %v4080, 112
    %v4176 = vpop.permute.xlu0 %4175
    %4177 = vrot.lane.b32.xlu0 %v4082, 112
    %v4178 = vpop.permute.xlu0 %4177
    %4179 = vrot.lane.b32.xlu0 %v4084, 112
    %v4180 = vpop.permute.xlu0 %4179
    %4181 = vrot.lane.b32.xlu0 %v4086, 112
    %v4182 = vpop.permute.xlu0 %4181
    %4183 = vrot.lane.b32.xlu0 %v4088, 112
    %v4184 = vpop.permute.xlu0 %4183
    %4185 = vrot.lane.b32.xlu0 %v4090, 112
    %v4186 = vpop.permute.xlu0 %4185
    %4187 = vrot.lane.b32.xlu0 %v4092, 112
    %v4188 = vpop.permute.xlu0 %4187
    %4189 = vrot.lane.b32.xlu0 %v4094, 112
    %v4190 = vpop.permute.xlu0 %4189
    %4191 = vrot.lane.b32.xlu0 %v4096, 112
    %v4192 = vpop.permute.xlu0 %4191
    %4193 = vrot.lane.b32.xlu0 %v4098, 112
    %v4194 = vpop.permute.xlu0 %4193
    %4195 = vrot.lane.b32.xlu0 %v4100, 112
    %v4196 = vpop.permute.xlu0 %4195
    %4197 = vrot.lane.b32.xlu0 %v4102, 112
    %v4198 = vpop.permute.xlu0 %4197
    %4199 = vrot.lane.b32.xlu0 %v4104, 112
    %v4200 = vpop.permute.xlu0 %4199
    %4201 = vrot.lane.b32.xlu0 %v4106, 112
    %v4202 = vpop.permute.xlu0 %4201
    %4203 = vrot.lane.b32.xlu0 %v4108, 112
    %v4204 = vpop.permute.xlu0 %4203
    %v4237 = vsel %vm2066, %v4142, 0.0
    %4238 = vadd.xlane.f32.xlu0 %v4237
    %v4239 = vpop.xlane.xlu0 %4238
    %v4240 = vsel %vm2066, %v4144, 0.0
    %4241 = vadd.xlane.f32.xlu0 %v4240
    %v4242 = vpop.xlane.xlu0 %4241
    %v4243 = vsel %vm2066, %v4146, 0.0
    %4244 = vadd.xlane.f32.xlu0 %v4243
    %v4245 = vpop.xlane.xlu0 %4244
    %v4246 = vsel %vm2066, %v4148, 0.0
    %4247 = vadd.xlane.f32.xlu0 %v4246
    %v4248 = vpop.xlane.xlu0 %4247
    %v4249 = vsel %vm2066, %v4150, 0.0
    %4250 = vadd.xlane.f32.xlu0 %v4249
    %v4251 = vpop.xlane.xlu0 %4250
    %v4252 = vsel %vm2066, %v4152, 0.0
    %4253 = vadd.xlane.f32.xlu0 %v4252
    %v4254 = vpop.xlane.xlu0 %4253
    %v4255 = vsel %vm2066, %v4154, 0.0
    %4256 = vadd.xlane.f32.xlu0 %v4255
    %v4257 = vpop.xlane.xlu0 %4256
    %v4258 = vsel %vm2066, %v4156, 0.0
    %4259 = vadd.xlane.f32.xlu0 %v4258
    %v4260 = vpop.xlane.xlu0 %4259
    %v4261 = vsel %vm2066, %v4158, 0.0
    %4262 = vadd.xlane.f32.xlu0 %v4261
    %v4263 = vpop.xlane.xlu0 %4262
    %v4264 = vsel %vm2066, %v4160, 0.0
    %4265 = vadd.xlane.f32.xlu0 %v4264
    %v4266 = vpop.xlane.xlu0 %4265
    %v4267 = vsel %vm2066, %v4162, 0.0
    %4268 = vadd.xlane.f32.xlu0 %v4267
    %v4269 = vpop.xlane.xlu0 %4268
    %v4270 = vsel %vm2066, %v4164, 0.0
    %4271 = vadd.xlane.f32.xlu0 %v4270
    %v4272 = vpop.xlane.xlu0 %4271
    %v4273 = vsel %vm2066, %v4166, 0.0
    %4274 = vadd.xlane.f32.xlu0 %v4273
    %v4275 = vpop.xlane.xlu0 %4274
    %v4276 = vsel %vm2066, %v4168, 0.0
    %4277 = vadd.xlane.f32.xlu0 %v4276
    %v4278 = vpop.xlane.xlu0 %4277
    %v4279 = vsel %vm2066, %v4170, 0.0
    %4280 = vadd.xlane.f32.xlu0 %v4279
    %v4281 = vpop.xlane.xlu0 %4280
    %v4282 = vsel %vm2066, %v4172, 0.0
    %4283 = vadd.xlane.f32.xlu0 %v4282
    %v4284 = vpop.xlane.xlu0 %4283
    %v4285 = vsel %vm2066, %v4174, 0.0
    %4286 = vadd.xlane.f32.xlu0 %v4285
    %v4287 = vpop.xlane.xlu0 %4286
    %v4288 = vsel %vm2066, %v4176, 0.0
    %4289 = vadd.xlane.f32.xlu0 %v4288
    %v4290 = vpop.xlane.xlu0 %4289
    %v4291 = vsel %vm2066, %v4178, 0.0
    %4292 = vadd.xlane.f32.xlu0 %v4291
    %v4293 = vpop.xlane.xlu0 %4292
    %v4294 = vsel %vm2066, %v4180, 0.0
    %4295 = vadd.xlane.f32.xlu0 %v4294
    %v4296 = vpop.xlane.xlu0 %4295
    %v4297 = vsel %vm2066, %v4182, 0.0
    %4298 = vadd.xlane.f32.xlu0 %v4297
    %v4299 = vpop.xlane.xlu0 %4298
    %v4300 = vsel %vm2066, %v4184, 0.0
    %4301 = vadd.xlane.f32.xlu0 %v4300
    %v4302 = vpop.xlane.xlu0 %4301
    %v4303 = vsel %vm2066, %v4186, 0.0
    %4304 = vadd.xlane.f32.xlu0 %v4303
    %v4305 = vpop.xlane.xlu0 %4304
    %v4306 = vsel %vm2066, %v4188, 0.0
    %4307 = vadd.xlane.f32.xlu0 %v4306
    %v4308 = vpop.xlane.xlu0 %4307
    %v4309 = vsel %vm2066, %v4190, 0.0
    %4310 = vadd.xlane.f32.xlu0 %v4309
    %v4311 = vpop.xlane.xlu0 %4310
    %v4312 = vsel %vm2066, %v4192, 0.0
    %4313 = vadd.xlane.f32.xlu0 %v4312
    %v4314 = vpop.xlane.xlu0 %4313
    %v4315 = vsel %vm2066, %v4194, 0.0
    %4316 = vadd.xlane.f32.xlu0 %v4315
    %v4317 = vpop.xlane.xlu0 %4316
    %v4318 = vsel %vm2066, %v4196, 0.0
    %4319 = vadd.xlane.f32.xlu0 %v4318
    %v4320 = vpop.xlane.xlu0 %4319
    %v4321 = vsel %vm2066, %v4198, 0.0
    %4322 = vadd.xlane.f32.xlu0 %v4321
    %v4323 = vpop.xlane.xlu0 %4322
    %v4324 = vsel %vm2066, %v4200, 0.0
    %4325 = vadd.xlane.f32.xlu0 %v4324
    %v4326 = vpop.xlane.xlu0 %4325
    %v4327 = vsel %vm2066, %v4202, 0.0
    %4328 = vadd.xlane.f32.xlu0 %v4327
    %v4329 = vpop.xlane.xlu0 %4328
    %v4330 = vsel %vm2066, %v4204, 0.0
    %4331 = vadd.xlane.f32.xlu0 %v4330
    %v4332 = vpop.xlane.xlu0 %4331
    %v4333 = vrcp.pop %v4239
    %v4334 = vmul.f32 %v4046, %v4333
    %v4335 = vrcp.pop %v4242
    %v4336 = vmul.f32 %v4048, %v4335
    %v4337 = vrcp.pop %v4245
    %v4338 = vmul.f32 %v4050, %v4337
    %v4339 = vrcp.pop %v4248
    %v4340 = vmul.f32 %v4052, %v4339
    %v4341 = vrcp.pop %v4251
    %v4342 = vmul.f32 %v4054, %v4341
    %v4343 = vrcp.pop %v4254
    %v4344 = vmul.f32 %v4056, %v4343
    %v4345 = vrcp.pop %v4257
    %v4346 = vmul.f32 %v4058, %v4345
    %v4347 = vrcp.pop %v4260
    %v4348 = vmul.f32 %v4060, %v4347
    %v4349 = vrcp.pop %v4263
    %v4350 = vmul.f32 %v4062, %v4349
    %v4351 = vrcp.pop %v4266
    %v4352 = vmul.f32 %v4064, %v4351
    %v4353 = vrcp.pop %v4269
    %v4354 = vmul.f32 %v4066, %v4353
    %v4355 = vrcp.pop %v4272
    %v4356 = vmul.f32 %v4068, %v4355
    %v4357 = vrcp.pop %v4275
    %v4358 = vmul.f32 %v4070, %v4357
    %v4359 = vrcp.pop %v4278
    %v4360 = vmul.f32 %v4072, %v4359
    %v4361 = vrcp.pop %v4281
    %v4362 = vmul.f32 %v4074, %v4361
    %v4363 = vrcp.pop %v4284
    %v4364 = vmul.f32 %v4076, %v4363
    %v4365 = vrcp.pop %v4287
    %v4366 = vmul.f32 %v4078, %v4365
    %v4367 = vrcp.pop %v4290
    %v4368 = vmul.f32 %v4080, %v4367
    %v4369 = vrcp.pop %v4293
    %v4370 = vmul.f32 %v4082, %v4369
    %v4371 = vrcp.pop %v4296
    %v4372 = vmul.f32 %v4084, %v4371
    %v4373 = vrcp.pop %v4299
    %v4374 = vmul.f32 %v4086, %v4373
    %v4375 = vrcp.pop %v4302
    %v4376 = vmul.f32 %v4088, %v4375
    %v4377 = vrcp.pop %v4305
    %v4378 = vmul.f32 %v4090, %v4377
    %v4379 = vrcp.pop %v4308
    %v4380 = vmul.f32 %v4092, %v4379
    %v4381 = vrcp.pop %v4311
    %v4382 = vmul.f32 %v4094, %v4381
    %v4383 = vrcp.pop %v4314
    %v4384 = vmul.f32 %v4096, %v4383
    %v4385 = vrcp.pop %v4317
    %v4386 = vmul.f32 %v4098, %v4385
    %v4387 = vrcp.pop %v4320
    %v4388 = vmul.f32 %v4100, %v4387
    %v4389 = vrcp.pop %v4323
    %v4390 = vmul.f32 %v4102, %v4389
    %v4391 = vrcp.pop %v4326
    %v4392 = vmul.f32 %v4104, %v4391
    %v4393 = vrcp.pop %v4329
    %v4394 = vmul.f32 %v4106, %v4393
    %v4395 = vrcp.pop %v4332
    %v4396 = vmul.f32 %v4108, %v4395
    %4399 = vrot.lane.b32.xlu0 %v4334, 112
    %v4400 = vpop.permute.xlu0 %4399
    %4401 = vrot.lane.b32.xlu0 %v4336, 112
    %v4402 = vpop.permute.xlu0 %4401
    %4405 = vmatprep.subr.mxu0 0.0
    %4406 = vmatpush1.msra.mxu0 %v4400
    %4407 = vmatprep.subr.mxu0 0.0
    %4408 = vmatpush1.msra.mxu0 %v4402
    %4409 = vmatprep.subr.mxu0 0.0
    %4410 = vmatpush1.msra.mxu0 0.0
    %4411 = vmatprep.subr.mxu0 0.0
    %4412 = vmatpush1.msra.mxu0 0.0
    %4413 = vmatprep.subr.mxu0 0.0
    %4414 = vmatpush1.msra.mxu0 0.0
    %4415 = vmatprep.subr.mxu0 0.0
    %4416 = vmatpush1.msra.mxu0 0.0
    %4417 = vmatprep.subr.mxu0 0.0
    %4418 = vmatpush1.msra.mxu0 0.0
    %4419 = vmatprep.subr.mxu0 0.0
    %4420 = vmatpush1.msra.mxu0 0.0
    %4421 = vmatprep.subr.mxu0 0.0
    %4422 = vmatpush1.msra.mxu0 0.0
    %4423 = vmatprep.subr.mxu0 0.0
    %4424 = vmatpush1.msra.mxu0 0.0
    %4425 = vmatprep.subr.mxu0 0.0
    %4426 = vmatpush1.msra.mxu0 0.0
    %4427 = vmatprep.subr.mxu0 0.0
    %4428 = vmatpush1.msra.mxu0 0.0
    %4429 = vmatprep.subr.mxu0 0.0
    %4430 = vmatpush1.msra.mxu0 0.0
    %4431 = vmatprep.subr.mxu0 0.0
    %4432 = vmatpush1.msra.mxu0 0.0
    %4433 = vmatprep.subr.mxu0 0.0
    %4434 = vmatpush1.msra.mxu0 0.0
    %4435 = vmatprep.subr.mxu0 0.0
    %4436 = vmatpush1.msra.mxu0 0.0
    %4437 = vmatprep.subr.mxu0 0.0
    %4438 = vmatpush1.msra.mxu0 0.0
    %4439 = vmatprep.subr.mxu0 0.0
    %4440 = vmatpush1.msra.mxu0 0.0
    %4441 = vmatprep.subr.mxu0 0.0
    %4442 = vmatpush1.msra.mxu0 0.0
    %4443 = vmatprep.subr.mxu0 0.0
    %4444 = vmatpush1.msra.mxu0 0.0
    %4445 = vmatprep.subr.mxu0 0.0
    %4446 = vmatpush1.msra.mxu0 0.0
    %4447 = vmatprep.subr.mxu0 0.0
    %4448 = vmatpush1.msra.mxu0 0.0
    %4449 = vmatprep.subr.mxu0 0.0
    %4450 = vmatpush1.msra.mxu0 0.0
    %4451 = vmatprep.subr.mxu0 0.0
    %4452 = vmatpush1.msra.mxu0 0.0
    %4453 = vmatprep.subr.mxu0 0.0
    %4454 = vmatpush1.msra.mxu0 0.0
    %4455 = vmatprep.subr.mxu0 0.0
    %4456 = vmatpush1.msra.mxu0 0.0
    %4457 = vmatprep.subr.mxu0 0.0
    %4458 = vmatpush1.msra.mxu0 0.0
    %4459 = vmatprep.subr.mxu0 0.0
    %4460 = vmatpush1.msra.mxu0 0.0
    %4461 = vmatprep.subr.mxu0 0.0
    %4462 = vmatpush1.msra.mxu0 0.0
    %4463 = vmatprep.subr.mxu0 0.0
    %4464 = vmatpush1.msra.mxu0 0.0
    %4465 = vmatprep.subr.mxu0 0.0
    %4466 = vmatpush1.msra.mxu0 0.0
    %4467 = vmatprep.subr.mxu0 0.0
    %4468 = vmatpush1.msra.mxu0 0.0
    %4469 = vmatprep.mubr.f32.mxu0 0.0
    %4470 = vmatmul.mubr.f32.gmra.mrb[0].mxu0 %v2469
    %v4471 = vpop.f32.mrb[0].mxu0
    %v4472 = vadd.f32 0.0, %v4471
    %v4473 = vpop.f32.mrb[0].mxu0
    %4474 = vmatprep.mubr.f32.mxu0 0.0
    %4475 = vmatmul.mubr.f32.gmra.mrb[0].mxu0 %v2472
    %v4476 = vpop.f32.mrb[0].mxu0
    %v4477 = vadd.f32 0.0, %v4476
    %v4478 = vpop.f32.mrb[0].mxu0
    %4479 = vdwg.mxu0
    %4482 = vrot.lane.b32.xlu0 %v4338, 112
    %v4483 = vpop.permute.xlu0 %4482
    %4484 = vrot.lane.b32.xlu0 %v4340, 112
    %v4485 = vpop.permute.xlu0 %4484
    %4488 = vmatprep.subr.mxu0 0.0
    %4489 = vmatpush1.msra.mxu0 %v4483
    %4490 = vmatprep.subr.mxu0 0.0
    %4491 = vmatpush1.msra.mxu0 %v4485
    %4492 = vmatprep.subr.mxu0 0.0
    %4493 = vmatpush1.msra.mxu0 0.0
    %4494 = vmatprep.subr.mxu0 0.0
    %4495 = vmatpush1.msra.mxu0 0.0
    %4496 = vmatprep.subr.mxu0 0.0
    %4497 = vmatpush1.msra.mxu0 0.0
    %4498 = vmatprep.subr.mxu0 0.0
    %4499 = vmatpush1.msra.mxu0 0.0
    %4500 = vmatprep.subr.mxu0 0.0
    %4501 = vmatpush1.msra.mxu0 0.0
    %4502 = vmatprep.subr.mxu0 0.0
    %4503 = vmatpush1.msra.mxu0 0.0
    %4504 = vmatprep.subr.mxu0 0.0
    %4505 = vmatpush1.msra.mxu0 0.0
    %4506 = vmatprep.subr.mxu0 0.0
    %4507 = vmatpush1.msra.mxu0 0.0
    %4508 = vmatprep.subr.mxu0 0.0
    %4509 = vmatpush1.msra.mxu0 0.0
    %4510 = vmatprep.subr.mxu0 0.0
    %4511 = vmatpush1.msra.mxu0 0.0
    %4512 = vmatprep.subr.mxu0 0.0
    %4513 = vmatpush1.msra.mxu0 0.0
    %4514 = vmatprep.subr.mxu0 0.0
    %4515 = vmatpush1.msra.mxu0 0.0
    %4516 = vmatprep.subr.mxu0 0.0
    %4517 = vmatpush1.msra.mxu0 0.0
    %4518 = vmatprep.subr.mxu0 0.0
    %4519 = vmatpush1.msra.mxu0 0.0
    %4520 = vmatprep.subr.mxu0 0.0
    %4521 = vmatpush1.msra.mxu0 0.0
    %4522 = vmatprep.subr.mxu0 0.0
    %4523 = vmatpush1.msra.mxu0 0.0
    %4524 = vmatprep.subr.mxu0 0.0
    %4525 = vmatpush1.msra.mxu0 0.0
    %4526 = vmatprep.subr.mxu0 0.0
    %4527 = vmatpush1.msra.mxu0 0.0
    %4528 = vmatprep.subr.mxu0 0.0
    %4529 = vmatpush1.msra.mxu0 0.0
    %4530 = vmatprep.subr.mxu0 0.0
    %4531 = vmatpush1.msra.mxu0 0.0
    %4532 = vmatprep.subr.mxu0 0.0
    %4533 = vmatpush1.msra.mxu0 0.0
    %4534 = vmatprep.subr.mxu0 0.0
    %4535 = vmatpush1.msra.mxu0 0.0
    %4536 = vmatprep.subr.mxu0 0.0
    %4537 = vmatpush1.msra.mxu0 0.0
    %4538 = vmatprep.subr.mxu0 0.0
    %4539 = vmatpush1.msra.mxu0 0.0
    %4540 = vmatprep.subr.mxu0 0.0
    %4541 = vmatpush1.msra.mxu0 0.0
    %4542 = vmatprep.subr.mxu0 0.0
    %4543 = vmatpush1.msra.mxu0 0.0
    %4544 = vmatprep.subr.mxu0 0.0
    %4545 = vmatpush1.msra.mxu0 0.0
    %4546 = vmatprep.subr.mxu0 0.0
    %4547 = vmatpush1.msra.mxu0 0.0
    %4548 = vmatprep.subr.mxu0 0.0
    %4549 = vmatpush1.msra.mxu0 0.0
    %4550 = vmatprep.subr.mxu0 0.0
    %4551 = vmatpush1.msra.mxu0 0.0
    %4552 = vmatprep.mubr.f32.mxu0 0.0
    %4553 = vmatmul.mubr.f32.gmra.mrb[0].mxu0 %v2558
    %v4554 = vpop.f32.mrb[0].mxu0
    %v4555 = vadd.f32 0.0, %v4554
    %v4556 = vpop.f32.mrb[0].mxu0
    %4557 = vmatprep.mubr.f32.mxu0 0.0
    %4558 = vmatmul.mubr.f32.gmra.mrb[0].mxu0 %v2561
    %v4559 = vpop.f32.mrb[0].mxu0
    %v4560 = vadd.f32 0.0, %v4559
    %v4561 = vpop.f32.mrb[0].mxu0
    %4562 = vdwg.mxu0
    %4565 = vrot.lane.b32.xlu0 %v4342, 112
    %v4566 = vpop.permute.xlu0 %4565
    %4567 = vrot.lane.b32.xlu0 %v4344, 112
    %v4568 = vpop.permute.xlu0 %4567
    %4571 = vmatprep.subr.mxu0 0.0
    %4572 = vmatpush1.msra.mxu0 %v4566
    %4573 = vmatprep.subr.mxu0 0.0
    %4574 = vmatpush1.msra.mxu0 %v4568
    %4575 = vmatprep.subr.mxu0 0.0
    %4576 = vmatpush1.msra.mxu0 0.0
    %4577 = vmatprep.subr.mxu0 0.0
    %4578 = vmatpush1.msra.mxu0 0.0
    %4579 = vmatprep.subr.mxu0 0.0
    %4580 = vmatpush1.msra.mxu0 0.0
    %4581 = vmatprep.subr.mxu0 0.0
    %4582 = vmatpush1.msra.mxu0 0.0
    %4583 = vmatprep.subr.mxu0 0.0
    %4584 = vmatpush1.msra.mxu0 0.0
    %4585 = vmatprep.subr.mxu0 0.0
    %4586 = vmatpush1.msra.mxu0 0.0
    %4587 = vmatprep.subr.mxu0 0.0
    %4588 = vmatpush1.msra.mxu0 0.0
    %4589 = vmatprep.subr.mxu0 0.0
    %4590 = vmatpush1.msra.mxu0 0.0
    %4591 = vmatprep.subr.mxu0 0.0
    %4592 = vmatpush1.msra.mxu0 0.0
    %4593 = vmatprep.subr.mxu0 0.0
    %4594 = vmatpush1.msra.mxu0 0.0
    %4595 = vmatprep.subr.mxu0 0.0
    %4596 = vmatpush1.msra.mxu0 0.0
    %4597 = vmatprep.subr.mxu0 0.0
    %4598 = vmatpush1.msra.mxu0 0.0
    %4599 = vmatprep.subr.mxu0 0.0
    %4600 = vmatpush1.msra.mxu0 0.0
    %4601 = vmatprep.subr.mxu0 0.0
    %4602 = vmatpush1.msra.mxu0 0.0
    %4603 = vmatprep.subr.mxu0 0.0
    %4604 = vmatpush1.msra.mxu0 0.0
    %4605 = vmatprep.subr.mxu0 0.0
    %4606 = vmatpush1.msra.mxu0 0.0
    %4607 = vmatprep.subr.mxu0 0.0
    %4608 = vmatpush1.msra.mxu0 0.0
    %4609 = vmatprep.subr.mxu0 0.0
    %4610 = vmatpush1.msra.mxu0 0.0
    %4611 = vmatprep.subr.mxu0 0.0
    %4612 = vmatpush1.msra.mxu0 0.0
    %4613 = vmatprep.subr.mxu0 0.0
    %4614 = vmatpush1.msra.mxu0 0.0
    %4615 = vmatprep.subr.mxu0 0.0
    %4616 = vmatpush1.msra.mxu0 0.0
    %4617 = vmatprep.subr.mxu0 0.0
    %4618 = vmatpush1.msra.mxu0 0.0
    %4619 = vmatprep.subr.mxu0 0.0
    %4620 = vmatpush1.msra.mxu0 0.0
    %4621 = vmatprep.subr.mxu0 0.0
    %4622 = vmatpush1.msra.mxu0 0.0
    %4623 = vmatprep.subr.mxu0 0.0
    %4624 = vmatpush1.msra.mxu0 0.0
    %4625 = vmatprep.subr.mxu0 0.0
    %4626 = vmatpush1.msra.mxu0 0.0
    %4627 = vmatprep.subr.mxu0 0.0
    %4628 = vmatpush1.msra.mxu0 0.0
    %4629 = vmatprep.subr.mxu0 0.0
    %4630 = vmatpush1.msra.mxu0 0.0
    %4631 = vmatprep.subr.mxu0 0.0
    %4632 = vmatpush1.msra.mxu0 0.0
    %4633 = vmatprep.subr.mxu0 0.0
    %4634 = vmatpush1.msra.mxu0 0.0
    %4635 = vmatprep.mubr.f32.mxu0 0.0
    %4636 = vmatmul.mubr.f32.gmra.mrb[0].mxu0 %v2647
    %v4637 = vpop.f32.mrb[0].mxu0
    %v4638 = vadd.f32 0.0, %v4637
    %v4639 = vpop.f32.mrb[0].mxu0
    %4640 = vmatprep.mubr.f32.mxu0 0.0
    %4641 = vmatmul.mubr.f32.gmra.mrb[0].mxu0 %v2650
    %v4642 = vpop.f32.mrb[0].mxu0
    %v4643 = vadd.f32 0.0, %v4642
    %v4644 = vpop.f32.mrb[0].mxu0
    %4645 = vdwg.mxu0
    %4648 = vrot.lane.b32.xlu0 %v4346, 112
    %v4649 = vpop.permute.xlu0 %4648
    %4650 = vrot.lane.b32.xlu0 %v4348, 112
    %v4651 = vpop.permute.xlu0 %4650
    %4654 = vmatprep.subr.mxu0 0.0
    %4655 = vmatpush1.msra.mxu0 %v4649
    %4656 = vmatprep.subr.mxu0 0.0
    %4657 = vmatpush1.msra.mxu0 %v4651
    %4658 = vmatprep.subr.mxu0 0.0
    %4659 = vmatpush1.msra.mxu0 0.0
    %4660 = vmatprep.subr.mxu0 0.0
    %4661 = vmatpush1.msra.mxu0 0.0
    %4662 = vmatprep.subr.mxu0 0.0
    %4663 = vmatpush1.msra.mxu0 0.0
    %4664 = vmatprep.subr.mxu0 0.0
    %4665 = vmatpush1.msra.mxu0 0.0
    %4666 = vmatprep.subr.mxu0 0.0
    %4667 = vmatpush1.msra.mxu0 0.0
    %4668 = vmatprep.subr.mxu0 0.0
    %4669 = vmatpush1.msra.mxu0 0.0
    %4670 = vmatprep.subr.mxu0 0.0
    %4671 = vmatpush1.msra.mxu0 0.0
    %4672 = vmatprep.subr.mxu0 0.0
    %4673 = vmatpush1.msra.mxu0 0.0
    %4674 = vmatprep.subr.mxu0 0.0
    %4675 = vmatpush1.msra.mxu0 0.0
    %4676 = vmatprep.subr.mxu0 0.0
    %4677 = vmatpush1.msra.mxu0 0.0
    %4678 = vmatprep.subr.mxu0 0.0
    %4679 = vmatpush1.msra.mxu0 0.0
    %4680 = vmatprep.subr.mxu0 0.0
    %4681 = vmatpush1.msra.mxu0 0.0
    %4682 = vmatprep.subr.mxu0 0.0
    %4683 = vmatpush1.msra.mxu0 0.0
    %4684 = vmatprep.subr.mxu0 0.0
    %4685 = vmatpush1.msra.mxu0 0.0
    %4686 = vmatprep.subr.mxu0 0.0
    %4687 = vmatpush1.msra.mxu0 0.0
    %4688 = vmatprep.subr.mxu0 0.0
    %4689 = vmatpush1.msra.mxu0 0.0
    %4690 = vmatprep.subr.mxu0 0.0
    %4691 = vmatpush1.msra.mxu0 0.0
    %4692 = vmatprep.subr.mxu0 0.0
    %4693 = vmatpush1.msra.mxu0 0.0
    %4694 = vmatprep.subr.mxu0 0.0
    %4695 = vmatpush1.msra.mxu0 0.0
    %4696 = vmatprep.subr.mxu0 0.0
    %4697 = vmatpush1.msra.mxu0 0.0
    %4698 = vmatprep.subr.mxu0 0.0
    %4699 = vmatpush1.msra.mxu0 0.0
    %4700 = vmatprep.subr.mxu0 0.0
    %4701 = vmatpush1.msra.mxu0 0.0
    %4702 = vmatprep.subr.mxu0 0.0
    %4703 = vmatpush1.msra.mxu0 0.0
    %4704 = vmatprep.subr.mxu0 0.0
    %4705 = vmatpush1.msra.mxu0 0.0
    %4706 = vmatprep.subr.mxu0 0.0
    %4707 = vmatpush1.msra.mxu0 0.0
    %4708 = vmatprep.subr.mxu0 0.0
    %4709 = vmatpush1.msra.mxu0 0.0
    %4710 = vmatprep.subr.mxu0 0.0
    %4711 = vmatpush1.msra.mxu0 0.0
    %4712 = vmatprep.subr.mxu0 0.0
    %4713 = vmatpush1.msra.mxu0 0.0
    %4714 = vmatprep.subr.mxu0 0.0
    %4715 = vmatpush1.msra.mxu0 0.0
    %4716 = vmatprep.subr.mxu0 0.0
    %4717 = vmatpush1.msra.mxu0 0.0
    %4718 = vmatprep.mubr.f32.mxu0 0.0
    %4719 = vmatmul.mubr.f32.gmra.mrb[0].mxu0 %v2736
    %v4720 = vpop.f32.mrb[0].mxu0
    %v4721 = vadd.f32 0.0, %v4720
    %v4722 = vpop.f32.mrb[0].mxu0
    %4723 = vmatprep.mubr.f32.mxu0 0.0
    %4724 = vmatmul.mubr.f32.gmra.mrb[0].mxu0 %v2739
    %v4725 = vpop.f32.mrb[0].mxu0
    %v4726 = vadd.f32 0.0, %v4725
    %v4727 = vpop.f32.mrb[0].mxu0
    %4728 = vdwg.mxu0
    %4731 = vrot.lane.b32.xlu0 %v4350, 112
    %v4732 = vpop.permute.xlu0 %4731
    %4733 = vrot.lane.b32.xlu0 %v4352, 112
    %v4734 = vpop.permute.xlu0 %4733
    %4737 = vmatprep.subr.mxu0 0.0
    %4738 = vmatpush1.msra.mxu0 %v4732
    %4739 = vmatprep.subr.mxu0 0.0
    %4740 = vmatpush1.msra.mxu0 %v4734
    %4741 = vmatprep.subr.mxu0 0.0
    %4742 = vmatpush1.msra.mxu0 0.0
    %4743 = vmatprep.subr.mxu0 0.0
    %4744 = vmatpush1.msra.mxu0 0.0
    %4745 = vmatprep.subr.mxu0 0.0
    %4746 = vmatpush1.msra.mxu0 0.0
    %4747 = vmatprep.subr.mxu0 0.0
    %4748 = vmatpush1.msra.mxu0 0.0
    %4749 = vmatprep.subr.mxu0 0.0
    %4750 = vmatpush1.msra.mxu0 0.0
    %4751 = vmatprep.subr.mxu0 0.0
    %4752 = vmatpush1.msra.mxu0 0.0
    %4753 = vmatprep.subr.mxu0 0.0
    %4754 = vmatpush1.msra.mxu0 0.0
    %4755 = vmatprep.subr.mxu0 0.0
    %4756 = vmatpush1.msra.mxu0 0.0
    %4757 = vmatprep.subr.mxu0 0.0
    %4758 = vmatpush1.msra.mxu0 0.0
    %4759 = vmatprep.subr.mxu0 0.0
    %4760 = vmatpush1.msra.mxu0 0.0
    %4761 = vmatprep.subr.mxu0 0.0
    %4762 = vmatpush1.msra.mxu0 0.0
    %4763 = vmatprep.subr.mxu0 0.0
    %4764 = vmatpush1.msra.mxu0 0.0
    %4765 = vmatprep.subr.mxu0 0.0
    %4766 = vmatpush1.msra.mxu0 0.0
    %4767 = vmatprep.subr.mxu0 0.0
    %4768 = vmatpush1.msra.mxu0 0.0
    %4769 = vmatprep.subr.mxu0 0.0
    %4770 = vmatpush1.msra.mxu0 0.0
    %4771 = vmatprep.subr.mxu0 0.0
    %4772 = vmatpush1.msra.mxu0 0.0
    %4773 = vmatprep.subr.mxu0 0.0
    %4774 = vmatpush1.msra.mxu0 0.0
    %4775 = vmatprep.subr.mxu0 0.0
    %4776 = vmatpush1.msra.mxu0 0.0
    %4777 = vmatprep.subr.mxu0 0.0
    %4778 = vmatpush1.msra.mxu0 0.0
    %4779 = vmatprep.subr.mxu0 0.0
    %4780 = vmatpush1.msra.mxu0 0.0
    %4781 = vmatprep.subr.mxu0 0.0
    %4782 = vmatpush1.msra.mxu0 0.0
    %4783 = vmatprep.subr.mxu0 0.0
    %4784 = vmatpush1.msra.mxu0 0.0
    %4785 = vmatprep.subr.mxu0 0.0
    %4786 = vmatpush1.msra.mxu0 0.0
    %4787 = vmatprep.subr.mxu0 0.0
    %4788 = vmatpush1.msra.mxu0 0.0
    %4789 = vmatprep.subr.mxu0 0.0
    %4790 = vmatpush1.msra.mxu0 0.0
    %4791 = vmatprep.subr.mxu0 0.0
    %4792 = vmatpush1.msra.mxu0 0.0
    %4793 = vmatprep.subr.mxu0 0.0
    %4794 = vmatpush1.msra.mxu0 0.0
    %4795 = vmatprep.subr.mxu0 0.0
    %4796 = vmatpush1.msra.mxu0 0.0
    %4797 = vmatprep.subr.mxu0 0.0
    %4798 = vmatpush1.msra.mxu0 0.0
    %4799 = vmatprep.subr.mxu0 0.0
    %4800 = vmatpush1.msra.mxu0 0.0
    %4801 = vmatprep.mubr.f32.mxu0 0.0
    %4802 = vmatmul.mubr.f32.gmra.mrb[0].mxu0 %v2825
    %v4803 = vpop.f32.mrb[0].mxu0
    %v4804 = vadd.f32 0.0, %v4803
    %v4805 = vpop.f32.mrb[0].mxu0
    %4806 = vmatprep.mubr.f32.mxu0 0.0
    %4807 = vmatmul.mubr.f32.gmra.mrb[0].mxu0 %v2828
    %v4808 = vpop.f32.mrb[0].mxu0
    %v4809 = vadd.f32 0.0, %v4808
    %v4810 = vpop.f32.mrb[0].mxu0
    %4811 = vdwg.mxu0
    %4814 = vrot.lane.b32.xlu0 %v4354, 112
    %v4815 = vpop.permute.xlu0 %4814
    %4816 = vrot.lane.b32.xlu0 %v4356, 112
    %v4817 = vpop.permute.xlu0 %4816
    %4820 = vmatprep.subr.mxu0 0.0
    %4821 = vmatpush1.msra.mxu0 %v4815
    %4822 = vmatprep.subr.mxu0 0.0
    %4823 = vmatpush1.msra.mxu0 %v4817
    %4824 = vmatprep.subr.mxu0 0.0
    %4825 = vmatpush1.msra.mxu0 0.0
    %4826 = vmatprep.subr.mxu0 0.0
    %4827 = vmatpush1.msra.mxu0 0.0
    %4828 = vmatprep.subr.mxu0 0.0
    %4829 = vmatpush1.msra.mxu0 0.0
    %4830 = vmatprep.subr.mxu0 0.0
    %4831 = vmatpush1.msra.mxu0 0.0
    %4832 = vmatprep.subr.mxu0 0.0
    %4833 = vmatpush1.msra.mxu0 0.0
    %4834 = vmatprep.subr.mxu0 0.0
    %4835 = vmatpush1.msra.mxu0 0.0
    %4836 = vmatprep.subr.mxu0 0.0
    %4837 = vmatpush1.msra.mxu0 0.0
    %4838 = vmatprep.subr.mxu0 0.0
    %4839 = vmatpush1.msra.mxu0 0.0
    %4840 = vmatprep.subr.mxu0 0.0
    %4841 = vmatpush1.msra.mxu0 0.0
    %4842 = vmatprep.subr.mxu0 0.0
    %4843 = vmatpush1.msra.mxu0 0.0
    %4844 = vmatprep.subr.mxu0 0.0
    %4845 = vmatpush1.msra.mxu0 0.0
    %4846 = vmatprep.subr.mxu0 0.0
    %4847 = vmatpush1.msra.mxu0 0.0
    %4848 = vmatprep.subr.mxu0 0.0
    %4849 = vmatpush1.msra.mxu0 0.0
    %4850 = vmatprep.subr.mxu0 0.0
    %4851 = vmatpush1.msra.mxu0 0.0
    %4852 = vmatprep.subr.mxu0 0.0
    %4853 = vmatpush1.msra.mxu0 0.0
    %4854 = vmatprep.subr.mxu0 0.0
    %4855 = vmatpush1.msra.mxu0 0.0
    %4856 = vmatprep.subr.mxu0 0.0
    %4857 = vmatpush1.msra.mxu0 0.0
    %4858 = vmatprep.subr.mxu0 0.0
    %4859 = vmatpush1.msra.mxu0 0.0
    %4860 = vmatprep.subr.mxu0 0.0
    %4861 = vmatpush1.msra.mxu0 0.0
    %4862 = vmatprep.subr.mxu0 0.0
    %4863 = vmatpush1.msra.mxu0 0.0
    %4864 = vmatprep.subr.mxu0 0.0
    %4865 = vmatpush1.msra.mxu0 0.0
    %4866 = vmatprep.subr.mxu0 0.0
    %4867 = vmatpush1.msra.mxu0 0.0
    %4868 = vmatprep.subr.mxu0 0.0
    %4869 = vmatpush1.msra.mxu0 0.0
    %4870 = vmatprep.subr.mxu0 0.0
    %4871 = vmatpush1.msra.mxu0 0.0
    %4872 = vmatprep.subr.mxu0 0.0
    %4873 = vmatpush1.msra.mxu0 0.0
    %4874 = vmatprep.subr.mxu0 0.0
    %4875 = vmatpush1.msra.mxu0 0.0
    %4876 = vmatprep.subr.mxu0 0.0
    %4877 = vmatpush1.msra.mxu0 0.0
    %4878 = vmatprep.subr.mxu0 0.0
    %4879 = vmatpush1.msra.mxu0 0.0
    %4880 = vmatprep.subr.mxu0 0.0
    %4881 = vmatpush1.msra.mxu0 0.0
    %4882 = vmatprep.subr.mxu0 0.0
    %4883 = vmatpush1.msra.mxu0 0.0
    %4884 = vmatprep.mubr.f32.mxu0 0.0
    %4885 = vmatmul.mubr.f32.gmra.mrb[0].mxu0 %v2914
    %v4886 = vpop.f32.mrb[0].mxu0
    %v4887 = vadd.f32 0.0, %v4886
    %v4888 = vpop.f32.mrb[0].mxu0
    %4889 = vmatprep.mubr.f32.mxu0 0.0
    %4890 = vmatmul.mubr.f32.gmra.mrb[0].mxu0 %v2917
    %v4891 = vpop.f32.mrb[0].mxu0
    %v4892 = vadd.f32 0.0, %v4891
    %v4893 = vpop.f32.mrb[0].mxu0
    %4894 = vdwg.mxu0
    %4897 = vrot.lane.b32.xlu0 %v4358, 112
    %v4898 = vpop.permute.xlu0 %4897
    %4899 = vrot.lane.b32.xlu0 %v4360, 112
    %v4900 = vpop.permute.xlu0 %4899
    %4903 = vmatprep.subr.mxu0 0.0
    %4904 = vmatpush1.msra.mxu0 %v4898
    %4905 = vmatprep.subr.mxu0 0.0
    %4906 = vmatpush1.msra.mxu0 %v4900
    %4907 = vmatprep.subr.mxu0 0.0
    %4908 = vmatpush1.msra.mxu0 0.0
    %4909 = vmatprep.subr.mxu0 0.0
    %4910 = vmatpush1.msra.mxu0 0.0
    %4911 = vmatprep.subr.mxu0 0.0
    %4912 = vmatpush1.msra.mxu0 0.0
    %4913 = vmatprep.subr.mxu0 0.0
    %4914 = vmatpush1.msra.mxu0 0.0
    %4915 = vmatprep.subr.mxu0 0.0
    %4916 = vmatpush1.msra.mxu0 0.0
    %4917 = vmatprep.subr.mxu0 0.0
    %4918 = vmatpush1.msra.mxu0 0.0
    %4919 = vmatprep.subr.mxu0 0.0
    %4920 = vmatpush1.msra.mxu0 0.0
    %4921 = vmatprep.subr.mxu0 0.0
    %4922 = vmatpush1.msra.mxu0 0.0
    %4923 = vmatprep.subr.mxu0 0.0
    %4924 = vmatpush1.msra.mxu0 0.0
    %4925 = vmatprep.subr.mxu0 0.0
    %4926 = vmatpush1.msra.mxu0 0.0
    %4927 = vmatprep.subr.mxu0 0.0
    %4928 = vmatpush1.msra.mxu0 0.0
    %4929 = vmatprep.subr.mxu0 0.0
    %4930 = vmatpush1.msra.mxu0 0.0
    %4931 = vmatprep.subr.mxu0 0.0
    %4932 = vmatpush1.msra.mxu0 0.0
    %4933 = vmatprep.subr.mxu0 0.0
    %4934 = vmatpush1.msra.mxu0 0.0
    %4935 = vmatprep.subr.mxu0 0.0
    %4936 = vmatpush1.msra.mxu0 0.0
    %4937 = vmatprep.subr.mxu0 0.0
    %4938 = vmatpush1.msra.mxu0 0.0
    %4939 = vmatprep.subr.mxu0 0.0
    %4940 = vmatpush1.msra.mxu0 0.0
    %4941 = vmatprep.subr.mxu0 0.0
    %4942 = vmatpush1.msra.mxu0 0.0
    %4943 = vmatprep.subr.mxu0 0.0
    %4944 = vmatpush1.msra.mxu0 0.0
    %4945 = vmatprep.subr.mxu0 0.0
    %4946 = vmatpush1.msra.mxu0 0.0
    %4947 = vmatprep.subr.mxu0 0.0
    %4948 = vmatpush1.msra.mxu0 0.0
    %4949 = vmatprep.subr.mxu0 0.0
    %4950 = vmatpush1.msra.mxu0 0.0
    %4951 = vmatprep.subr.mxu0 0.0
    %4952 = vmatpush1.msra.mxu0 0.0
    %4953 = vmatprep.subr.mxu0 0.0
    %4954 = vmatpush1.msra.mxu0 0.0
    %4955 = vmatprep.subr.mxu0 0.0
    %4956 = vmatpush1.msra.mxu0 0.0
    %4957 = vmatprep.subr.mxu0 0.0
    %4958 = vmatpush1.msra.mxu0 0.0
    %4959 = vmatprep.subr.mxu0 0.0
    %4960 = vmatpush1.msra.mxu0 0.0
    %4961 = vmatprep.subr.mxu0 0.0
    %4962 = vmatpush1.msra.mxu0 0.0
    %4963 = vmatprep.subr.mxu0 0.0
    %4964 = vmatpush1.msra.mxu0 0.0
    %4965 = vmatprep.subr.mxu0 0.0
    %4966 = vmatpush1.msra.mxu0 0.0
    %4967 = vmatprep.mubr.f32.mxu0 0.0
    %4968 = vmatmul.mubr.f32.gmra.mrb[0].mxu0 %v3003
    %v4969 = vpop.f32.mrb[0].mxu0
    %v4970 = vadd.f32 0.0, %v4969
    %v4971 = vpop.f32.mrb[0].mxu0
    %4972 = vmatprep.mubr.f32.mxu0 0.0
    %4973 = vmatmul.mubr.f32.gmra.mrb[0].mxu0 %v3006
    %v4974 = vpop.f32.mrb[0].mxu0
    %v4975 = vadd.f32 0.0, %v4974
    %v4976 = vpop.f32.mrb[0].mxu0
    %4977 = vdwg.mxu0
    %4980 = vrot.lane.b32.xlu0 %v4362, 112
    %v4981 = vpop.permute.xlu0 %4980
    %4982 = vrot.lane.b32.xlu0 %v4364, 112
    %v4983 = vpop.permute.xlu0 %4982
    %4986 = vmatprep.subr.mxu0 0.0
    %4987 = vmatpush1.msra.mxu0 %v4981
    %4988 = vmatprep.subr.mxu0 0.0
    %4989 = vmatpush1.msra.mxu0 %v4983
    %4990 = vmatprep.subr.mxu0 0.0
    %4991 = vmatpush1.msra.mxu0 0.0
    %4992 = vmatprep.subr.mxu0 0.0
    %4993 = vmatpush1.msra.mxu0 0.0
    %4994 = vmatprep.subr.mxu0 0.0
    %4995 = vmatpush1.msra.mxu0 0.0
    %4996 = vmatprep.subr.mxu0 0.0
    %4997 = vmatpush1.msra.mxu0 0.0
    %4998 = vmatprep.subr.mxu0 0.0
    %4999 = vmatpush1.msra.mxu0 0.0
    %5000 = vmatprep.subr.mxu0 0.0
    %5001 = vmatpush1.msra.mxu0 0.0
    %5002 = vmatprep.subr.mxu0 0.0
    %5003 = vmatpush1.msra.mxu0 0.0
    %5004 = vmatprep.subr.mxu0 0.0
    %5005 = vmatpush1.msra.mxu0 0.0
    %5006 = vmatprep.subr.mxu0 0.0
    %5007 = vmatpush1.msra.mxu0 0.0
    %5008 = vmatprep.subr.mxu0 0.0
    %5009 = vmatpush1.msra.mxu0 0.0
    %5010 = vmatprep.subr.mxu0 0.0
    %5011 = vmatpush1.msra.mxu0 0.0
    %5012 = vmatprep.subr.mxu0 0.0
    %5013 = vmatpush1.msra.mxu0 0.0
    %5014 = vmatprep.subr.mxu0 0.0
    %5015 = vmatpush1.msra.mxu0 0.0
    %5016 = vmatprep.subr.mxu0 0.0
    %5017 = vmatpush1.msra.mxu0 0.0
    %5018 = vmatprep.subr.mxu0 0.0
    %5019 = vmatpush1.msra.mxu0 0.0
    %5020 = vmatprep.subr.mxu0 0.0
    %5021 = vmatpush1.msra.mxu0 0.0
    %5022 = vmatprep.subr.mxu0 0.0
    %5023 = vmatpush1.msra.mxu0 0.0
    %5024 = vmatprep.subr.mxu0 0.0
    %5025 = vmatpush1.msra.mxu0 0.0
    %5026 = vmatprep.subr.mxu0 0.0
    %5027 = vmatpush1.msra.mxu0 0.0
    %5028 = vmatprep.subr.mxu0 0.0
    %5029 = vmatpush1.msra.mxu0 0.0
    %5030 = vmatprep.subr.mxu0 0.0
    %5031 = vmatpush1.msra.mxu0 0.0
    %5032 = vmatprep.subr.mxu0 0.0
    %5033 = vmatpush1.msra.mxu0 0.0
    %5034 = vmatprep.subr.mxu0 0.0
    %5035 = vmatpush1.msra.mxu0 0.0
    %5036 = vmatprep.subr.mxu0 0.0
    %5037 = vmatpush1.msra.mxu0 0.0
    %5038 = vmatprep.subr.mxu0 0.0
    %5039 = vmatpush1.msra.mxu0 0.0
    %5040 = vmatprep.subr.mxu0 0.0
    %5041 = vmatpush1.msra.mxu0 0.0
    %5042 = vmatprep.subr.mxu0 0.0
    %5043 = vmatpush1.msra.mxu0 0.0
    %5044 = vmatprep.subr.mxu0 0.0
    %5045 = vmatpush1.msra.mxu0 0.0
    %5046 = vmatprep.subr.mxu0 0.0
    %5047 = vmatpush1.msra.mxu0 0.0
    %5048 = vmatprep.subr.mxu0 0.0
    %5049 = vmatpush1.msra.mxu0 0.0
    %5050 = vmatprep.mubr.f32.mxu0 0.0
    %5051 = vmatmul.mubr.f32.gmra.mrb[0].mxu0 %v3092
    %v5052 = vpop.f32.mrb[0].mxu0
    %v5053 = vadd.f32 0.0, %v5052
    %v5054 = vpop.f32.mrb[0].mxu0
    %5055 = vmatprep.mubr.f32.mxu0 0.0
    %5056 = vmatmul.mubr.f32.gmra.mrb[0].mxu0 %v3095
    %v5057 = vpop.f32.mrb[0].mxu0
    %v5058 = vadd.f32 0.0, %v5057
    %v5059 = vpop.f32.mrb[0].mxu0
    %5060 = vdwg.mxu0
    %5063 = vrot.lane.b32.xlu0 %v4366, 112
    %v5064 = vpop.permute.xlu0 %5063
    %5065 = vrot.lane.b32.xlu0 %v4368, 112
    %v5066 = vpop.permute.xlu0 %5065
    %5069 = vmatprep.subr.mxu0 0.0
    %5070 = vmatpush1.msra.mxu0 %v5064
    %5071 = vmatprep.subr.mxu0 0.0
    %5072 = vmatpush1.msra.mxu0 %v5066
    %5073 = vmatprep.subr.mxu0 0.0
    %5074 = vmatpush1.msra.mxu0 0.0
    %5075 = vmatprep.subr.mxu0 0.0
    %5076 = vmatpush1.msra.mxu0 0.0
    %5077 = vmatprep.subr.mxu0 0.0
    %5078 = vmatpush1.msra.mxu0 0.0
    %5079 = vmatprep.subr.mxu0 0.0
    %5080 = vmatpush1.msra.mxu0 0.0
    %5081 = vmatprep.subr.mxu0 0.0
    %5082 = vmatpush1.msra.mxu0 0.0
    %5083 = vmatprep.subr.mxu0 0.0
    %5084 = vmatpush1.msra.mxu0 0.0
    %5085 = vmatprep.subr.mxu0 0.0
    %5086 = vmatpush1.msra.mxu0 0.0
    %5087 = vmatprep.subr.mxu0 0.0
    %5088 = vmatpush1.msra.mxu0 0.0
    %5089 = vmatprep.subr.mxu0 0.0
    %5090 = vmatpush1.msra.mxu0 0.0
    %5091 = vmatprep.subr.mxu0 0.0
    %5092 = vmatpush1.msra.mxu0 0.0
    %5093 = vmatprep.subr.mxu0 0.0
    %5094 = vmatpush1.msra.mxu0 0.0
    %5095 = vmatprep.subr.mxu0 0.0
    %5096 = vmatpush1.msra.mxu0 0.0
    %5097 = vmatprep.subr.mxu0 0.0
    %5098 = vmatpush1.msra.mxu0 0.0
    %5099 = vmatprep.subr.mxu0 0.0
    %5100 = vmatpush1.msra.mxu0 0.0
    %5101 = vmatprep.subr.mxu0 0.0
    %5102 = vmatpush1.msra.mxu0 0.0
    %5103 = vmatprep.subr.mxu0 0.0
    %5104 = vmatpush1.msra.mxu0 0.0
    %5105 = vmatprep.subr.mxu0 0.0
    %5106 = vmatpush1.msra.mxu0 0.0
    %5107 = vmatprep.subr.mxu0 0.0
    %5108 = vmatpush1.msra.mxu0 0.0
    %5109 = vmatprep.subr.mxu0 0.0
    %5110 = vmatpush1.msra.mxu0 0.0
    %5111 = vmatprep.subr.mxu0 0.0
    %5112 = vmatpush1.msra.mxu0 0.0
    %5113 = vmatprep.subr.mxu0 0.0
    %5114 = vmatpush1.msra.mxu0 0.0
    %5115 = vmatprep.subr.mxu0 0.0
    %5116 = vmatpush1.msra.mxu0 0.0
    %5117 = vmatprep.subr.mxu0 0.0
    %5118 = vmatpush1.msra.mxu0 0.0
    %5119 = vmatprep.subr.mxu0 0.0
    %5120 = vmatpush1.msra.mxu0 0.0
    %5121 = vmatprep.subr.mxu0 0.0
    %5122 = vmatpush1.msra.mxu0 0.0
    %5123 = vmatprep.subr.mxu0 0.0
    %5124 = vmatpush1.msra.mxu0 0.0
    %5125 = vmatprep.subr.mxu0 0.0
    %5126 = vmatpush1.msra.mxu0 0.0
    %5127 = vmatprep.subr.mxu0 0.0
    %5128 = vmatpush1.msra.mxu0 0.0
    %5129 = vmatprep.subr.mxu0 0.0
    %5130 = vmatpush1.msra.mxu0 0.0
    %5131 = vmatprep.subr.mxu0 0.0
    %5132 = vmatpush1.msra.mxu0 0.0
    %5133 = vmatprep.mubr.f32.mxu0 0.0
    %5134 = vmatmul.mubr.f32.gmra.mrb[0].mxu0 %v3181
    %v5135 = vpop.f32.mrb[0].mxu0
    %v5136 = vadd.f32 0.0, %v5135
    %v5137 = vpop.f32.mrb[0].mxu0
    %5138 = vmatprep.mubr.f32.mxu0 0.0
    %5139 = vmatmul.mubr.f32.gmra.mrb[0].mxu0 %v3184
    %v5140 = vpop.f32.mrb[0].mxu0
    %v5141 = vadd.f32 0.0, %v5140
    %v5142 = vpop.f32.mrb[0].mxu0
    %5143 = vdwg.mxu0
    %5146 = vrot.lane.b32.xlu0 %v4370, 112
    %v5147 = vpop.permute.xlu0 %5146
    %5148 = vrot.lane.b32.xlu0 %v4372, 112
    %v5149 = vpop.permute.xlu0 %5148
    %5152 = vmatprep.subr.mxu0 0.0
    %5153 = vmatpush1.msra.mxu0 %v5147
    %5154 = vmatprep.subr.mxu0 0.0
    %5155 = vmatpush1.msra.mxu0 %v5149
    %5156 = vmatprep.subr.mxu0 0.0
    %5157 = vmatpush1.msra.mxu0 0.0
    %5158 = vmatprep.subr.mxu0 0.0
    %5159 = vmatpush1.msra.mxu0 0.0
    %5160 = vmatprep.subr.mxu0 0.0
    %5161 = vmatpush1.msra.mxu0 0.0
    %5162 = vmatprep.subr.mxu0 0.0
    %5163 = vmatpush1.msra.mxu0 0.0
    %5164 = vmatprep.subr.mxu0 0.0
    %5165 = vmatpush1.msra.mxu0 0.0
    %5166 = vmatprep.subr.mxu0 0.0
    %5167 = vmatpush1.msra.mxu0 0.0
    %5168 = vmatprep.subr.mxu0 0.0
    %5169 = vmatpush1.msra.mxu0 0.0
    %5170 = vmatprep.subr.mxu0 0.0
    %5171 = vmatpush1.msra.mxu0 0.0
    %5172 = vmatprep.subr.mxu0 0.0
    %5173 = vmatpush1.msra.mxu0 0.0
    %5174 = vmatprep.subr.mxu0 0.0
    %5175 = vmatpush1.msra.mxu0 0.0
    %5176 = vmatprep.subr.mxu0 0.0
    %5177 = vmatpush1.msra.mxu0 0.0
    %5178 = vmatprep.subr.mxu0 0.0
    %5179 = vmatpush1.msra.mxu0 0.0
    %5180 = vmatprep.subr.mxu0 0.0
    %5181 = vmatpush1.msra.mxu0 0.0
    %5182 = vmatprep.subr.mxu0 0.0
    %5183 = vmatpush1.msra.mxu0 0.0
    %5184 = vmatprep.subr.mxu0 0.0
    %5185 = vmatpush1.msra.mxu0 0.0
    %5186 = vmatprep.subr.mxu0 0.0
    %5187 = vmatpush1.msra.mxu0 0.0
    %5188 = vmatprep.subr.mxu0 0.0
    %5189 = vmatpush1.msra.mxu0 0.0
    %5190 = vmatprep.subr.mxu0 0.0
    %5191 = vmatpush1.msra.mxu0 0.0
    %5192 = vmatprep.subr.mxu0 0.0
    %5193 = vmatpush1.msra.mxu0 0.0
    %5194 = vmatprep.subr.mxu0 0.0
    %5195 = vmatpush1.msra.mxu0 0.0
    %5196 = vmatprep.subr.mxu0 0.0
    %5197 = vmatpush1.msra.mxu0 0.0
    %5198 = vmatprep.subr.mxu0 0.0
    %5199 = vmatpush1.msra.mxu0 0.0
    %5200 = vmatprep.subr.mxu0 0.0
    %5201 = vmatpush1.msra.mxu0 0.0
    %5202 = vmatprep.subr.mxu0 0.0
    %5203 = vmatpush1.msra.mxu0 0.0
    %5204 = vmatprep.subr.mxu0 0.0
    %5205 = vmatpush1.msra.mxu0 0.0
    %5206 = vmatprep.subr.mxu0 0.0
    %5207 = vmatpush1.msra.mxu0 0.0
    %5208 = vmatprep.subr.mxu0 0.0
    %5209 = vmatpush1.msra.mxu0 0.0
    %5210 = vmatprep.subr.mxu0 0.0
    %5211 = vmatpush1.msra.mxu0 0.0
    %5212 = vmatprep.subr.mxu0 0.0
    %5213 = vmatpush1.msra.mxu0 0.0
    %5214 = vmatprep.subr.mxu0 0.0
    %5215 = vmatpush1.msra.mxu0 0.0
    %5216 = vmatprep.mubr.f32.mxu0 0.0
    %5217 = vmatmul.mubr.f32.gmra.mrb[0].mxu0 %v3270
    %v5218 = vpop.f32.mrb[0].mxu0
    %v5219 = vadd.f32 0.0, %v5218
    %v5220 = vpop.f32.mrb[0].mxu0
    %5221 = vmatprep.mubr.f32.mxu0 0.0
    %5222 = vmatmul.mubr.f32.gmra.mrb[0].mxu0 %v3273
    %v5223 = vpop.f32.mrb[0].mxu0
    %v5224 = vadd.f32 0.0, %v5223
    %v5225 = vpop.f32.mrb[0].mxu0
    %5226 = vdwg.mxu0
    %5229 = vrot.lane.b32.xlu0 %v4374, 112
    %v5230 = vpop.permute.xlu0 %5229
    %5231 = vrot.lane.b32.xlu0 %v4376, 112
    %v5232 = vpop.permute.xlu0 %5231
    %5235 = vmatprep.subr.mxu0 0.0
    %5236 = vmatpush1.msra.mxu0 %v5230
    %5237 = vmatprep.subr.mxu0 0.0
    %5238 = vmatpush1.msra.mxu0 %v5232
    %5239 = vmatprep.subr.mxu0 0.0
    %5240 = vmatpush1.msra.mxu0 0.0
    %5241 = vmatprep.subr.mxu0 0.0
    %5242 = vmatpush1.msra.mxu0 0.0
    %5243 = vmatprep.subr.mxu0 0.0
    %5244 = vmatpush1.msra.mxu0 0.0
    %5245 = vmatprep.subr.mxu0 0.0
    %5246 = vmatpush1.msra.mxu0 0.0
    %5247 = vmatprep.subr.mxu0 0.0
    %5248 = vmatpush1.msra.mxu0 0.0
    %5249 = vmatprep.subr.mxu0 0.0
    %5250 = vmatpush1.msra.mxu0 0.0
    %5251 = vmatprep.subr.mxu0 0.0
    %5252 = vmatpush1.msra.mxu0 0.0
    %5253 = vmatprep.subr.mxu0 0.0
    %5254 = vmatpush1.msra.mxu0 0.0
    %5255 = vmatprep.subr.mxu0 0.0
    %5256 = vmatpush1.msra.mxu0 0.0
    %5257 = vmatprep.subr.mxu0 0.0
    %5258 = vmatpush1.msra.mxu0 0.0
    %5259 = vmatprep.subr.mxu0 0.0
    %5260 = vmatpush1.msra.mxu0 0.0
    %5261 = vmatprep.subr.mxu0 0.0
    %5262 = vmatpush1.msra.mxu0 0.0
    %5263 = vmatprep.subr.mxu0 0.0
    %5264 = vmatpush1.msra.mxu0 0.0
    %5265 = vmatprep.subr.mxu0 0.0
    %5266 = vmatpush1.msra.mxu0 0.0
    %5267 = vmatprep.subr.mxu0 0.0
    %5268 = vmatpush1.msra.mxu0 0.0
    %5269 = vmatprep.subr.mxu0 0.0
    %5270 = vmatpush1.msra.mxu0 0.0
    %5271 = vmatprep.subr.mxu0 0.0
    %5272 = vmatpush1.msra.mxu0 0.0
    %5273 = vmatprep.subr.mxu0 0.0
    %5274 = vmatpush1.msra.mxu0 0.0
    %5275 = vmatprep.subr.mxu0 0.0
    %5276 = vmatpush1.msra.mxu0 0.0
    %5277 = vmatprep.subr.mxu0 0.0
    %5278 = vmatpush1.msra.mxu0 0.0
    %5279 = vmatprep.subr.mxu0 0.0
    %5280 = vmatpush1.msra.mxu0 0.0
    %5281 = vmatprep.subr.mxu0 0.0
    %5282 = vmatpush1.msra.mxu0 0.0
    %5283 = vmatprep.subr.mxu0 0.0
    %5284 = vmatpush1.msra.mxu0 0.0
    %5285 = vmatprep.subr.mxu0 0.0
    %5286 = vmatpush1.msra.mxu0 0.0
    %5287 = vmatprep.subr.mxu0 0.0
    %5288 = vmatpush1.msra.mxu0 0.0
    %5289 = vmatprep.subr.mxu0 0.0
    %5290 = vmatpush1.msra.mxu0 0.0
    %5291 = vmatprep.subr.mxu0 0.0
    %5292 = vmatpush1.msra.mxu0 0.0
    %5293 = vmatprep.subr.mxu0 0.0
    %5294 = vmatpush1.msra.mxu0 0.0
    %5295 = vmatprep.subr.mxu0 0.0
    %5296 = vmatpush1.msra.mxu0 0.0
    %5297 = vmatprep.subr.mxu0 0.0
    %5298 = vmatpush1.msra.mxu0 0.0
    %5299 = vmatprep.mubr.f32.mxu0 0.0
    %5300 = vmatmul.mubr.f32.gmra.mrb[0].mxu0 %v3359
    %v5301 = vpop.f32.mrb[0].mxu0
    %v5302 = vadd.f32 0.0, %v5301
    %v5303 = vpop.f32.mrb[0].mxu0
    %5304 = vmatprep.mubr.f32.mxu0 0.0
    %5305 = vmatmul.mubr.f32.gmra.mrb[0].mxu0 %v3362
    %v5306 = vpop.f32.mrb[0].mxu0
    %v5307 = vadd.f32 0.0, %v5306
    %v5308 = vpop.f32.mrb[0].mxu0
    %5309 = vdwg.mxu0
    %5312 = vrot.lane.b32.xlu0 %v4378, 112
    %v5313 = vpop.permute.xlu0 %5312
    %5314 = vrot.lane.b32.xlu0 %v4380, 112
    %v5315 = vpop.permute.xlu0 %5314
    %5318 = vmatprep.subr.mxu0 0.0
    %5319 = vmatpush1.msra.mxu0 %v5313
    %5320 = vmatprep.subr.mxu0 0.0
    %5321 = vmatpush1.msra.mxu0 %v5315
    %5322 = vmatprep.subr.mxu0 0.0
    %5323 = vmatpush1.msra.mxu0 0.0
    %5324 = vmatprep.subr.mxu0 0.0
    %5325 = vmatpush1.msra.mxu0 0.0
    %5326 = vmatprep.subr.mxu0 0.0
    %5327 = vmatpush1.msra.mxu0 0.0
    %5328 = vmatprep.subr.mxu0 0.0
    %5329 = vmatpush1.msra.mxu0 0.0
    %5330 = vmatprep.subr.mxu0 0.0
    %5331 = vmatpush1.msra.mxu0 0.0
    %5332 = vmatprep.subr.mxu0 0.0
    %5333 = vmatpush1.msra.mxu0 0.0
    %5334 = vmatprep.subr.mxu0 0.0
    %5335 = vmatpush1.msra.mxu0 0.0
    %5336 = vmatprep.subr.mxu0 0.0
    %5337 = vmatpush1.msra.mxu0 0.0
    %5338 = vmatprep.subr.mxu0 0.0
    %5339 = vmatpush1.msra.mxu0 0.0
    %5340 = vmatprep.subr.mxu0 0.0
    %5341 = vmatpush1.msra.mxu0 0.0
    %5342 = vmatprep.subr.mxu0 0.0
    %5343 = vmatpush1.msra.mxu0 0.0
    %5344 = vmatprep.subr.mxu0 0.0
    %5345 = vmatpush1.msra.mxu0 0.0
    %5346 = vmatprep.subr.mxu0 0.0
    %5347 = vmatpush1.msra.mxu0 0.0
    %5348 = vmatprep.subr.mxu0 0.0
    %5349 = vmatpush1.msra.mxu0 0.0
    %5350 = vmatprep.subr.mxu0 0.0
    %5351 = vmatpush1.msra.mxu0 0.0
    %5352 = vmatprep.subr.mxu0 0.0
    %5353 = vmatpush1.msra.mxu0 0.0
    %5354 = vmatprep.subr.mxu0 0.0
    %5355 = vmatpush1.msra.mxu0 0.0
    %5356 = vmatprep.subr.mxu0 0.0
    %5357 = vmatpush1.msra.mxu0 0.0
    %5358 = vmatprep.subr.mxu0 0.0
    %5359 = vmatpush1.msra.mxu0 0.0
    %5360 = vmatprep.subr.mxu0 0.0
    %5361 = vmatpush1.msra.mxu0 0.0
    %5362 = vmatprep.subr.mxu0 0.0
    %5363 = vmatpush1.msra.mxu0 0.0
    %5364 = vmatprep.subr.mxu0 0.0
    %5365 = vmatpush1.msra.mxu0 0.0
    %5366 = vmatprep.subr.mxu0 0.0
    %5367 = vmatpush1.msra.mxu0 0.0
    %5368 = vmatprep.subr.mxu0 0.0
    %5369 = vmatpush1.msra.mxu0 0.0
    %5370 = vmatprep.subr.mxu0 0.0
    %5371 = vmatpush1.msra.mxu0 0.0
    %5372 = vmatprep.subr.mxu0 0.0
    %5373 = vmatpush1.msra.mxu0 0.0
    %5374 = vmatprep.subr.mxu0 0.0
    %5375 = vmatpush1.msra.mxu0 0.0
    %5376 = vmatprep.subr.mxu0 0.0
    %5377 = vmatpush1.msra.mxu0 0.0
    %5378 = vmatprep.subr.mxu0 0.0
    %5379 = vmatpush1.msra.mxu0 0.0
    %5380 = vmatprep.subr.mxu0 0.0
    %5381 = vmatpush1.msra.mxu0 0.0
    %5382 = vmatprep.mubr.f32.mxu0 0.0
    %5383 = vmatmul.mubr.f32.gmra.mrb[0].mxu0 %v3448
    %v5384 = vpop.f32.mrb[0].mxu0
    %v5385 = vadd.f32 0.0, %v5384
    %v5386 = vpop.f32.mrb[0].mxu0
    %5387 = vmatprep.mubr.f32.mxu0 0.0
    %5388 = vmatmul.mubr.f32.gmra.mrb[0].mxu0 %v3451
    %v5389 = vpop.f32.mrb[0].mxu0
    %v5390 = vadd.f32 0.0, %v5389
    %v5391 = vpop.f32.mrb[0].mxu0
    %5392 = vdwg.mxu0
    %5395 = vrot.lane.b32.xlu0 %v4382, 112
    %v5396 = vpop.permute.xlu0 %5395
    %5397 = vrot.lane.b32.xlu0 %v4384, 112
    %v5398 = vpop.permute.xlu0 %5397
    %5401 = vmatprep.subr.mxu0 0.0
    %5402 = vmatpush1.msra.mxu0 %v5396
    %5403 = vmatprep.subr.mxu0 0.0
    %5404 = vmatpush1.msra.mxu0 %v5398
    %5405 = vmatprep.subr.mxu0 0.0
    %5406 = vmatpush1.msra.mxu0 0.0
    %5407 = vmatprep.subr.mxu0 0.0
    %5408 = vmatpush1.msra.mxu0 0.0
    %5409 = vmatprep.subr.mxu0 0.0
    %5410 = vmatpush1.msra.mxu0 0.0
    %5411 = vmatprep.subr.mxu0 0.0
    %5412 = vmatpush1.msra.mxu0 0.0
    %5413 = vmatprep.subr.mxu0 0.0
    %5414 = vmatpush1.msra.mxu0 0.0
    %5415 = vmatprep.subr.mxu0 0.0
    %5416 = vmatpush1.msra.mxu0 0.0
    %5417 = vmatprep.subr.mxu0 0.0
    %5418 = vmatpush1.msra.mxu0 0.0
    %5419 = vmatprep.subr.mxu0 0.0
    %5420 = vmatpush1.msra.mxu0 0.0
    %5421 = vmatprep.subr.mxu0 0.0
    %5422 = vmatpush1.msra.mxu0 0.0
    %5423 = vmatprep.subr.mxu0 0.0
    %5424 = vmatpush1.msra.mxu0 0.0
    %5425 = vmatprep.subr.mxu0 0.0
    %5426 = vmatpush1.msra.mxu0 0.0
    %5427 = vmatprep.subr.mxu0 0.0
    %5428 = vmatpush1.msra.mxu0 0.0
    %5429 = vmatprep.subr.mxu0 0.0
    %5430 = vmatpush1.msra.mxu0 0.0
    %5431 = vmatprep.subr.mxu0 0.0
    %5432 = vmatpush1.msra.mxu0 0.0
    %5433 = vmatprep.subr.mxu0 0.0
    %5434 = vmatpush1.msra.mxu0 0.0
    %5435 = vmatprep.subr.mxu0 0.0
    %5436 = vmatpush1.msra.mxu0 0.0
    %5437 = vmatprep.subr.mxu0 0.0
    %5438 = vmatpush1.msra.mxu0 0.0
    %5439 = vmatprep.subr.mxu0 0.0
    %5440 = vmatpush1.msra.mxu0 0.0
    %5441 = vmatprep.subr.mxu0 0.0
    %5442 = vmatpush1.msra.mxu0 0.0
    %5443 = vmatprep.subr.mxu0 0.0
    %5444 = vmatpush1.msra.mxu0 0.0
    %5445 = vmatprep.subr.mxu0 0.0
    %5446 = vmatpush1.msra.mxu0 0.0
    %5447 = vmatprep.subr.mxu0 0.0
    %5448 = vmatpush1.msra.mxu0 0.0
    %5449 = vmatprep.subr.mxu0 0.0
    %5450 = vmatpush1.msra.mxu0 0.0
    %5451 = vmatprep.subr.mxu0 0.0
    %5452 = vmatpush1.msra.mxu0 0.0
    %5453 = vmatprep.subr.mxu0 0.0
    %5454 = vmatpush1.msra.mxu0 0.0
    %5455 = vmatprep.subr.mxu0 0.0
    %5456 = vmatpush1.msra.mxu0 0.0
    %5457 = vmatprep.subr.mxu0 0.0
    %5458 = vmatpush1.msra.mxu0 0.0
    %5459 = vmatprep.subr.mxu0 0.0
    %5460 = vmatpush1.msra.mxu0 0.0
    %5461 = vmatprep.subr.mxu0 0.0
    %5462 = vmatpush1.msra.mxu0 0.0
    %5463 = vmatprep.subr.mxu0 0.0
    %5464 = vmatpush1.msra.mxu0 0.0
    %5465 = vmatprep.mubr.f32.mxu0 0.0
    %5466 = vmatmul.mubr.f32.gmra.mrb[0].mxu0 %v3537
    %v5467 = vpop.f32.mrb[0].mxu0
    %v5468 = vadd.f32 0.0, %v5467
    %v5469 = vpop.f32.mrb[0].mxu0
    %5470 = vmatprep.mubr.f32.mxu0 0.0
    %5471 = vmatmul.mubr.f32.gmra.mrb[0].mxu0 %v3540
    %v5472 = vpop.f32.mrb[0].mxu0
    %v5473 = vadd.f32 0.0, %v5472
    %v5474 = vpop.f32.mrb[0].mxu0
    %5475 = vdwg.mxu0
    %5478 = vrot.lane.b32.xlu0 %v4386, 112
    %v5479 = vpop.permute.xlu0 %5478
    %5480 = vrot.lane.b32.xlu0 %v4388, 112
    %v5481 = vpop.permute.xlu0 %5480
    %5484 = vmatprep.subr.mxu0 0.0
    %5485 = vmatpush1.msra.mxu0 %v5479
    %5486 = vmatprep.subr.mxu0 0.0
    %5487 = vmatpush1.msra.mxu0 %v5481
    %5488 = vmatprep.subr.mxu0 0.0
    %5489 = vmatpush1.msra.mxu0 0.0
    %5490 = vmatprep.subr.mxu0 0.0
    %5491 = vmatpush1.msra.mxu0 0.0
    %5492 = vmatprep.subr.mxu0 0.0
    %5493 = vmatpush1.msra.mxu0 0.0
    %5494 = vmatprep.subr.mxu0 0.0
    %5495 = vmatpush1.msra.mxu0 0.0
    %5496 = vmatprep.subr.mxu0 0.0
    %5497 = vmatpush1.msra.mxu0 0.0
    %5498 = vmatprep.subr.mxu0 0.0
    %5499 = vmatpush1.msra.mxu0 0.0
    %5500 = vmatprep.subr.mxu0 0.0
    %5501 = vmatpush1.msra.mxu0 0.0
    %5502 = vmatprep.subr.mxu0 0.0
    %5503 = vmatpush1.msra.mxu0 0.0
    %5504 = vmatprep.subr.mxu0 0.0
    %5505 = vmatpush1.msra.mxu0 0.0
    %5506 = vmatprep.subr.mxu0 0.0
    %5507 = vmatpush1.msra.mxu0 0.0
    %5508 = vmatprep.subr.mxu0 0.0
    %5509 = vmatpush1.msra.mxu0 0.0
    %5510 = vmatprep.subr.mxu0 0.0
    %5511 = vmatpush1.msra.mxu0 0.0
    %5512 = vmatprep.subr.mxu0 0.0
    %5513 = vmatpush1.msra.mxu0 0.0
    %5514 = vmatprep.subr.mxu0 0.0
    %5515 = vmatpush1.msra.mxu0 0.0
    %5516 = vmatprep.subr.mxu0 0.0
    %5517 = vmatpush1.msra.mxu0 0.0
    %5518 = vmatprep.subr.mxu0 0.0
    %5519 = vmatpush1.msra.mxu0 0.0
    %5520 = vmatprep.subr.mxu0 0.0
    %5521 = vmatpush1.msra.mxu0 0.0
    %5522 = vmatprep.subr.mxu0 0.0
    %5523 = vmatpush1.msra.mxu0 0.0
    %5524 = vmatprep.subr.mxu0 0.0
    %5525 = vmatpush1.msra.mxu0 0.0
    %5526 = vmatprep.subr.mxu0 0.0
    %5527 = vmatpush1.msra.mxu0 0.0
    %5528 = vmatprep.subr.mxu0 0.0
    %5529 = vmatpush1.msra.mxu0 0.0
    %5530 = vmatprep.subr.mxu0 0.0
    %5531 = vmatpush1.msra.mxu0 0.0
    %5532 = vmatprep.subr.mxu0 0.0
    %5533 = vmatpush1.msra.mxu0 0.0
    %5534 = vmatprep.subr.mxu0 0.0
    %5535 = vmatpush1.msra.mxu0 0.0
    %5536 = vmatprep.subr.mxu0 0.0
    %5537 = vmatpush1.msra.mxu0 0.0
    %5538 = vmatprep.subr.mxu0 0.0
    %5539 = vmatpush1.msra.mxu0 0.0
    %5540 = vmatprep.subr.mxu0 0.0
    %5541 = vmatpush1.msra.mxu0 0.0
    %5542 = vmatprep.subr.mxu0 0.0
    %5543 = vmatpush1.msra.mxu0 0.0
    %5544 = vmatprep.subr.mxu0 0.0
    %5545 = vmatpush1.msra.mxu0 0.0
    %5546 = vmatprep.subr.mxu0 0.0
    %5547 = vmatpush1.msra.mxu0 0.0
    %5548 = vmatprep.mubr.f32.mxu0 0.0
    %5549 = vmatmul.mubr.f32.gmra.mrb[0].mxu0 %v3626
    %v5550 = vpop.f32.mrb[0].mxu0
    %v5551 = vadd.f32 0.0, %v5550
    %v5552 = vpop.f32.mrb[0].mxu0
    %5553 = vmatprep.mubr.f32.mxu0 0.0
    %5554 = vmatmul.mubr.f32.gmra.mrb[0].mxu0 %v3629
    %v5555 = vpop.f32.mrb[0].mxu0
    %v5556 = vadd.f32 0.0, %v5555
    %v5557 = vpop.f32.mrb[0].mxu0
    %5558 = vdwg.mxu0
    %5561 = vrot.lane.b32.xlu0 %v4390, 112
    %v5562 = vpop.permute.xlu0 %5561
    %5563 = vrot.lane.b32.xlu0 %v4392, 112
    %v5564 = vpop.permute.xlu0 %5563
    %5567 = vmatprep.subr.mxu0 0.0
    %5568 = vmatpush1.msra.mxu0 %v5562
    %5569 = vmatprep.subr.mxu0 0.0
    %5570 = vmatpush1.msra.mxu0 %v5564
    %5571 = vmatprep.subr.mxu0 0.0
    %5572 = vmatpush1.msra.mxu0 0.0
    %5573 = vmatprep.subr.mxu0 0.0
    %5574 = vmatpush1.msra.mxu0 0.0
    %5575 = vmatprep.subr.mxu0 0.0
    %5576 = vmatpush1.msra.mxu0 0.0
    %5577 = vmatprep.subr.mxu0 0.0
    %5578 = vmatpush1.msra.mxu0 0.0
    %5579 = vmatprep.subr.mxu0 0.0
    %5580 = vmatpush1.msra.mxu0 0.0
    %5581 = vmatprep.subr.mxu0 0.0
    %5582 = vmatpush1.msra.mxu0 0.0
    %5583 = vmatprep.subr.mxu0 0.0
    %5584 = vmatpush1.msra.mxu0 0.0
    %5585 = vmatprep.subr.mxu0 0.0
    %5586 = vmatpush1.msra.mxu0 0.0
    %5587 = vmatprep.subr.mxu0 0.0
    %5588 = vmatpush1.msra.mxu0 0.0
    %5589 = vmatprep.subr.mxu0 0.0
    %5590 = vmatpush1.msra.mxu0 0.0
    %5591 = vmatprep.subr.mxu0 0.0
    %5592 = vmatpush1.msra.mxu0 0.0
    %5593 = vmatprep.subr.mxu0 0.0
    %5594 = vmatpush1.msra.mxu0 0.0
    %5595 = vmatprep.subr.mxu0 0.0
    %5596 = vmatpush1.msra.mxu0 0.0
    %5597 = vmatprep.subr.mxu0 0.0
    %5598 = vmatpush1.msra.mxu0 0.0
    %5599 = vmatprep.subr.mxu0 0.0
    %5600 = vmatpush1.msra.mxu0 0.0
    %5601 = vmatprep.subr.mxu0 0.0
    %5602 = vmatpush1.msra.mxu0 0.0
    %5603 = vmatprep.subr.mxu0 0.0
    %5604 = vmatpush1.msra.mxu0 0.0
    %5605 = vmatprep.subr.mxu0 0.0
    %5606 = vmatpush1.msra.mxu0 0.0
    %5607 = vmatprep.subr.mxu0 0.0
    %5608 = vmatpush1.msra.mxu0 0.0
    %5609 = vmatprep.subr.mxu0 0.0
    %5610 = vmatpush1.msra.mxu0 0.0
    %5611 = vmatprep.subr.mxu0 0.0
    %5612 = vmatpush1.msra.mxu0 0.0
    %5613 = vmatprep.subr.mxu0 0.0
    %5614 = vmatpush1.msra.mxu0 0.0
    %5615 = vmatprep.subr.mxu0 0.0
    %5616 = vmatpush1.msra.mxu0 0.0
    %5617 = vmatprep.subr.mxu0 0.0
    %5618 = vmatpush1.msra.mxu0 0.0
    %5619 = vmatprep.subr.mxu0 0.0
    %5620 = vmatpush1.msra.mxu0 0.0
    %5621 = vmatprep.subr.mxu0 0.0
    %5622 = vmatpush1.msra.mxu0 0.0
    %5623 = vmatprep.subr.mxu0 0.0
    %5624 = vmatpush1.msra.mxu0 0.0
    %5625 = vmatprep.subr.mxu0 0.0
    %5626 = vmatpush1.msra.mxu0 0.0
    %5627 = vmatprep.subr.mxu0 0.0
    %5628 = vmatpush1.msra.mxu0 0.0
    %5629 = vmatprep.subr.mxu0 0.0
    %5630 = vmatpush1.msra.mxu0 0.0
    %5631 = vmatprep.mubr.f32.mxu0 0.0
    %5632 = vmatmul.mubr.f32.gmra.mrb[0].mxu0 %v3715
    %v5633 = vpop.f32.mrb[0].mxu0
    %v5634 = vadd.f32 0.0, %v5633
    %v5635 = vpop.f32.mrb[0].mxu0
    %5636 = vmatprep.mubr.f32.mxu0 0.0
    %5637 = vmatmul.mubr.f32.gmra.mrb[0].mxu0 %v3718
    %v5638 = vpop.f32.mrb[0].mxu0
    %v5639 = vadd.f32 0.0, %v5638
    %v5640 = vpop.f32.mrb[0].mxu0
    %5641 = vdwg.mxu0
    %5644 = vrot.lane.b32.xlu0 %v4394, 112
    %v5645 = vpop.permute.xlu0 %5644
    %5646 = vrot.lane.b32.xlu0 %v4396, 112
    %v5647 = vpop.permute.xlu0 %5646
    %5650 = vmatprep.subr.mxu0 0.0
    %5651 = vmatpush1.msra.mxu0 %v5645
    %5652 = vmatprep.subr.mxu0 0.0
    %5653 = vmatpush1.msra.mxu0 %v5647
    %5654 = vmatprep.subr.mxu0 0.0
    %5655 = vmatpush1.msra.mxu0 0.0
    %5656 = vmatprep.subr.mxu0 0.0
    %5657 = vmatpush1.msra.mxu0 0.0
    %5658 = vmatprep.subr.mxu0 0.0
    %5659 = vmatpush1.msra.mxu0 0.0
    %5660 = vmatprep.subr.mxu0 0.0
    %5661 = vmatpush1.msra.mxu0 0.0
    %5662 = vmatprep.subr.mxu0 0.0
    %5663 = vmatpush1.msra.mxu0 0.0
    %5664 = vmatprep.subr.mxu0 0.0
    %5665 = vmatpush1.msra.mxu0 0.0
    %5666 = vmatprep.subr.mxu0 0.0
    %5667 = vmatpush1.msra.mxu0 0.0
    %5668 = vmatprep.subr.mxu0 0.0
    %5669 = vmatpush1.msra.mxu0 0.0
    %5670 = vmatprep.subr.mxu0 0.0
    %5671 = vmatpush1.msra.mxu0 0.0
    %5672 = vmatprep.subr.mxu0 0.0
    %5673 = vmatpush1.msra.mxu0 0.0
    %5674 = vmatprep.subr.mxu0 0.0
    %5675 = vmatpush1.msra.mxu0 0.0
    %5676 = vmatprep.subr.mxu0 0.0
    %5677 = vmatpush1.msra.mxu0 0.0
    %5678 = vmatprep.subr.mxu0 0.0
    %5679 = vmatpush1.msra.mxu0 0.0
    %5680 = vmatprep.subr.mxu0 0.0
    %5681 = vmatpush1.msra.mxu0 0.0
    %5682 = vmatprep.subr.mxu0 0.0
    %5683 = vmatpush1.msra.mxu0 0.0
    %5684 = vmatprep.subr.mxu0 0.0
    %5685 = vmatpush1.msra.mxu0 0.0
    %5686 = vmatprep.subr.mxu0 0.0
    %5687 = vmatpush1.msra.mxu0 0.0
    %5688 = vmatprep.subr.mxu0 0.0
    %5689 = vmatpush1.msra.mxu0 0.0
    %5690 = vmatprep.subr.mxu0 0.0
    %5691 = vmatpush1.msra.mxu0 0.0
    %5692 = vmatprep.subr.mxu0 0.0
    %5693 = vmatpush1.msra.mxu0 0.0
    %5694 = vmatprep.subr.mxu0 0.0
    %5695 = vmatpush1.msra.mxu0 0.0
    %5696 = vmatprep.subr.mxu0 0.0
    %5697 = vmatpush1.msra.mxu0 0.0
    %5698 = vmatprep.subr.mxu0 0.0
    %5699 = vmatpush1.msra.mxu0 0.0
    %5700 = vmatprep.subr.mxu0 0.0
    %5701 = vmatpush1.msra.mxu0 0.0
    %5702 = vmatprep.subr.mxu0 0.0
    %5703 = vmatpush1.msra.mxu0 0.0
    %5704 = vmatprep.subr.mxu0 0.0
    %5705 = vmatpush1.msra.mxu0 0.0
    %5706 = vmatprep.subr.mxu0 0.0
    %5707 = vmatpush1.msra.mxu0 0.0
    %5708 = vmatprep.subr.mxu0 0.0
    %5709 = vmatpush1.msra.mxu0 0.0
    %5710 = vmatprep.subr.mxu0 0.0
    %5711 = vmatpush1.msra.mxu0 0.0
    %5712 = vmatprep.subr.mxu0 0.0
    %5713 = vmatpush1.msra.mxu0 0.0
    %5714 = vmatprep.mubr.f32.mxu0 0.0
    %5715 = vmatmul.mubr.f32.gmra.mrb[0].mxu0 %v3804
    %v5716 = vpop.f32.mrb[0].mxu0
    %v5717 = vadd.f32 0.0, %v5716
    %v5718 = vpop.f32.mrb[0].mxu0
    %5719 = vmatprep.mubr.f32.mxu0 0.0
    %5720 = vmatmul.mubr.f32.gmra.mrb[0].mxu0 %v3807
    %v5721 = vpop.f32.mrb[0].mxu0
    %v5722 = vadd.f32 0.0, %v5721
    %v5723 = vpop.f32.mrb[0].mxu0
    %5724 = vdwg.mxu0
    %5757 = vrot.lane.b32.xlu0 %v4472, 16
    %v5758 = vpop.permute.xlu0 %5757
    %5759 = vrot.lane.b32.xlu0 %v4477, 16
    %v5760 = vpop.permute.xlu0 %5759
    %5761 = vrot.lane.b32.xlu0 %v4555, 16
    %v5762 = vpop.permute.xlu0 %5761
    %5763 = vrot.lane.b32.xlu0 %v4560, 16
    %v5764 = vpop.permute.xlu0 %5763
    %5765 = vrot.lane.b32.xlu0 %v4638, 16
    %v5766 = vpop.permute.xlu0 %5765
    %5767 = vrot.lane.b32.xlu0 %v4643, 16
    %v5768 = vpop.permute.xlu0 %5767
    %5769 = vrot.lane.b32.xlu0 %v4721, 16
    %v5770 = vpop.permute.xlu0 %5769
    %5771 = vrot.lane.b32.xlu0 %v4726, 16
    %v5772 = vpop.permute.xlu0 %5771
    %5773 = vrot.lane.b32.xlu0 %v4804, 16
    %v5774 = vpop.permute.xlu0 %5773
    %5775 = vrot.lane.b32.xlu0 %v4809, 16
    %v5776 = vpop.permute.xlu0 %5775
    %5777 = vrot.lane.b32.xlu0 %v4887, 16
    %v5778 = vpop.permute.xlu0 %5777
    %5779 = vrot.lane.b32.xlu0 %v4892, 16
    %v5780 = vpop.permute.xlu0 %5779
    %5781 = vrot.lane.b32.xlu0 %v4970, 16
    %v5782 = vpop.permute.xlu0 %5781
    %5783 = vrot.lane.b32.xlu0 %v4975, 16
    %v5784 = vpop.permute.xlu0 %5783
    %5785 = vrot.lane.b32.xlu0 %v5053, 16
    %v5786 = vpop.permute.xlu0 %5785
    %5787 = vrot.lane.b32.xlu0 %v5058, 16
    %v5788 = vpop.permute.xlu0 %5787
    %5789 = vrot.lane.b32.xlu0 %v5136, 16
    %v5790 = vpop.permute.xlu0 %5789
    %5791 = vrot.lane.b32.xlu0 %v5141, 16
    %v5792 = vpop.permute.xlu0 %5791
    %5793 = vrot.lane.b32.xlu0 %v5219, 16
    %v5794 = vpop.permute.xlu0 %5793
    %5795 = vrot.lane.b32.xlu0 %v5224, 16
    %v5796 = vpop.permute.xlu0 %5795
    %5797 = vrot.lane.b32.xlu0 %v5302, 16
    %v5798 = vpop.permute.xlu0 %5797
    %5799 = vrot.lane.b32.xlu0 %v5307, 16
    %v5800 = vpop.permute.xlu0 %5799
    %5801 = vrot.lane.b32.xlu0 %v5385, 16
    %v5802 = vpop.permute.xlu0 %5801
    %5803 = vrot.lane.b32.xlu0 %v5390, 16
    %v5804 = vpop.permute.xlu0 %5803
    %5805 = vrot.lane.b32.xlu0 %v5468, 16
    %v5806 = vpop.permute.xlu0 %5805
    %5807 = vrot.lane.b32.xlu0 %v5473, 16
    %v5808 = vpop.permute.xlu0 %5807
    %5809 = vrot.lane.b32.xlu0 %v5551, 16
    %v5810 = vpop.permute.xlu0 %5809
    %5811 = vrot.lane.b32.xlu0 %v5556, 16
    %v5812 = vpop.permute.xlu0 %5811
    %5813 = vrot.lane.b32.xlu0 %v5634, 16
    %v5814 = vpop.permute.xlu0 %5813
    %5815 = vrot.lane.b32.xlu0 %v5639, 16
    %v5816 = vpop.permute.xlu0 %5815
    %5817 = vrot.lane.b32.xlu0 %v5717, 16
    %v5818 = vpop.permute.xlu0 %5817
    %5819 = vrot.lane.b32.xlu0 %v5722, 16
    %v5820 = vpop.permute.xlu0 %5819
    %v5853 = vsel %vm2467, %v3884, %v5758
    %v5854 = vsel %vm2467, %v3885, %v5760
    %v5855 = vsel %vm2467, %v3886, %v5762
    %v5856 = vsel %vm2467, %v3887, %v5764
    %v5857 = vsel %vm2467, %v3888, %v5766
    %v5858 = vsel %vm2467, %v3889, %v5768
    %v5859 = vsel %vm2467, %v3890, %v5770
    %v5860 = vsel %vm2467, %v3891, %v5772
    %v5861 = vsel %vm2467, %v3892, %v5774
    %v5862 = vsel %vm2467, %v3893, %v5776
    %v5863 = vsel %vm2467, %v3894, %v5778
    %v5864 = vsel %vm2467, %v3895, %v5780
    %v5865 = vsel %vm2467, %v3896, %v5782
    %v5866 = vsel %vm2467, %v3897, %v5784
    %v5867 = vsel %vm2467, %v3898, %v5786
    %v5868 = vsel %vm2467, %v3899, %v5788
    %v5869 = vsel %vm2467, %v3900, %v5790
    %v5870 = vsel %vm2467, %v3901, %v5792
    %v5871 = vsel %vm2467, %v3902, %v5794
    %v5872 = vsel %vm2467, %v3903, %v5796
    %v5873 = vsel %vm2467, %v3904, %v5798
    %v5874 = vsel %vm2467, %v3905, %v5800
    %v5875 = vsel %vm2467, %v3906, %v5802
    %v5876 = vsel %vm2467, %v3907, %v5804
    %v5877 = vsel %vm2467, %v3908, %v5806
    %v5878 = vsel %vm2467, %v3909, %v5808
    %v5879 = vsel %vm2467, %v3910, %v5810
    %v5880 = vsel %vm2467, %v3911, %v5812
    %v5881 = vsel %vm2467, %v3912, %v5814
    %v5882 = vsel %vm2467, %v3913, %v5816
    %v5883 = vsel %vm2467, %v3914, %v5818
    %v5884 = vsel %vm2467, %v3915, %v5820
    %vm5885 = vcmask 195584
    %v5886 = vsel %vm5885, %v5853, 0.0
    %v5887 = vsel %vm5885, %v5854, 0.0
    %v5888 = vsel %vm5885, %v5855, 0.0
    %v5889 = vsel %vm5885, %v5856, 0.0
    %v5890 = vsel %vm5885, %v5857, 0.0
    %v5891 = vsel %vm5885, %v5858, 0.0
    %v5892 = vsel %vm5885, %v5859, 0.0
    %v5893 = vsel %vm5885, %v5860, 0.0
    %v5894 = vsel %vm5885, %v5861, 0.0
    %v5895 = vsel %vm5885, %v5862, 0.0
    %v5896 = vsel %vm5885, %v5863, 0.0
    %v5897 = vsel %vm5885, %v5864, 0.0
    %v5898 = vsel %vm5885, %v5865, 0.0
    %v5899 = vsel %vm5885, %v5866, 0.0
    %v5900 = vsel %vm5885, %v5867, 0.0
    %v5901 = vsel %vm5885, %v5868, 0.0
    %v5902 = vsel %vm5885, %v5869, 0.0
    %v5903 = vsel %vm5885, %v5870, 0.0
    %v5904 = vsel %vm5885, %v5871, 0.0
    %v5905 = vsel %vm5885, %v5872, 0.0
    %v5906 = vsel %vm5885, %v5873, 0.0
    %v5907 = vsel %vm5885, %v5874, 0.0
    %v5908 = vsel %vm5885, %v5875, 0.0
    %v5909 = vsel %vm5885, %v5876, 0.0
    %v5910 = vsel %vm5885, %v5877, 0.0
    %v5911 = vsel %vm5885, %v5878, 0.0
    %v5912 = vsel %vm5885, %v5879, 0.0
    %v5913 = vsel %vm5885, %v5880, 0.0
    %v5914 = vsel %vm5885, %v5881, 0.0
    %v5915 = vsel %vm5885, %v5882, 0.0
    %v5916 = vsel %vm5885, %v5883, 0.0
    %v5917 = vsel %vm5885, %v5884, 0.0
    %5918 = vxpose.xlu0.b32.start [1/16] %v4400, 128
    %5919 = vxpose.xlu0.b32.cont [2/16] %v4402, 128
    %5920 = vxpose.xlu0.b32.cont [3/16] 0.0, 128
    %5921 = vxpose.xlu0.b32.cont [4/16] 0.0, 128
    %5922 = vxpose.xlu0.b32.cont [5/16] 0.0, 128
    %5923 = vxpose.xlu0.b32.cont [6/16] 0.0, 128
    %5924 = vxpose.xlu0.b32.cont [7/16] 0.0, 128
    %5925 = vxpose.xlu0.b32.cont [8/16] 0.0, 128
    %5926 = vxpose.xlu0.b32.cont [9/16] 0.0, 128
    %5927 = vxpose.xlu0.b32.cont [10/16] 0.0, 128
    %5928 = vxpose.xlu0.b32.cont [11/16] 0.0, 128
    %5929 = vxpose.xlu0.b32.cont [12/16] 0.0, 128
    %5930 = vxpose.xlu0.b32.cont [13/16] 0.0, 128
    %5931 = vxpose.xlu0.b32.cont [14/16] 0.0, 128
    %5932 = vxpose.xlu0.b32.cont [15/16] 0.0, 128
    %5933 = vxpose.xlu0.b32.end [16/16] 0.0, 128
    %v5934 = vpop.trf.xlu0
    %v5935 = vpop.trf.xlu0
    %v5936 = vpop.trf.xlu0
    %v5937 = vpop.trf.xlu0
    %v5938 = vpop.trf.xlu0
    %v5939 = vpop.trf.xlu0
    %v5940 = vpop.trf.xlu0
    %v5941 = vpop.trf.xlu0
    %v5942 = vpop.trf.xlu0
    %v5943 = vpop.trf.xlu0
    %v5944 = vpop.trf.xlu0
    %v5945 = vpop.trf.xlu0
    %v5946 = vpop.trf.xlu0
    %v5947 = vpop.trf.xlu0
    %v5948 = vpop.trf.xlu0
    %v5949 = vpop.trf.xlu0
    %v5951 = vsel %vm2467, %v5934, 0
    %5953 = vmatprep.subr.mxu0 0.0
    %5954 = vmatpush1.msra.mxu0 %v5886
    %5955 = vmatprep.subr.mxu0 0.0
    %5956 = vmatpush1.msra.mxu0 %v5887
    %5957 = vmatprep.subr.mxu0 0.0
    %5958 = vmatpush1.msra.mxu0 0.0
    %5959 = vmatprep.subr.mxu0 0.0
    %5960 = vmatpush1.msra.mxu0 0.0
    %5961 = vmatprep.subr.mxu0 0.0
    %5962 = vmatpush1.msra.mxu0 0.0
    %5963 = vmatprep.subr.mxu0 0.0
    %5964 = vmatpush1.msra.mxu0 0.0
    %5965 = vmatprep.subr.mxu0 0.0
    %5966 = vmatpush1.msra.mxu0 0.0
    %5967 = vmatprep.subr.mxu0 0.0
    %5968 = vmatpush1.msra.mxu0 0.0
    %5969 = vmatprep.subr.mxu0 0.0
    %5970 = vmatpush1.msra.mxu0 0.0
    %5971 = vmatprep.subr.mxu0 0.0
    %5972 = vmatpush1.msra.mxu0 0.0
    %5973 = vmatprep.subr.mxu0 0.0
    %5974 = vmatpush1.msra.mxu0 0.0
    %5975 = vmatprep.subr.mxu0 0.0
    %5976 = vmatpush1.msra.mxu0 0.0
    %5977 = vmatprep.subr.mxu0 0.0
    %5978 = vmatpush1.msra.mxu0 0.0
    %5979 = vmatprep.subr.mxu0 0.0
    %5980 = vmatpush1.msra.mxu0 0.0
    %5981 = vmatprep.subr.mxu0 0.0
    %5982 = vmatpush1.msra.mxu0 0.0
    %5983 = vmatprep.subr.mxu0 0.0
    %5984 = vmatpush1.msra.mxu0 0.0
    %5985 = vmatprep.subr.mxu0 0.0
    %5986 = vmatpush1.msra.mxu0 0.0
    %5987 = vmatprep.subr.mxu0 0.0
    %5988 = vmatpush1.msra.mxu0 0.0
    %5989 = vmatprep.subr.mxu0 0.0
    %5990 = vmatpush1.msra.mxu0 0.0
    %5991 = vmatprep.subr.mxu0 0.0
    %5992 = vmatpush1.msra.mxu0 0.0
    %5993 = vmatprep.subr.mxu0 0.0
    %5994 = vmatpush1.msra.mxu0 0.0
    %5995 = vmatprep.subr.mxu0 0.0
    %5996 = vmatpush1.msra.mxu0 0.0
    %5997 = vmatprep.subr.mxu0 0.0
    %5998 = vmatpush1.msra.mxu0 0.0
    %5999 = vmatprep.subr.mxu0 0.0
    %6000 = vmatpush1.msra.mxu0 0.0
    %6001 = vmatprep.subr.mxu0 0.0
    %6002 = vmatpush1.msra.mxu0 0.0
    %6003 = vmatprep.subr.mxu0 0.0
    %6004 = vmatpush1.msra.mxu0 0.0
    %6005 = vmatprep.subr.mxu0 0.0
    %6006 = vmatpush1.msra.mxu0 0.0
    %6007 = vmatprep.subr.mxu0 0.0
    %6008 = vmatpush1.msra.mxu0 0.0
    %6009 = vmatprep.subr.mxu0 0.0
    %6010 = vmatpush1.msra.mxu0 0.0
    %6011 = vmatprep.subr.mxu0 0.0
    %6012 = vmatpush1.msra.mxu0 0.0
    %6013 = vmatprep.subr.mxu0 0.0
    %6014 = vmatpush1.msra.mxu0 0.0
    %6015 = vmatprep.subr.mxu0 0.0
    %6016 = vmatpush1.msra.mxu0 0.0
    %6017 = vmatprep.mubr.f32.mxu0 0.0
    %6018 = vmatmul.mubr.f32.gmra.mrb[0].mxu0 %v5951
    %v6019 = vpop.f32.mrb[0].mxu0
    %v6020 = vadd.f32 0.0, %v6019
    %v6021 = vpop.f32.mrb[0].mxu0
    %6022 = vdwg.mxu0
    %6023 = vxpose.xlu0.b32.start [1/16] %v4483, 128
    %6024 = vxpose.xlu0.b32.cont [2/16] %v4485, 128
    %6025 = vxpose.xlu0.b32.cont [3/16] 0.0, 128
    %6026 = vxpose.xlu0.b32.cont [4/16] 0.0, 128
    %6027 = vxpose.xlu0.b32.cont [5/16] 0.0, 128
    %6028 = vxpose.xlu0.b32.cont [6/16] 0.0, 128
    %6029 = vxpose.xlu0.b32.cont [7/16] 0.0, 128
    %6030 = vxpose.xlu0.b32.cont [8/16] 0.0, 128
    %6031 = vxpose.xlu0.b32.cont [9/16] 0.0, 128
    %6032 = vxpose.xlu0.b32.cont [10/16] 0.0, 128
    %6033 = vxpose.xlu0.b32.cont [11/16] 0.0, 128
    %6034 = vxpose.xlu0.b32.cont [12/16] 0.0, 128
    %6035 = vxpose.xlu0.b32.cont [13/16] 0.0, 128
    %6036 = vxpose.xlu0.b32.cont [14/16] 0.0, 128
    %6037 = vxpose.xlu0.b32.cont [15/16] 0.0, 128
    %6038 = vxpose.xlu0.b32.end [16/16] 0.0, 128
    %v6039 = vpop.trf.xlu0
    %v6040 = vpop.trf.xlu0
    %v6041 = vpop.trf.xlu0
    %v6042 = vpop.trf.xlu0
    %v6043 = vpop.trf.xlu0
    %v6044 = vpop.trf.xlu0
    %v6045 = vpop.trf.xlu0
    %v6046 = vpop.trf.xlu0
    %v6047 = vpop.trf.xlu0
    %v6048 = vpop.trf.xlu0
    %v6049 = vpop.trf.xlu0
    %v6050 = vpop.trf.xlu0
    %v6051 = vpop.trf.xlu0
    %v6052 = vpop.trf.xlu0
    %v6053 = vpop.trf.xlu0
    %v6054 = vpop.trf.xlu0
    %v6056 = vsel %vm2467, %v6039, 0
    %6058 = vmatprep.subr.mxu0 0.0
    %6059 = vmatpush1.msra.mxu0 %v5888
    %6060 = vmatprep.subr.mxu0 0.0
    %6061 = vmatpush1.msra.mxu0 %v5889
    %6062 = vmatprep.subr.mxu0 0.0
    %6063 = vmatpush1.msra.mxu0 0.0
    %6064 = vmatprep.subr.mxu0 0.0
    %6065 = vmatpush1.msra.mxu0 0.0
    %6066 = vmatprep.subr.mxu0 0.0
    %6067 = vmatpush1.msra.mxu0 0.0
    %6068 = vmatprep.subr.mxu0 0.0
    %6069 = vmatpush1.msra.mxu0 0.0
    %6070 = vmatprep.subr.mxu0 0.0
    %6071 = vmatpush1.msra.mxu0 0.0
    %6072 = vmatprep.subr.mxu0 0.0
    %6073 = vmatpush1.msra.mxu0 0.0
    %6074 = vmatprep.subr.mxu0 0.0
    %6075 = vmatpush1.msra.mxu0 0.0
    %6076 = vmatprep.subr.mxu0 0.0
    %6077 = vmatpush1.msra.mxu0 0.0
    %6078 = vmatprep.subr.mxu0 0.0
    %6079 = vmatpush1.msra.mxu0 0.0
    %6080 = vmatprep.subr.mxu0 0.0
    %6081 = vmatpush1.msra.mxu0 0.0
    %6082 = vmatprep.subr.mxu0 0.0
    %6083 = vmatpush1.msra.mxu0 0.0
    %6084 = vmatprep.subr.mxu0 0.0
    %6085 = vmatpush1.msra.mxu0 0.0
    %6086 = vmatprep.subr.mxu0 0.0
    %6087 = vmatpush1.msra.mxu0 0.0
    %6088 = vmatprep.subr.mxu0 0.0
    %6089 = vmatpush1.msra.mxu0 0.0
    %6090 = vmatprep.subr.mxu0 0.0
    %6091 = vmatpush1.msra.mxu0 0.0
    %6092 = vmatprep.subr.mxu0 0.0
    %6093 = vmatpush1.msra.mxu0 0.0
    %6094 = vmatprep.subr.mxu0 0.0
    %6095 = vmatpush1.msra.mxu0 0.0
    %6096 = vmatprep.subr.mxu0 0.0
    %6097 = vmatpush1.msra.mxu0 0.0
    %6098 = vmatprep.subr.mxu0 0.0
    %6099 = vmatpush1.msra.mxu0 0.0
    %6100 = vmatprep.subr.mxu0 0.0
    %6101 = vmatpush1.msra.mxu0 0.0
    %6102 = vmatprep.subr.mxu0 0.0
    %6103 = vmatpush1.msra.mxu0 0.0
    %6104 = vmatprep.subr.mxu0 0.0
    %6105 = vmatpush1.msra.mxu0 0.0
    %6106 = vmatprep.subr.mxu0 0.0
    %6107 = vmatpush1.msra.mxu0 0.0
    %6108 = vmatprep.subr.mxu0 0.0
    %6109 = vmatpush1.msra.mxu0 0.0
    %6110 = vmatprep.subr.mxu0 0.0
    %6111 = vmatpush1.msra.mxu0 0.0
    %6112 = vmatprep.subr.mxu0 0.0
    %6113 = vmatpush1.msra.mxu0 0.0
    %6114 = vmatprep.subr.mxu0 0.0
    %6115 = vmatpush1.msra.mxu0 0.0
    %6116 = vmatprep.subr.mxu0 0.0
    %6117 = vmatpush1.msra.mxu0 0.0
    %6118 = vmatprep.subr.mxu0 0.0
    %6119 = vmatpush1.msra.mxu0 0.0
    %6120 = vmatprep.subr.mxu0 0.0
    %6121 = vmatpush1.msra.mxu0 0.0
    %6122 = vmatprep.mubr.f32.mxu0 0.0
    %6123 = vmatmul.mubr.f32.gmra.mrb[0].mxu0 %v6056
    %v6124 = vpop.f32.mrb[0].mxu0
    %v6125 = vadd.f32 0.0, %v6124
    %v6126 = vpop.f32.mrb[0].mxu0
    %6127 = vdwg.mxu0
    %6128 = vxpose.xlu0.b32.start [1/16] %v4566, 128
    %6129 = vxpose.xlu0.b32.cont [2/16] %v4568, 128
    %6130 = vxpose.xlu0.b32.cont [3/16] 0.0, 128
    %6131 = vxpose.xlu0.b32.cont [4/16] 0.0, 128
    %6132 = vxpose.xlu0.b32.cont [5/16] 0.0, 128
    %6133 = vxpose.xlu0.b32.cont [6/16] 0.0, 128
    %6134 = vxpose.xlu0.b32.cont [7/16] 0.0, 128
    %6135 = vxpose.xlu0.b32.cont [8/16] 0.0, 128
    %6136 = vxpose.xlu0.b32.cont [9/16] 0.0, 128
    %6137 = vxpose.xlu0.b32.cont [10/16] 0.0, 128
    %6138 = vxpose.xlu0.b32.cont [11/16] 0.0, 128
    %6139 = vxpose.xlu0.b32.cont [12/16] 0.0, 128
    %6140 = vxpose.xlu0.b32.cont [13/16] 0.0, 128
    %6141 = vxpose.xlu0.b32.cont [14/16] 0.0, 128
    %6142 = vxpose.xlu0.b32.cont [15/16] 0.0, 128
    %6143 = vxpose.xlu0.b32.end [16/16] 0.0, 128
    %v6144 = vpop.trf.xlu0
    %v6145 = vpop.trf.xlu0
    %v6146 = vpop.trf.xlu0
    %v6147 = vpop.trf.xlu0
    %v6148 = vpop.trf.xlu0
    %v6149 = vpop.trf.xlu0
    %v6150 = vpop.trf.xlu0
    %v6151 = vpop.trf.xlu0
    %v6152 = vpop.trf.xlu0
    %v6153 = vpop.trf.xlu0
    %v6154 = vpop.trf.xlu0
    %v6155 = vpop.trf.xlu0
    %v6156 = vpop.trf.xlu0
    %v6157 = vpop.trf.xlu0
    %v6158 = vpop.trf.xlu0
    %v6159 = vpop.trf.xlu0
    %v6161 = vsel %vm2467, %v6144, 0
    %6163 = vmatprep.subr.mxu0 0.0
    %6164 = vmatpush1.msra.mxu0 %v5890
    %6165 = vmatprep.subr.mxu0 0.0
    %6166 = vmatpush1.msra.mxu0 %v5891
    %6167 = vmatprep.subr.mxu0 0.0
    %6168 = vmatpush1.msra.mxu0 0.0
    %6169 = vmatprep.subr.mxu0 0.0
    %6170 = vmatpush1.msra.mxu0 0.0
    %6171 = vmatprep.subr.mxu0 0.0
    %6172 = vmatpush1.msra.mxu0 0.0
    %6173 = vmatprep.subr.mxu0 0.0
    %6174 = vmatpush1.msra.mxu0 0.0
    %6175 = vmatprep.subr.mxu0 0.0
    %6176 = vmatpush1.msra.mxu0 0.0
    %6177 = vmatprep.subr.mxu0 0.0
    %6178 = vmatpush1.msra.mxu0 0.0
    %6179 = vmatprep.subr.mxu0 0.0
    %6180 = vmatpush1.msra.mxu0 0.0
    %6181 = vmatprep.subr.mxu0 0.0
    %6182 = vmatpush1.msra.mxu0 0.0
    %6183 = vmatprep.subr.mxu0 0.0
    %6184 = vmatpush1.msra.mxu0 0.0
    %6185 = vmatprep.subr.mxu0 0.0
    %6186 = vmatpush1.msra.mxu0 0.0
    %6187 = vmatprep.subr.mxu0 0.0
    %6188 = vmatpush1.msra.mxu0 0.0
    %6189 = vmatprep.subr.mxu0 0.0
    %6190 = vmatpush1.msra.mxu0 0.0
    %6191 = vmatprep.subr.mxu0 0.0
    %6192 = vmatpush1.msra.mxu0 0.0
    %6193 = vmatprep.subr.mxu0 0.0
    %6194 = vmatpush1.msra.mxu0 0.0
    %6195 = vmatprep.subr.mxu0 0.0
    %6196 = vmatpush1.msra.mxu0 0.0
    %6197 = vmatprep.subr.mxu0 0.0
    %6198 = vmatpush1.msra.mxu0 0.0
    %6199 = vmatprep.subr.mxu0 0.0
    %6200 = vmatpush1.msra.mxu0 0.0
    %6201 = vmatprep.subr.mxu0 0.0
    %6202 = vmatpush1.msra.mxu0 0.0
    %6203 = vmatprep.subr.mxu0 0.0
    %6204 = vmatpush1.msra.mxu0 0.0
    %6205 = vmatprep.subr.mxu0 0.0
    %6206 = vmatpush1.msra.mxu0 0.0
    %6207 = vmatprep.subr.mxu0 0.0
    %6208 = vmatpush1.msra.mxu0 0.0
    %6209 = vmatprep.subr.mxu0 0.0
    %6210 = vmatpush1.msra.mxu0 0.0
    %6211 = vmatprep.subr.mxu0 0.0
    %6212 = vmatpush1.msra.mxu0 0.0
    %6213 = vmatprep.subr.mxu0 0.0
    %6214 = vmatpush1.msra.mxu0 0.0
    %6215 = vmatprep.subr.mxu0 0.0
    %6216 = vmatpush1.msra.mxu0 0.0
    %6217 = vmatprep.subr.mxu0 0.0
    %6218 = vmatpush1.msra.mxu0 0.0
    %6219 = vmatprep.subr.mxu0 0.0
    %6220 = vmatpush1.msra.mxu0 0.0
    %6221 = vmatprep.subr.mxu0 0.0
    %6222 = vmatpush1.msra.mxu0 0.0
    %6223 = vmatprep.subr.mxu0 0.0
    %6224 = vmatpush1.msra.mxu0 0.0
    %6225 = vmatprep.subr.mxu0 0.0
    %6226 = vmatpush1.msra.mxu0 0.0
    %6227 = vmatprep.mubr.f32.mxu0 0.0
    %6228 = vmatmul.mubr.f32.gmra.mrb[0].mxu0 %v6161
    %v6229 = vpop.f32.mrb[0].mxu0
    %v6230 = vadd.f32 0.0, %v6229
    %v6231 = vpop.f32.mrb[0].mxu0
    %6232 = vdwg.mxu0
    %6233 = vxpose.xlu0.b32.start [1/16] %v4649, 128
    %6234 = vxpose.xlu0.b32.cont [2/16] %v4651, 128
    %6235 = vxpose.xlu0.b32.cont [3/16] 0.0, 128
    %6236 = vxpose.xlu0.b32.cont [4/16] 0.0, 128
    %6237 = vxpose.xlu0.b32.cont [5/16] 0.0, 128
    %6238 = vxpose.xlu0.b32.cont [6/16] 0.0, 128
    %6239 = vxpose.xlu0.b32.cont [7/16] 0.0, 128
    %6240 = vxpose.xlu0.b32.cont [8/16] 0.0, 128
    %6241 = vxpose.xlu0.b32.cont [9/16] 0.0, 128
    %6242 = vxpose.xlu0.b32.cont [10/16] 0.0, 128
    %6243 = vxpose.xlu0.b32.cont [11/16] 0.0, 128
    %6244 = vxpose.xlu0.b32.cont [12/16] 0.0, 128
    %6245 = vxpose.xlu0.b32.cont [13/16] 0.0, 128
    %6246 = vxpose.xlu0.b32.cont [14/16] 0.0, 128
    %6247 = vxpose.xlu0.b32.cont [15/16] 0.0, 128
    %6248 = vxpose.xlu0.b32.end [16/16] 0.0, 128
    %v6249 = vpop.trf.xlu0
    %v6250 = vpop.trf.xlu0
    %v6251 = vpop.trf.xlu0
    %v6252 = vpop.trf.xlu0
    %v6253 = vpop.trf.xlu0
    %v6254 = vpop.trf.xlu0
    %v6255 = vpop.trf.xlu0
    %v6256 = vpop.trf.xlu0
    %v6257 = vpop.trf.xlu0
    %v6258 = vpop.trf.xlu0
    %v6259 = vpop.trf.xlu0
    %v6260 = vpop.trf.xlu0
    %v6261 = vpop.trf.xlu0
    %v6262 = vpop.trf.xlu0
    %v6263 = vpop.trf.xlu0
    %v6264 = vpop.trf.xlu0
    %v6266 = vsel %vm2467, %v6249, 0
    %6268 = vmatprep.subr.mxu0 0.0
    %6269 = vmatpush1.msra.mxu0 %v5892
    %6270 = vmatprep.subr.mxu0 0.0
    %6271 = vmatpush1.msra.mxu0 %v5893
    %6272 = vmatprep.subr.mxu0 0.0
    %6273 = vmatpush1.msra.mxu0 0.0
    %6274 = vmatprep.subr.mxu0 0.0
    %6275 = vmatpush1.msra.mxu0 0.0
    %6276 = vmatprep.subr.mxu0 0.0
    %6277 = vmatpush1.msra.mxu0 0.0
    %6278 = vmatprep.subr.mxu0 0.0
    %6279 = vmatpush1.msra.mxu0 0.0
    %6280 = vmatprep.subr.mxu0 0.0
    %6281 = vmatpush1.msra.mxu0 0.0
    %6282 = vmatprep.subr.mxu0 0.0
    %6283 = vmatpush1.msra.mxu0 0.0
    %6284 = vmatprep.subr.mxu0 0.0
    %6285 = vmatpush1.msra.mxu0 0.0
    %6286 = vmatprep.subr.mxu0 0.0
    %6287 = vmatpush1.msra.mxu0 0.0
    %6288 = vmatprep.subr.mxu0 0.0
    %6289 = vmatpush1.msra.mxu0 0.0
    %6290 = vmatprep.subr.mxu0 0.0
    %6291 = vmatpush1.msra.mxu0 0.0
    %6292 = vmatprep.subr.mxu0 0.0
    %6293 = vmatpush1.msra.mxu0 0.0
    %6294 = vmatprep.subr.mxu0 0.0
    %6295 = vmatpush1.msra.mxu0 0.0
    %6296 = vmatprep.subr.mxu0 0.0
    %6297 = vmatpush1.msra.mxu0 0.0
    %6298 = vmatprep.subr.mxu0 0.0
    %6299 = vmatpush1.msra.mxu0 0.0
    %6300 = vmatprep.subr.mxu0 0.0
    %6301 = vmatpush1.msra.mxu0 0.0
    %6302 = vmatprep.subr.mxu0 0.0
    %6303 = vmatpush1.msra.mxu0 0.0
    %6304 = vmatprep.subr.mxu0 0.0
    %6305 = vmatpush1.msra.mxu0 0.0
    %6306 = vmatprep.subr.mxu0 0.0
    %6307 = vmatpush1.msra.mxu0 0.0
    %6308 = vmatprep.subr.mxu0 0.0
    %6309 = vmatpush1.msra.mxu0 0.0
    %6310 = vmatprep.subr.mxu0 0.0
    %6311 = vmatpush1.msra.mxu0 0.0
    %6312 = vmatprep.subr.mxu0 0.0
    %6313 = vmatpush1.msra.mxu0 0.0
    %6314 = vmatprep.subr.mxu0 0.0
    %6315 = vmatpush1.msra.mxu0 0.0
    %6316 = vmatprep.subr.mxu0 0.0
    %6317 = vmatpush1.msra.mxu0 0.0
    %6318 = vmatprep.subr.mxu0 0.0
    %6319 = vmatpush1.msra.mxu0 0.0
    %6320 = vmatprep.subr.mxu0 0.0
    %6321 = vmatpush1.msra.mxu0 0.0
    %6322 = vmatprep.subr.mxu0 0.0
    %6323 = vmatpush1.msra.mxu0 0.0
    %6324 = vmatprep.subr.mxu0 0.0
    %6325 = vmatpush1.msra.mxu0 0.0
    %6326 = vmatprep.subr.mxu0 0.0
    %6327 = vmatpush1.msra.mxu0 0.0
    %6328 = vmatprep.subr.mxu0 0.0
    %6329 = vmatpush1.msra.mxu0 0.0
    %6330 = vmatprep.subr.mxu0 0.0
    %6331 = vmatpush1.msra.mxu0 0.0
    %6332 = vmatprep.mubr.f32.mxu0 0.0
    %6333 = vmatmul.mubr.f32.gmra.mrb[0].mxu0 %v6266
    %v6334 = vpop.f32.mrb[0].mxu0
    %v6335 = vadd.f32 0.0, %v6334
    %v6336 = vpop.f32.mrb[0].mxu0
    %6337 = vdwg.mxu0
    %6338 = vxpose.xlu0.b32.start [1/16] %v4732, 128
    %6339 = vxpose.xlu0.b32.cont [2/16] %v4734, 128
    %6340 = vxpose.xlu0.b32.cont [3/16] 0.0, 128
    %6341 = vxpose.xlu0.b32.cont [4/16] 0.0, 128
    %6342 = vxpose.xlu0.b32.cont [5/16] 0.0, 128
    %6343 = vxpose.xlu0.b32.cont [6/16] 0.0, 128
    %6344 = vxpose.xlu0.b32.cont [7/16] 0.0, 128
    %6345 = vxpose.xlu0.b32.cont [8/16] 0.0, 128
    %6346 = vxpose.xlu0.b32.cont [9/16] 0.0, 128
    %6347 = vxpose.xlu0.b32.cont [10/16] 0.0, 128
    %6348 = vxpose.xlu0.b32.cont [11/16] 0.0, 128
    %6349 = vxpose.xlu0.b32.cont [12/16] 0.0, 128
    %6350 = vxpose.xlu0.b32.cont [13/16] 0.0, 128
    %6351 = vxpose.xlu0.b32.cont [14/16] 0.0, 128
    %6352 = vxpose.xlu0.b32.cont [15/16] 0.0, 128
    %6353 = vxpose.xlu0.b32.end [16/16] 0.0, 128
    %v6354 = vpop.trf.xlu0
    %v6355 = vpop.trf.xlu0
    %v6356 = vpop.trf.xlu0
    %v6357 = vpop.trf.xlu0
    %v6358 = vpop.trf.xlu0
    %v6359 = vpop.trf.xlu0
    %v6360 = vpop.trf.xlu0
    %v6361 = vpop.trf.xlu0
    %v6362 = vpop.trf.xlu0
    %v6363 = vpop.trf.xlu0
    %v6364 = vpop.trf.xlu0
    %v6365 = vpop.trf.xlu0
    %v6366 = vpop.trf.xlu0
    %v6367 = vpop.trf.xlu0
    %v6368 = vpop.trf.xlu0
    %v6369 = vpop.trf.xlu0
    %v6371 = vsel %vm2467, %v6354, 0
    %6373 = vmatprep.subr.mxu0 0.0
    %6374 = vmatpush1.msra.mxu0 %v5894
    %6375 = vmatprep.subr.mxu0 0.0
    %6376 = vmatpush1.msra.mxu0 %v5895
    %6377 = vmatprep.subr.mxu0 0.0
    %6378 = vmatpush1.msra.mxu0 0.0
    %6379 = vmatprep.subr.mxu0 0.0
    %6380 = vmatpush1.msra.mxu0 0.0
    %6381 = vmatprep.subr.mxu0 0.0
    %6382 = vmatpush1.msra.mxu0 0.0
    %6383 = vmatprep.subr.mxu0 0.0
    %6384 = vmatpush1.msra.mxu0 0.0
    %6385 = vmatprep.subr.mxu0 0.0
    %6386 = vmatpush1.msra.mxu0 0.0
    %6387 = vmatprep.subr.mxu0 0.0
    %6388 = vmatpush1.msra.mxu0 0.0
    %6389 = vmatprep.subr.mxu0 0.0
    %6390 = vmatpush1.msra.mxu0 0.0
    %6391 = vmatprep.subr.mxu0 0.0
    %6392 = vmatpush1.msra.mxu0 0.0
    %6393 = vmatprep.subr.mxu0 0.0
    %6394 = vmatpush1.msra.mxu0 0.0
    %6395 = vmatprep.subr.mxu0 0.0
    %6396 = vmatpush1.msra.mxu0 0.0
    %6397 = vmatprep.subr.mxu0 0.0
    %6398 = vmatpush1.msra.mxu0 0.0
    %6399 = vmatprep.subr.mxu0 0.0
    %6400 = vmatpush1.msra.mxu0 0.0
    %6401 = vmatprep.subr.mxu0 0.0
    %6402 = vmatpush1.msra.mxu0 0.0
    %6403 = vmatprep.subr.mxu0 0.0
    %6404 = vmatpush1.msra.mxu0 0.0
    %6405 = vmatprep.subr.mxu0 0.0
    %6406 = vmatpush1.msra.mxu0 0.0
    %6407 = vmatprep.subr.mxu0 0.0
    %6408 = vmatpush1.msra.mxu0 0.0
    %6409 = vmatprep.subr.mxu0 0.0
    %6410 = vmatpush1.msra.mxu0 0.0
    %6411 = vmatprep.subr.mxu0 0.0
    %6412 = vmatpush1.msra.mxu0 0.0
    %6413 = vmatprep.subr.mxu0 0.0
    %6414 = vmatpush1.msra.mxu0 0.0
    %6415 = vmatprep.subr.mxu0 0.0
    %6416 = vmatpush1.msra.mxu0 0.0
    %6417 = vmatprep.subr.mxu0 0.0
    %6418 = vmatpush1.msra.mxu0 0.0
    %6419 = vmatprep.subr.mxu0 0.0
    %6420 = vmatpush1.msra.mxu0 0.0
    %6421 = vmatprep.subr.mxu0 0.0
    %6422 = vmatpush1.msra.mxu0 0.0
    %6423 = vmatprep.subr.mxu0 0.0
    %6424 = vmatpush1.msra.mxu0 0.0
    %6425 = vmatprep.subr.mxu0 0.0
    %6426 = vmatpush1.msra.mxu0 0.0
    %6427 = vmatprep.subr.mxu0 0.0
    %6428 = vmatpush1.msra.mxu0 0.0
    %6429 = vmatprep.subr.mxu0 0.0
    %6430 = vmatpush1.msra.mxu0 0.0
    %6431 = vmatprep.subr.mxu0 0.0
    %6432 = vmatpush1.msra.mxu0 0.0
    %6433 = vmatprep.subr.mxu0 0.0
    %6434 = vmatpush1.msra.mxu0 0.0
    %6435 = vmatprep.subr.mxu0 0.0
    %6436 = vmatpush1.msra.mxu0 0.0
    %6437 = vmatprep.mubr.f32.mxu0 0.0
    %6438 = vmatmul.mubr.f32.gmra.mrb[0].mxu0 %v6371
    %v6439 = vpop.f32.mrb[0].mxu0
    %v6440 = vadd.f32 0.0, %v6439
    %v6441 = vpop.f32.mrb[0].mxu0
    %6442 = vdwg.mxu0
    %6443 = vxpose.xlu0.b32.start [1/16] %v4815, 128
    %6444 = vxpose.xlu0.b32.cont [2/16] %v4817, 128
    %6445 = vxpose.xlu0.b32.cont [3/16] 0.0, 128
    %6446 = vxpose.xlu0.b32.cont [4/16] 0.0, 128
    %6447 = vxpose.xlu0.b32.cont [5/16] 0.0, 128
    %6448 = vxpose.xlu0.b32.cont [6/16] 0.0, 128
    %6449 = vxpose.xlu0.b32.cont [7/16] 0.0, 128
    %6450 = vxpose.xlu0.b32.cont [8/16] 0.0, 128
    %6451 = vxpose.xlu0.b32.cont [9/16] 0.0, 128
    %6452 = vxpose.xlu0.b32.cont [10/16] 0.0, 128
    %6453 = vxpose.xlu0.b32.cont [11/16] 0.0, 128
    %6454 = vxpose.xlu0.b32.cont [12/16] 0.0, 128
    %6455 = vxpose.xlu0.b32.cont [13/16] 0.0, 128
    %6456 = vxpose.xlu0.b32.cont [14/16] 0.0, 128
    %6457 = vxpose.xlu0.b32.cont [15/16] 0.0, 128
    %6458 = vxpose.xlu0.b32.end [16/16] 0.0, 128
    %v6459 = vpop.trf.xlu0
    %v6460 = vpop.trf.xlu0
    %v6461 = vpop.trf.xlu0
    %v6462 = vpop.trf.xlu0
    %v6463 = vpop.trf.xlu0
    %v6464 = vpop.trf.xlu0
    %v6465 = vpop.trf.xlu0
    %v6466 = vpop.trf.xlu0
    %v6467 = vpop.trf.xlu0
    %v6468 = vpop.trf.xlu0
    %v6469 = vpop.trf.xlu0
    %v6470 = vpop.trf.xlu0
    %v6471 = vpop.trf.xlu0
    %v6472 = vpop.trf.xlu0
    %v6473 = vpop.trf.xlu0
    %v6474 = vpop.trf.xlu0
    %v6476 = vsel %vm2467, %v6459, 0
    %6478 = vmatprep.subr.mxu0 0.0
    %6479 = vmatpush1.msra.mxu0 %v5896
    %6480 = vmatprep.subr.mxu0 0.0
    %6481 = vmatpush1.msra.mxu0 %v5897
    %6482 = vmatprep.subr.mxu0 0.0
    %6483 = vmatpush1.msra.mxu0 0.0
    %6484 = vmatprep.subr.mxu0 0.0
    %6485 = vmatpush1.msra.mxu0 0.0
    %6486 = vmatprep.subr.mxu0 0.0
    %6487 = vmatpush1.msra.mxu0 0.0
    %6488 = vmatprep.subr.mxu0 0.0
    %6489 = vmatpush1.msra.mxu0 0.0
    %6490 = vmatprep.subr.mxu0 0.0
    %6491 = vmatpush1.msra.mxu0 0.0
    %6492 = vmatprep.subr.mxu0 0.0
    %6493 = vmatpush1.msra.mxu0 0.0
    %6494 = vmatprep.subr.mxu0 0.0
    %6495 = vmatpush1.msra.mxu0 0.0
    %6496 = vmatprep.subr.mxu0 0.0
    %6497 = vmatpush1.msra.mxu0 0.0
    %6498 = vmatprep.subr.mxu0 0.0
    %6499 = vmatpush1.msra.mxu0 0.0
    %6500 = vmatprep.subr.mxu0 0.0
    %6501 = vmatpush1.msra.mxu0 0.0
    %6502 = vmatprep.subr.mxu0 0.0
    %6503 = vmatpush1.msra.mxu0 0.0
    %6504 = vmatprep.subr.mxu0 0.0
    %6505 = vmatpush1.msra.mxu0 0.0
    %6506 = vmatprep.subr.mxu0 0.0
    %6507 = vmatpush1.msra.mxu0 0.0
    %6508 = vmatprep.subr.mxu0 0.0
    %6509 = vmatpush1.msra.mxu0 0.0
    %6510 = vmatprep.subr.mxu0 0.0
    %6511 = vmatpush1.msra.mxu0 0.0
    %6512 = vmatprep.subr.mxu0 0.0
    %6513 = vmatpush1.msra.mxu0 0.0
    %6514 = vmatprep.subr.mxu0 0.0
    %6515 = vmatpush1.msra.mxu0 0.0
    %6516 = vmatprep.subr.mxu0 0.0
    %6517 = vmatpush1.msra.mxu0 0.0
    %6518 = vmatprep.subr.mxu0 0.0
    %6519 = vmatpush1.msra.mxu0 0.0
    %6520 = vmatprep.subr.mxu0 0.0
    %6521 = vmatpush1.msra.mxu0 0.0
    %6522 = vmatprep.subr.mxu0 0.0
    %6523 = vmatpush1.msra.mxu0 0.0
    %6524 = vmatprep.subr.mxu0 0.0
    %6525 = vmatpush1.msra.mxu0 0.0
    %6526 = vmatprep.subr.mxu0 0.0
    %6527 = vmatpush1.msra.mxu0 0.0
    %6528 = vmatprep.subr.mxu0 0.0
    %6529 = vmatpush1.msra.mxu0 0.0
    %6530 = vmatprep.subr.mxu0 0.0
    %6531 = vmatpush1.msra.mxu0 0.0
    %6532 = vmatprep.subr.mxu0 0.0
    %6533 = vmatpush1.msra.mxu0 0.0
    %6534 = vmatprep.subr.mxu0 0.0
    %6535 = vmatpush1.msra.mxu0 0.0
    %6536 = vmatprep.subr.mxu0 0.0
    %6537 = vmatpush1.msra.mxu0 0.0
    %6538 = vmatprep.subr.mxu0 0.0
    %6539 = vmatpush1.msra.mxu0 0.0
    %6540 = vmatprep.subr.mxu0 0.0
    %6541 = vmatpush1.msra.mxu0 0.0
    %6542 = vmatprep.mubr.f32.mxu0 0.0
    %6543 = vmatmul.mubr.f32.gmra.mrb[0].mxu0 %v6476
    %v6544 = vpop.f32.mrb[0].mxu0
    %v6545 = vadd.f32 0.0, %v6544
    %v6546 = vpop.f32.mrb[0].mxu0
    %6547 = vdwg.mxu0
    %6548 = vxpose.xlu0.b32.start [1/16] %v4898, 128
    %6549 = vxpose.xlu0.b32.cont [2/16] %v4900, 128
    %6550 = vxpose.xlu0.b32.cont [3/16] 0.0, 128
    %6551 = vxpose.xlu0.b32.cont [4/16] 0.0, 128
    %6552 = vxpose.xlu0.b32.cont [5/16] 0.0, 128
    %6553 = vxpose.xlu0.b32.cont [6/16] 0.0, 128
    %6554 = vxpose.xlu0.b32.cont [7/16] 0.0, 128
    %6555 = vxpose.xlu0.b32.cont [8/16] 0.0, 128
    %6556 = vxpose.xlu0.b32.cont [9/16] 0.0, 128
    %6557 = vxpose.xlu0.b32.cont [10/16] 0.0, 128
    %6558 = vxpose.xlu0.b32.cont [11/16] 0.0, 128
    %6559 = vxpose.xlu0.b32.cont [12/16] 0.0, 128
    %6560 = vxpose.xlu0.b32.cont [13/16] 0.0, 128
    %6561 = vxpose.xlu0.b32.cont [14/16] 0.0, 128
    %6562 = vxpose.xlu0.b32.cont [15/16] 0.0, 128
    %6563 = vxpose.xlu0.b32.end [16/16] 0.0, 128
    %v6564 = vpop.trf.xlu0
    %v6565 = vpop.trf.xlu0
    %v6566 = vpop.trf.xlu0
    %v6567 = vpop.trf.xlu0
    %v6568 = vpop.trf.xlu0
    %v6569 = vpop.trf.xlu0
    %v6570 = vpop.trf.xlu0
    %v6571 = vpop.trf.xlu0
    %v6572 = vpop.trf.xlu0
    %v6573 = vpop.trf.xlu0
    %v6574 = vpop.trf.xlu0
    %v6575 = vpop.trf.xlu0
    %v6576 = vpop.trf.xlu0
    %v6577 = vpop.trf.xlu0
    %v6578 = vpop.trf.xlu0
    %v6579 = vpop.trf.xlu0
    %v6581 = vsel %vm2467, %v6564, 0
    %6583 = vmatprep.subr.mxu0 0.0
    %6584 = vmatpush1.msra.mxu0 %v5898
    %6585 = vmatprep.subr.mxu0 0.0
    %6586 = vmatpush1.msra.mxu0 %v5899
    %6587 = vmatprep.subr.mxu0 0.0
    %6588 = vmatpush1.msra.mxu0 0.0
    %6589 = vmatprep.subr.mxu0 0.0
    %6590 = vmatpush1.msra.mxu0 0.0
    %6591 = vmatprep.subr.mxu0 0.0
    %6592 = vmatpush1.msra.mxu0 0.0
    %6593 = vmatprep.subr.mxu0 0.0
    %6594 = vmatpush1.msra.mxu0 0.0
    %6595 = vmatprep.subr.mxu0 0.0
    %6596 = vmatpush1.msra.mxu0 0.0
    %6597 = vmatprep.subr.mxu0 0.0
    %6598 = vmatpush1.msra.mxu0 0.0
    %6599 = vmatprep.subr.mxu0 0.0
    %6600 = vmatpush1.msra.mxu0 0.0
    %6601 = vmatprep.subr.mxu0 0.0
    %6602 = vmatpush1.msra.mxu0 0.0
    %6603 = vmatprep.subr.mxu0 0.0
    %6604 = vmatpush1.msra.mxu0 0.0
    %6605 = vmatprep.subr.mxu0 0.0
    %6606 = vmatpush1.msra.mxu0 0.0
    %6607 = vmatprep.subr.mxu0 0.0
    %6608 = vmatpush1.msra.mxu0 0.0
    %6609 = vmatprep.subr.mxu0 0.0
    %6610 = vmatpush1.msra.mxu0 0.0
    %6611 = vmatprep.subr.mxu0 0.0
    %6612 = vmatpush1.msra.mxu0 0.0
    %6613 = vmatprep.subr.mxu0 0.0
    %6614 = vmatpush1.msra.mxu0 0.0
    %6615 = vmatprep.subr.mxu0 0.0
    %6616 = vmatpush1.msra.mxu0 0.0
    %6617 = vmatprep.subr.mxu0 0.0
    %6618 = vmatpush1.msra.mxu0 0.0
    %6619 = vmatprep.subr.mxu0 0.0
    %6620 = vmatpush1.msra.mxu0 0.0
    %6621 = vmatprep.subr.mxu0 0.0
    %6622 = vmatpush1.msra.mxu0 0.0
    %6623 = vmatprep.subr.mxu0 0.0
    %6624 = vmatpush1.msra.mxu0 0.0
    %6625 = vmatprep.subr.mxu0 0.0
    %6626 = vmatpush1.msra.mxu0 0.0
    %6627 = vmatprep.subr.mxu0 0.0
    %6628 = vmatpush1.msra.mxu0 0.0
    %6629 = vmatprep.subr.mxu0 0.0
    %6630 = vmatpush1.msra.mxu0 0.0
    %6631 = vmatprep.subr.mxu0 0.0
    %6632 = vmatpush1.msra.mxu0 0.0
    %6633 = vmatprep.subr.mxu0 0.0
    %6634 = vmatpush1.msra.mxu0 0.0
    %6635 = vmatprep.subr.mxu0 0.0
    %6636 = vmatpush1.msra.mxu0 0.0
    %6637 = vmatprep.subr.mxu0 0.0
    %6638 = vmatpush1.msra.mxu0 0.0
    %6639 = vmatprep.subr.mxu0 0.0
    %6640 = vmatpush1.msra.mxu0 0.0
    %6641 = vmatprep.subr.mxu0 0.0
    %6642 = vmatpush1.msra.mxu0 0.0
    %6643 = vmatprep.subr.mxu0 0.0
    %6644 = vmatpush1.msra.mxu0 0.0
    %6645 = vmatprep.subr.mxu0 0.0
    %6646 = vmatpush1.msra.mxu0 0.0
    %6647 = vmatprep.mubr.f32.mxu0 0.0
    %6648 = vmatmul.mubr.f32.gmra.mrb[0].mxu0 %v6581
    %v6649 = vpop.f32.mrb[0].mxu0
    %v6650 = vadd.f32 0.0, %v6649
    %v6651 = vpop.f32.mrb[0].mxu0
    %6652 = vdwg.mxu0
    %6653 = vxpose.xlu0.b32.start [1/16] %v4981, 128
    %6654 = vxpose.xlu0.b32.cont [2/16] %v4983, 128
    %6655 = vxpose.xlu0.b32.cont [3/16] 0.0, 128
    %6656 = vxpose.xlu0.b32.cont [4/16] 0.0, 128
    %6657 = vxpose.xlu0.b32.cont [5/16] 0.0, 128
    %6658 = vxpose.xlu0.b32.cont [6/16] 0.0, 128
    %6659 = vxpose.xlu0.b32.cont [7/16] 0.0, 128
    %6660 = vxpose.xlu0.b32.cont [8/16] 0.0, 128
    %6661 = vxpose.xlu0.b32.cont [9/16] 0.0, 128
    %6662 = vxpose.xlu0.b32.cont [10/16] 0.0, 128
    %6663 = vxpose.xlu0.b32.cont [11/16] 0.0, 128
    %6664 = vxpose.xlu0.b32.cont [12/16] 0.0, 128
    %6665 = vxpose.xlu0.b32.cont [13/16] 0.0, 128
    %6666 = vxpose.xlu0.b32.cont [14/16] 0.0, 128
    %6667 = vxpose.xlu0.b32.cont [15/16] 0.0, 128
    %6668 = vxpose.xlu0.b32.end [16/16] 0.0, 128
    %v6669 = vpop.trf.xlu0
    %v6670 = vpop.trf.xlu0
    %v6671 = vpop.trf.xlu0
    %v6672 = vpop.trf.xlu0
    %v6673 = vpop.trf.xlu0
    %v6674 = vpop.trf.xlu0
    %v6675 = vpop.trf.xlu0
    %v6676 = vpop.trf.xlu0
    %v6677 = vpop.trf.xlu0
    %v6678 = vpop.trf.xlu0
    %v6679 = vpop.trf.xlu0
    %v6680 = vpop.trf.xlu0
    %v6681 = vpop.trf.xlu0
    %v6682 = vpop.trf.xlu0
    %v6683 = vpop.trf.xlu0
    %v6684 = vpop.trf.xlu0
    %v6686 = vsel %vm2467, %v6669, 0
    %6688 = vmatprep.subr.mxu0 0.0
    %6689 = vmatpush1.msra.mxu0 %v5900
    %6690 = vmatprep.subr.mxu0 0.0
    %6691 = vmatpush1.msra.mxu0 %v5901
    %6692 = vmatprep.subr.mxu0 0.0
    %6693 = vmatpush1.msra.mxu0 0.0
    %6694 = vmatprep.subr.mxu0 0.0
    %6695 = vmatpush1.msra.mxu0 0.0
    %6696 = vmatprep.subr.mxu0 0.0
    %6697 = vmatpush1.msra.mxu0 0.0
    %6698 = vmatprep.subr.mxu0 0.0
    %6699 = vmatpush1.msra.mxu0 0.0
    %6700 = vmatprep.subr.mxu0 0.0
    %6701 = vmatpush1.msra.mxu0 0.0
    %6702 = vmatprep.subr.mxu0 0.0
    %6703 = vmatpush1.msra.mxu0 0.0
    %6704 = vmatprep.subr.mxu0 0.0
    %6705 = vmatpush1.msra.mxu0 0.0
    %6706 = vmatprep.subr.mxu0 0.0
    %6707 = vmatpush1.msra.mxu0 0.0
    %6708 = vmatprep.subr.mxu0 0.0
    %6709 = vmatpush1.msra.mxu0 0.0
    %6710 = vmatprep.subr.mxu0 0.0
    %6711 = vmatpush1.msra.mxu0 0.0
    %6712 = vmatprep.subr.mxu0 0.0
    %6713 = vmatpush1.msra.mxu0 0.0
    %6714 = vmatprep.subr.mxu0 0.0
    %6715 = vmatpush1.msra.mxu0 0.0
    %6716 = vmatprep.subr.mxu0 0.0
    %6717 = vmatpush1.msra.mxu0 0.0
    %6718 = vmatprep.subr.mxu0 0.0
    %6719 = vmatpush1.msra.mxu0 0.0
    %6720 = vmatprep.subr.mxu0 0.0
    %6721 = vmatpush1.msra.mxu0 0.0
    %6722 = vmatprep.subr.mxu0 0.0
    %6723 = vmatpush1.msra.mxu0 0.0
    %6724 = vmatprep.subr.mxu0 0.0
    %6725 = vmatpush1.msra.mxu0 0.0
    %6726 = vmatprep.subr.mxu0 0.0
    %6727 = vmatpush1.msra.mxu0 0.0
    %6728 = vmatprep.subr.mxu0 0.0
    %6729 = vmatpush1.msra.mxu0 0.0
    %6730 = vmatprep.subr.mxu0 0.0
    %6731 = vmatpush1.msra.mxu0 0.0
    %6732 = vmatprep.subr.mxu0 0.0
    %6733 = vmatpush1.msra.mxu0 0.0
    %6734 = vmatprep.subr.mxu0 0.0
    %6735 = vmatpush1.msra.mxu0 0.0
    %6736 = vmatprep.subr.mxu0 0.0
    %6737 = vmatpush1.msra.mxu0 0.0
    %6738 = vmatprep.subr.mxu0 0.0
    %6739 = vmatpush1.msra.mxu0 0.0
    %6740 = vmatprep.subr.mxu0 0.0
    %6741 = vmatpush1.msra.mxu0 0.0
    %6742 = vmatprep.subr.mxu0 0.0
    %6743 = vmatpush1.msra.mxu0 0.0
    %6744 = vmatprep.subr.mxu0 0.0
    %6745 = vmatpush1.msra.mxu0 0.0
    %6746 = vmatprep.subr.mxu0 0.0
    %6747 = vmatpush1.msra.mxu0 0.0
    %6748 = vmatprep.subr.mxu0 0.0
    %6749 = vmatpush1.msra.mxu0 0.0
    %6750 = vmatprep.subr.mxu0 0.0
    %6751 = vmatpush1.msra.mxu0 0.0
    %6752 = vmatprep.mubr.f32.mxu0 0.0
    %6753 = vmatmul.mubr.f32.gmra.mrb[0].mxu0 %v6686
    %v6754 = vpop.f32.mrb[0].mxu0
    %v6755 = vadd.f32 0.0, %v6754
    %v6756 = vpop.f32.mrb[0].mxu0
    %6757 = vdwg.mxu0
    %6758 = vxpose.xlu0.b32.start [1/16] %v5064, 128
    %6759 = vxpose.xlu0.b32.cont [2/16] %v5066, 128
    %6760 = vxpose.xlu0.b32.cont [3/16] 0.0, 128
    %6761 = vxpose.xlu0.b32.cont [4/16] 0.0, 128
    %6762 = vxpose.xlu0.b32.cont [5/16] 0.0, 128
    %6763 = vxpose.xlu0.b32.cont [6/16] 0.0, 128
    %6764 = vxpose.xlu0.b32.cont [7/16] 0.0, 128
    %6765 = vxpose.xlu0.b32.cont [8/16] 0.0, 128
    %6766 = vxpose.xlu0.b32.cont [9/16] 0.0, 128
    %6767 = vxpose.xlu0.b32.cont [10/16] 0.0, 128
    %6768 = vxpose.xlu0.b32.cont [11/16] 0.0, 128
    %6769 = vxpose.xlu0.b32.cont [12/16] 0.0, 128
    %6770 = vxpose.xlu0.b32.cont [13/16] 0.0, 128
    %6771 = vxpose.xlu0.b32.cont [14/16] 0.0, 128
    %6772 = vxpose.xlu0.b32.cont [15/16] 0.0, 128
    %6773 = vxpose.xlu0.b32.end [16/16] 0.0, 128
    %v6774 = vpop.trf.xlu0
    %v6775 = vpop.trf.xlu0
    %v6776 = vpop.trf.xlu0
    %v6777 = vpop.trf.xlu0
    %v6778 = vpop.trf.xlu0
    %v6779 = vpop.trf.xlu0
    %v6780 = vpop.trf.xlu0
    %v6781 = vpop.trf.xlu0
    %v6782 = vpop.trf.xlu0
    %v6783 = vpop.trf.xlu0
    %v6784 = vpop.trf.xlu0
    %v6785 = vpop.trf.xlu0
    %v6786 = vpop.trf.xlu0
    %v6787 = vpop.trf.xlu0
    %v6788 = vpop.trf.xlu0
    %v6789 = vpop.trf.xlu0
    %v6791 = vsel %vm2467, %v6774, 0
    %6793 = vmatprep.subr.mxu0 0.0
    %6794 = vmatpush1.msra.mxu0 %v5902
    %6795 = vmatprep.subr.mxu0 0.0
    %6796 = vmatpush1.msra.mxu0 %v5903
    %6797 = vmatprep.subr.mxu0 0.0
    %6798 = vmatpush1.msra.mxu0 0.0
    %6799 = vmatprep.subr.mxu0 0.0
    %6800 = vmatpush1.msra.mxu0 0.0
    %6801 = vmatprep.subr.mxu0 0.0
    %6802 = vmatpush1.msra.mxu0 0.0
    %6803 = vmatprep.subr.mxu0 0.0
    %6804 = vmatpush1.msra.mxu0 0.0
    %6805 = vmatprep.subr.mxu0 0.0
    %6806 = vmatpush1.msra.mxu0 0.0
    %6807 = vmatprep.subr.mxu0 0.0
    %6808 = vmatpush1.msra.mxu0 0.0
    %6809 = vmatprep.subr.mxu0 0.0
    %6810 = vmatpush1.msra.mxu0 0.0
    %6811 = vmatprep.subr.mxu0 0.0
    %6812 = vmatpush1.msra.mxu0 0.0
    %6813 = vmatprep.subr.mxu0 0.0
    %6814 = vmatpush1.msra.mxu0 0.0
    %6815 = vmatprep.subr.mxu0 0.0
    %6816 = vmatpush1.msra.mxu0 0.0
    %6817 = vmatprep.subr.mxu0 0.0
    %6818 = vmatpush1.msra.mxu0 0.0
    %6819 = vmatprep.subr.mxu0 0.0
    %6820 = vmatpush1.msra.mxu0 0.0
    %6821 = vmatprep.subr.mxu0 0.0
    %6822 = vmatpush1.msra.mxu0 0.0
    %6823 = vmatprep.subr.mxu0 0.0
    %6824 = vmatpush1.msra.mxu0 0.0
    %6825 = vmatprep.subr.mxu0 0.0
    %6826 = vmatpush1.msra.mxu0 0.0
    %6827 = vmatprep.subr.mxu0 0.0
    %6828 = vmatpush1.msra.mxu0 0.0
    %6829 = vmatprep.subr.mxu0 0.0
    %6830 = vmatpush1.msra.mxu0 0.0
    %6831 = vmatprep.subr.mxu0 0.0
    %6832 = vmatpush1.msra.mxu0 0.0
    %6833 = vmatprep.subr.mxu0 0.0
    %6834 = vmatpush1.msra.mxu0 0.0
    %6835 = vmatprep.subr.mxu0 0.0
    %6836 = vmatpush1.msra.mxu0 0.0
    %6837 = vmatprep.subr.mxu0 0.0
    %6838 = vmatpush1.msra.mxu0 0.0
    %6839 = vmatprep.subr.mxu0 0.0
    %6840 = vmatpush1.msra.mxu0 0.0
    %6841 = vmatprep.subr.mxu0 0.0
    %6842 = vmatpush1.msra.mxu0 0.0
    %6843 = vmatprep.subr.mxu0 0.0
    %6844 = vmatpush1.msra.mxu0 0.0
    %6845 = vmatprep.subr.mxu0 0.0
    %6846 = vmatpush1.msra.mxu0 0.0
    %6847 = vmatprep.subr.mxu0 0.0
    %6848 = vmatpush1.msra.mxu0 0.0
    %6849 = vmatprep.subr.mxu0 0.0
    %6850 = vmatpush1.msra.mxu0 0.0
    %6851 = vmatprep.subr.mxu0 0.0
    %6852 = vmatpush1.msra.mxu0 0.0
    %6853 = vmatprep.subr.mxu0 0.0
    %6854 = vmatpush1.msra.mxu0 0.0
    %6855 = vmatprep.subr.mxu0 0.0
    %6856 = vmatpush1.msra.mxu0 0.0
    %6857 = vmatprep.mubr.f32.mxu0 0.0
    %6858 = vmatmul.mubr.f32.gmra.mrb[0].mxu0 %v6791
    %v6859 = vpop.f32.mrb[0].mxu0
    %v6860 = vadd.f32 0.0, %v6859
    %v6861 = vpop.f32.mrb[0].mxu0
    %6862 = vdwg.mxu0
    %6863 = vxpose.xlu0.b32.start [1/16] %v5147, 128
    %6864 = vxpose.xlu0.b32.cont [2/16] %v5149, 128
    %6865 = vxpose.xlu0.b32.cont [3/16] 0.0, 128
    %6866 = vxpose.xlu0.b32.cont [4/16] 0.0, 128
    %6867 = vxpose.xlu0.b32.cont [5/16] 0.0, 128
    %6868 = vxpose.xlu0.b32.cont [6/16] 0.0, 128
    %6869 = vxpose.xlu0.b32.cont [7/16] 0.0, 128
    %6870 = vxpose.xlu0.b32.cont [8/16] 0.0, 128
    %6871 = vxpose.xlu0.b32.cont [9/16] 0.0, 128
    %6872 = vxpose.xlu0.b32.cont [10/16] 0.0, 128
    %6873 = vxpose.xlu0.b32.cont [11/16] 0.0, 128
    %6874 = vxpose.xlu0.b32.cont [12/16] 0.0, 128
    %6875 = vxpose.xlu0.b32.cont [13/16] 0.0, 128
    %6876 = vxpose.xlu0.b32.cont [14/16] 0.0, 128
    %6877 = vxpose.xlu0.b32.cont [15/16] 0.0, 128
    %6878 = vxpose.xlu0.b32.end [16/16] 0.0, 128
    %v6879 = vpop.trf.xlu0
    %v6880 = vpop.trf.xlu0
    %v6881 = vpop.trf.xlu0
    %v6882 = vpop.trf.xlu0
    %v6883 = vpop.trf.xlu0
    %v6884 = vpop.trf.xlu0
    %v6885 = vpop.trf.xlu0
    %v6886 = vpop.trf.xlu0
    %v6887 = vpop.trf.xlu0
    %v6888 = vpop.trf.xlu0
    %v6889 = vpop.trf.xlu0
    %v6890 = vpop.trf.xlu0
    %v6891 = vpop.trf.xlu0
    %v6892 = vpop.trf.xlu0
    %v6893 = vpop.trf.xlu0
    %v6894 = vpop.trf.xlu0
    %v6896 = vsel %vm2467, %v6879, 0
    %6898 = vmatprep.subr.mxu0 0.0
    %6899 = vmatpush1.msra.mxu0 %v5904
    %6900 = vmatprep.subr.mxu0 0.0
    %6901 = vmatpush1.msra.mxu0 %v5905
    %6902 = vmatprep.subr.mxu0 0.0
    %6903 = vmatpush1.msra.mxu0 0.0
    %6904 = vmatprep.subr.mxu0 0.0
    %6905 = vmatpush1.msra.mxu0 0.0
    %6906 = vmatprep.subr.mxu0 0.0
    %6907 = vmatpush1.msra.mxu0 0.0
    %6908 = vmatprep.subr.mxu0 0.0
    %6909 = vmatpush1.msra.mxu0 0.0
    %6910 = vmatprep.subr.mxu0 0.0
    %6911 = vmatpush1.msra.mxu0 0.0
    %6912 = vmatprep.subr.mxu0 0.0
    %6913 = vmatpush1.msra.mxu0 0.0
    %6914 = vmatprep.subr.mxu0 0.0
    %6915 = vmatpush1.msra.mxu0 0.0
    %6916 = vmatprep.subr.mxu0 0.0
    %6917 = vmatpush1.msra.mxu0 0.0
    %6918 = vmatprep.subr.mxu0 0.0
    %6919 = vmatpush1.msra.mxu0 0.0
    %6920 = vmatprep.subr.mxu0 0.0
    %6921 = vmatpush1.msra.mxu0 0.0
    %6922 = vmatprep.subr.mxu0 0.0
    %6923 = vmatpush1.msra.mxu0 0.0
    %6924 = vmatprep.subr.mxu0 0.0
    %6925 = vmatpush1.msra.mxu0 0.0
    %6926 = vmatprep.subr.mxu0 0.0
    %6927 = vmatpush1.msra.mxu0 0.0
    %6928 = vmatprep.subr.mxu0 0.0
    %6929 = vmatpush1.msra.mxu0 0.0
    %6930 = vmatprep.subr.mxu0 0.0
    %6931 = vmatpush1.msra.mxu0 0.0
    %6932 = vmatprep.subr.mxu0 0.0
    %6933 = vmatpush1.msra.mxu0 0.0
    %6934 = vmatprep.subr.mxu0 0.0
    %6935 = vmatpush1.msra.mxu0 0.0
    %6936 = vmatprep.subr.mxu0 0.0
    %6937 = vmatpush1.msra.mxu0 0.0
    %6938 = vmatprep.subr.mxu0 0.0
    %6939 = vmatpush1.msra.mxu0 0.0
    %6940 = vmatprep.subr.mxu0 0.0
    %6941 = vmatpush1.msra.mxu0 0.0
    %6942 = vmatprep.subr.mxu0 0.0
    %6943 = vmatpush1.msra.mxu0 0.0
    %6944 = vmatprep.subr.mxu0 0.0
    %6945 = vmatpush1.msra.mxu0 0.0
    %6946 = vmatprep.subr.mxu0 0.0
    %6947 = vmatpush1.msra.mxu0 0.0
    %6948 = vmatprep.subr.mxu0 0.0
    %6949 = vmatpush1.msra.mxu0 0.0
    %6950 = vmatprep.subr.mxu0 0.0
    %6951 = vmatpush1.msra.mxu0 0.0
    %6952 = vmatprep.subr.mxu0 0.0
    %6953 = vmatpush1.msra.mxu0 0.0
    %6954 = vmatprep.subr.mxu0 0.0
    %6955 = vmatpush1.msra.mxu0 0.0
    %6956 = vmatprep.subr.mxu0 0.0
    %6957 = vmatpush1.msra.mxu0 0.0
    %6958 = vmatprep.subr.mxu0 0.0
    %6959 = vmatpush1.msra.mxu0 0.0
    %6960 = vmatprep.subr.mxu0 0.0
    %6961 = vmatpush1.msra.mxu0 0.0
    %6962 = vmatprep.mubr.f32.mxu0 0.0
    %6963 = vmatmul.mubr.f32.gmra.mrb[0].mxu0 %v6896
    %v6964 = vpop.f32.mrb[0].mxu0
    %v6965 = vadd.f32 0.0, %v6964
    %v6966 = vpop.f32.mrb[0].mxu0
    %6967 = vdwg.mxu0
    %6968 = vxpose.xlu0.b32.start [1/16] %v5230, 128
    %6969 = vxpose.xlu0.b32.cont [2/16] %v5232, 128
    %6970 = vxpose.xlu0.b32.cont [3/16] 0.0, 128
    %6971 = vxpose.xlu0.b32.cont [4/16] 0.0, 128
    %6972 = vxpose.xlu0.b32.cont [5/16] 0.0, 128
    %6973 = vxpose.xlu0.b32.cont [6/16] 0.0, 128
    %6974 = vxpose.xlu0.b32.cont [7/16] 0.0, 128
    %6975 = vxpose.xlu0.b32.cont [8/16] 0.0, 128
    %6976 = vxpose.xlu0.b32.cont [9/16] 0.0, 128
    %6977 = vxpose.xlu0.b32.cont [10/16] 0.0, 128
    %6978 = vxpose.xlu0.b32.cont [11/16] 0.0, 128
    %6979 = vxpose.xlu0.b32.cont [12/16] 0.0, 128
    %6980 = vxpose.xlu0.b32.cont [13/16] 0.0, 128
    %6981 = vxpose.xlu0.b32.cont [14/16] 0.0, 128
    %6982 = vxpose.xlu0.b32.cont [15/16] 0.0, 128
    %6983 = vxpose.xlu0.b32.end [16/16] 0.0, 128
    %v6984 = vpop.trf.xlu0
    %v6985 = vpop.trf.xlu0
    %v6986 = vpop.trf.xlu0
    %v6987 = vpop.trf.xlu0
    %v6988 = vpop.trf.xlu0
    %v6989 = vpop.trf.xlu0
    %v6990 = vpop.trf.xlu0
    %v6991 = vpop.trf.xlu0
    %v6992 = vpop.trf.xlu0
    %v6993 = vpop.trf.xlu0
    %v6994 = vpop.trf.xlu0
    %v6995 = vpop.trf.xlu0
    %v6996 = vpop.trf.xlu0
    %v6997 = vpop.trf.xlu0
    %v6998 = vpop.trf.xlu0
    %v6999 = vpop.trf.xlu0
    %v7001 = vsel %vm2467, %v6984, 0
    %7003 = vmatprep.subr.mxu0 0.0
    %7004 = vmatpush1.msra.mxu0 %v5906
    %7005 = vmatprep.subr.mxu0 0.0
    %7006 = vmatpush1.msra.mxu0 %v5907
    %7007 = vmatprep.subr.mxu0 0.0
    %7008 = vmatpush1.msra.mxu0 0.0
    %7009 = vmatprep.subr.mxu0 0.0
    %7010 = vmatpush1.msra.mxu0 0.0
    %7011 = vmatprep.subr.mxu0 0.0
    %7012 = vmatpush1.msra.mxu0 0.0
    %7013 = vmatprep.subr.mxu0 0.0
    %7014 = vmatpush1.msra.mxu0 0.0
    %7015 = vmatprep.subr.mxu0 0.0
    %7016 = vmatpush1.msra.mxu0 0.0
    %7017 = vmatprep.subr.mxu0 0.0
    %7018 = vmatpush1.msra.mxu0 0.0
    %7019 = vmatprep.subr.mxu0 0.0
    %7020 = vmatpush1.msra.mxu0 0.0
    %7021 = vmatprep.subr.mxu0 0.0
    %7022 = vmatpush1.msra.mxu0 0.0
    %7023 = vmatprep.subr.mxu0 0.0
    %7024 = vmatpush1.msra.mxu0 0.0
    %7025 = vmatprep.subr.mxu0 0.0
    %7026 = vmatpush1.msra.mxu0 0.0
    %7027 = vmatprep.subr.mxu0 0.0
    %7028 = vmatpush1.msra.mxu0 0.0
    %7029 = vmatprep.subr.mxu0 0.0
    %7030 = vmatpush1.msra.mxu0 0.0
    %7031 = vmatprep.subr.mxu0 0.0
    %7032 = vmatpush1.msra.mxu0 0.0
    %7033 = vmatprep.subr.mxu0 0.0
    %7034 = vmatpush1.msra.mxu0 0.0
    %7035 = vmatprep.subr.mxu0 0.0
    %7036 = vmatpush1.msra.mxu0 0.0
    %7037 = vmatprep.subr.mxu0 0.0
    %7038 = vmatpush1.msra.mxu0 0.0
    %7039 = vmatprep.subr.mxu0 0.0
    %7040 = vmatpush1.msra.mxu0 0.0
    %7041 = vmatprep.subr.mxu0 0.0
    %7042 = vmatpush1.msra.mxu0 0.0
    %7043 = vmatprep.subr.mxu0 0.0
    %7044 = vmatpush1.msra.mxu0 0.0
    %7045 = vmatprep.subr.mxu0 0.0
    %7046 = vmatpush1.msra.mxu0 0.0
    %7047 = vmatprep.subr.mxu0 0.0
    %7048 = vmatpush1.msra.mxu0 0.0
    %7049 = vmatprep.subr.mxu0 0.0
    %7050 = vmatpush1.msra.mxu0 0.0
    %7051 = vmatprep.subr.mxu0 0.0
    %7052 = vmatpush1.msra.mxu0 0.0
    %7053 = vmatprep.subr.mxu0 0.0
    %7054 = vmatpush1.msra.mxu0 0.0
    %7055 = vmatprep.subr.mxu0 0.0
    %7056 = vmatpush1.msra.mxu0 0.0
    %7057 = vmatprep.subr.mxu0 0.0
    %7058 = vmatpush1.msra.mxu0 0.0
    %7059 = vmatprep.subr.mxu0 0.0
    %7060 = vmatpush1.msra.mxu0 0.0
    %7061 = vmatprep.subr.mxu0 0.0
    %7062 = vmatpush1.msra.mxu0 0.0
    %7063 = vmatprep.subr.mxu0 0.0
    %7064 = vmatpush1.msra.mxu0 0.0
    %7065 = vmatprep.subr.mxu0 0.0
    %7066 = vmatpush1.msra.mxu0 0.0
    %7067 = vmatprep.mubr.f32.mxu0 0.0
    %7068 = vmatmul.mubr.f32.gmra.mrb[0].mxu0 %v7001
    %v7069 = vpop.f32.mrb[0].mxu0
    %v7070 = vadd.f32 0.0, %v7069
    %v7071 = vpop.f32.mrb[0].mxu0
    %7072 = vdwg.mxu0
    %7073 = vxpose.xlu0.b32.start [1/16] %v5313, 128
    %7074 = vxpose.xlu0.b32.cont [2/16] %v5315, 128
    %7075 = vxpose.xlu0.b32.cont [3/16] 0.0, 128
    %7076 = vxpose.xlu0.b32.cont [4/16] 0.0, 128
    %7077 = vxpose.xlu0.b32.cont [5/16] 0.0, 128
    %7078 = vxpose.xlu0.b32.cont [6/16] 0.0, 128
    %7079 = vxpose.xlu0.b32.cont [7/16] 0.0, 128
    %7080 = vxpose.xlu0.b32.cont [8/16] 0.0, 128
    %7081 = vxpose.xlu0.b32.cont [9/16] 0.0, 128
    %7082 = vxpose.xlu0.b32.cont [10/16] 0.0, 128
    %7083 = vxpose.xlu0.b32.cont [11/16] 0.0, 128
    %7084 = vxpose.xlu0.b32.cont [12/16] 0.0, 128
    %7085 = vxpose.xlu0.b32.cont [13/16] 0.0, 128
    %7086 = vxpose.xlu0.b32.cont [14/16] 0.0, 128
    %7087 = vxpose.xlu0.b32.cont [15/16] 0.0, 128
    %7088 = vxpose.xlu0.b32.end [16/16] 0.0, 128
    %v7089 = vpop.trf.xlu0
    %v7090 = vpop.trf.xlu0
    %v7091 = vpop.trf.xlu0
    %v7092 = vpop.trf.xlu0
    %v7093 = vpop.trf.xlu0
    %v7094 = vpop.trf.xlu0
    %v7095 = vpop.trf.xlu0
    %v7096 = vpop.trf.xlu0
    %v7097 = vpop.trf.xlu0
    %v7098 = vpop.trf.xlu0
    %v7099 = vpop.trf.xlu0
    %v7100 = vpop.trf.xlu0
    %v7101 = vpop.trf.xlu0
    %v7102 = vpop.trf.xlu0
    %v7103 = vpop.trf.xlu0
    %v7104 = vpop.trf.xlu0
    %v7106 = vsel %vm2467, %v7089, 0
    %7108 = vmatprep.subr.mxu0 0.0
    %7109 = vmatpush1.msra.mxu0 %v5908
    %7110 = vmatprep.subr.mxu0 0.0
    %7111 = vmatpush1.msra.mxu0 %v5909
    %7112 = vmatprep.subr.mxu0 0.0
    %7113 = vmatpush1.msra.mxu0 0.0
    %7114 = vmatprep.subr.mxu0 0.0
    %7115 = vmatpush1.msra.mxu0 0.0
    %7116 = vmatprep.subr.mxu0 0.0
    %7117 = vmatpush1.msra.mxu0 0.0
    %7118 = vmatprep.subr.mxu0 0.0
    %7119 = vmatpush1.msra.mxu0 0.0
    %7120 = vmatprep.subr.mxu0 0.0
    %7121 = vmatpush1.msra.mxu0 0.0
    %7122 = vmatprep.subr.mxu0 0.0
    %7123 = vmatpush1.msra.mxu0 0.0
    %7124 = vmatprep.subr.mxu0 0.0
    %7125 = vmatpush1.msra.mxu0 0.0
    %7126 = vmatprep.subr.mxu0 0.0
    %7127 = vmatpush1.msra.mxu0 0.0
    %7128 = vmatprep.subr.mxu0 0.0
    %7129 = vmatpush1.msra.mxu0 0.0
    %7130 = vmatprep.subr.mxu0 0.0
    %7131 = vmatpush1.msra.mxu0 0.0
    %7132 = vmatprep.subr.mxu0 0.0
    %7133 = vmatpush1.msra.mxu0 0.0
    %7134 = vmatprep.subr.mxu0 0.0
    %7135 = vmatpush1.msra.mxu0 0.0
    %7136 = vmatprep.subr.mxu0 0.0
    %7137 = vmatpush1.msra.mxu0 0.0
    %7138 = vmatprep.subr.mxu0 0.0
    %7139 = vmatpush1.msra.mxu0 0.0
    %7140 = vmatprep.subr.mxu0 0.0
    %7141 = vmatpush1.msra.mxu0 0.0
    %7142 = vmatprep.subr.mxu0 0.0
    %7143 = vmatpush1.msra.mxu0 0.0
    %7144 = vmatprep.subr.mxu0 0.0
    %7145 = vmatpush1.msra.mxu0 0.0
    %7146 = vmatprep.subr.mxu0 0.0
    %7147 = vmatpush1.msra.mxu0 0.0
    %7148 = vmatprep.subr.mxu0 0.0
    %7149 = vmatpush1.msra.mxu0 0.0
    %7150 = vmatprep.subr.mxu0 0.0
    %7151 = vmatpush1.msra.mxu0 0.0
    %7152 = vmatprep.subr.mxu0 0.0
    %7153 = vmatpush1.msra.mxu0 0.0
    %7154 = vmatprep.subr.mxu0 0.0
    %7155 = vmatpush1.msra.mxu0 0.0
    %7156 = vmatprep.subr.mxu0 0.0
    %7157 = vmatpush1.msra.mxu0 0.0
    %7158 = vmatprep.subr.mxu0 0.0
    %7159 = vmatpush1.msra.mxu0 0.0
    %7160 = vmatprep.subr.mxu0 0.0
    %7161 = vmatpush1.msra.mxu0 0.0
    %7162 = vmatprep.subr.mxu0 0.0
    %7163 = vmatpush1.msra.mxu0 0.0
    %7164 = vmatprep.subr.mxu0 0.0
    %7165 = vmatpush1.msra.mxu0 0.0
    %7166 = vmatprep.subr.mxu0 0.0
    %7167 = vmatpush1.msra.mxu0 0.0
    %7168 = vmatprep.subr.mxu0 0.0
    %7169 = vmatpush1.msra.mxu0 0.0
    %7170 = vmatprep.subr.mxu0 0.0
    %7171 = vmatpush1.msra.mxu0 0.0
    %7172 = vmatprep.mubr.f32.mxu0 0.0
    %7173 = vmatmul.mubr.f32.gmra.mrb[0].mxu0 %v7106
    %v7174 = vpop.f32.mrb[0].mxu0
    %v7175 = vadd.f32 0.0, %v7174
    %v7176 = vpop.f32.mrb[0].mxu0
    %7177 = vdwg.mxu0
    %7178 = vxpose.xlu0.b32.start [1/16] %v5396, 128
    %7179 = vxpose.xlu0.b32.cont [2/16] %v5398, 128
    %7180 = vxpose.xlu0.b32.cont [3/16] 0.0, 128
    %7181 = vxpose.xlu0.b32.cont [4/16] 0.0, 128
    %7182 = vxpose.xlu0.b32.cont [5/16] 0.0, 128
    %7183 = vxpose.xlu0.b32.cont [6/16] 0.0, 128
    %7184 = vxpose.xlu0.b32.cont [7/16] 0.0, 128
    %7185 = vxpose.xlu0.b32.cont [8/16] 0.0, 128
    %7186 = vxpose.xlu0.b32.cont [9/16] 0.0, 128
    %7187 = vxpose.xlu0.b32.cont [10/16] 0.0, 128
    %7188 = vxpose.xlu0.b32.cont [11/16] 0.0, 128
    %7189 = vxpose.xlu0.b32.cont [12/16] 0.0, 128
    %7190 = vxpose.xlu0.b32.cont [13/16] 0.0, 128
    %7191 = vxpose.xlu0.b32.cont [14/16] 0.0, 128
    %7192 = vxpose.xlu0.b32.cont [15/16] 0.0, 128
    %7193 = vxpose.xlu0.b32.end [16/16] 0.0, 128
    %v7194 = vpop.trf.xlu0
    %v7195 = vpop.trf.xlu0
    %v7196 = vpop.trf.xlu0
    %v7197 = vpop.trf.xlu0
    %v7198 = vpop.trf.xlu0
    %v7199 = vpop.trf.xlu0
    %v7200 = vpop.trf.xlu0
    %v7201 = vpop.trf.xlu0
    %v7202 = vpop.trf.xlu0
    %v7203 = vpop.trf.xlu0
    %v7204 = vpop.trf.xlu0
    %v7205 = vpop.trf.xlu0
    %v7206 = vpop.trf.xlu0
    %v7207 = vpop.trf.xlu0
    %v7208 = vpop.trf.xlu0
    %v7209 = vpop.trf.xlu0
    %v7211 = vsel %vm2467, %v7194, 0
    %7213 = vmatprep.subr.mxu0 0.0
    %7214 = vmatpush1.msra.mxu0 %v5910
    %7215 = vmatprep.subr.mxu0 0.0
    %7216 = vmatpush1.msra.mxu0 %v5911
    %7217 = vmatprep.subr.mxu0 0.0
    %7218 = vmatpush1.msra.mxu0 0.0
    %7219 = vmatprep.subr.mxu0 0.0
    %7220 = vmatpush1.msra.mxu0 0.0
    %7221 = vmatprep.subr.mxu0 0.0
    %7222 = vmatpush1.msra.mxu0 0.0
    %7223 = vmatprep.subr.mxu0 0.0
    %7224 = vmatpush1.msra.mxu0 0.0
    %7225 = vmatprep.subr.mxu0 0.0
    %7226 = vmatpush1.msra.mxu0 0.0
    %7227 = vmatprep.subr.mxu0 0.0
    %7228 = vmatpush1.msra.mxu0 0.0
    %7229 = vmatprep.subr.mxu0 0.0
    %7230 = vmatpush1.msra.mxu0 0.0
    %7231 = vmatprep.subr.mxu0 0.0
    %7232 = vmatpush1.msra.mxu0 0.0
    %7233 = vmatprep.subr.mxu0 0.0
    %7234 = vmatpush1.msra.mxu0 0.0
    %7235 = vmatprep.subr.mxu0 0.0
    %7236 = vmatpush1.msra.mxu0 0.0
    %7237 = vmatprep.subr.mxu0 0.0
    %7238 = vmatpush1.msra.mxu0 0.0
    %7239 = vmatprep.subr.mxu0 0.0
    %7240 = vmatpush1.msra.mxu0 0.0
    %7241 = vmatprep.subr.mxu0 0.0
    %7242 = vmatpush1.msra.mxu0 0.0
    %7243 = vmatprep.subr.mxu0 0.0
    %7244 = vmatpush1.msra.mxu0 0.0
    %7245 = vmatprep.subr.mxu0 0.0
    %7246 = vmatpush1.msra.mxu0 0.0
    %7247 = vmatprep.subr.mxu0 0.0
    %7248 = vmatpush1.msra.mxu0 0.0
    %7249 = vmatprep.subr.mxu0 0.0
    %7250 = vmatpush1.msra.mxu0 0.0
    %7251 = vmatprep.subr.mxu0 0.0
    %7252 = vmatpush1.msra.mxu0 0.0
    %7253 = vmatprep.subr.mxu0 0.0
    %7254 = vmatpush1.msra.mxu0 0.0
    %7255 = vmatprep.subr.mxu0 0.0
    %7256 = vmatpush1.msra.mxu0 0.0
    %7257 = vmatprep.subr.mxu0 0.0
    %7258 = vmatpush1.msra.mxu0 0.0
    %7259 = vmatprep.subr.mxu0 0.0
    %7260 = vmatpush1.msra.mxu0 0.0
    %7261 = vmatprep.subr.mxu0 0.0
    %7262 = vmatpush1.msra.mxu0 0.0
    %7263 = vmatprep.subr.mxu0 0.0
    %7264 = vmatpush1.msra.mxu0 0.0
    %7265 = vmatprep.subr.mxu0 0.0
    %7266 = vmatpush1.msra.mxu0 0.0
    %7267 = vmatprep.subr.mxu0 0.0
    %7268 = vmatpush1.msra.mxu0 0.0
    %7269 = vmatprep.subr.mxu0 0.0
    %7270 = vmatpush1.msra.mxu0 0.0
    %7271 = vmatprep.subr.mxu0 0.0
    %7272 = vmatpush1.msra.mxu0 0.0
    %7273 = vmatprep.subr.mxu0 0.0
    %7274 = vmatpush1.msra.mxu0 0.0
    %7275 = vmatprep.subr.mxu0 0.0
    %7276 = vmatpush1.msra.mxu0 0.0
    %7277 = vmatprep.mubr.f32.mxu0 0.0
    %7278 = vmatmul.mubr.f32.gmra.mrb[0].mxu0 %v7211
    %v7279 = vpop.f32.mrb[0].mxu0
    %v7280 = vadd.f32 0.0, %v7279
    %v7281 = vpop.f32.mrb[0].mxu0
    %7282 = vdwg.mxu0
    %7283 = vxpose.xlu0.b32.start [1/16] %v5479, 128
    %7284 = vxpose.xlu0.b32.cont [2/16] %v5481, 128
    %7285 = vxpose.xlu0.b32.cont [3/16] 0.0, 128
    %7286 = vxpose.xlu0.b32.cont [4/16] 0.0, 128
    %7287 = vxpose.xlu0.b32.cont [5/16] 0.0, 128
    %7288 = vxpose.xlu0.b32.cont [6/16] 0.0, 128
    %7289 = vxpose.xlu0.b32.cont [7/16] 0.0, 128
    %7290 = vxpose.xlu0.b32.cont [8/16] 0.0, 128
    %7291 = vxpose.xlu0.b32.cont [9/16] 0.0, 128
    %7292 = vxpose.xlu0.b32.cont [10/16] 0.0, 128
    %7293 = vxpose.xlu0.b32.cont [11/16] 0.0, 128
    %7294 = vxpose.xlu0.b32.cont [12/16] 0.0, 128
    %7295 = vxpose.xlu0.b32.cont [13/16] 0.0, 128
    %7296 = vxpose.xlu0.b32.cont [14/16] 0.0, 128
    %7297 = vxpose.xlu0.b32.cont [15/16] 0.0, 128
    %7298 = vxpose.xlu0.b32.end [16/16] 0.0, 128
    %v7299 = vpop.trf.xlu0
    %v7300 = vpop.trf.xlu0
    %v7301 = vpop.trf.xlu0
    %v7302 = vpop.trf.xlu0
    %v7303 = vpop.trf.xlu0
    %v7304 = vpop.trf.xlu0
    %v7305 = vpop.trf.xlu0
    %v7306 = vpop.trf.xlu0
    %v7307 = vpop.trf.xlu0
    %v7308 = vpop.trf.xlu0
    %v7309 = vpop.trf.xlu0
    %v7310 = vpop.trf.xlu0
    %v7311 = vpop.trf.xlu0
    %v7312 = vpop.trf.xlu0
    %v7313 = vpop.trf.xlu0
    %v7314 = vpop.trf.xlu0
    %v7316 = vsel %vm2467, %v7299, 0
    %7318 = vmatprep.subr.mxu0 0.0
    %7319 = vmatpush1.msra.mxu0 %v5912
    %7320 = vmatprep.subr.mxu0 0.0
    %7321 = vmatpush1.msra.mxu0 %v5913
    %7322 = vmatprep.subr.mxu0 0.0
    %7323 = vmatpush1.msra.mxu0 0.0
    %7324 = vmatprep.subr.mxu0 0.0
    %7325 = vmatpush1.msra.mxu0 0.0
    %7326 = vmatprep.subr.mxu0 0.0
    %7327 = vmatpush1.msra.mxu0 0.0
    %7328 = vmatprep.subr.mxu0 0.0
    %7329 = vmatpush1.msra.mxu0 0.0
    %7330 = vmatprep.subr.mxu0 0.0
    %7331 = vmatpush1.msra.mxu0 0.0
    %7332 = vmatprep.subr.mxu0 0.0
    %7333 = vmatpush1.msra.mxu0 0.0
    %7334 = vmatprep.subr.mxu0 0.0
    %7335 = vmatpush1.msra.mxu0 0.0
    %7336 = vmatprep.subr.mxu0 0.0
    %7337 = vmatpush1.msra.mxu0 0.0
    %7338 = vmatprep.subr.mxu0 0.0
    %7339 = vmatpush1.msra.mxu0 0.0
    %7340 = vmatprep.subr.mxu0 0.0
    %7341 = vmatpush1.msra.mxu0 0.0
    %7342 = vmatprep.subr.mxu0 0.0
    %7343 = vmatpush1.msra.mxu0 0.0
    %7344 = vmatprep.subr.mxu0 0.0
    %7345 = vmatpush1.msra.mxu0 0.0
    %7346 = vmatprep.subr.mxu0 0.0
    %7347 = vmatpush1.msra.mxu0 0.0
    %7348 = vmatprep.subr.mxu0 0.0
    %7349 = vmatpush1.msra.mxu0 0.0
    %7350 = vmatprep.subr.mxu0 0.0
    %7351 = vmatpush1.msra.mxu0 0.0
    %7352 = vmatprep.subr.mxu0 0.0
    %7353 = vmatpush1.msra.mxu0 0.0
    %7354 = vmatprep.subr.mxu0 0.0
    %7355 = vmatpush1.msra.mxu0 0.0
    %7356 = vmatprep.subr.mxu0 0.0
    %7357 = vmatpush1.msra.mxu0 0.0
    %7358 = vmatprep.subr.mxu0 0.0
    %7359 = vmatpush1.msra.mxu0 0.0
    %7360 = vmatprep.subr.mxu0 0.0
    %7361 = vmatpush1.msra.mxu0 0.0
    %7362 = vmatprep.subr.mxu0 0.0
    %7363 = vmatpush1.msra.mxu0 0.0
    %7364 = vmatprep.subr.mxu0 0.0
    %7365 = vmatpush1.msra.mxu0 0.0
    %7366 = vmatprep.subr.mxu0 0.0
    %7367 = vmatpush1.msra.mxu0 0.0
    %7368 = vmatprep.subr.mxu0 0.0
    %7369 = vmatpush1.msra.mxu0 0.0
    %7370 = vmatprep.subr.mxu0 0.0
    %7371 = vmatpush1.msra.mxu0 0.0
    %7372 = vmatprep.subr.mxu0 0.0
    %7373 = vmatpush1.msra.mxu0 0.0
    %7374 = vmatprep.subr.mxu0 0.0
    %7375 = vmatpush1.msra.mxu0 0.0
    %7376 = vmatprep.subr.mxu0 0.0
    %7377 = vmatpush1.msra.mxu0 0.0
    %7378 = vmatprep.subr.mxu0 0.0
    %7379 = vmatpush1.msra.mxu0 0.0
    %7380 = vmatprep.subr.mxu0 0.0
    %7381 = vmatpush1.msra.mxu0 0.0
    %7382 = vmatprep.mubr.f32.mxu0 0.0
    %7383 = vmatmul.mubr.f32.gmra.mrb[0].mxu0 %v7316
    %v7384 = vpop.f32.mrb[0].mxu0
    %v7385 = vadd.f32 0.0, %v7384
    %v7386 = vpop.f32.mrb[0].mxu0
    %7387 = vdwg.mxu0
    %7388 = vxpose.xlu0.b32.start [1/16] %v5562, 128
    %7389 = vxpose.xlu0.b32.cont [2/16] %v5564, 128
    %7390 = vxpose.xlu0.b32.cont [3/16] 0.0, 128
    %7391 = vxpose.xlu0.b32.cont [4/16] 0.0, 128
    %7392 = vxpose.xlu0.b32.cont [5/16] 0.0, 128
    %7393 = vxpose.xlu0.b32.cont [6/16] 0.0, 128
    %7394 = vxpose.xlu0.b32.cont [7/16] 0.0, 128
    %7395 = vxpose.xlu0.b32.cont [8/16] 0.0, 128
    %7396 = vxpose.xlu0.b32.cont [9/16] 0.0, 128
    %7397 = vxpose.xlu0.b32.cont [10/16] 0.0, 128
    %7398 = vxpose.xlu0.b32.cont [11/16] 0.0, 128
    %7399 = vxpose.xlu0.b32.cont [12/16] 0.0, 128
    %7400 = vxpose.xlu0.b32.cont [13/16] 0.0, 128
    %7401 = vxpose.xlu0.b32.cont [14/16] 0.0, 128
    %7402 = vxpose.xlu0.b32.cont [15/16] 0.0, 128
    %7403 = vxpose.xlu0.b32.end [16/16] 0.0, 128
    %v7404 = vpop.trf.xlu0
    %v7405 = vpop.trf.xlu0
    %v7406 = vpop.trf.xlu0
    %v7407 = vpop.trf.xlu0
    %v7408 = vpop.trf.xlu0
    %v7409 = vpop.trf.xlu0
    %v7410 = vpop.trf.xlu0
    %v7411 = vpop.trf.xlu0
    %v7412 = vpop.trf.xlu0
    %v7413 = vpop.trf.xlu0
    %v7414 = vpop.trf.xlu0
    %v7415 = vpop.trf.xlu0
    %v7416 = vpop.trf.xlu0
    %v7417 = vpop.trf.xlu0
    %v7418 = vpop.trf.xlu0
    %v7419 = vpop.trf.xlu0
    %v7421 = vsel %vm2467, %v7404, 0
    %7423 = vmatprep.subr.mxu0 0.0
    %7424 = vmatpush1.msra.mxu0 %v5914
    %7425 = vmatprep.subr.mxu0 0.0
    %7426 = vmatpush1.msra.mxu0 %v5915
    %7427 = vmatprep.subr.mxu0 0.0
    %7428 = vmatpush1.msra.mxu0 0.0
    %7429 = vmatprep.subr.mxu0 0.0
    %7430 = vmatpush1.msra.mxu0 0.0
    %7431 = vmatprep.subr.mxu0 0.0
    %7432 = vmatpush1.msra.mxu0 0.0
    %7433 = vmatprep.subr.mxu0 0.0
    %7434 = vmatpush1.msra.mxu0 0.0
    %7435 = vmatprep.subr.mxu0 0.0
    %7436 = vmatpush1.msra.mxu0 0.0
    %7437 = vmatprep.subr.mxu0 0.0
    %7438 = vmatpush1.msra.mxu0 0.0
    %7439 = vmatprep.subr.mxu0 0.0
    %7440 = vmatpush1.msra.mxu0 0.0
    %7441 = vmatprep.subr.mxu0 0.0
    %7442 = vmatpush1.msra.mxu0 0.0
    %7443 = vmatprep.subr.mxu0 0.0
    %7444 = vmatpush1.msra.mxu0 0.0
    %7445 = vmatprep.subr.mxu0 0.0
    %7446 = vmatpush1.msra.mxu0 0.0
    %7447 = vmatprep.subr.mxu0 0.0
    %7448 = vmatpush1.msra.mxu0 0.0
    %7449 = vmatprep.subr.mxu0 0.0
    %7450 = vmatpush1.msra.mxu0 0.0
    %7451 = vmatprep.subr.mxu0 0.0
    %7452 = vmatpush1.msra.mxu0 0.0
    %7453 = vmatprep.subr.mxu0 0.0
    %7454 = vmatpush1.msra.mxu0 0.0
    %7455 = vmatprep.subr.mxu0 0.0
    %7456 = vmatpush1.msra.mxu0 0.0
    %7457 = vmatprep.subr.mxu0 0.0
    %7458 = vmatpush1.msra.mxu0 0.0
    %7459 = vmatprep.subr.mxu0 0.0
    %7460 = vmatpush1.msra.mxu0 0.0
    %7461 = vmatprep.subr.mxu0 0.0
    %7462 = vmatpush1.msra.mxu0 0.0
    %7463 = vmatprep.subr.mxu0 0.0
    %7464 = vmatpush1.msra.mxu0 0.0
    %7465 = vmatprep.subr.mxu0 0.0
    %7466 = vmatpush1.msra.mxu0 0.0
    %7467 = vmatprep.subr.mxu0 0.0
    %7468 = vmatpush1.msra.mxu0 0.0
    %7469 = vmatprep.subr.mxu0 0.0
    %7470 = vmatpush1.msra.mxu0 0.0
    %7471 = vmatprep.subr.mxu0 0.0
    %7472 = vmatpush1.msra.mxu0 0.0
    %7473 = vmatprep.subr.mxu0 0.0
    %7474 = vmatpush1.msra.mxu0 0.0
    %7475 = vmatprep.subr.mxu0 0.0
    %7476 = vmatpush1.msra.mxu0 0.0
    %7477 = vmatprep.subr.mxu0 0.0
    %7478 = vmatpush1.msra.mxu0 0.0
    %7479 = vmatprep.subr.mxu0 0.0
    %7480 = vmatpush1.msra.mxu0 0.0
    %7481 = vmatprep.subr.mxu0 0.0
    %7482 = vmatpush1.msra.mxu0 0.0
    %7483 = vmatprep.subr.mxu0 0.0
    %7484 = vmatpush1.msra.mxu0 0.0
    %7485 = vmatprep.subr.mxu0 0.0
    %7486 = vmatpush1.msra.mxu0 0.0
    %7487 = vmatprep.mubr.f32.mxu0 0.0
    %7488 = vmatmul.mubr.f32.gmra.mrb[0].mxu0 %v7421
    %v7489 = vpop.f32.mrb[0].mxu0
    %v7490 = vadd.f32 0.0, %v7489
    %v7491 = vpop.f32.mrb[0].mxu0
    %7492 = vdwg.mxu0
    %7493 = vxpose.xlu0.b32.start [1/16] %v5645, 128
    %7494 = vxpose.xlu0.b32.cont [2/16] %v5647, 128
    %7495 = vxpose.xlu0.b32.cont [3/16] 0.0, 128
    %7496 = vxpose.xlu0.b32.cont [4/16] 0.0, 128
    %7497 = vxpose.xlu0.b32.cont [5/16] 0.0, 128
    %7498 = vxpose.xlu0.b32.cont [6/16] 0.0, 128
    %7499 = vxpose.xlu0.b32.cont [7/16] 0.0, 128
    %7500 = vxpose.xlu0.b32.cont [8/16] 0.0, 128
    %7501 = vxpose.xlu0.b32.cont [9/16] 0.0, 128
    %7502 = vxpose.xlu0.b32.cont [10/16] 0.0, 128
    %7503 = vxpose.xlu0.b32.cont [11/16] 0.0, 128
    %7504 = vxpose.xlu0.b32.cont [12/16] 0.0, 128
    %7505 = vxpose.xlu0.b32.cont [13/16] 0.0, 128
    %7506 = vxpose.xlu0.b32.cont [14/16] 0.0, 128
    %7507 = vxpose.xlu0.b32.cont [15/16] 0.0, 128
    %7508 = vxpose.xlu0.b32.end [16/16] 0.0, 128
    %v7509 = vpop.trf.xlu0
    %v7510 = vpop.trf.xlu0
    %v7511 = vpop.trf.xlu0
    %v7512 = vpop.trf.xlu0
    %v7513 = vpop.trf.xlu0
    %v7514 = vpop.trf.xlu0
    %v7515 = vpop.trf.xlu0
    %v7516 = vpop.trf.xlu0
    %v7517 = vpop.trf.xlu0
    %v7518 = vpop.trf.xlu0
    %v7519 = vpop.trf.xlu0
    %v7520 = vpop.trf.xlu0
    %v7521 = vpop.trf.xlu0
    %v7522 = vpop.trf.xlu0
    %v7523 = vpop.trf.xlu0
    %v7524 = vpop.trf.xlu0
    %v7526 = vsel %vm2467, %v7509, 0
    %7528 = vmatprep.subr.mxu0 0.0
    %7529 = vmatpush1.msra.mxu0 %v5916
    %7530 = vmatprep.subr.mxu0 0.0
    %7531 = vmatpush1.msra.mxu0 %v5917
    %7532 = vmatprep.subr.mxu0 0.0
    %7533 = vmatpush1.msra.mxu0 0.0
    %7534 = vmatprep.subr.mxu0 0.0
    %7535 = vmatpush1.msra.mxu0 0.0
    %7536 = vmatprep.subr.mxu0 0.0
    %7537 = vmatpush1.msra.mxu0 0.0
    %7538 = vmatprep.subr.mxu0 0.0
    %7539 = vmatpush1.msra.mxu0 0.0
    %7540 = vmatprep.subr.mxu0 0.0
    %7541 = vmatpush1.msra.mxu0 0.0
    %7542 = vmatprep.subr.mxu0 0.0
    %7543 = vmatpush1.msra.mxu0 0.0
    %7544 = vmatprep.subr.mxu0 0.0
    %7545 = vmatpush1.msra.mxu0 0.0
    %7546 = vmatprep.subr.mxu0 0.0
    %7547 = vmatpush1.msra.mxu0 0.0
    %7548 = vmatprep.subr.mxu0 0.0
    %7549 = vmatpush1.msra.mxu0 0.0
    %7550 = vmatprep.subr.mxu0 0.0
    %7551 = vmatpush1.msra.mxu0 0.0
    %7552 = vmatprep.subr.mxu0 0.0
    %7553 = vmatpush1.msra.mxu0 0.0
    %7554 = vmatprep.subr.mxu0 0.0
    %7555 = vmatpush1.msra.mxu0 0.0
    %7556 = vmatprep.subr.mxu0 0.0
    %7557 = vmatpush1.msra.mxu0 0.0
    %7558 = vmatprep.subr.mxu0 0.0
    %7559 = vmatpush1.msra.mxu0 0.0
    %7560 = vmatprep.subr.mxu0 0.0
    %7561 = vmatpush1.msra.mxu0 0.0
    %7562 = vmatprep.subr.mxu0 0.0
    %7563 = vmatpush1.msra.mxu0 0.0
    %7564 = vmatprep.subr.mxu0 0.0
    %7565 = vmatpush1.msra.mxu0 0.0
    %7566 = vmatprep.subr.mxu0 0.0
    %7567 = vmatpush1.msra.mxu0 0.0
    %7568 = vmatprep.subr.mxu0 0.0
    %7569 = vmatpush1.msra.mxu0 0.0
    %7570 = vmatprep.subr.mxu0 0.0
    %7571 = vmatpush1.msra.mxu0 0.0
    %7572 = vmatprep.subr.mxu0 0.0
    %7573 = vmatpush1.msra.mxu0 0.0
    %7574 = vmatprep.subr.mxu0 0.0
    %7575 = vmatpush1.msra.mxu0 0.0
    %7576 = vmatprep.subr.mxu0 0.0
    %7577 = vmatpush1.msra.mxu0 0.0
    %7578 = vmatprep.subr.mxu0 0.0
    %7579 = vmatpush1.msra.mxu0 0.0
    %7580 = vmatprep.subr.mxu0 0.0
    %7581 = vmatpush1.msra.mxu0 0.0
    %7582 = vmatprep.subr.mxu0 0.0
    %7583 = vmatpush1.msra.mxu0 0.0
    %7584 = vmatprep.subr.mxu0 0.0
    %7585 = vmatpush1.msra.mxu0 0.0
    %7586 = vmatprep.subr.mxu0 0.0
    %7587 = vmatpush1.msra.mxu0 0.0
    %7588 = vmatprep.subr.mxu0 0.0
    %7589 = vmatpush1.msra.mxu0 0.0
    %7590 = vmatprep.subr.mxu0 0.0
    %7591 = vmatpush1.msra.mxu0 0.0
    %7592 = vmatprep.mubr.f32.mxu0 0.0
    %7593 = vmatmul.mubr.f32.gmra.mrb[0].mxu0 %v7526
    %v7594 = vpop.f32.mrb[0].mxu0
    %v7595 = vadd.f32 0.0, %v7594
    %v7596 = vpop.f32.mrb[0].mxu0
    %7597 = vdwg.mxu0
    %7598 = vst [vmem:[#allocation2] sm:$0xff] %v6020
    %7599 = vst [vmem:[#allocation2 + $0x8] sm:$0xff] %v6125
    %7600 = vst [vmem:[#allocation2 + $0x10] sm:$0xff] %v6230
    %7601 = vst [vmem:[#allocation2 + $0x18] sm:$0xff] %v6335
    %7602 = vst [vmem:[#allocation2 + $0x20] sm:$0xff] %v6440
    %7603 = vst [vmem:[#allocation2 + $0x28] sm:$0xff] %v6545
    %7604 = vst [vmem:[#allocation2 + $0x30] sm:$0xff] %v6650
    %7605 = vst [vmem:[#allocation2 + $0x38] sm:$0xff] %v6755
    %7606 = vst [vmem:[#allocation2 + $0x40] sm:$0xff] %v6860
    %7607 = vst [vmem:[#allocation2 + $0x48] sm:$0xff] %v6965
    %7608 = vst [vmem:[#allocation2 + $0x50] sm:$0xff] %v7070
    %7609 = vst [vmem:[#allocation2 + $0x58] sm:$0xff] %v7175
    %7610 = vst [vmem:[#allocation2 + $0x60] sm:$0xff] %v7280
    %7611 = vst [vmem:[#allocation2 + $0x68] sm:$0xff] %v7385
    %7612 = vst [vmem:[#allocation2 + $0x70] sm:$0xff] %v7490
    %7613 = vst [vmem:[#allocation2 + $0x78] sm:$0xff] %v7595
    // Predicated region
    $region22: #{tpu_custom_call.1} parent=1 // pred_check
      _
    $region23: #{tpu_custom_call.1} parent=1 // pred_check_branch
      %7615 = sbr.rel (0) target = $region25
    $region24: #{tpu_custom_call.1} parent=1 // pred_region
      %s7617 = ssub.s32 2048, 2048
      %7618 = vsyncadd [#allocation3], %s7617
      %s7619 = sshll.u32 [#allocation2], 4
      %s7620 = int_to_ptr.vmem [resolvable:$true] %s7619
      %7625 = dma.vmem_to_hbm [thread:$0]  %s7620, 2048, %s5, [#allocation3], 128, 128, 8
    $region25: #{tpu_custom_call.1} parent=1 // pred_fallthru
      _
    // Predicated region
    $region26: #{tpu_custom_call.1} parent=1 // pred_check
      _
    $region27: #{tpu_custom_call.1} parent=1 // pred_check_branch
      %7627 = sbr.rel (0) target = $region29
    $region28: #{tpu_custom_call.1} parent=1 // pred_region
      %7628 = dma.done [#allocation3], 2048
    $region29: #{tpu_custom_call.1} parent=1 // pred_fallthru
      _
    %7629 = vsyncpa [#allocation3], 1

</llo_original>
